<compile_context>
chip_gen: v7x
topology: tpu7x:2x2x1
jax: 0.10.0
libtpu: 0.0.40
codegen_flags: <defaults>
</compile_context>

<pallas_src>
import functools

import jax
import jax.numpy as jnp
from jax.experimental import pallas as pl
from jax.experimental.pallas import tpu as pltpu

# ----------------------------- model config ---------------------------------
DIM = 128         # model dim (stand-in for 4096; multiple of 128)
DEPTH = 2         # video_encoder depth=2
HEADS = 2
DIM_HEAD = 128    # lane-dense head dim
INNER = HEADS * DIM_HEAD
FF_MULT = 4
HIDDEN = DIM * FF_MULT
BATCH = 2
SEQ = 256
EPS = 1e-5


# ----------------------------- Pallas kernels -------------------------------
def _ln_matmul_kernel(x_ref, g_ref, b_ref, w_ref, bias_ref, o_ref, *, eps,
                      activation):
    """Fused LayerNorm -> bf16 matmul -> bias (-> GELU) for one (tm, tn) tile.

    x_ref holds the full feature dim so the LN stats are exact; LN is
    recomputed per N-tile (cheap VPU work vs. the HBM round trip it saves).
    """
    x = x_ref[...].astype(jnp.float32)
    mu = jnp.mean(x, axis=-1, keepdims=True)
    var = jnp.mean(jnp.square(x - mu), axis=-1, keepdims=True)
    xn = (x - mu) * jax.lax.rsqrt(var + eps)
    xn = xn * g_ref[...].astype(jnp.float32) + b_ref[...].astype(jnp.float32)
    y = jnp.dot(xn.astype(jnp.bfloat16), w_ref[...],
                preferred_element_type=jnp.float32)
    y = y + bias_ref[...].astype(jnp.float32)
    if activation == "gelu":
        # TODO(synk): PyTorch nn.GELU default is the exact erf form; the tanh
        # approximation is used here for guaranteed Mosaic lowering (~1e-3).
        y = jax.nn.gelu(y, approximate=True)
    o_ref[...] = y.astype(o_ref.dtype)


def _matmul_res_kernel(x_ref, w_ref, bias_ref, res_ref, o_ref, acc_ref):
    """K-tiled bf16 matmul with f32 accumulator; bias + residual add fused in
    the epilogue (removes a standalone residual-add HBM round trip)."""
    @pl.when(pl.program_id(2) == 0)
    def _():
        acc_ref[...] = jnp.zeros_like(acc_ref)

    acc_ref[...] += jnp.dot(x_ref[...], w_ref[...],
                            preferred_element_type=jnp.float32)

    @pl.when(pl.program_id(2) == pl.num_programs(2) - 1)
    def _():
        y = (acc_ref[...] + bias_ref[...].astype(jnp.float32)
             + res_ref[...].astype(jnp.float32))
        o_ref[...] = y.astype(o_ref.dtype)


def _flash_attn_kernel(q_ref, k_ref, v_ref, o_ref, m_ref, l_ref, acc_ref, *,
                       scale):
    """Online-softmax (flash) attention; grid = (B, H, q-tile, kv-tile)."""
    ki = pl.program_id(3)

    @pl.when(ki == 0)
    def _():
        m_ref[...] = jnp.full_like(m_ref, -jnp.inf)
        l_ref[...] = jnp.zeros_like(l_ref)
        acc_ref[...] = jnp.zeros_like(acc_ref)

    q = q_ref[...]                                    # (tq, Dh) bf16
    k = k_ref[...]                                    # (tk, Dh) bf16
    # 2-D dot with contraction on the last dims (q @ k^T) -> clean MXU lowering.
    s = jax.lax.dot_general(q, k, (((1,), (1,)), ((), ())),
                            preferred_element_type=jnp.float32) * scale
    m_prev = m_ref[...]
    m_new = jnp.maximum(m_prev, jnp.max(s, axis=-1, keepdims=True))
    alpha = jnp.exp(m_prev - m_new)
    p = jnp.exp(s - m_new)
    l_ref[...] = alpha * l_ref[...] + jnp.sum(p, axis=-1, keepdims=True)
    acc_ref[...] = alpha * acc_ref[...] + jnp.dot(
        p.astype(jnp.bfloat16), v_ref[...], preferred_element_type=jnp.float32)
    m_ref[...] = m_new

    @pl.when(ki == pl.num_programs(3) - 1)
    def _():
        inv_l = pl.reciprocal(l_ref[...], approx=True)
        o_ref[...] = (acc_ref[...] * inv_l).astype(o_ref.dtype)


def _layernorm_kernel(x_ref, g_ref, b_ref, o_ref, *, eps):
    x = x_ref[...].astype(jnp.float32)
    mu = jnp.mean(x, axis=-1, keepdims=True)
    var = jnp.mean(jnp.square(x - mu), axis=-1, keepdims=True)
    xn = (x - mu) * jax.lax.rsqrt(var + eps)
    y = xn * g_ref[...].astype(jnp.float32) + b_ref[...].astype(jnp.float32)
    o_ref[...] = y.astype(o_ref.dtype)


# ----------------------------- kernel wrappers -------------------------------
def layernorm_matmul(x2d, gamma, beta, w, b, activation=None, *, tm=128,
                     tn=256, eps=EPS):
    """LN(x) @ w + b (optionally GELU).  Full K per block (LN needs the full
    row anyway); grid tiled over (M, N) — both axes 'parallel'."""
    M, K = x2d.shape
    Kw, N = w.shape
    assert K == Kw
    tm = min(tm, M)
    tn = min(tn, N)
    assert M % tm == 0 and N % tn == 0, "demo requires divisible tiles"
    grid = (pl.cdiv(M, tm), pl.cdiv(N, tn))
    return pl.pallas_call(
        functools.partial(_ln_matmul_kernel, eps=eps, activation=activation),
        out_shape=jax.ShapeDtypeStruct((M, N), jnp.bfloat16),
        grid_spec=pltpu.PrefetchScalarGridSpec(
            num_scalar_prefetch=0,
            grid=grid,
            in_specs=[
                pl.BlockSpec((tm, K), lambda i, j: (i, 0)),
                pl.BlockSpec((1, K), lambda i, j: (0, 0)),
                pl.BlockSpec((1, K), lambda i, j: (0, 0)),
                pl.BlockSpec((K, tn), lambda i, j: (0, j)),
                pl.BlockSpec((1, tn), lambda i, j: (0, j)),
            ],
            out_specs=pl.BlockSpec((tm, tn), lambda i, j: (i, j)),
        ),
        compiler_params=pltpu.CompilerParams(
            dimension_semantics=("parallel", "parallel")),
    )(x2d, gamma.reshape(1, K), beta.reshape(1, K), w, b.reshape(1, N))


def matmul_bias_residual(x2d, w, b, res, *, tm=128, tn=128, tk=256):
    """x @ w + b + res with K-tiled accumulation (reduction axis last)."""
    M, K = x2d.shape
    Kw, N = w.shape
    assert K == Kw and res.shape == (M, N)
    tm = min(tm, M)
    tn = min(tn, N)
    tk = min(tk, K)
    assert M % tm == 0 and N % tn == 0 and K % tk == 0, \
        "demo requires divisible tiles"
    grid = (pl.cdiv(M, tm), pl.cdiv(N, tn), pl.cdiv(K, tk))
    return pl.pallas_call(
        _matmul_res_kernel,
        out_shape=jax.ShapeDtypeStruct((M, N), res.dtype),
        grid_spec=pltpu.PrefetchScalarGridSpec(
            num_scalar_prefetch=0,
            grid=grid,
            in_specs=[
                pl.BlockSpec((tm, tk), lambda i, j, k: (i, k)),
                pl.BlockSpec((tk, tn), lambda i, j, k: (k, j)),
                pl.BlockSpec((1, tn), lambda i, j, k: (0, j)),
                pl.BlockSpec((tm, tn), lambda i, j, k: (i, j)),
            ],
            out_specs=pl.BlockSpec((tm, tn), lambda i, j, k: (i, j)),
            scratch_shapes=[pltpu.VMEM((tm, tn), jnp.float32)],
        ),
        compiler_params=pltpu.CompilerParams(
            dimension_semantics=("parallel", "parallel", "arbitrary")),
    )(x2d, w, b.reshape(1, N), res)


def flash_attention(qkv, B, S, heads, dim_head, scale, *, tq=128, tkv=128):
    """Flash attention over the fused (B*S, 3*H*Dh) QKV slab.

    Head split/merge is done entirely via BlockSpec index maps (no transposes
    in plain JAX).  Output is the (B*S, H*Dh) merged-head slab in bf16.
    """
    M, three_inner = qkv.shape
    inner = heads * dim_head
    assert three_inner == 3 * inner and M == B * S
    tq = min(tq, S)
    tkv = min(tkv, S)
    assert S % tq == 0 and S % tkv == 0, "demo requires divisible tiles"
    nq = S // tq
    nk = S // tkv
    grid = (B, heads, nq, nk)

    q_spec = pl.BlockSpec((tq, dim_head),
                          lambda b, h, qi, ki: (b * nq + qi, h))
    k_spec = pl.BlockSpec((tkv, dim_head),
                          lambda b, h, qi, ki: (b * nk + ki, heads + h))
    v_spec = pl.BlockSpec((tkv, dim_head),
                          lambda b, h, qi, ki: (b * nk + ki, 2 * heads + h))
    o_spec = pl.BlockSpec((tq, dim_head),
                          lambda b, h, qi, ki: (b * nq + qi, h))

    return pl.pallas_call(
        functools.partial(_flash_attn_kernel, scale=scale),
        out_shape=jax.ShapeDtypeStruct((M, inner), jnp.bfloat16),
        grid_spec=pltpu.PrefetchScalarGridSpec(
            num_scalar_prefetch=0,
            grid=grid,
            in_specs=[q_spec, k_spec, v_spec],
            out_specs=o_spec,
            scratch_shapes=[
                pltpu.VMEM((tq, 1), jnp.float32),          # running max m
                pltpu.VMEM((tq, 1), jnp.float32),          # running sum l
                pltpu.VMEM((tq, dim_head), jnp.float32),   # accumulator
            ],
        ),
        compiler_params=pltpu.CompilerParams(
            dimension_semantics=("parallel", "parallel", "parallel",
                                 "arbitrary")),
    )(qkv, qkv, qkv)


def layernorm(x2d, gamma, beta, *, tm=128, eps=EPS):
    """Row-tiled standalone LayerNorm (final LN only)."""
    M, D = x2d.shape
    tm = min(tm, M)
    assert M % tm == 0
    return pl.pallas_call(
        functools.partial(_layernorm_kernel, eps=eps),
        out_shape=jax.ShapeDtypeStruct((M, D), x2d.dtype),
        grid_spec=pltpu.PrefetchScalarGridSpec(
            num_scalar_prefetch=0,
            grid=(pl.cdiv(M, tm),),
            in_specs=[
                pl.BlockSpec((tm, D), lambda i: (i, 0)),
                pl.BlockSpec((1, D), lambda i: (0, 0)),
                pl.BlockSpec((1, D), lambda i: (0, 0)),
            ],
            out_specs=pl.BlockSpec((tm, D), lambda i: (i, 0)),
        ),
        compiler_params=pltpu.CompilerParams(
            dimension_semantics=("parallel",)),
    )(x2d, gamma.reshape(1, D), beta.reshape(1, D))


# ----------------------------- parameters -----------------------------------
def make_params(key, dim=DIM, depth=DEPTH, heads=HEADS, dim_head=DIM_HEAD,
                ff_mult=FF_MULT):
    inner = heads * dim_head
    hidden = dim * ff_mult
    layers = []
    for _ in range(depth):
        keys = jax.random.split(key, 7)
        key = keys[0]
        wq = 0.02 * jax.random.normal(keys[1], (dim, inner), jnp.float32)
        wk = 0.02 * jax.random.normal(keys[2], (dim, inner), jnp.float32)
        wv = 0.02 * jax.random.normal(keys[3], (dim, inner), jnp.float32)
        layers.append(dict(
            ln1_g=jnp.ones((dim,), jnp.float32),
            ln1_b=jnp.zeros((dim,), jnp.float32),
            # Fused QKV weight/bias, stored bf16 (halves weight HBM traffic).
            wqkv=jnp.concatenate([wq, wk, wv], axis=1).astype(jnp.bfloat16),
            bqkv=jnp.zeros((3 * inner,), jnp.float32),
            wo=(0.02 * jax.random.normal(keys[4], (inner, dim), jnp.float32)
                ).astype(jnp.bfloat16),
            bo=jnp.zeros((dim,), jnp.float32),
            ln2_g=jnp.ones((dim,), jnp.float32),
            ln2_b=jnp.zeros((dim,), jnp.float32),
            w1=(0.02 * jax.random.normal(keys[5], (dim, hidden), jnp.float32)
                ).astype(jnp.bfloat16),
            b1=jnp.zeros((hidden,), jnp.float32),
            w2=(0.02 * jax.random.normal(keys[6], (hidden, dim), jnp.float32)
                ).astype(jnp.bfloat16),
            b2=jnp.zeros((dim,), jnp.float32),
        ))
    return dict(
        layers=layers,
        lnf_g=jnp.ones((dim,), jnp.float32),
        lnf_b=jnp.zeros((dim,), jnp.float32),
    )


# ----------------------------- forward pass ----------------------------------
def vision_encoder_forward(params, x, heads=HEADS, dim_head=DIM_HEAD):
    B, S, D = x.shape
    M = B * S
    scale = dim_head ** -0.5
    x2 = x.reshape(M, D)                     # residual stream stays f32

    for lyr in params["layers"]:
        # --- attention block: LN fused into QKV matmul; flash attention with
        #     head split via BlockSpec; residual fused into output projection.
        qkv = layernorm_matmul(x2, lyr["ln1_g"], lyr["ln1_b"],
                               lyr["wqkv"], lyr["bqkv"])
        attn = flash_attention(qkv, B, S, heads, dim_head, scale)
        x2 = matmul_bias_residual(attn, lyr["wo"], lyr["bo"], x2)

        # --- feedforward block: LN + GELU fused into FF1; residual fused
        #     into FF2's epilogue.
        h = layernorm_matmul(x2, lyr["ln2_g"], lyr["ln2_b"],
                             lyr["w1"], lyr["b1"], activation="gelu")
        x2 = matmul_bias_residual(h, lyr["w2"], lyr["b2"], x2)

    out = layernorm(x2, params["lnf_g"], params["lnf_b"])
    return out.reshape(B, S, D)


# ----------------------------- pure-JAX reference ----------------------------
def reference_forward(params, x, heads=HEADS, dim_head=DIM_HEAD, eps=EPS):
    """Mirrors the kernel's dtype choices so it isolates kernel bugs."""
    B, S, D = x.shape
    M = B * S
    inner = heads * dim_head
    scale = dim_head ** -0.5

    def ln(v, g, b):
        v = v.astype(jnp.float32)
        mu = jnp.mean(v, -1, keepdims=True)
        var = jnp.mean(jnp.square(v - mu), -1, keepdims=True)
        return (v - mu) * jax.lax.rsqrt(var + eps) * g + b

    x2 = x.reshape(M, D)
    for lyr in params["layers"]:
        h = ln(x2, lyr["ln1_g"], lyr["ln1_b"]).astype(jnp.bfloat16)
        qkv = (jnp.dot(h, lyr["wqkv"], preferred_element_type=jnp.float32)
               + lyr["bqkv"]).astype(jnp.bfloat16)
        q, k, v = jnp.split(qkv, 3, axis=-1)

        def sh(t):
            return t.reshape(B, S, heads, dim_head).transpose(0, 2, 1, 3)

        qh, kh, vh = sh(q), sh(k), sh(v)
        s = jnp.einsum("bhqd,bhkd->bhqk", qh.astype(jnp.float32),
                       kh.astype(jnp.float32)) * scale
        p = jax.nn.softmax(s, axis=-1)
        o = jnp.einsum("bhqk,bhkd->bhqd", p, vh.astype(jnp.float32))
        o = o.transpose(0, 2, 1, 3).reshape(M, inner).astype(jnp.bfloat16)
        x2 = (x2 + jnp.dot(o, lyr["wo"], preferred_element_type=jnp.float32)
              + lyr["bo"])

        h = ln(x2, lyr["ln2_g"], lyr["ln2_b"]).astype(jnp.bfloat16)
        h1 = jax.nn.gelu(
            jnp.dot(h, lyr["w1"], preferred_element_type=jnp.float32)
            + lyr["b1"], approximate=True).astype(jnp.bfloat16)
        x2 = (x2 + jnp.dot(h1, lyr["w2"], preferred_element_type=jnp.float32)
              + lyr["b2"])

    out = ln(x2, params["lnf_g"], params["lnf_b"])
    return out.reshape(B, S, D)


# --------------------------------- main --------------------------------------
if __name__ == "__main__":
    key = jax.random.PRNGKey(0)
    x = jax.random.normal(key, (BATCH, SEQ, DIM), jnp.float32)
    params = make_params(jax.random.PRNGKey(42))

    fwd = jax.jit(vision_encoder_forward)
    y = fwd(params, x)
    jax.block_until_ready(y)

    assert y.shape == (BATCH, SEQ, DIM), y.shape
    assert jnp.all(jnp.isfinite(y))

    y_ref = reference_forward(params, x)
    err = float(jnp.max(jnp.abs(y - y_ref)))
    assert err < 5e-2, f"max abs error vs reference: {err}"

    print("KERNEL_OK")
</pallas_src>

<mosaic_0001>
module attributes {stable_mosaic.version = 11 : i64} {
  func.func @_flash_attn_kernel(%arg0: i32, %arg1: i32, %arg2: i32, %arg3: i32, %arg4: memref<128x128xbf16, #tpu.memory_space<vmem>>, %arg5: memref<128x128xbf16, #tpu.memory_space<vmem>>, %arg6: memref<128x128xbf16, #tpu.memory_space<vmem>>, %arg7: memref<128x128xbf16, #tpu.memory_space<vmem>>, %arg8: memref<128x1xf32, #tpu.memory_space<vmem>>, %arg9: memref<128x1xf32, #tpu.memory_space<vmem>>, %arg10: memref<128x128xf32, #tpu.memory_space<vmem>>) attributes {dimension_semantics = [#tpu.dimension_semantics<parallel>, #tpu.dimension_semantics<parallel>, #tpu.dimension_semantics<parallel>, #tpu.dimension_semantics<arbitrary>], iteration_bounds = array<i64: 2, 2, 2, 2>, scalar_prefetch = 0 : i64, scratch_operands = 3 : i64, tpu.core_type = #tpu.core_type<tc>, window_params = [{transform_indices = @transform_0, window_bounds = array<i64: 128, 128>}, {transform_indices = @transform_1, window_bounds = array<i64: 128, 128>}, {transform_indices = @transform_2, window_bounds = array<i64: 128, 128>}, {transform_indices = @transform_3, window_bounds = array<i64: 128, 128>}]} {
    %c0_i32 = arith.constant 0 : i32
    %0 = arith.cmpi eq, %arg3, %c0_i32 : i32
    %1 = arith.extui %0 : i1 to i32
    %c0_i32_0 = arith.constant 0 : i32
    %2 = arith.cmpi ne, %1, %c0_i32_0 : i32
    scf.if %2 {
      %cst_23 = arith.constant 0xFF800000 : f32
      %35 = vector.broadcast %cst_23 : f32 to vector<128x1xf32>
      %c0_24 = arith.constant 0 : index
      %c0_25 = arith.constant 0 : index
      %36 = vector.load %arg8[%c0_24, %c0_25] : memref<128x1xf32, #tpu.memory_space<vmem>>, vector<128x1xf32>
      tpu.vector_store %arg8[%c0_24, %c0_25], %35 {strides = array<i32>} : memref<128x1xf32, #tpu.memory_space<vmem>>, vector<128x1xf32>,
      %cst_26 = arith.constant 0.000000e+00 : f32
      %37 = vector.broadcast %cst_26 : f32 to vector<128x1xf32>
      %c0_27 = arith.constant 0 : index
      %c0_28 = arith.constant 0 : index
      %38 = vector.load %arg9[%c0_27, %c0_28] : memref<128x1xf32, #tpu.memory_space<vmem>>, vector<128x1xf32>
      tpu.vector_store %arg9[%c0_27, %c0_28], %37 {strides = array<i32>} : memref<128x1xf32, #tpu.memory_space<vmem>>, vector<128x1xf32>,
      %cst_29 = arith.constant 0.000000e+00 : f32
      %39 = vector.broadcast %cst_29 : f32 to vector<128x128xf32>
      %c0_30 = arith.constant 0 : index
      %c0_31 = arith.constant 0 : index
      %40 = vector.load %arg10[%c0_30, %c0_31] : memref<128x128xf32, #tpu.memory_space<vmem>>, vector<128x128xf32>
      tpu.vector_store %arg10[%c0_30, %c0_31], %39 {strides = array<i32>} : memref<128x128xf32, #tpu.memory_space<vmem>>, vector<128x128xf32>,
    } else {
    }
    %c0 = arith.constant 0 : index
    %c0_1 = arith.constant 0 : index
    %3 = vector.load %arg4[%c0, %c0_1] : memref<128x128xbf16, #tpu.memory_space<vmem>>, vector<128x128xbf16>
    %c0_2 = arith.constant 0 : index
    %c0_3 = arith.constant 0 : index
    %4 = vector.load %arg5[%c0_2, %c0_3] : memref<128x128xbf16, #tpu.memory_space<vmem>>, vector<128x128xbf16>
    %cst = arith.constant dense<0.000000e+00> : vector<128x128xf32>
    %5 = tpu.matmul %3, %4, %cst {dimension_numbers = #tpu.dot_dimension_numbers<[1], [1], [0], [0], [0, 0, 1, 0], [], []>} : vector<128x128xbf16>, vector<128x128xbf16>, vector<128x128xf32> -> vector<128x128xf32>
    %cst_4 = arith.constant 0.0883883461 : f32
    %6 = vector.broadcast %cst_4 : f32 to vector<128x128xf32>
    %7 = arith.mulf %5, %6 : vector<128x128xf32>
    %c0_5 = arith.constant 0 : index
    %c0_6 = arith.constant 0 : index
    %8 = vector.load %arg8[%c0_5, %c0_6] : memref<128x1xf32, #tpu.memory_space<vmem>>, vector<128x1xf32>
    %cst_7 = arith.constant dense<0xFF800000> : vector<128xf32>
    %9 = vector.multi_reduction <maximumf>, %7, %cst_7 [1] : vector<128x128xf32> to vector<128xf32>
    %10 = vector.shape_cast %9 : vector<128xf32> to vector<128x1xf32>
    %11 = arith.maximumf %8, %10 : vector<128x1xf32>
    %12 = arith.subf %8, %11 : vector<128x1xf32>
    %13 = math.exp %12 : vector<128x1xf32>
    %14 = vector.broadcast %11 : vector<128x1xf32> to vector<128x128xf32>
    %15 = arith.subf %7, %14 : vector<128x128xf32>
    %16 = math.exp %15 : vector<128x128xf32>
    %c0_8 = arith.constant 0 : index
    %c0_9 = arith.constant 0 : index
    %17 = vector.load %arg9[%c0_8, %c0_9] : memref<128x1xf32, #tpu.memory_space<vmem>>, vector<128x1xf32>
    %18 = arith.mulf %13, %17 : vector<128x1xf32>
    %cst_10 = arith.constant dense<0.000000e+00> : vector<128xf32>
    %19 = vector.multi_reduction <add>, %16, %cst_10 [1] : vector<128x128xf32> to vector<128xf32>
    %20 = vector.shape_cast %19 : vector<128xf32> to vector<128x1xf32>
    %21 = arith.addf %18, %20 : vector<128x1xf32>
    %c0_11 = arith.constant 0 : index
    %c0_12 = arith.constant 0 : index
    %22 = vector.load %arg9[%c0_11, %c0_12] : memref<128x1xf32, #tpu.memory_space<vmem>>, vector<128x1xf32>
    tpu.vector_store %arg9[%c0_11, %c0_12], %21 {strides = array<i32>} : memref<128x1xf32, #tpu.memory_space<vmem>>, vector<128x1xf32>,
    %c0_13 = arith.constant 0 : index
    %c0_14 = arith.constant 0 : index
    %23 = vector.load %arg10[%c0_13, %c0_14] : memref<128x128xf32, #tpu.memory_space<vmem>>, vector<128x128xf32>
    %24 = vector.broadcast %13 : vector<128x1xf32> to vector<128x128xf32>
    %25 = arith.mulf %24, %23 : vector<128x128xf32>
    %26 = arith.truncf %16 : vector<128x128xf32> to vector<128x128xbf16>
    %c0_15 = arith.constant 0 : index
    %c0_16 = arith.constant 0 : index
    %27 = vector.load %arg6[%c0_15, %c0_16] : memref<128x128xbf16, #tpu.memory_space<vmem>>, vector<128x128xbf16>
    %cst_17 = arith.constant dense<0.000000e+00> : vector<128x128xf32>
    %28 = tpu.matmul %26, %27, %cst_17 {dimension_numbers = #tpu.dot_dimension_numbers<[1], [0], [0], [1], [0, 0, 1, 1], [], []>} : vector<128x128xbf16>, vector<128x128xbf16>, vector<128x128xf32> -> vector<128x128xf32>
    %29 = arith.addf %25, %28 : vector<128x128xf32>
    %c0_18 = arith.constant 0 : index
    %c0_19 = arith.constant 0 : index
    %30 = vector.load %arg10[%c0_18, %c0_19] : memref<128x128xf32, #tpu.memory_space<vmem>>, vector<128x128xf32>
    tpu.vector_store %arg10[%c0_18, %c0_19], %29 {strides = array<i32>} : memref<128x128xf32, #tpu.memory_space<vmem>>, vector<128x128xf32>,
    %c0_20 = arith.constant 0 : index
    %c0_21 = arith.constant 0 : index
    %31 = vector.load %arg8[%c0_20, %c0_21] : memref<128x1xf32, #tpu.memory_space<vmem>>, vector<128x1xf32>
    tpu.vector_store %arg8[%c0_20, %c0_21], %11 {strides = array<i32>} : memref<128x1xf32, #tpu.memory_space<vmem>>, vector<128x1xf32>,
    %c1_i32 = arith.constant 1 : i32
    %32 = arith.cmpi eq, %arg3, %c1_i32 : i32
    %33 = arith.extui %32 : i1 to i32
    %c0_i32_22 = arith.constant 0 : i32
    %34 = arith.cmpi ne, %33, %c0_i32_22 : i32
    scf.if %34 {
      %c0_23 = arith.constant 0 : index
      %c0_24 = arith.constant 0 : index
      %35 = vector.load %arg9[%c0_23, %c0_24] : memref<128x1xf32, #tpu.memory_space<vmem>>, vector<128x1xf32>
      %36 = tpu.reciprocal %35 {approx = true} : vector<128x1xf32> -> vector<128x1xf32>
      %c0_25 = arith.constant 0 : index
      %c0_26 = arith.constant 0 : index
      %37 = vector.load %arg10[%c0_25, %c0_26] : memref<128x128xf32, #tpu.memory_space<vmem>>, vector<128x128xf32>
      %38 = vector.broadcast %36 : vector<128x1xf32> to vector<128x128xf32>
      %39 = arith.mulf %37, %38 : vector<128x128xf32>
      %40 = arith.truncf %39 : vector<128x128xf32> to vector<128x128xbf16>
      %c0_27 = arith.constant 0 : index
      %c0_28 = arith.constant 0 : index
      %41 = vector.load %arg7[%c0_27, %c0_28] : memref<128x128xbf16, #tpu.memory_space<vmem>>, vector<128x128xbf16>
      tpu.vector_store %arg7[%c0_27, %c0_28], %40 {strides = array<i32>} : memref<128x128xbf16, #tpu.memory_space<vmem>>, vector<128x128xbf16>,
    } else {
    }
    return
  }
  func.func @transform_0(%arg0: i32, %arg1: i32, %arg2: i32, %arg3: i32) -> (i32, i32) {
    %c2_i32 = arith.constant 2 : i32
    %0 = arith.muli %arg0, %c2_i32 : i32
    %1 = arith.addi %0, %arg2 : i32
    %c0_i32 = arith.constant 0 : i32
    return %1, %arg1 : i32, i32
  }
  func.func @transform_1(%arg0: i32, %arg1: i32, %arg2: i32, %arg3: i32) -> (i32, i32) {
    %c2_i32 = arith.constant 2 : i32
    %0 = arith.muli %arg0, %c2_i32 : i32
    %1 = arith.addi %0, %arg3 : i32
    %c2_i32_0 = arith.constant 2 : i32
    %2 = arith.addi %c2_i32_0, %arg1 : i32
    %c0_i32 = arith.constant 0 : i32
    return %1, %2 : i32, i32
  }
  func.func @transform_2(%arg0: i32, %arg1: i32, %arg2: i32, %arg3: i32) -> (i32, i32) {
    %c2_i32 = arith.constant 2 : i32
    %0 = arith.muli %arg0, %c2_i32 : i32
    %1 = arith.addi %0, %arg3 : i32
    %c4_i32 = arith.constant 4 : i32
    %2 = arith.addi %c4_i32, %arg1 : i32
    %c0_i32 = arith.constant 0 : i32
    return %1, %2 : i32, i32
  }
  func.func @transform_3(%arg0: i32, %arg1: i32, %arg2: i32, %arg3: i32) -> (i32, i32) {
    %c2_i32 = arith.constant 2 : i32
    %0 = arith.muli %arg0, %c2_i32 : i32
    %1 = arith.addi %0, %arg2 : i32
    %c0_i32 = arith.constant 0 : i32
    return %1, %arg1 : i32, i32
  }
}

module attributes {stable_mosaic.version = 11 : i64} {
  func.func @_matmul_res_kernel(%arg0: i32, %arg1: i32, %arg2: i32, %arg3: memref<128x256xbf16, #tpu.memory_space<vmem>>, %arg4: memref<256x128xbf16, #tpu.memory_space<vmem>>, %arg5: memref<1x128xf32, #tpu.memory_space<vmem>>, %arg6: memref<128x128xf32, #tpu.memory_space<vmem>>, %arg7: memref<128x128xf32, #tpu.memory_space<vmem>>, %arg8: memref<128x128xf32, #tpu.memory_space<vmem>>) attributes {dimension_semantics = [#tpu.dimension_semantics<parallel>, #tpu.dimension_semantics<parallel>, #tpu.dimension_semantics<arbitrary>], iteration_bounds = array<i64: 4, 1, 1>, scalar_prefetch = 0 : i64, scratch_operands = 1 : i64, tpu.core_type = #tpu.core_type<tc>, window_params = [{transform_indices = @transform_0, window_bounds = array<i64: 128, 256>}, {transform_indices = @transform_1, window_bounds = array<i64: 256, 128>}, {transform_indices = @transform_2, window_bounds = array<i64: 1, 128>}, {transform_indices = @transform_3, window_bounds = array<i64: 128, 128>}, {transform_indices = @transform_4, window_bounds = array<i64: 128, 128>}]} {
    %c0_i32 = arith.constant 0 : i32
    %0 = arith.cmpi eq, %arg2, %c0_i32 : i32
    %1 = arith.extui %0 : i1 to i32
    %c0_i32_0 = arith.constant 0 : i32
    %2 = arith.cmpi ne, %1, %c0_i32_0 : i32
    scf.if %2 {
      %cst_10 = arith.constant 0.000000e+00 : f32
      %12 = vector.broadcast %cst_10 : f32 to vector<128x128xf32>
      %c0_11 = arith.constant 0 : index
      %c0_12 = arith.constant 0 : index
      %13 = vector.load %arg8[%c0_11, %c0_12] : memref<128x128xf32, #tpu.memory_space<vmem>>, vector<128x128xf32>
      tpu.vector_store %arg8[%c0_11, %c0_12], %12 {strides = array<i32>} : memref<128x128xf32, #tpu.memory_space<vmem>>, vector<128x128xf32>,
    } else {
    }
    %c0 = arith.constant 0 : index
    %c0_1 = arith.constant 0 : index
    %3 = vector.load %arg8[%c0, %c0_1] : memref<128x128xf32, #tpu.memory_space<vmem>>, vector<128x128xf32>
    %c0_2 = arith.constant 0 : index
    %c0_3 = arith.constant 0 : index
    %4 = vector.load %arg3[%c0_2, %c0_3] : memref<128x256xbf16, #tpu.memory_space<vmem>>, vector<128x256xbf16>
    %c0_4 = arith.constant 0 : index
    %c0_5 = arith.constant 0 : index
    %5 = vector.load %arg4[%c0_4, %c0_5] : memref<256x128xbf16, #tpu.memory_space<vmem>>, vector<256x128xbf16>
    %cst = arith.constant dense<0.000000e+00> : vector<128x128xf32>
    %6 = tpu.matmul %4, %5, %cst {dimension_numbers = #tpu.dot_dimension_numbers<[1], [0], [0], [1], [0, 0, 1, 1], [], []>} : vector<128x256xbf16>, vector<256x128xbf16>, vector<128x128xf32> -> vector<128x128xf32>
    %7 = arith.addf %3, %6 : vector<128x128xf32>
    %c0_6 = arith.constant 0 : index
    %c0_7 = arith.constant 0 : index
    %8 = vector.load %arg8[%c0_6, %c0_7] : memref<128x128xf32, #tpu.memory_space<vmem>>, vector<128x128xf32>
    tpu.vector_store %arg8[%c0_6, %c0_7], %7 {strides = array<i32>} : memref<128x128xf32, #tpu.memory_space<vmem>>, vector<128x128xf32>,
    %c0_i32_8 = arith.constant 0 : i32
    %9 = arith.cmpi eq, %arg2, %c0_i32_8 : i32
    %10 = arith.extui %9 : i1 to i32
    %c0_i32_9 = arith.constant 0 : i32
    %11 = arith.cmpi ne, %10, %c0_i32_9 : i32
    scf.if %11 {
      %c0_10 = arith.constant 0 : index
      %c0_11 = arith.constant 0 : index
      %12 = vector.load %arg8[%c0_10, %c0_11] : memref<128x128xf32, #tpu.memory_space<vmem>>, vector<128x128xf32>
      %c0_12 = arith.constant 0 : index
      %c0_13 = arith.constant 0 : index
      %13 = vector.load %arg5[%c0_12, %c0_13] : memref<1x128xf32, #tpu.memory_space<vmem>>, vector<1x128xf32>
      %14 = vector.broadcast %13 : vector<1x128xf32> to vector<128x128xf32>
      %15 = arith.addf %12, %14 : vector<128x128xf32>
      %c0_14 = arith.constant 0 : index
      %c0_15 = arith.constant 0 : index
      %16 = vector.load %arg6[%c0_14, %c0_15] : memref<128x128xf32, #tpu.memory_space<vmem>>, vector<128x128xf32>
      %17 = arith.addf %15, %16 : vector<128x128xf32>
      %c0_16 = arith.constant 0 : index
      %c0_17 = arith.constant 0 : index
      %18 = vector.load %arg7[%c0_16, %c0_17] : memref<128x128xf32, #tpu.memory_space<vmem>>, vector<128x128xf32>
      tpu.vector_store %arg7[%c0_16, %c0_17], %17 {strides = array<i32>} : memref<128x128xf32, #tpu.memory_space<vmem>>, vector<128x128xf32>,
    } else {
    }
    return
  }
  func.func @transform_0(%arg0: i32, %arg1: i32, %arg2: i32) -> (i32, i32) {
    %c0_i32 = arith.constant 0 : i32
    return %arg0, %arg2 : i32, i32
  }
  func.func @transform_1(%arg0: i32, %arg1: i32, %arg2: i32) -> (i32, i32) {
    %c0_i32 = arith.constant 0 : i32
    return %arg2, %arg1 : i32, i32
  }
  func.func @transform_2(%arg0: i32, %arg1: i32, %arg2: i32) -> (i32, i32) {
    %c0_i32 = arith.constant 0 : i32
    %c0_i32_0 = arith.constant 0 : i32
    return %c0_i32, %arg1 : i32, i32
  }
  func.func @transform_3(%arg0: i32, %arg1: i32, %arg2: i32) -> (i32, i32) {
    %c0_i32 = arith.constant 0 : i32
    return %arg0, %arg1 : i32, i32
  }
  func.func @transform_4(%arg0: i32, %arg1: i32, %arg2: i32) -> (i32, i32) {
    %c0_i32 = arith.constant 0 : i32
    return %arg0, %arg1 : i32, i32
  }
}

module attributes {stable_mosaic.version = 11 : i64} {
  func.func @_ln_matmul_kernel(%arg0: i32, %arg1: i32, %arg2: memref<128x128xf32, #tpu.memory_space<vmem>>, %arg3: memref<1x128xf32, #tpu.memory_space<vmem>>, %arg4: memref<1x128xf32, #tpu.memory_space<vmem>>, %arg5: memref<128x256xbf16, #tpu.memory_space<vmem>>, %arg6: memref<1x256xf32, #tpu.memory_space<vmem>>, %arg7: memref<128x256xbf16, #tpu.memory_space<vmem>>) attributes {dimension_semantics = [#tpu.dimension_semantics<parallel>, #tpu.dimension_semantics<parallel>], iteration_bounds = array<i64: 4, 3>, scalar_prefetch = 0 : i64, scratch_operands = 0 : i64, tpu.core_type = #tpu.core_type<tc>, window_params = [{transform_indices = @transform_0, window_bounds = array<i64: 128, 128>}, {pipeline_mode = #tpu.pipeline_mode<synchronous>, transform_indices = @transform_1, window_bounds = array<i64: 1, 128>}, {pipeline_mode = #tpu.pipeline_mode<synchronous>, transform_indices = @transform_2, window_bounds = array<i64: 1, 128>}, {transform_indices = @transform_3, window_bounds = array<i64: 128, 256>}, {transform_indices = @transform_4, window_bounds = array<i64: 1, 256>}, {transform_indices = @transform_5, window_bounds = array<i64: 128, 256>}]} {
    %c0 = arith.constant 0 : index
    %c0_0 = arith.constant 0 : index
    %0 = vector.load %arg2[%c0, %c0_0] : memref<128x128xf32, #tpu.memory_space<vmem>>, vector<128x128xf32>
    %cst = arith.constant dense<0.000000e+00> : vector<128xf32>
    %1 = vector.multi_reduction <add>, %0, %cst [1] : vector<128x128xf32> to vector<128xf32>
    %2 = vector.shape_cast %1 : vector<128xf32> to vector<128x1xf32>
    %cst_1 = arith.constant 1.280000e+02 : f32
    %3 = vector.broadcast %cst_1 : f32 to vector<128x1xf32>
    %4 = arith.divf %2, %3 : vector<128x1xf32>
    %5 = vector.broadcast %4 : vector<128x1xf32> to vector<128x128xf32>
    %6 = arith.subf %0, %5 : vector<128x128xf32>
    %7 = arith.mulf %6, %6 : vector<128x128xf32>
    %cst_2 = arith.constant dense<0.000000e+00> : vector<128xf32>
    %8 = vector.multi_reduction <add>, %7, %cst_2 [1] : vector<128x128xf32> to vector<128xf32>
    %9 = vector.shape_cast %8 : vector<128xf32> to vector<128x1xf32>
    %cst_3 = arith.constant 1.280000e+02 : f32
    %10 = vector.broadcast %cst_3 : f32 to vector<128x1xf32>
    %11 = arith.divf %9, %10 : vector<128x1xf32>
    %12 = vector.broadcast %4 : vector<128x1xf32> to vector<128x128xf32>
    %13 = arith.subf %0, %12 : vector<128x128xf32>
    %cst_4 = arith.constant 9.99999974E-6 : f32
    %14 = vector.broadcast %cst_4 : f32 to vector<128x1xf32>
    %15 = arith.addf %11, %14 : vector<128x1xf32>
    %16 = math.rsqrt %15 : vector<128x1xf32>
    %17 = vector.broadcast %16 : vector<128x1xf32> to vector<128x128xf32>
    %18 = arith.mulf %13, %17 : vector<128x128xf32>
    %c0_5 = arith.constant 0 : index
    %c0_6 = arith.constant 0 : index
    %19 = vector.load %arg3[%c0_5, %c0_6] : memref<1x128xf32, #tpu.memory_space<vmem>>, vector<1x128xf32>
    %20 = vector.broadcast %19 : vector<1x128xf32> to vector<128x128xf32>
    %21 = arith.mulf %18, %20 : vector<128x128xf32>
    %c0_7 = arith.constant 0 : index
    %c0_8 = arith.constant 0 : index
    %22 = vector.load %arg4[%c0_7, %c0_8] : memref<1x128xf32, #tpu.memory_space<vmem>>, vector<1x128xf32>
    %23 = vector.broadcast %22 : vector<1x128xf32> to vector<128x128xf32>
    %24 = arith.addf %21, %23 : vector<128x128xf32>
    %25 = arith.truncf %24 : vector<128x128xf32> to vector<128x128xbf16>
    %c0_9 = arith.constant 0 : index
    %c0_10 = arith.constant 0 : index
    %26 = vector.load %arg5[%c0_9, %c0_10] : memref<128x256xbf16, #tpu.memory_space<vmem>>, vector<128x256xbf16>
    %cst_11 = arith.constant dense<0.000000e+00> : vector<128x256xf32>
    %27 = tpu.matmul %25, %26, %cst_11 {dimension_numbers = #tpu.dot_dimension_numbers<[1], [0], [0], [1], [0, 0, 1, 1], [], []>} : vector<128x128xbf16>, vector<128x256xbf16>, vector<128x256xf32> -> vector<128x256xf32>
    %c0_12 = arith.constant 0 : index
    %c0_13 = arith.constant 0 : index
    %28 = vector.load %arg6[%c0_12, %c0_13] : memref<1x256xf32, #tpu.memory_space<vmem>>, vector<1x256xf32>
    %29 = vector.broadcast %28 : vector<1x256xf32> to vector<128x256xf32>
    %30 = arith.addf %27, %29 : vector<128x256xf32>
    %31 = arith.truncf %30 : vector<128x256xf32> to vector<128x256xbf16>
    %c0_14 = arith.constant 0 : index
    %c0_15 = arith.constant 0 : index
    %32 = vector.load %arg7[%c0_14, %c0_15] : memref<128x256xbf16, #tpu.memory_space<vmem>>, vector<128x256xbf16>
    tpu.vector_store %arg7[%c0_14, %c0_15], %31 {strides = array<i32>} : memref<128x256xbf16, #tpu.memory_space<vmem>>, vector<128x256xbf16>,
    return
  }
  func.func @transform_0(%arg0: i32, %arg1: i32) -> (i32, i32) {
    %c0_i32 = arith.constant 0 : i32
    %c0_i32_0 = arith.constant 0 : i32
    return %arg0, %c0_i32 : i32, i32
  }
  func.func @transform_1(%arg0: i32, %arg1: i32) -> (i32, i32) {
    %c0_i32 = arith.constant 0 : i32
    %c0_i32_0 = arith.constant 0 : i32
    %c0_i32_1 = arith.constant 0 : i32
    return %c0_i32, %c0_i32_0 : i32, i32
  }
  func.func @transform_2(%arg0: i32, %arg1: i32) -> (i32, i32) {
    %c0_i32 = arith.constant 0 : i32
    %c0_i32_0 = arith.constant 0 : i32
    %c0_i32_1 = arith.constant 0 : i32
    return %c0_i32, %c0_i32_0 : i32, i32
  }
  func.func @transform_3(%arg0: i32, %arg1: i32) -> (i32, i32) {
    %c0_i32 = arith.constant 0 : i32
    %c0_i32_0 = arith.constant 0 : i32
    return %c0_i32, %arg1 : i32, i32
  }
  func.func @transform_4(%arg0: i32, %arg1: i32) -> (i32, i32) {
    %c0_i32 = arith.constant 0 : i32
    %c0_i32_0 = arith.constant 0 : i32
    return %c0_i32, %arg1 : i32, i32
  }
  func.func @transform_5(%arg0: i32, %arg1: i32) -> (i32, i32) {
    %c0_i32 = arith.constant 0 : i32
    return %arg0, %arg1 : i32, i32
  }
}

module attributes {stable_mosaic.version = 11 : i64} {
  func.func @_ln_matmul_kernel(%arg0: i32, %arg1: i32, %arg2: memref<128x128xf32, #tpu.memory_space<vmem>>, %arg3: memref<1x128xf32, #tpu.memory_space<vmem>>, %arg4: memref<1x128xf32, #tpu.memory_space<vmem>>, %arg5: memref<128x256xbf16, #tpu.memory_space<vmem>>, %arg6: memref<1x256xf32, #tpu.memory_space<vmem>>, %arg7: memref<128x256xbf16, #tpu.memory_space<vmem>>) attributes {dimension_semantics = [#tpu.dimension_semantics<parallel>, #tpu.dimension_semantics<parallel>], iteration_bounds = array<i64: 4, 2>, scalar_prefetch = 0 : i64, scratch_operands = 0 : i64, tpu.core_type = #tpu.core_type<tc>, window_params = [{transform_indices = @transform_0, window_bounds = array<i64: 128, 128>}, {pipeline_mode = #tpu.pipeline_mode<synchronous>, transform_indices = @transform_1, window_bounds = array<i64: 1, 128>}, {pipeline_mode = #tpu.pipeline_mode<synchronous>, transform_indices = @transform_2, window_bounds = array<i64: 1, 128>}, {transform_indices = @transform_3, window_bounds = array<i64: 128, 256>}, {transform_indices = @transform_4, window_bounds = array<i64: 1, 256>}, {transform_indices = @transform_5, window_bounds = array<i64: 128, 256>}]} {
    %c0 = arith.constant 0 : index
    %c0_0 = arith.constant 0 : index
    %0 = vector.load %arg2[%c0, %c0_0] : memref<128x128xf32, #tpu.memory_space<vmem>>, vector<128x128xf32>
    %cst = arith.constant dense<0.000000e+00> : vector<128xf32>
    %1 = vector.multi_reduction <add>, %0, %cst [1] : vector<128x128xf32> to vector<128xf32>
    %2 = vector.shape_cast %1 : vector<128xf32> to vector<128x1xf32>
    %cst_1 = arith.constant 1.280000e+02 : f32
    %3 = vector.broadcast %cst_1 : f32 to vector<128x1xf32>
    %4 = arith.divf %2, %3 : vector<128x1xf32>
    %5 = vector.broadcast %4 : vector<128x1xf32> to vector<128x128xf32>
    %6 = arith.subf %0, %5 : vector<128x128xf32>
    %7 = arith.mulf %6, %6 : vector<128x128xf32>
    %cst_2 = arith.constant dense<0.000000e+00> : vector<128xf32>
    %8 = vector.multi_reduction <add>, %7, %cst_2 [1] : vector<128x128xf32> to vector<128xf32>
    %9 = vector.shape_cast %8 : vector<128xf32> to vector<128x1xf32>
    %cst_3 = arith.constant 1.280000e+02 : f32
    %10 = vector.broadcast %cst_3 : f32 to vector<128x1xf32>
    %11 = arith.divf %9, %10 : vector<128x1xf32>
    %12 = vector.broadcast %4 : vector<128x1xf32> to vector<128x128xf32>
    %13 = arith.subf %0, %12 : vector<128x128xf32>
    %cst_4 = arith.constant 9.99999974E-6 : f32
    %14 = vector.broadcast %cst_4 : f32 to vector<128x1xf32>
    %15 = arith.addf %11, %14 : vector<128x1xf32>
    %16 = math.rsqrt %15 : vector<128x1xf32>
    %17 = vector.broadcast %16 : vector<128x1xf32> to vector<128x128xf32>
    %18 = arith.mulf %13, %17 : vector<128x128xf32>
    %c0_5 = arith.constant 0 : index
    %c0_6 = arith.constant 0 : index
    %19 = vector.load %arg3[%c0_5, %c0_6] : memref<1x128xf32, #tpu.memory_space<vmem>>, vector<1x128xf32>
    %20 = vector.broadcast %19 : vector<1x128xf32> to vector<128x128xf32>
    %21 = arith.mulf %18, %20 : vector<128x128xf32>
    %c0_7 = arith.constant 0 : index
    %c0_8 = arith.constant 0 : index
    %22 = vector.load %arg4[%c0_7, %c0_8] : memref<1x128xf32, #tpu.memory_space<vmem>>, vector<1x128xf32>
    %23 = vector.broadcast %22 : vector<1x128xf32> to vector<128x128xf32>
    %24 = arith.addf %21, %23 : vector<128x128xf32>
    %25 = arith.truncf %24 : vector<128x128xf32> to vector<128x128xbf16>
    %c0_9 = arith.constant 0 : index
    %c0_10 = arith.constant 0 : index
    %26 = vector.load %arg5[%c0_9, %c0_10] : memref<128x256xbf16, #tpu.memory_space<vmem>>, vector<128x256xbf16>
    %cst_11 = arith.constant dense<0.000000e+00> : vector<128x256xf32>
    %27 = tpu.matmul %25, %26, %cst_11 {dimension_numbers = #tpu.dot_dimension_numbers<[1], [0], [0], [1], [0, 0, 1, 1], [], []>} : vector<128x128xbf16>, vector<128x256xbf16>, vector<128x256xf32> -> vector<128x256xf32>
    %c0_12 = arith.constant 0 : index
    %c0_13 = arith.constant 0 : index
    %28 = vector.load %arg6[%c0_12, %c0_13] : memref<1x256xf32, #tpu.memory_space<vmem>>, vector<1x256xf32>
    %29 = vector.broadcast %28 : vector<1x256xf32> to vector<128x256xf32>
    %30 = arith.addf %27, %29 : vector<128x256xf32>
    %31 = arith.mulf %30, %30 : vector<128x256xf32>
    %32 = arith.mulf %30, %31 : vector<128x256xf32>
    %cst_14 = arith.constant 4.471500e-02 : f32
    %33 = vector.broadcast %cst_14 : f32 to vector<128x256xf32>
    %34 = arith.mulf %33, %32 : vector<128x256xf32>
    %35 = arith.addf %30, %34 : vector<128x256xf32>
    %cst_15 = arith.constant 0.797884583 : f32
    %36 = vector.broadcast %cst_15 : f32 to vector<128x256xf32>
    %37 = arith.mulf %36, %35 : vector<128x256xf32>
    %38 = math.tanh %37 : vector<128x256xf32>
    %cst_16 = arith.constant 1.000000e+00 : f32
    %39 = vector.broadcast %cst_16 : f32 to vector<128x256xf32>
    %40 = arith.addf %39, %38 : vector<128x256xf32>
    %cst_17 = arith.constant 5.000000e-01 : f32
    %41 = vector.broadcast %cst_17 : f32 to vector<128x256xf32>
    %42 = arith.mulf %41, %40 : vector<128x256xf32>
    %43 = arith.mulf %30, %42 : vector<128x256xf32>
    %44 = arith.truncf %43 : vector<128x256xf32> to vector<128x256xbf16>
    %c0_18 = arith.constant 0 : index
    %c0_19 = arith.constant 0 : index
    %45 = vector.load %arg7[%c0_18, %c0_19] : memref<128x256xbf16, #tpu.memory_space<vmem>>, vector<128x256xbf16>
    tpu.vector_store %arg7[%c0_18, %c0_19], %44 {strides = array<i32>} : memref<128x256xbf16, #tpu.memory_space<vmem>>, vector<128x256xbf16>,
    return
  }
  func.func @transform_0(%arg0: i32, %arg1: i32) -> (i32, i32) {
    %c0_i32 = arith.constant 0 : i32
    %c0_i32_0 = arith.constant 0 : i32
    return %arg0, %c0_i32 : i32, i32
  }
  func.func @transform_1(%arg0: i32, %arg1: i32) -> (i32, i32) {
    %c0_i32 = arith.constant 0 : i32
    %c0_i32_0 = arith.constant 0 : i32
    %c0_i32_1 = arith.constant 0 : i32
    return %c0_i32, %c0_i32_0 : i32, i32
  }
  func.func @transform_2(%arg0: i32, %arg1: i32) -> (i32, i32) {
    %c0_i32 = arith.constant 0 : i32
    %c0_i32_0 = arith.constant 0 : i32
    %c0_i32_1 = arith.constant 0 : i32
    return %c0_i32, %c0_i32_0 : i32, i32
  }
  func.func @transform_3(%arg0: i32, %arg1: i32) -> (i32, i32) {
    %c0_i32 = arith.constant 0 : i32
    %c0_i32_0 = arith.constant 0 : i32
    return %c0_i32, %arg1 : i32, i32
  }
  func.func @transform_4(%arg0: i32, %arg1: i32) -> (i32, i32) {
    %c0_i32 = arith.constant 0 : i32
    %c0_i32_0 = arith.constant 0 : i32
    return %c0_i32, %arg1 : i32, i32
  }
  func.func @transform_5(%arg0: i32, %arg1: i32) -> (i32, i32) {
    %c0_i32 = arith.constant 0 : i32
    return %arg0, %arg1 : i32, i32
  }
}

module attributes {stable_mosaic.version = 11 : i64} {
  func.func @_matmul_res_kernel(%arg0: i32, %arg1: i32, %arg2: i32, %arg3: memref<128x256xbf16, #tpu.memory_space<vmem>>, %arg4: memref<256x128xbf16, #tpu.memory_space<vmem>>, %arg5: memref<1x128xf32, #tpu.memory_space<vmem>>, %arg6: memref<128x128xf32, #tpu.memory_space<vmem>>, %arg7: memref<128x128xf32, #tpu.memory_space<vmem>>, %arg8: memref<128x128xf32, #tpu.memory_space<vmem>>) attributes {dimension_semantics = [#tpu.dimension_semantics<parallel>, #tpu.dimension_semantics<parallel>, #tpu.dimension_semantics<arbitrary>], iteration_bounds = array<i64: 4, 1, 2>, scalar_prefetch = 0 : i64, scratch_operands = 1 : i64, tpu.core_type = #tpu.core_type<tc>, window_params = [{transform_indices = @transform_0, window_bounds = array<i64: 128, 256>}, {transform_indices = @transform_1, window_bounds = array<i64: 256, 128>}, {transform_indices = @transform_2, window_bounds = array<i64: 1, 128>}, {transform_indices = @transform_3, window_bounds = array<i64: 128, 128>}, {transform_indices = @transform_4, window_bounds = array<i64: 128, 128>}]} {
    %c0_i32 = arith.constant 0 : i32
    %0 = arith.cmpi eq, %arg2, %c0_i32 : i32
    %1 = arith.extui %0 : i1 to i32
    %c0_i32_0 = arith.constant 0 : i32
    %2 = arith.cmpi ne, %1, %c0_i32_0 : i32
    scf.if %2 {
      %cst_9 = arith.constant 0.000000e+00 : f32
      %12 = vector.broadcast %cst_9 : f32 to vector<128x128xf32>
      %c0_10 = arith.constant 0 : index
      %c0_11 = arith.constant 0 : index
      %13 = vector.load %arg8[%c0_10, %c0_11] : memref<128x128xf32, #tpu.memory_space<vmem>>, vector<128x128xf32>
      tpu.vector_store %arg8[%c0_10, %c0_11], %12 {strides = array<i32>} : memref<128x128xf32, #tpu.memory_space<vmem>>, vector<128x128xf32>,
    } else {
    }
    %c0 = arith.constant 0 : index
    %c0_1 = arith.constant 0 : index
    %3 = vector.load %arg8[%c0, %c0_1] : memref<128x128xf32, #tpu.memory_space<vmem>>, vector<128x128xf32>
    %c0_2 = arith.constant 0 : index
    %c0_3 = arith.constant 0 : index
    %4 = vector.load %arg3[%c0_2, %c0_3] : memref<128x256xbf16, #tpu.memory_space<vmem>>, vector<128x256xbf16>
    %c0_4 = arith.constant 0 : index
    %c0_5 = arith.constant 0 : index
    %5 = vector.load %arg4[%c0_4, %c0_5] : memref<256x128xbf16, #tpu.memory_space<vmem>>, vector<256x128xbf16>
    %cst = arith.constant dense<0.000000e+00> : vector<128x128xf32>
    %6 = tpu.matmul %4, %5, %cst {dimension_numbers = #tpu.dot_dimension_numbers<[1], [0], [0], [1], [0, 0, 1, 1], [], []>} : vector<128x256xbf16>, vector<256x128xbf16>, vector<128x128xf32> -> vector<128x128xf32>
    %7 = arith.addf %3, %6 : vector<128x128xf32>
    %c0_6 = arith.constant 0 : index
    %c0_7 = arith.constant 0 : index
    %8 = vector.load %arg8[%c0_6, %c0_7] : memref<128x128xf32, #tpu.memory_space<vmem>>, vector<128x128xf32>
    tpu.vector_store %arg8[%c0_6, %c0_7], %7 {strides = array<i32>} : memref<128x128xf32, #tpu.memory_space<vmem>>, vector<128x128xf32>,
    %c1_i32 = arith.constant 1 : i32
    %9 = arith.cmpi eq, %arg2, %c1_i32 : i32
    %10 = arith.extui %9 : i1 to i32
    %c0_i32_8 = arith.constant 0 : i32
    %11 = arith.cmpi ne, %10, %c0_i32_8 : i32
    scf.if %11 {
      %c0_9 = arith.constant 0 : index
      %c0_10 = arith.constant 0 : index
      %12 = vector.load %arg8[%c0_9, %c0_10] : memref<128x128xf32, #tpu.memory_space<vmem>>, vector<128x128xf32>
      %c0_11 = arith.constant 0 : index
      %c0_12 = arith.constant 0 : index
      %13 = vector.load %arg5[%c0_11, %c0_12] : memref<1x128xf32, #tpu.memory_space<vmem>>, vector<1x128xf32>
      %14 = vector.broadcast %13 : vector<1x128xf32> to vector<128x128xf32>
      %15 = arith.addf %12, %14 : vector<128x128xf32>
      %c0_13 = arith.constant 0 : index
      %c0_14 = arith.constant 0 : index
      %16 = vector.load %arg6[%c0_13, %c0_14] : memref<128x128xf32, #tpu.memory_space<vmem>>, vector<128x128xf32>
      %17 = arith.addf %15, %16 : vector<128x128xf32>
      %c0_15 = arith.constant 0 : index
      %c0_16 = arith.constant 0 : index
      %18 = vector.load %arg7[%c0_15, %c0_16] : memref<128x128xf32, #tpu.memory_space<vmem>>, vector<128x128xf32>
      tpu.vector_store %arg7[%c0_15, %c0_16], %17 {strides = array<i32>} : memref<128x128xf32, #tpu.memory_space<vmem>>, vector<128x128xf32>,
    } else {
    }
    return
  }
  func.func @transform_0(%arg0: i32, %arg1: i32, %arg2: i32) -> (i32, i32) {
    %c0_i32 = arith.constant 0 : i32
    return %arg0, %arg2 : i32, i32
  }
  func.func @transform_1(%arg0: i32, %arg1: i32, %arg2: i32) -> (i32, i32) {
    %c0_i32 = arith.constant 0 : i32
    return %arg2, %arg1 : i32, i32
  }
  func.func @transform_2(%arg0: i32, %arg1: i32, %arg2: i32) -> (i32, i32) {
    %c0_i32 = arith.constant 0 : i32
    %c0_i32_0 = arith.constant 0 : i32
    return %c0_i32, %arg1 : i32, i32
  }
  func.func @transform_3(%arg0: i32, %arg1: i32, %arg2: i32) -> (i32, i32) {
    %c0_i32 = arith.constant 0 : i32
    return %arg0, %arg1 : i32, i32
  }
  func.func @transform_4(%arg0: i32, %arg1: i32, %arg2: i32) -> (i32, i32) {
    %c0_i32 = arith.constant 0 : i32
    return %arg0, %arg1 : i32, i32
  }
}

module attributes {stable_mosaic.version = 11 : i64} {
  func.func @_ln_matmul_kernel(%arg0: i32, %arg1: i32, %arg2: memref<128x128xf32, #tpu.memory_space<vmem>>, %arg3: memref<1x128xf32, #tpu.memory_space<vmem>>, %arg4: memref<1x128xf32, #tpu.memory_space<vmem>>, %arg5: memref<128x256xbf16, #tpu.memory_space<vmem>>, %arg6: memref<1x256xf32, #tpu.memory_space<vmem>>, %arg7: memref<128x256xbf16, #tpu.memory_space<vmem>>) attributes {dimension_semantics = [#tpu.dimension_semantics<parallel>, #tpu.dimension_semantics<parallel>], iteration_bounds = array<i64: 4, 3>, scalar_prefetch = 0 : i64, scratch_operands = 0 : i64, tpu.core_type = #tpu.core_type<tc>, window_params = [{transform_indices = @transform_0, window_bounds = array<i64: 128, 128>}, {pipeline_mode = #tpu.pipeline_mode<synchronous>, transform_indices = @transform_1, window_bounds = array<i64: 1, 128>}, {pipeline_mode = #tpu.pipeline_mode<synchronous>, transform_indices = @transform_2, window_bounds = array<i64: 1, 128>}, {transform_indices = @transform_3, window_bounds = array<i64: 128, 256>}, {transform_indices = @transform_4, window_bounds = array<i64: 1, 256>}, {transform_indices = @transform_5, window_bounds = array<i64: 128, 256>}]} {
    %c0 = arith.constant 0 : index
    %c0_0 = arith.constant 0 : index
    %0 = vector.load %arg2[%c0, %c0_0] : memref<128x128xf32, #tpu.memory_space<vmem>>, vector<128x128xf32>
    %cst = arith.constant dense<0.000000e+00> : vector<128xf32>
    %1 = vector.multi_reduction <add>, %0, %cst [1] : vector<128x128xf32> to vector<128xf32>
    %2 = vector.shape_cast %1 : vector<128xf32> to vector<128x1xf32>
    %cst_1 = arith.constant 1.280000e+02 : f32
    %3 = vector.broadcast %cst_1 : f32 to vector<128x1xf32>
    %4 = arith.divf %2, %3 : vector<128x1xf32>
    %5 = vector.broadcast %4 : vector<128x1xf32> to vector<128x128xf32>
    %6 = arith.subf %0, %5 : vector<128x128xf32>
    %7 = arith.mulf %6, %6 : vector<128x128xf32>
    %cst_2 = arith.constant dense<0.000000e+00> : vector<128xf32>
    %8 = vector.multi_reduction <add>, %7, %cst_2 [1] : vector<128x128xf32> to vector<128xf32>
    %9 = vector.shape_cast %8 : vector<128xf32> to vector<128x1xf32>
    %cst_3 = arith.constant 1.280000e+02 : f32
    %10 = vector.broadcast %cst_3 : f32 to vector<128x1xf32>
    %11 = arith.divf %9, %10 : vector<128x1xf32>
    %12 = vector.broadcast %4 : vector<128x1xf32> to vector<128x128xf32>
    %13 = arith.subf %0, %12 : vector<128x128xf32>
    %cst_4 = arith.constant 9.99999974E-6 : f32
    %14 = vector.broadcast %cst_4 : f32 to vector<128x1xf32>
    %15 = arith.addf %11, %14 : vector<128x1xf32>
    %16 = math.rsqrt %15 : vector<128x1xf32>
    %17 = vector.broadcast %16 : vector<128x1xf32> to vector<128x128xf32>
    %18 = arith.mulf %13, %17 : vector<128x128xf32>
    %c0_5 = arith.constant 0 : index
    %c0_6 = arith.constant 0 : index
    %19 = vector.load %arg3[%c0_5, %c0_6] : memref<1x128xf32, #tpu.memory_space<vmem>>, vector<1x128xf32>
    %20 = vector.broadcast %19 : vector<1x128xf32> to vector<128x128xf32>
    %21 = arith.mulf %18, %20 : vector<128x128xf32>
    %c0_7 = arith.constant 0 : index
    %c0_8 = arith.constant 0 : index
    %22 = vector.load %arg4[%c0_7, %c0_8] : memref<1x128xf32, #tpu.memory_space<vmem>>, vector<1x128xf32>
    %23 = vector.broadcast %22 : vector<1x128xf32> to vector<128x128xf32>
    %24 = arith.addf %21, %23 : vector<128x128xf32>
    %25 = arith.truncf %24 : vector<128x128xf32> to vector<128x128xbf16>
    %c0_9 = arith.constant 0 : index
    %c0_10 = arith.constant 0 : index
    %26 = vector.load %arg5[%c0_9, %c0_10] : memref<128x256xbf16, #tpu.memory_space<vmem>>, vector<128x256xbf16>
    %cst_11 = arith.constant dense<0.000000e+00> : vector<128x256xf32>
    %27 = tpu.matmul %25, %26, %cst_11 {dimension_numbers = #tpu.dot_dimension_numbers<[1], [0], [0], [1], [0, 0, 1, 1], [], []>} : vector<128x128xbf16>, vector<128x256xbf16>, vector<128x256xf32> -> vector<128x256xf32>
    %c0_12 = arith.constant 0 : index
    %c0_13 = arith.constant 0 : index
    %28 = vector.load %arg6[%c0_12, %c0_13] : memref<1x256xf32, #tpu.memory_space<vmem>>, vector<1x256xf32>
    %29 = vector.broadcast %28 : vector<1x256xf32> to vector<128x256xf32>
    %30 = arith.addf %27, %29 : vector<128x256xf32>
    %31 = arith.truncf %30 : vector<128x256xf32> to vector<128x256xbf16>
    %c0_14 = arith.constant 0 : index
    %c0_15 = arith.constant 0 : index
    %32 = vector.load %arg7[%c0_14, %c0_15] : memref<128x256xbf16, #tpu.memory_space<vmem>>, vector<128x256xbf16>
    tpu.vector_store %arg7[%c0_14, %c0_15], %31 {strides = array<i32>} : memref<128x256xbf16, #tpu.memory_space<vmem>>, vector<128x256xbf16>,
    return
  }
  func.func @transform_0(%arg0: i32, %arg1: i32) -> (i32, i32) {
    %c0_i32 = arith.constant 0 : i32
    %c0_i32_0 = arith.constant 0 : i32
    return %arg0, %c0_i32 : i32, i32
  }
  func.func @transform_1(%arg0: i32, %arg1: i32) -> (i32, i32) {
    %c0_i32 = arith.constant 0 : i32
    %c0_i32_0 = arith.constant 0 : i32
    %c0_i32_1 = arith.constant 0 : i32
    return %c0_i32, %c0_i32_0 : i32, i32
  }
  func.func @transform_2(%arg0: i32, %arg1: i32) -> (i32, i32) {
    %c0_i32 = arith.constant 0 : i32
    %c0_i32_0 = arith.constant 0 : i32
    %c0_i32_1 = arith.constant 0 : i32
    return %c0_i32, %c0_i32_0 : i32, i32
  }
  func.func @transform_3(%arg0: i32, %arg1: i32) -> (i32, i32) {
    %c0_i32 = arith.constant 0 : i32
    %c0_i32_0 = arith.constant 0 : i32
    return %c0_i32, %arg1 : i32, i32
  }
  func.func @transform_4(%arg0: i32, %arg1: i32) -> (i32, i32) {
    %c0_i32 = arith.constant 0 : i32
    %c0_i32_0 = arith.constant 0 : i32
    return %c0_i32, %arg1 : i32, i32
  }
  func.func @transform_5(%arg0: i32, %arg1: i32) -> (i32, i32) {
    %c0_i32 = arith.constant 0 : i32
    return %arg0, %arg1 : i32, i32
  }
}

module attributes {stable_mosaic.version = 11 : i64} {
  func.func @_layernorm_kernel(%arg0: i32, %arg1: memref<128x128xf32, #tpu.memory_space<vmem>>, %arg2: memref<1x128xf32, #tpu.memory_space<vmem>>, %arg3: memref<1x128xf32, #tpu.memory_space<vmem>>, %arg4: memref<128x128xf32, #tpu.memory_space<vmem>>) attributes {dimension_semantics = [#tpu.dimension_semantics<parallel>], iteration_bounds = array<i64: 4>, scalar_prefetch = 0 : i64, scratch_operands = 0 : i64, tpu.core_type = #tpu.core_type<tc>, window_params = [{transform_indices = @transform_0, window_bounds = array<i64: 128, 128>}, {pipeline_mode = #tpu.pipeline_mode<synchronous>, transform_indices = @transform_1, window_bounds = array<i64: 1, 128>}, {pipeline_mode = #tpu.pipeline_mode<synchronous>, transform_indices = @transform_2, window_bounds = array<i64: 1, 128>}, {transform_indices = @transform_3, window_bounds = array<i64: 128, 128>}]} {
    %c0 = arith.constant 0 : index
    %c0_0 = arith.constant 0 : index
    %0 = vector.load %arg1[%c0, %c0_0] : memref<128x128xf32, #tpu.memory_space<vmem>>, vector<128x128xf32>
    %cst = arith.constant dense<0.000000e+00> : vector<128xf32>
    %1 = vector.multi_reduction <add>, %0, %cst [1] : vector<128x128xf32> to vector<128xf32>
    %2 = vector.shape_cast %1 : vector<128xf32> to vector<128x1xf32>
    %cst_1 = arith.constant 1.280000e+02 : f32
    %3 = vector.broadcast %cst_1 : f32 to vector<128x1xf32>
    %4 = arith.divf %2, %3 : vector<128x1xf32>
    %5 = vector.broadcast %4 : vector<128x1xf32> to vector<128x128xf32>
    %6 = arith.subf %0, %5 : vector<128x128xf32>
    %7 = arith.mulf %6, %6 : vector<128x128xf32>
    %cst_2 = arith.constant dense<0.000000e+00> : vector<128xf32>
    %8 = vector.multi_reduction <add>, %7, %cst_2 [1] : vector<128x128xf32> to vector<128xf32>
    %9 = vector.shape_cast %8 : vector<128xf32> to vector<128x1xf32>
    %cst_3 = arith.constant 1.280000e+02 : f32
    %10 = vector.broadcast %cst_3 : f32 to vector<128x1xf32>
    %11 = arith.divf %9, %10 : vector<128x1xf32>
    %12 = vector.broadcast %4 : vector<128x1xf32> to vector<128x128xf32>
    %13 = arith.subf %0, %12 : vector<128x128xf32>
    %cst_4 = arith.constant 9.99999974E-6 : f32
    %14 = vector.broadcast %cst_4 : f32 to vector<128x1xf32>
    %15 = arith.addf %11, %14 : vector<128x1xf32>
    %16 = math.rsqrt %15 : vector<128x1xf32>
    %17 = vector.broadcast %16 : vector<128x1xf32> to vector<128x128xf32>
    %18 = arith.mulf %13, %17 : vector<128x128xf32>
    %c0_5 = arith.constant 0 : index
    %c0_6 = arith.constant 0 : index
    %19 = vector.load %arg2[%c0_5, %c0_6] : memref<1x128xf32, #tpu.memory_space<vmem>>, vector<1x128xf32>
    %20 = vector.broadcast %19 : vector<1x128xf32> to vector<128x128xf32>
    %21 = arith.mulf %18, %20 : vector<128x128xf32>
    %c0_7 = arith.constant 0 : index
    %c0_8 = arith.constant 0 : index
    %22 = vector.load %arg3[%c0_7, %c0_8] : memref<1x128xf32, #tpu.memory_space<vmem>>, vector<1x128xf32>
    %23 = vector.broadcast %22 : vector<1x128xf32> to vector<128x128xf32>
    %24 = arith.addf %21, %23 : vector<128x128xf32>
    %c0_9 = arith.constant 0 : index
    %c0_10 = arith.constant 0 : index
    %25 = vector.load %arg4[%c0_9, %c0_10] : memref<128x128xf32, #tpu.memory_space<vmem>>, vector<128x128xf32>
    tpu.vector_store %arg4[%c0_9, %c0_10], %24 {strides = array<i32>} : memref<128x128xf32, #tpu.memory_space<vmem>>, vector<128x128xf32>,
    return
  }
  func.func @transform_0(%arg0: i32) -> (i32, i32) {
    %c0_i32 = arith.constant 0 : i32
    %c0_i32_0 = arith.constant 0 : i32
    return %arg0, %c0_i32 : i32, i32
  }
  func.func @transform_1(%arg0: i32) -> (i32, i32) {
    %c0_i32 = arith.constant 0 : i32
    %c0_i32_0 = arith.constant 0 : i32
    %c0_i32_1 = arith.constant 0 : i32
    return %c0_i32, %c0_i32_0 : i32, i32
  }
  func.func @transform_2(%arg0: i32) -> (i32, i32) {
    %c0_i32 = arith.constant 0 : i32
    %c0_i32_0 = arith.constant 0 : i32
    %c0_i32_1 = arith.constant 0 : i32
    return %c0_i32, %c0_i32_0 : i32, i32
  }
  func.func @transform_3(%arg0: i32) -> (i32, i32) {
    %c0_i32 = arith.constant 0 : i32
    %c0_i32_0 = arith.constant 0 : i32
    return %arg0, %c0_i32 : i32, i32
  }
}

</mosaic_0001>

<llo_original>
// kernel: vision_encoder_forward.13
$region0: #{vision_encoder_forward.13}
  #allocation0 [shape = 'u32[]', space=smem, size = 0x4, offset = 0x4, fixed_abs, tag = 'smem constant byte address 0x4 - core index']
  #allocation1 [shape = 'u32[144,128]{1,0:T(1,128)}', space=vmem, size = 0x12000, scoped, tag = 'internal scratch']
  #allocation2 [shape = 'f32[128,128]{1,0:T(8,128)}', space=vmem, size = 0x10000, scoped, tag = 'scratch operand']
  %s0 = inlined_call_operand.vmem [shape: bf16[512,256], index: 0, kind: input, shape index: {}]
  %s1 = inlined_call_operand.vmem [shape: bf16[256,128], index: 1, kind: input, shape index: {}]
  %s2 = inlined_call_operand.vmem [shape: f32[1,128], index: 2, kind: input, shape index: {}]
  %s3 = inlined_call_operand.vmem [shape: f32[512,128], index: 3, kind: input, shape index: {}]
  %s4 = inlined_call_operand.vmem [shape: f32[512,128], index: 4, kind: output, shape index: {}]
  %s5 = sld [smem:[#allocation0]]
  $region57: #{vision_encoder_forward.13} parent=0
    _
  %s7 = ssub.s32 1, %s5
  %s8 = scalar_select 0, %s7, %s5
  loop: start=0, step=1, limit=6
  $region2: #{vision_encoder_forward.13} parent=0 // loop_pre_header
    _
  $region3: #{vision_encoder_forward.13} parent=0 // loop_header
    %s10 = sphi 0, %s14
    %p11 = scmp.ge.s32.totalorder %s10, 6
    %s17 = sphi 0, %s36
    %s18 = sphi 0, %s32
    %s19 = sphi 0, %s28
    %s20 = sphi 0, %s17
    %s21 = sphi 0, %s18
    %s22 = sphi 0, %s19
    %s23 = sphi 0, %s20
    %s24 = sphi 0, %s21
    %s25 = sphi 0, %s22
    %s41 = sphi 0, %s43
    %s44 = sphi 0, %s41
    %s45 = sphi 0, %s44
    %s61 = sphi 0, %s45
    %s69 = sphi 0, %s71
    %s72 = sphi 0, %s69
    %s73 = sphi 0, %s72
    %s89 = sphi 0, %s73
    %s95 = sphi 0, %s97
    %s98 = sphi 0, %s95
    %s99 = sphi 0, %s98
    %s115 = sphi 0, %s99
    %s123 = sphi 0, %s125
    %s126 = sphi 0, %s123
    %s127 = sphi 0, %s126
    %s143 = sphi 0, %s127
    %s151 = sphi 0, %s153
    %s154 = sphi 0, %s151
    %s155 = sphi 0, %s154
    %s171 = sphi 0, %s155
  $region4: #{vision_encoder_forward.13} parent=0 // loop_header_branch
    %13 = sbr.rel (%p11) target = $region8
  $region5: #{vision_encoder_forward.13} parent=0 // loop_body
    %s15 = ssub.s32 %s10, 1
    %s16 = ssub.s32 %s10, 2
    %s26 = sadd.s32 1, %s19
    %p27 = scmp.ge.s32.totalorder %s26, 1
    %s28 = scalar_select %p27, 0, %s26
    %s29 = sadd.s32 1, %s18
    %s30 = scalar_select %p27, %s29, %s18
    %p31 = scmp.ge.s32.totalorder %s30, 1
    %s32 = scalar_select %p31, 0, %s30
    %s33 = sadd.s32 1, %s17
    %s34 = scalar_select %p31, %s33, %s17
    %p35 = scmp.ge.s32.totalorder %s34, 4
    %s36 = scalar_select %p35, 0, %s34
    %s37 = ssub.s32 %s17, %s36
    %s38 = ssub.s32 %s19, %s28
    %s39 = sor.u32 %s37, %s38
    %p40 = scmp.eq.s32.totalorder %s39, 0
    %s42 = sadd.s32 %s41, 1
    %s43 = scalar_select %p40, %s41, %s42
    %p46 = pneg %p40
    %p47 = scmp.eq.s32.totalorder %s10, 3
    %p48 = por %p46, %p47
    %p49 = scmp.ne.s32.totalorder %s41, %s44
    %p50 = scmp.eq.s32.totalorder %s10, 0
    %p51 = por %p49, %p50
    %p52 = scmp.ne.s32.totalorder %s41, %s44
    %p53 = scmp.eq.s32.totalorder %s15, 3
    %p54 = por %p52, %p53
    %p55 = scmp.ne.s32.totalorder %s44, %s45
    %p56 = scmp.eq.s32.totalorder %s15, 0
    %p57 = por %p55, %p56
    %p58 = scmp.ne.s32.totalorder %s44, %s45
    %p59 = scmp.eq.s32.totalorder %s16, 3
    %p60 = por %p58, %p59
    %p62 = scmp.ne.s32.totalorder %s45, %s61
    %p63 = scmp.eq.s32.totalorder %s16, 0
    %p64 = por %p62, %p63
    %s65 = ssub.s32 %s19, %s28
    %s66 = ssub.s32 %s18, %s32
    %s67 = sor.u32 %s65, %s66
    %p68 = scmp.eq.s32.totalorder %s67, 0
    %s70 = sadd.s32 %s69, 1
    %s71 = scalar_select %p68, %s69, %s70
    %p74 = pneg %p68
    %p75 = scmp.eq.s32.totalorder %s10, 3
    %p76 = por %p74, %p75
    %p77 = scmp.ne.s32.totalorder %s69, %s72
    %p78 = scmp.eq.s32.totalorder %s10, 0
    %p79 = por %p77, %p78
    %p80 = scmp.ne.s32.totalorder %s69, %s72
    %p81 = scmp.eq.s32.totalorder %s15, 3
    %p82 = por %p80, %p81
    %p83 = scmp.ne.s32.totalorder %s72, %s73
    %p84 = scmp.eq.s32.totalorder %s15, 0
    %p85 = por %p83, %p84
    %p86 = scmp.ne.s32.totalorder %s72, %s73
    %p87 = scmp.eq.s32.totalorder %s16, 3
    %p88 = por %p86, %p87
    %p90 = scmp.ne.s32.totalorder %s73, %s89
    %p91 = scmp.eq.s32.totalorder %s16, 0
    %p92 = por %p90, %p91
    %s93 = ssub.s32 %s18, %s32
    %p94 = scmp.eq.s32.totalorder %s93, 0
    %s96 = sadd.s32 %s95, 1
    %s97 = scalar_select %p94, %s95, %s96
    %p100 = pneg %p94
    %p101 = scmp.eq.s32.totalorder %s10, 3
    %p102 = por %p100, %p101
    %p103 = scmp.ne.s32.totalorder %s95, %s98
    %p104 = scmp.eq.s32.totalorder %s10, 0
    %p105 = por %p103, %p104
    %p106 = scmp.ne.s32.totalorder %s95, %s98
    %p107 = scmp.eq.s32.totalorder %s15, 3
    %p108 = por %p106, %p107
    %p109 = scmp.ne.s32.totalorder %s98, %s99
    %p110 = scmp.eq.s32.totalorder %s15, 0
    %p111 = por %p109, %p110
    %p112 = scmp.ne.s32.totalorder %s98, %s99
    %p113 = scmp.eq.s32.totalorder %s16, 3
    %p114 = por %p112, %p113
    %p116 = scmp.ne.s32.totalorder %s99, %s115
    %p117 = scmp.eq.s32.totalorder %s16, 0
    %p118 = por %p116, %p117
    %s119 = ssub.s32 %s17, %s36
    %s120 = ssub.s32 %s18, %s32
    %s121 = sor.u32 %s119, %s120
    %p122 = scmp.eq.s32.totalorder %s121, 0
    %s124 = sadd.s32 %s123, 1
    %s125 = scalar_select %p122, %s123, %s124
    %p128 = pneg %p122
    %p129 = scmp.eq.s32.totalorder %s10, 3
    %p130 = por %p128, %p129
    %p131 = scmp.ne.s32.totalorder %s123, %s126
    %p132 = scmp.eq.s32.totalorder %s10, 0
    %p133 = por %p131, %p132
    %p134 = scmp.ne.s32.totalorder %s123, %s126
    %p135 = scmp.eq.s32.totalorder %s15, 3
    %p136 = por %p134, %p135
    %p137 = scmp.ne.s32.totalorder %s126, %s127
    %p138 = scmp.eq.s32.totalorder %s15, 0
    %p139 = por %p137, %p138
    %p140 = scmp.ne.s32.totalorder %s126, %s127
    %p141 = scmp.eq.s32.totalorder %s16, 3
    %p142 = por %p140, %p141
    %p144 = scmp.ne.s32.totalorder %s127, %s143
    %p145 = scmp.eq.s32.totalorder %s16, 0
    %p146 = por %p144, %p145
    %s147 = ssub.s32 %s17, %s36
    %s148 = ssub.s32 %s18, %s32
    %s149 = sor.u32 %s147, %s148
    %p150 = scmp.eq.s32.totalorder %s149, 0
    %s152 = sadd.s32 %s151, 1
    %s153 = scalar_select %p150, %s151, %s152
    %p156 = pneg %p150
    %p157 = scmp.eq.s32.totalorder %s10, 3
    %p158 = por %p156, %p157
    %p159 = scmp.ne.s32.totalorder %s151, %s154
    %p160 = scmp.eq.s32.totalorder %s10, 0
    %p161 = por %p159, %p160
    %p162 = scmp.ne.s32.totalorder %s151, %s154
    %p163 = scmp.eq.s32.totalorder %s15, 3
    %p164 = por %p162, %p163
    %p165 = scmp.ne.s32.totalorder %s154, %s155
    %p166 = scmp.eq.s32.totalorder %s15, 0
    %p167 = por %p165, %p166
    %p168 = scmp.ne.s32.totalorder %s154, %s155
    %p169 = scmp.eq.s32.totalorder %s16, 3
    %p170 = por %p168, %p169
    %p172 = scmp.ne.s32.totalorder %s155, %s171
    %p173 = scmp.eq.s32.totalorder %s16, 0
    %p174 = por %p172, %p173
    %p175 = scmp.le.s32.totalorder 1, %s10
    %p176 = scmp.lt.s32.totalorder %s10, 5
    %p177 = pnand %p175, %p176
    %p178 = pneg %p177
    // Predicated region
    $region9: #{vision_encoder_forward.13} parent=5 // pred_check
      _
    $region10: #{vision_encoder_forward.13} parent=5 // pred_check_branch
      %180 = sbr.rel (%p177) target = $region12
    $region11: #{vision_encoder_forward.13} parent=5 // pred_region
      %s181 = ssub.s32 %s10, 1
      // Predicated region
      $region13: #{vision_encoder_forward.13} parent=11 // pred_check
        %p182 = pneg %p85
      $region14: #{vision_encoder_forward.13} parent=11 // pred_check_branch
        %184 = sbr.rel (%p182) target = $region16
      $region15: #{vision_encoder_forward.13} parent=11 // pred_region
        %s185 = smul.u32 32, %s22
        %p186 = scmp.lt.s32.totalorder %s185, 31
        %s187 = scalar_select %p186, %s185, 31
        %p188 = scmp.lt.s32.totalorder %s21, 0
        %s189 = scalar_select %p188, %s21, 0
        %s190 = sadd.s32 %s189, %s187
        %s191 = smul.addr %s190, 4
        %s192 = scalar_lea.vmem %s1, %s191
        %s193 = smul.u32 32, %s22
      $region16: #{vision_encoder_forward.13} parent=11 // pred_fallthru
        _
      // Predicated region
      $region17: #{vision_encoder_forward.13} parent=11 // pred_check
        %p194 = pneg %p111
      $region18: #{vision_encoder_forward.13} parent=11 // pred_check_branch
        %196 = sbr.rel (%p194) target = $region20
      $region19: #{vision_encoder_forward.13} parent=11 // pred_region
        %p197 = scmp.lt.s32.totalorder %s21, 0
        %s198 = scalar_select %p197, %s21, 0
        %s199 = scalar_lea.vmem %s2, %s198
      $region20: #{vision_encoder_forward.13} parent=11 // pred_fallthru
        _
    $region12: #{vision_encoder_forward.13} parent=5 // pred_fallthru
      _
    %p200 = scmp.lt.s32.totalorder %s10, 4
    // Predicated region
    $region21: #{vision_encoder_forward.13} parent=5 // pred_check
      %p201 = pneg %p200
    $region22: #{vision_encoder_forward.13} parent=5 // pred_check_branch
      %203 = sbr.rel (%p201) target = $region24
    $region23: #{vision_encoder_forward.13} parent=5 // pred_region
      // Predicated region
      $region25: #{vision_encoder_forward.13} parent=23 // pred_check
        %p204 = pneg %p51
      $region26: #{vision_encoder_forward.13} parent=23 // pred_check_branch
        %206 = sbr.rel (%p204) target = $region28
      $region27: #{vision_encoder_forward.13} parent=23 // pred_region
        %s207 = smul.u32 16, %s17
        %s208 = smul.u32 2, %s19
        %p209 = scmp.lt.s32.totalorder %s207, 63
        %s210 = scalar_select %p209, %s207, 63
        %p211 = scmp.lt.s32.totalorder %s208, 1
        %s212 = scalar_select %p211, %s208, 1
        %s213 = smul.addr %s210, 2
        %s214 = sadd.s32 %s212, %s213
        %s215 = smul.addr %s214, 4
        %s216 = scalar_lea.vmem %s0, %s215
        %s217 = smul.u32 16, %s17
        %s218 = smul.u32 2, %s19
      $region28: #{vision_encoder_forward.13} parent=23 // pred_fallthru
        _
      // Predicated region
      $region29: #{vision_encoder_forward.13} parent=23 // pred_check
        %p219 = pneg %p133
      $region30: #{vision_encoder_forward.13} parent=23 // pred_check_branch
        %221 = sbr.rel (%p219) target = $region32
      $region31: #{vision_encoder_forward.13} parent=23 // pred_region
        %s222 = smul.u32 16, %s17
        %p223 = scmp.lt.s32.totalorder %s222, 63
        %s224 = scalar_select %p223, %s222, 63
        %p225 = scmp.lt.s32.totalorder %s18, 0
        %s226 = scalar_select %p225, %s18, 0
        %s227 = sadd.s32 %s226, %s224
        %s228 = smul.addr %s227, 8
        %s229 = scalar_lea.vmem %s3, %s228
        %s230 = smul.u32 16, %s17
      $region32: #{vision_encoder_forward.13} parent=23 // pred_fallthru
        _
    $region24: #{vision_encoder_forward.13} parent=5 // pred_fallthru
      _
    %p231 = scmp.le.s32.totalorder 1, %s10
    %p232 = scmp.lt.s32.totalorder %s10, 5
    %p233 = pnand %p231, %p232
    %p234 = pneg %p233
    // Predicated region
    $region33: #{vision_encoder_forward.13} parent=5 // pred_check
      _
    $region34: #{vision_encoder_forward.13} parent=5 // pred_check_branch
      %236 = sbr.rel (%p233) target = $region36
    $region35: #{vision_encoder_forward.13} parent=5 // pred_region
      %s237 = ssub.s32 %s10, 1
      %s238 = smul.u32 16, %s20
      %s239 = smul.u32 2, %s22
      %p240 = scmp.lt.s32.totalorder %s238, 63
      %s241 = scalar_select %p240, %s238, 63
      %p242 = scmp.lt.s32.totalorder %s239, 1
      %s243 = scalar_select %p242, %s239, 1
      %s244 = smul.addr %s241, 2
      %s245 = sadd.s32 %s243, %s244
      %s246 = smul.addr %s245, 4
      %s247 = scalar_lea.vmem %s0, %s246
      %p248 = pneg %p57
      %p249 = pneg %p54
      %s250 = smul.u32 32, %s22
      %p251 = scmp.lt.s32.totalorder %s250, 31
      %s252 = scalar_select %p251, %s250, 31
      %p253 = scmp.lt.s32.totalorder %s21, 0
      %s254 = scalar_select %p253, %s21, 0
      %s255 = sadd.s32 %s254, %s252
      %s256 = smul.addr %s255, 4
      %s257 = scalar_lea.vmem %s1, %s256
      %p258 = pneg %p85
      %p259 = pneg %p82
      %p260 = scmp.lt.s32.totalorder %s21, 0
      %s261 = scalar_select %p260, %s21, 0
      %s262 = scalar_lea.vmem %s2, %s261
      %p263 = pneg %p111
      %p264 = pneg %p108
      %s265 = smul.u32 16, %s20
      %p266 = scmp.lt.s32.totalorder %s265, 63
      %s267 = scalar_select %p266, %s265, 63
      %p268 = scmp.lt.s32.totalorder %s21, 0
      %s269 = scalar_select %p268, %s21, 0
      %s270 = sadd.s32 %s269, %s267
      %s271 = smul.addr %s270, 8
      %s272 = scalar_lea.vmem %s3, %s271
      %p273 = pneg %p139
      %p274 = pneg %p136
      %p275 = pneg %p167
      %p276 = pneg %p164
      %s277 = smul.u32 16, %s20
      %p278 = scmp.lt.s32.totalorder %s277, 63
      %s279 = scalar_select %p278, %s277, 63
      %p280 = scmp.lt.s32.totalorder %s21, 0
      %s281 = scalar_select %p280, %s21, 0
      %s282 = sadd.s32 %s281, %s279
      %s283 = smul.addr %s282, 8
      %s284 = scalar_lea.vmem %s4, %s283
      %s285 = smul.u32 16, %s20
      %s286 = smul.u32 2, %s22
      %p287 = scmp.lt.s32.totalorder %s285, 63
      %s288 = scalar_select %p287, %s285, 63
      %p289 = scmp.lt.s32.totalorder %s286, 1
      %s290 = scalar_select %p289, %s286, 1
      %s291 = smul.addr %s288, 2
      %s292 = sadd.s32 %s290, %s291
      %s293 = smul.addr %s292, 4
      %s294 = scalar_lea.vmem %s0, %s293
      %s295 = smul.u32 16, %s20
      %s296 = smul.u32 2, %s22
      %s297 = smul.u32 32, %s22
      %p298 = scmp.lt.s32.totalorder %s297, 31
      %s299 = scalar_select %p298, %s297, 31
      %p300 = scmp.lt.s32.totalorder %s21, 0
      %s301 = scalar_select %p300, %s21, 0
      %s302 = sadd.s32 %s301, %s299
      %s303 = smul.addr %s302, 4
      %s304 = scalar_lea.vmem %s1, %s303
      %s305 = smul.u32 32, %s22
      %p306 = scmp.lt.s32.totalorder %s21, 0
      %s307 = scalar_select %p306, %s21, 0
      %s308 = scalar_lea.vmem %s2, %s307
      %s309 = smul.u32 16, %s20
      %p310 = scmp.lt.s32.totalorder %s309, 63
      %s311 = scalar_select %p310, %s309, 63
      %p312 = scmp.lt.s32.totalorder %s21, 0
      %s313 = scalar_select %p312, %s21, 0
      %s314 = sadd.s32 %s313, %s311
      %s315 = smul.addr %s314, 8
      %s316 = scalar_lea.vmem %s3, %s315
      %s317 = smul.u32 16, %s20
      %s318 = smul.u32 16, %s20
      %p319 = scmp.lt.s32.totalorder %s318, 63
      %s320 = scalar_select %p319, %s318, 63
      %p321 = scmp.lt.s32.totalorder %s21, 0
      %s322 = scalar_select %p321, %s21, 0
      %s323 = sadd.s32 %s322, %s320
      %s324 = smul.addr %s323, 8
      %s325 = scalar_lea.vmem %s4, %s324
      %s326 = smul.u32 16, %s20
      %p328 = scmp.eq.s32.totalorder %s22, 0
      // Predicated region
      $region37: #{vision_encoder_forward.13} parent=35 // pred_check
        %p329 = pneg %p328
      $region38: #{vision_encoder_forward.13} parent=35 // pred_check_branch
        %331 = sbr.rel (%p329) target = $region40
      $region39: #{vision_encoder_forward.13} parent=35 // pred_region
        %332 = vst [vmem:[#allocation2] sm:$0xff] 0.0
        %333 = vst [vmem:[#allocation2 + $0x8] sm:$0xff] 0.0
        %334 = vst [vmem:[#allocation2 + $0x10] sm:$0xff] 0.0
        %335 = vst [vmem:[#allocation2 + $0x18] sm:$0xff] 0.0
        %336 = vst [vmem:[#allocation2 + $0x20] sm:$0xff] 0.0
        %337 = vst [vmem:[#allocation2 + $0x28] sm:$0xff] 0.0
        %338 = vst [vmem:[#allocation2 + $0x30] sm:$0xff] 0.0
        %339 = vst [vmem:[#allocation2 + $0x38] sm:$0xff] 0.0
        %340 = vst [vmem:[#allocation2 + $0x40] sm:$0xff] 0.0
        %341 = vst [vmem:[#allocation2 + $0x48] sm:$0xff] 0.0
        %342 = vst [vmem:[#allocation2 + $0x50] sm:$0xff] 0.0
        %343 = vst [vmem:[#allocation2 + $0x58] sm:$0xff] 0.0
        %344 = vst [vmem:[#allocation2 + $0x60] sm:$0xff] 0.0
        %345 = vst [vmem:[#allocation2 + $0x68] sm:$0xff] 0.0
        %346 = vst [vmem:[#allocation2 + $0x70] sm:$0xff] 0.0
        %347 = vst [vmem:[#allocation2 + $0x78] sm:$0xff] 0.0
      $region40: #{vision_encoder_forward.13} parent=35 // pred_fallthru
        _
      %v348 = vld [vmem:[#allocation2] sm:$0xff]
      %v349 = vld [vmem:[#allocation2 + $0x8] sm:$0xff]
      %v350 = vld [vmem:[#allocation2 + $0x10] sm:$0xff]
      %v351 = vld [vmem:[#allocation2 + $0x18] sm:$0xff]
      %v352 = vld [vmem:[#allocation2 + $0x20] sm:$0xff]
      %v353 = vld [vmem:[#allocation2 + $0x28] sm:$0xff]
      %v354 = vld [vmem:[#allocation2 + $0x30] sm:$0xff]
      %v355 = vld [vmem:[#allocation2 + $0x38] sm:$0xff]
      %v356 = vld [vmem:[#allocation2 + $0x40] sm:$0xff]
      %v357 = vld [vmem:[#allocation2 + $0x48] sm:$0xff]
      %v358 = vld [vmem:[#allocation2 + $0x50] sm:$0xff]
      %v359 = vld [vmem:[#allocation2 + $0x58] sm:$0xff]
      %v360 = vld [vmem:[#allocation2 + $0x60] sm:$0xff]
      %v361 = vld [vmem:[#allocation2 + $0x68] sm:$0xff]
      %v362 = vld [vmem:[#allocation2 + $0x70] sm:$0xff]
      %v363 = vld [vmem:[#allocation2 + $0x78] sm:$0xff]
      %v364 = vld [vmem:[%s294] sm:$0xff]
      %v365 = vld [vmem:[%s294 + $0x8] sm:$0xff]
      %v366 = vld [vmem:[%s294 + $0x10] sm:$0xff]
      %v367 = vld [vmem:[%s294 + $0x18] sm:$0xff]
      %v368 = vld [vmem:[%s294 + $0x20] sm:$0xff]
      %v369 = vld [vmem:[%s294 + $0x28] sm:$0xff]
      %v370 = vld [vmem:[%s294 + $0x30] sm:$0xff]
      %v371 = vld [vmem:[%s294 + $0x38] sm:$0xff]
      %v372 = vld [vmem:[%s294 + $0x40] sm:$0xff]
      %v373 = vld [vmem:[%s294 + $0x48] sm:$0xff]
      %v374 = vld [vmem:[%s294 + $0x50] sm:$0xff]
      %v375 = vld [vmem:[%s294 + $0x58] sm:$0xff]
      %v376 = vld [vmem:[%s294 + $0x60] sm:$0xff]
      %v377 = vld [vmem:[%s294 + $0x68] sm:$0xff]
      %v378 = vld [vmem:[%s294 + $0x70] sm:$0xff]
      %v379 = vld [vmem:[%s294 + $0x78] sm:$0xff]
      %v380 = vld [vmem:[%s304] sm:$0xf]
      %v381 = vld [vmem:[%s304 + $0x4] sm:$0xf]
      %v382 = vld [vmem:[%s304 + $0x8] sm:$0xf]
      %v383 = vld [vmem:[%s304 + $0xc] sm:$0xf]
      %v384 = vld [vmem:[%s304 + $0x10] sm:$0xf]
      %v385 = vld [vmem:[%s304 + $0x14] sm:$0xf]
      %v386 = vld [vmem:[%s304 + $0x18] sm:$0xf]
      %v387 = vld [vmem:[%s304 + $0x1c] sm:$0xf]
      %v388 = vld [vmem:[%s304 + $0x20] sm:$0xf]
      %v389 = vld [vmem:[%s304 + $0x24] sm:$0xf]
      %v390 = vld [vmem:[%s304 + $0x28] sm:$0xf]
      %v391 = vld [vmem:[%s304 + $0x2c] sm:$0xf]
      %v392 = vld [vmem:[%s304 + $0x30] sm:$0xf]
      %v393 = vld [vmem:[%s304 + $0x34] sm:$0xf]
      %v394 = vld [vmem:[%s304 + $0x38] sm:$0xf]
      %v395 = vld [vmem:[%s304 + $0x3c] sm:$0xf]
      %v396 = vld [vmem:[%s304 + $0x40] sm:$0xf]
      %v397 = vld [vmem:[%s304 + $0x44] sm:$0xf]
      %v398 = vld [vmem:[%s304 + $0x48] sm:$0xf]
      %v399 = vld [vmem:[%s304 + $0x4c] sm:$0xf]
      %v400 = vld [vmem:[%s304 + $0x50] sm:$0xf]
      %v401 = vld [vmem:[%s304 + $0x54] sm:$0xf]
      %v402 = vld [vmem:[%s304 + $0x58] sm:$0xf]
      %v403 = vld [vmem:[%s304 + $0x5c] sm:$0xf]
      %v404 = vld [vmem:[%s304 + $0x60] sm:$0xf]
      %v405 = vld [vmem:[%s304 + $0x64] sm:$0xf]
      %v406 = vld [vmem:[%s304 + $0x68] sm:$0xf]
      %v407 = vld [vmem:[%s304 + $0x6c] sm:$0xf]
      %v408 = vld [vmem:[%s304 + $0x70] sm:$0xf]
      %v409 = vld [vmem:[%s304 + $0x74] sm:$0xf]
      %v410 = vld [vmem:[%s304 + $0x78] sm:$0xf]
      %v411 = vld [vmem:[%s304 + $0x7c] sm:$0xf]
      %v428 = vunpack.c.l.b16 %v364
      %v429 = vunpack.c.h.b16 %v364
      %v430 = vunpack.c.l.b16 %v365
      %v431 = vunpack.c.h.b16 %v365
      %v432 = vunpack.c.l.b16 %v366
      %v433 = vunpack.c.h.b16 %v366
      %v434 = vunpack.c.l.b16 %v367
      %v435 = vunpack.c.h.b16 %v367
      %v436 = vunpack.c.l.b16 %v368
      %v437 = vunpack.c.h.b16 %v368
      %v438 = vunpack.c.l.b16 %v369
      %v439 = vunpack.c.h.b16 %v369
      %v440 = vunpack.c.l.b16 %v370
      %v441 = vunpack.c.h.b16 %v370
      %v442 = vunpack.c.l.b16 %v371
      %v443 = vunpack.c.h.b16 %v371
      %v444 = vunpack.c.l.b16 %v372
      %v445 = vunpack.c.h.b16 %v372
      %v446 = vunpack.c.l.b16 %v373
      %v447 = vunpack.c.h.b16 %v373
      %v448 = vunpack.c.l.b16 %v374
      %v449 = vunpack.c.h.b16 %v374
      %v450 = vunpack.c.l.b16 %v375
      %v451 = vunpack.c.h.b16 %v375
      %v452 = vunpack.c.l.b16 %v376
      %v453 = vunpack.c.h.b16 %v376
      %v454 = vunpack.c.l.b16 %v377
      %v455 = vunpack.c.h.b16 %v377
      %v456 = vunpack.c.l.b16 %v378
      %v457 = vunpack.c.h.b16 %v378
      %v458 = vunpack.c.l.b16 %v379
      %v459 = vunpack.c.h.b16 %v379
      %v460 = vpack.c.b16 %v430, %v428
      %v461 = vpack.c.b16 %v431, %v429
      %v462 = vpack.c.b16 %v434, %v432
      %v463 = vpack.c.b16 %v435, %v433
      %v464 = vpack.c.b16 %v438, %v436
      %v465 = vpack.c.b16 %v439, %v437
      %v466 = vpack.c.b16 %v442, %v440
      %v467 = vpack.c.b16 %v443, %v441
      %v468 = vpack.c.b16 %v446, %v444
      %v469 = vpack.c.b16 %v447, %v445
      %v470 = vpack.c.b16 %v450, %v448
      %v471 = vpack.c.b16 %v451, %v449
      %v472 = vpack.c.b16 %v454, %v452
      %v473 = vpack.c.b16 %v455, %v453
      %v474 = vpack.c.b16 %v458, %v456
      %v475 = vpack.c.b16 %v459, %v457
      %v524 = vunpack.c.l.b16 %v380
      %v525 = vunpack.c.l.b16 %v381
      %v526 = vunpack.c.l.b16 %v382
      %v527 = vunpack.c.l.b16 %v383
      %v528 = vunpack.c.l.b16 %v384
      %v529 = vunpack.c.l.b16 %v385
      %v530 = vunpack.c.l.b16 %v386
      %v531 = vunpack.c.l.b16 %v387
      %v532 = vunpack.c.l.b16 %v388
      %v533 = vunpack.c.l.b16 %v389
      %v534 = vunpack.c.l.b16 %v390
      %v535 = vunpack.c.l.b16 %v391
      %v536 = vunpack.c.l.b16 %v392
      %v537 = vunpack.c.l.b16 %v393
      %v538 = vunpack.c.l.b16 %v394
      %v539 = vunpack.c.l.b16 %v395
      %v540 = vunpack.c.l.b16 %v396
      %v541 = vunpack.c.l.b16 %v397
      %v542 = vunpack.c.l.b16 %v398
      %v543 = vunpack.c.l.b16 %v399
      %v544 = vunpack.c.l.b16 %v400
      %v545 = vunpack.c.l.b16 %v401
      %v546 = vunpack.c.l.b16 %v402
      %v547 = vunpack.c.l.b16 %v403
      %v548 = vunpack.c.l.b16 %v404
      %v549 = vunpack.c.l.b16 %v405
      %v550 = vunpack.c.l.b16 %v406
      %v551 = vunpack.c.l.b16 %v407
      %v552 = vunpack.c.l.b16 %v408
      %v553 = vunpack.c.l.b16 %v409
      %v554 = vunpack.c.l.b16 %v410
      %v555 = vunpack.c.l.b16 %v411
      %v556 = vpack.c.b16 %v525, %v524
      %v557 = vpack.c.b16 %v527, %v526
      %v558 = vpack.c.b16 %v529, %v528
      %v559 = vpack.c.b16 %v531, %v530
      %v560 = vpack.c.b16 %v533, %v532
      %v561 = vpack.c.b16 %v535, %v534
      %v562 = vpack.c.b16 %v537, %v536
      %v563 = vpack.c.b16 %v539, %v538
      %v564 = vpack.c.b16 %v541, %v540
      %v565 = vpack.c.b16 %v543, %v542
      %v566 = vpack.c.b16 %v545, %v544
      %v567 = vpack.c.b16 %v547, %v546
      %v568 = vpack.c.b16 %v549, %v548
      %v569 = vpack.c.b16 %v551, %v550
      %v570 = vpack.c.b16 %v553, %v552
      %v571 = vpack.c.b16 %v555, %v554
      %588 = vmatprep.subr.bf16.mxu0 0
      %589 = vmatpush1.bf16.msra.mxu0 %v556
      %590 = vmatprep.subr.bf16.mxu0 0
      %591 = vmatpush1.bf16.msra.mxu0 %v557
      %592 = vmatprep.subr.bf16.mxu0 0
      %593 = vmatpush1.bf16.msra.mxu0 %v558
      %594 = vmatprep.subr.bf16.mxu0 0
      %595 = vmatpush1.bf16.msra.mxu0 %v559
      %596 = vmatprep.subr.bf16.mxu0 0
      %597 = vmatpush1.bf16.msra.mxu0 %v560
      %598 = vmatprep.subr.bf16.mxu0 0
      %599 = vmatpush1.bf16.msra.mxu0 %v561
      %600 = vmatprep.subr.bf16.mxu0 0
      %601 = vmatpush1.bf16.msra.mxu0 %v562
      %602 = vmatprep.subr.bf16.mxu0 0
      %603 = vmatpush1.bf16.msra.mxu0 %v563
      %604 = vmatprep.subr.bf16.mxu0 0
      %605 = vmatpush1.bf16.msra.mxu0 %v564
      %606 = vmatprep.subr.bf16.mxu0 0
      %607 = vmatpush1.bf16.msra.mxu0 %v565
      %608 = vmatprep.subr.bf16.mxu0 0
      %609 = vmatpush1.bf16.msra.mxu0 %v566
      %610 = vmatprep.subr.bf16.mxu0 0
      %611 = vmatpush1.bf16.msra.mxu0 %v567
      %612 = vmatprep.subr.bf16.mxu0 0
      %613 = vmatpush1.bf16.msra.mxu0 %v568
      %614 = vmatprep.subr.bf16.mxu0 0
      %615 = vmatpush1.bf16.msra.mxu0 %v569
      %616 = vmatprep.subr.bf16.mxu0 0
      %617 = vmatpush1.bf16.msra.mxu0 %v570
      %618 = vmatprep.subr.bf16.mxu0 0
      %619 = vmatpush1.bf16.msra.mxu0 %v571
      %620 = vmatprep.mubr.bf16.mxu0 %v461
      %621 = vmatmul.mubr.bf16.gmra.mrb[0].mxu0 %v460
      %v622 = vpop.f32.mrb[0].mxu0
      %v623 = vadd.f32 0.0, %v622
      %v624 = vpop.f32.mrb[0].mxu0
      %v625 = vpop.f32.mrb[0].mxu0
      %v626 = vadd.f32 0.0, %v625
      %v627 = vpop.f32.mrb[0].mxu0
      %628 = vmatprep.mubr.bf16.mxu0 %v463
      %629 = vmatmul.mubr.bf16.gmra.mrb[0].mxu0 %v462
      %v630 = vpop.f32.mrb[0].mxu0
      %v631 = vadd.f32 0.0, %v630
      %v632 = vpop.f32.mrb[0].mxu0
      %v633 = vpop.f32.mrb[0].mxu0
      %v634 = vadd.f32 0.0, %v633
      %v635 = vpop.f32.mrb[0].mxu0
      %636 = vmatprep.mubr.bf16.mxu0 %v465
      %637 = vmatmul.mubr.bf16.gmra.mrb[0].mxu0 %v464
      %v638 = vpop.f32.mrb[0].mxu0
      %v639 = vadd.f32 0.0, %v638
      %v640 = vpop.f32.mrb[0].mxu0
      %v641 = vpop.f32.mrb[0].mxu0
      %v642 = vadd.f32 0.0, %v641
      %v643 = vpop.f32.mrb[0].mxu0
      %644 = vmatprep.mubr.bf16.mxu0 %v467
      %645 = vmatmul.mubr.bf16.gmra.mrb[0].mxu0 %v466
      %v646 = vpop.f32.mrb[0].mxu0
      %v647 = vadd.f32 0.0, %v646
      %v648 = vpop.f32.mrb[0].mxu0
      %v649 = vpop.f32.mrb[0].mxu0
      %v650 = vadd.f32 0.0, %v649
      %v651 = vpop.f32.mrb[0].mxu0
      %652 = vmatprep.mubr.bf16.mxu0 %v469
      %653 = vmatmul.mubr.bf16.gmra.mrb[0].mxu0 %v468
      %v654 = vpop.f32.mrb[0].mxu0
      %v655 = vadd.f32 0.0, %v654
      %v656 = vpop.f32.mrb[0].mxu0
      %v657 = vpop.f32.mrb[0].mxu0
      %v658 = vadd.f32 0.0, %v657
      %v659 = vpop.f32.mrb[0].mxu0
      %660 = vmatprep.mubr.bf16.mxu0 %v471
      %661 = vmatmul.mubr.bf16.gmra.mrb[0].mxu0 %v470
      %v662 = vpop.f32.mrb[0].mxu0
      %v663 = vadd.f32 0.0, %v662
      %v664 = vpop.f32.mrb[0].mxu0
      %v665 = vpop.f32.mrb[0].mxu0
      %v666 = vadd.f32 0.0, %v665
      %v667 = vpop.f32.mrb[0].mxu0
      %668 = vmatprep.mubr.bf16.mxu0 %v473
      %669 = vmatmul.mubr.bf16.gmra.mrb[0].mxu0 %v472
      %v670 = vpop.f32.mrb[0].mxu0
      %v671 = vadd.f32 0.0, %v670
      %v672 = vpop.f32.mrb[0].mxu0
      %v673 = vpop.f32.mrb[0].mxu0
      %v674 = vadd.f32 0.0, %v673
      %v675 = vpop.f32.mrb[0].mxu0
      %676 = vmatprep.mubr.bf16.mxu0 %v475
      %677 = vmatmul.mubr.bf16.gmra.mrb[0].mxu0 %v474
      %v678 = vpop.f32.mrb[0].mxu0
      %v679 = vadd.f32 0.0, %v678
      %v680 = vpop.f32.mrb[0].mxu0
      %v681 = vpop.f32.mrb[0].mxu0
      %v682 = vadd.f32 0.0, %v681
      %v683 = vpop.f32.mrb[0].mxu0
      %684 = vdwg.mxu0
      %v685 = vadd.f32 %v348, %v623
      %v686 = vadd.f32 %v349, %v626
      %v687 = vadd.f32 %v350, %v631
      %v688 = vadd.f32 %v351, %v634
      %v689 = vadd.f32 %v352, %v639
      %v690 = vadd.f32 %v353, %v642
      %v691 = vadd.f32 %v354, %v647
      %v692 = vadd.f32 %v355, %v650
      %v693 = vadd.f32 %v356, %v655
      %v694 = vadd.f32 %v357, %v658
      %v695 = vadd.f32 %v358, %v663
      %v696 = vadd.f32 %v359, %v666
      %v697 = vadd.f32 %v360, %v671
      %v698 = vadd.f32 %v361, %v674
      %v699 = vadd.f32 %v362, %v679
      %v700 = vadd.f32 %v363, %v682
      %701 = vst [vmem:[#allocation2] sm:$0xff] %v685
      %702 = vst [vmem:[#allocation2 + $0x8] sm:$0xff] %v686
      %703 = vst [vmem:[#allocation2 + $0x10] sm:$0xff] %v687
      %704 = vst [vmem:[#allocation2 + $0x18] sm:$0xff] %v688
      %705 = vst [vmem:[#allocation2 + $0x20] sm:$0xff] %v689
      %706 = vst [vmem:[#allocation2 + $0x28] sm:$0xff] %v690
      %707 = vst [vmem:[#allocation2 + $0x30] sm:$0xff] %v691
      %708 = vst [vmem:[#allocation2 + $0x38] sm:$0xff] %v692
      %709 = vst [vmem:[#allocation2 + $0x40] sm:$0xff] %v693
      %710 = vst [vmem:[#allocation2 + $0x48] sm:$0xff] %v694
      %711 = vst [vmem:[#allocation2 + $0x50] sm:$0xff] %v695
      %712 = vst [vmem:[#allocation2 + $0x58] sm:$0xff] %v696
      %713 = vst [vmem:[#allocation2 + $0x60] sm:$0xff] %v697
      %714 = vst [vmem:[#allocation2 + $0x68] sm:$0xff] %v698
      %715 = vst [vmem:[#allocation2 + $0x70] sm:$0xff] %v699
      %716 = vst [vmem:[#allocation2 + $0x78] sm:$0xff] %v700
      // Predicated region
      $region41: #{vision_encoder_forward.13} parent=35 // pred_check
        %p717 = pneg %p328
      $region42: #{vision_encoder_forward.13} parent=35 // pred_check_branch
        %719 = sbr.rel (%p717) target = $region44
      $region43: #{vision_encoder_forward.13} parent=35 // pred_region
        %v720 = vld [vmem:[#allocation2] sm:$0xff]
        %v721 = vld [vmem:[#allocation2 + $0x8] sm:$0xff]
        %v722 = vld [vmem:[#allocation2 + $0x10] sm:$0xff]
        %v723 = vld [vmem:[#allocation2 + $0x18] sm:$0xff]
        %v724 = vld [vmem:[#allocation2 + $0x20] sm:$0xff]
        %v725 = vld [vmem:[#allocation2 + $0x28] sm:$0xff]
        %v726 = vld [vmem:[#allocation2 + $0x30] sm:$0xff]
        %v727 = vld [vmem:[#allocation2 + $0x38] sm:$0xff]
        %v728 = vld [vmem:[#allocation2 + $0x40] sm:$0xff]
        %v729 = vld [vmem:[#allocation2 + $0x48] sm:$0xff]
        %v730 = vld [vmem:[#allocation2 + $0x50] sm:$0xff]
        %v731 = vld [vmem:[#allocation2 + $0x58] sm:$0xff]
        %v732 = vld [vmem:[#allocation2 + $0x60] sm:$0xff]
        %v733 = vld [vmem:[#allocation2 + $0x68] sm:$0xff]
        %v734 = vld [vmem:[#allocation2 + $0x70] sm:$0xff]
        %v735 = vld [vmem:[#allocation2 + $0x78] sm:$0xff]
        %v736 = vld [vmem:[%s308] sm:$0x1]
        %v738 = vlaneseq
        %v739 = vshrl.u32 %v738, 7
        %v740 = vsub.s32 0, %v739
        %v741 = vrot.slane %v736, %v740
        %v743 = vadd.f32 %v720, %v741
        %v744 = vadd.f32 %v721, %v741
        %v745 = vadd.f32 %v722, %v741
        %v746 = vadd.f32 %v723, %v741
        %v747 = vadd.f32 %v724, %v741
        %v748 = vadd.f32 %v725, %v741
        %v749 = vadd.f32 %v726, %v741
        %v750 = vadd.f32 %v727, %v741
        %v751 = vadd.f32 %v728, %v741
        %v752 = vadd.f32 %v729, %v741
        %v753 = vadd.f32 %v730, %v741
        %v754 = vadd.f32 %v731, %v741
        %v755 = vadd.f32 %v732, %v741
        %v756 = vadd.f32 %v733, %v741
        %v757 = vadd.f32 %v734, %v741
        %v758 = vadd.f32 %v735, %v741
        %v759 = vld [vmem:[%s316] sm:$0xff]
        %v760 = vld [vmem:[%s316 + $0x8] sm:$0xff]
        %v761 = vld [vmem:[%s316 + $0x10] sm:$0xff]
        %v762 = vld [vmem:[%s316 + $0x18] sm:$0xff]
        %v763 = vld [vmem:[%s316 + $0x20] sm:$0xff]
        %v764 = vld [vmem:[%s316 + $0x28] sm:$0xff]
        %v765 = vld [vmem:[%s316 + $0x30] sm:$0xff]
        %v766 = vld [vmem:[%s316 + $0x38] sm:$0xff]
        %v767 = vld [vmem:[%s316 + $0x40] sm:$0xff]
        %v768 = vld [vmem:[%s316 + $0x48] sm:$0xff]
        %v769 = vld [vmem:[%s316 + $0x50] sm:$0xff]
        %v770 = vld [vmem:[%s316 + $0x58] sm:$0xff]
        %v771 = vld [vmem:[%s316 + $0x60] sm:$0xff]
        %v772 = vld [vmem:[%s316 + $0x68] sm:$0xff]
        %v773 = vld [vmem:[%s316 + $0x70] sm:$0xff]
        %v774 = vld [vmem:[%s316 + $0x78] sm:$0xff]
        %v775 = vadd.f32 %v743, %v759
        %v776 = vadd.f32 %v744, %v760
        %v777 = vadd.f32 %v745, %v761
        %v778 = vadd.f32 %v746, %v762
        %v779 = vadd.f32 %v747, %v763
        %v780 = vadd.f32 %v748, %v764
        %v781 = vadd.f32 %v749, %v765
        %v782 = vadd.f32 %v750, %v766
        %v783 = vadd.f32 %v751, %v767
        %v784 = vadd.f32 %v752, %v768
        %v785 = vadd.f32 %v753, %v769
        %v786 = vadd.f32 %v754, %v770
        %v787 = vadd.f32 %v755, %v771
        %v788 = vadd.f32 %v756, %v772
        %v789 = vadd.f32 %v757, %v773
        %v790 = vadd.f32 %v758, %v774
        %791 = vst [vmem:[%s325] sm:$0xff] %v775
        %792 = vst [vmem:[%s325 + $0x8] sm:$0xff] %v776
        %793 = vst [vmem:[%s325 + $0x10] sm:$0xff] %v777
        %794 = vst [vmem:[%s325 + $0x18] sm:$0xff] %v778
        %795 = vst [vmem:[%s325 + $0x20] sm:$0xff] %v779
        %796 = vst [vmem:[%s325 + $0x28] sm:$0xff] %v780
        %797 = vst [vmem:[%s325 + $0x30] sm:$0xff] %v781
        %798 = vst [vmem:[%s325 + $0x38] sm:$0xff] %v782
        %799 = vst [vmem:[%s325 + $0x40] sm:$0xff] %v783
        %800 = vst [vmem:[%s325 + $0x48] sm:$0xff] %v784
        %801 = vst [vmem:[%s325 + $0x50] sm:$0xff] %v785
        %802 = vst [vmem:[%s325 + $0x58] sm:$0xff] %v786
        %803 = vst [vmem:[%s325 + $0x60] sm:$0xff] %v787
        %804 = vst [vmem:[%s325 + $0x68] sm:$0xff] %v788
        %805 = vst [vmem:[%s325 + $0x70] sm:$0xff] %v789
        %806 = vst [vmem:[%s325 + $0x78] sm:$0xff] %v790
      $region44: #{vision_encoder_forward.13} parent=35 // pred_fallthru
        _
      %s807 = smul.u32 16, %s20
      %p808 = scmp.lt.s32.totalorder %s807, 63
      %s809 = scalar_select %p808, %s807, 63
      %p810 = scmp.lt.s32.totalorder %s21, 0
      %s811 = scalar_select %p810, %s21, 0
      %s812 = sadd.s32 %s811, %s809
      %s813 = smul.addr %s812, 8
      %s814 = scalar_lea.vmem %s4, %s813
      // Predicated region
      $region45: #{vision_encoder_forward.13} parent=35 // pred_check
        %p815 = pneg %p164
      $region46: #{vision_encoder_forward.13} parent=35 // pred_check_branch
        %817 = sbr.rel (%p815) target = $region48
      $region47: #{vision_encoder_forward.13} parent=35 // pred_region
        %s818 = smul.u32 16, %s20
      $region48: #{vision_encoder_forward.13} parent=35 // pred_fallthru
        _
    $region36: #{vision_encoder_forward.13} parent=5 // pred_fallthru
      _
    %p819 = scmp.le.s32.totalorder 2, %s10
    // Predicated region
    $region49: #{vision_encoder_forward.13} parent=5 // pred_check
      %p820 = pneg %p819
    $region50: #{vision_encoder_forward.13} parent=5 // pred_check_branch
      %822 = sbr.rel (%p820) target = $region52
    $region51: #{vision_encoder_forward.13} parent=5 // pred_region
      %s823 = ssub.s32 %s10, 2
      // Predicated region
      $region53: #{vision_encoder_forward.13} parent=51 // pred_check
        %p824 = pneg %p170
      $region54: #{vision_encoder_forward.13} parent=51 // pred_check_branch
        %826 = sbr.rel (%p824) target = $region56
      $region55: #{vision_encoder_forward.13} parent=51 // pred_region
        %s827 = smul.u32 16, %s23
        %p828 = scmp.lt.s32.totalorder %s827, 63
        %s829 = scalar_select %p828, %s827, 63
        %p830 = scmp.lt.s32.totalorder %s24, 0
        %s831 = scalar_select %p830, %s24, 0
        %s832 = sadd.s32 %s831, %s829
        %s833 = smul.addr %s832, 8
        %s834 = scalar_lea.vmem %s4, %s833
      $region56: #{vision_encoder_forward.13} parent=51 // pred_fallthru
        _
    $region52: #{vision_encoder_forward.13} parent=5 // pred_fallthru
      _
  $region6: #{vision_encoder_forward.13} parent=0 // loop_footer
    %s14 = sadd.s32 1, %s10
  $region7: #{vision_encoder_forward.13} parent=0 // loop_footer_branch
    %9 = sbr.rel target = $region3
  $region8: #{vision_encoder_forward.13} parent=0 // loop_exit
    _

// kernel: vision_encoder_forward.11
$region0: #{vision_encoder_forward.11}
  #allocation0 [shape = 'u32[]', space=smem, size = 0x4, offset = 0x4, fixed_abs, tag = 'smem constant byte address 0x4 - core index']
  #allocation1 [shape = 'u32[144,128]{1,0:T(1,128)}', space=vmem, size = 0x12000, scoped, tag = 'internal scratch']
  %s0 = inlined_call_operand.hbm [shape: f32[512,128], index: 0, kind: input, shape index: {}]
  %s1 = inlined_call_operand.vmem [shape: f32[1,128], index: 1, kind: input, shape index: {}]
  %s2 = inlined_call_operand.vmem [shape: f32[1,128], index: 2, kind: input, shape index: {}]
  %s3 = inlined_call_operand.hbm [shape: bf16[128,768], index: 3, kind: input, shape index: {}]
  %s4 = inlined_call_operand.vmem [shape: f32[1,768], index: 4, kind: input, shape index: {}]
  %s5 = inlined_call_operand.vmem [shape: bf16[512,768], index: 5, kind: output, shape index: {}]
  %s6 = sld [smem:[#allocation0]]
  $region95: #{vision_encoder_forward.11} parent=0
    _
  %s8 = ssub.s32 1, %s6
  %s9 = scalar_select 0, %s8, %s6
  $region1: #{vision_encoder_forward.11} parent=0
    #allocation2 [shape = 'u8[131072]{0}', space=vmem, size = 0x20000, scoped, tag = 'input window, operand 0']
    #allocation3 [shape = 's32[2]{0}', space=sflag, size = 0x8, scoped, tag = 'scoped memory for vision_encoder_forward.11']
    #allocation4 [shape = 'u8[131072]{0}', space=vmem, size = 0x20000, scoped, tag = 'input window, operand 3']
    #allocation5 [shape = 's32[2]{0}', space=sflag, size = 0x8, scoped, tag = 'scoped memory for vision_encoder_forward.11']
    #allocation6 [shape = 'u8[131072]{0}', space=vmem, size = 0x20000, scoped, tag = 'output window, operand 0']
    %10 = vsyncpa [#allocation3], 0
    %s11 = scalar_lea.sflag [#allocation3], 1
    %12 = vsyncpa %s11, 0
    %13 = vsyncpa [#allocation5], 0
    %s14 = scalar_lea.sflag [#allocation5], 1
    %15 = vsyncpa %s14, 0
    loop: start=0, step=1, limit=14
    $region2: #{vision_encoder_forward.11} parent=1 // loop_pre_header
      _
    $region3: #{vision_encoder_forward.11} parent=1 // loop_header
      %s17 = sphi 0, %s21
      %p18 = scmp.ge.s32.totalorder %s17, 14
      %s24 = sphi 0, %s36
      %s25 = sphi 0, %s32
      %s26 = sphi 0, %s24
      %s27 = sphi 0, %s25
      %s28 = sphi 0, %s26
      %s29 = sphi 0, %s27
      %s39 = sphi 0, %s41
      %s42 = sphi 0, %s39
      %s43 = sphi 0, %s42
      %s59 = sphi 0, %s43
      %s63 = sphi 0, %s63
      %s65 = sphi 0, %s63
      %s66 = sphi 0, %s65
      %s80 = sphi 0, %s66
      %s84 = sphi 0, %s84
      %s86 = sphi 0, %s84
      %s87 = sphi 0, %s86
      %s101 = sphi 0, %s87
      %s107 = sphi 0, %s109
      %s110 = sphi 0, %s107
      %s111 = sphi 0, %s110
      %s127 = sphi 0, %s111
      %s133 = sphi 0, %s135
      %s136 = sphi 0, %s133
      %s137 = sphi 0, %s136
      %s153 = sphi 0, %s137
      %s161 = sphi 0, %s163
      %s164 = sphi 0, %s161
      %s165 = sphi 0, %s164
      %s181 = sphi 0, %s165
    $region4: #{vision_encoder_forward.11} parent=1 // loop_header_branch
      %20 = sbr.rel (%p18) target = $region8
    $region5: #{vision_encoder_forward.11} parent=1 // loop_body
      %s22 = ssub.s32 %s17, 1
      %s23 = ssub.s32 %s17, 2
      %s30 = sadd.s32 1, %s25
      %p31 = scmp.ge.s32.totalorder %s30, 3
      %s32 = scalar_select %p31, 0, %s30
      %s33 = sadd.s32 1, %s24
      %s34 = scalar_select %p31, %s33, %s24
      %p35 = scmp.ge.s32.totalorder %s34, 4
      %s36 = scalar_select %p35, 0, %s34
      %s37 = ssub.s32 %s24, %s36
      %p38 = scmp.eq.s32.totalorder %s37, 0
      %s40 = sadd.s32 %s39, 1
      %s41 = scalar_select %p38, %s39, %s40
      %p44 = pneg %p38
      %p45 = scmp.eq.s32.totalorder %s17, 11
      %p46 = por %p44, %p45
      %p47 = scmp.ne.s32.totalorder %s39, %s42
      %p48 = scmp.eq.s32.totalorder %s17, 0
      %p49 = por %p47, %p48
      %p50 = scmp.ne.s32.totalorder %s39, %s42
      %p51 = scmp.eq.s32.totalorder %s22, 11
      %p52 = por %p50, %p51
      %p53 = scmp.ne.s32.totalorder %s42, %s43
      %p54 = scmp.eq.s32.totalorder %s22, 0
      %p55 = por %p53, %p54
      %p56 = scmp.ne.s32.totalorder %s42, %s43
      %p57 = scmp.eq.s32.totalorder %s23, 11
      %p58 = por %p56, %p57
      %p60 = scmp.ne.s32.totalorder %s43, %s59
      %p61 = scmp.eq.s32.totalorder %s23, 0
      %p62 = por %p60, %p61
      %s64 = sadd.s32 %s63, 1
      %p67 = scmp.eq.s32.totalorder %s17, 11
      %p68 = scmp.ne.s32.totalorder %s63, %s65
      %p69 = scmp.eq.s32.totalorder %s17, 0
      %p70 = por %p68, %p69
      %p71 = scmp.ne.s32.totalorder %s63, %s65
      %p72 = scmp.eq.s32.totalorder %s22, 11
      %p73 = por %p71, %p72
      %p74 = scmp.ne.s32.totalorder %s65, %s66
      %p75 = scmp.eq.s32.totalorder %s22, 0
      %p76 = por %p74, %p75
      %p77 = scmp.ne.s32.totalorder %s65, %s66
      %p78 = scmp.eq.s32.totalorder %s23, 11
      %p79 = por %p77, %p78
      %p81 = scmp.ne.s32.totalorder %s66, %s80
      %p82 = scmp.eq.s32.totalorder %s23, 0
      %p83 = por %p81, %p82
      %s85 = sadd.s32 %s84, 1
      %p88 = scmp.eq.s32.totalorder %s17, 11
      %p89 = scmp.ne.s32.totalorder %s84, %s86
      %p90 = scmp.eq.s32.totalorder %s17, 0
      %p91 = por %p89, %p90
      %p92 = scmp.ne.s32.totalorder %s84, %s86
      %p93 = scmp.eq.s32.totalorder %s22, 11
      %p94 = por %p92, %p93
      %p95 = scmp.ne.s32.totalorder %s86, %s87
      %p96 = scmp.eq.s32.totalorder %s22, 0
      %p97 = por %p95, %p96
      %p98 = scmp.ne.s32.totalorder %s86, %s87
      %p99 = scmp.eq.s32.totalorder %s23, 11
      %p100 = por %p98, %p99
      %p102 = scmp.ne.s32.totalorder %s87, %s101
      %p103 = scmp.eq.s32.totalorder %s23, 0
      %p104 = por %p102, %p103
      %s105 = ssub.s32 %s25, %s32
      %p106 = scmp.eq.s32.totalorder %s105, 0
      %s108 = sadd.s32 %s107, 1
      %s109 = scalar_select %p106, %s107, %s108
      %p112 = pneg %p106
      %p113 = scmp.eq.s32.totalorder %s17, 11
      %p114 = por %p112, %p113
      %p115 = scmp.ne.s32.totalorder %s107, %s110
      %p116 = scmp.eq.s32.totalorder %s17, 0
      %p117 = por %p115, %p116
      %p118 = scmp.ne.s32.totalorder %s107, %s110
      %p119 = scmp.eq.s32.totalorder %s22, 11
      %p120 = por %p118, %p119
      %p121 = scmp.ne.s32.totalorder %s110, %s111
      %p122 = scmp.eq.s32.totalorder %s22, 0
      %p123 = por %p121, %p122
      %p124 = scmp.ne.s32.totalorder %s110, %s111
      %p125 = scmp.eq.s32.totalorder %s23, 11
      %p126 = por %p124, %p125
      %p128 = scmp.ne.s32.totalorder %s111, %s127
      %p129 = scmp.eq.s32.totalorder %s23, 0
      %p130 = por %p128, %p129
      %s131 = ssub.s32 %s25, %s32
      %p132 = scmp.eq.s32.totalorder %s131, 0
      %s134 = sadd.s32 %s133, 1
      %s135 = scalar_select %p132, %s133, %s134
      %p138 = pneg %p132
      %p139 = scmp.eq.s32.totalorder %s17, 11
      %p140 = por %p138, %p139
      %p141 = scmp.ne.s32.totalorder %s133, %s136
      %p142 = scmp.eq.s32.totalorder %s17, 0
      %p143 = por %p141, %p142
      %p144 = scmp.ne.s32.totalorder %s133, %s136
      %p145 = scmp.eq.s32.totalorder %s22, 11
      %p146 = por %p144, %p145
      %p147 = scmp.ne.s32.totalorder %s136, %s137
      %p148 = scmp.eq.s32.totalorder %s22, 0
      %p149 = por %p147, %p148
      %p150 = scmp.ne.s32.totalorder %s136, %s137
      %p151 = scmp.eq.s32.totalorder %s23, 11
      %p152 = por %p150, %p151
      %p154 = scmp.ne.s32.totalorder %s137, %s153
      %p155 = scmp.eq.s32.totalorder %s23, 0
      %p156 = por %p154, %p155
      %s157 = ssub.s32 %s24, %s36
      %s158 = ssub.s32 %s25, %s32
      %s159 = sor.u32 %s157, %s158
      %p160 = scmp.eq.s32.totalorder %s159, 0
      %s162 = sadd.s32 %s161, 1
      %s163 = scalar_select %p160, %s161, %s162
      %p166 = pneg %p160
      %p167 = scmp.eq.s32.totalorder %s17, 11
      %p168 = por %p166, %p167
      %p169 = scmp.ne.s32.totalorder %s161, %s164
      %p170 = scmp.eq.s32.totalorder %s17, 0
      %p171 = por %p169, %p170
      %p172 = scmp.ne.s32.totalorder %s161, %s164
      %p173 = scmp.eq.s32.totalorder %s22, 11
      %p174 = por %p172, %p173
      %p175 = scmp.ne.s32.totalorder %s164, %s165
      %p176 = scmp.eq.s32.totalorder %s22, 0
      %p177 = por %p175, %p176
      %p178 = scmp.ne.s32.totalorder %s164, %s165
      %p179 = scmp.eq.s32.totalorder %s23, 11
      %p180 = por %p178, %p179
      %p182 = scmp.ne.s32.totalorder %s165, %s181
      %p183 = scmp.eq.s32.totalorder %s23, 0
      %p184 = por %p182, %p183
      %p185 = scmp.le.s32.totalorder 1, %s17
      %p186 = scmp.lt.s32.totalorder %s17, 13
      %p187 = pnand %p185, %p186
      %p188 = pneg %p187
      // Predicated region
      $region9: #{vision_encoder_forward.11} parent=5 // pred_check
        _
      $region10: #{vision_encoder_forward.11} parent=5 // pred_check_branch
        %190 = sbr.rel (%p187) target = $region12
      $region11: #{vision_encoder_forward.11} parent=5 // pred_region
        %s191 = ssub.s32 %s17, 1
        // Predicated region
        $region13: #{vision_encoder_forward.11} parent=11 // pred_check
          %p192 = pneg %p76
        $region14: #{vision_encoder_forward.11} parent=11 // pred_check_branch
          %194 = sbr.rel (%p192) target = $region16
        $region15: #{vision_encoder_forward.11} parent=11 // pred_region
          _
        $region16: #{vision_encoder_forward.11} parent=11 // pred_fallthru
          _
        // Predicated region
        $region17: #{vision_encoder_forward.11} parent=11 // pred_check
          %p195 = pneg %p97
        $region18: #{vision_encoder_forward.11} parent=11 // pred_check_branch
          %197 = sbr.rel (%p195) target = $region20
        $region19: #{vision_encoder_forward.11} parent=11 // pred_region
          _
        $region20: #{vision_encoder_forward.11} parent=11 // pred_fallthru
          _
      $region12: #{vision_encoder_forward.11} parent=5 // pred_fallthru
        _
      %p198 = scmp.lt.s32.totalorder %s17, 12
      // Predicated region
      $region21: #{vision_encoder_forward.11} parent=5 // pred_check
        %p199 = pneg %p198
      $region22: #{vision_encoder_forward.11} parent=5 // pred_check_branch
        %201 = sbr.rel (%p199) target = $region24
      $region23: #{vision_encoder_forward.11} parent=5 // pred_region
        // Predicated region
        $region25: #{vision_encoder_forward.11} parent=23 // pred_check
          %p202 = pneg %p49
        $region26: #{vision_encoder_forward.11} parent=23 // pred_check_branch
          %204 = sbr.rel (%p202) target = $region28
        $region27: #{vision_encoder_forward.11} parent=23 // pred_region
          %s205 = sand.u32 %s39, 1
          %s206 = scalar_lea.sflag [#allocation3], %s205
          %s207 = sand.u32 %s39, 1
          %s208 = smul.addr %s207, 128
          %s209 = scalar_lea.vmem [#allocation2], %s208
          %s210 = smul.u32 16, %s24
          %s212 = ssub.s32 2048, 2048
          %213 = vsyncadd %s206, %s212
          %s214 = smul.addr %s210, 128
          %s215 = scalar_lea.hbm %s0, %s214
          %s216 = sshll.u32 %s209, 4
          %s217 = int_to_ptr.vmem [resolvable:$true] %s216
          %222 = dma.hbm_to_vmem [thread:$0]  %s215, 2048, %s217, %s206, 128, 128, 8
        $region28: #{vision_encoder_forward.11} parent=23 // pred_fallthru
          _
        // Predicated region
        $region29: #{vision_encoder_forward.11} parent=23 // pred_check
          %p223 = pneg %p117
        $region30: #{vision_encoder_forward.11} parent=23 // pred_check_branch
          %225 = sbr.rel (%p223) target = $region32
        $region31: #{vision_encoder_forward.11} parent=23 // pred_region
          %s226 = sand.u32 %s107, 1
          %s227 = scalar_lea.sflag [#allocation5], %s226
          %s228 = sand.u32 %s107, 1
          %s229 = smul.addr %s228, 128
          %s230 = scalar_lea.vmem [#allocation4], %s229
          %s231 = smul.u32 2, %s25
          %s233 = ssub.s32 2048, 2048
          %234 = vsyncadd %s227, %s233
          %s235 = smul.addr %s231, 64
          %s236 = scalar_lea.hbm %s3, %s235
          %s237 = sshll.u32 %s230, 4
          %s238 = int_to_ptr.vmem [resolvable:$true] %s237
          %243 = dma.hbm_to_vmem [thread:$0]  %s236, 2048, %s238, %s227, 384, 128, 8
        $region32: #{vision_encoder_forward.11} parent=23 // pred_fallthru
          _
        // Predicated region
        $region33: #{vision_encoder_forward.11} parent=23 // pred_check
          %p244 = pneg %p143
        $region34: #{vision_encoder_forward.11} parent=23 // pred_check_branch
          %246 = sbr.rel (%p244) target = $region36
        $region35: #{vision_encoder_forward.11} parent=23 // pred_region
          %s247 = smul.u32 2, %s25
          %p248 = scmp.lt.s32.totalorder %s247, 5
          %s249 = scalar_select %p248, %s247, 5
          %s250 = scalar_lea.vmem %s4, %s249
          %s251 = smul.u32 2, %s25
        $region36: #{vision_encoder_forward.11} parent=23 // pred_fallthru
          _
      $region24: #{vision_encoder_forward.11} parent=5 // pred_fallthru
        _
      %p252 = scmp.le.s32.totalorder 1, %s17
      %p253 = scmp.lt.s32.totalorder %s17, 13
      %p254 = pnand %p252, %p253
      %p255 = pneg %p254
      // Predicated region
      $region37: #{vision_encoder_forward.11} parent=5 // pred_check
        _
      $region38: #{vision_encoder_forward.11} parent=5 // pred_check_branch
        %257 = sbr.rel (%p254) target = $region40
      $region39: #{vision_encoder_forward.11} parent=5 // pred_region
        %s258 = ssub.s32 %s17, 1
        %s259 = sand.u32 %s42, 1
        %s260 = scalar_lea.sflag [#allocation3], %s259
        %s261 = sand.u32 %s42, 1
        %s262 = smul.addr %s261, 128
        %s263 = scalar_lea.vmem [#allocation2], %s262
        // Predicated region
        $region41: #{vision_encoder_forward.11} parent=39 // pred_check
          %p264 = pneg %p55
        $region42: #{vision_encoder_forward.11} parent=39 // pred_check_branch
          %266 = sbr.rel (%p264) target = $region44
        $region43: #{vision_encoder_forward.11} parent=39 // pred_region
          %267 = dma.done %s260, 2048
        $region44: #{vision_encoder_forward.11} parent=39 // pred_fallthru
          _
        %s268 = sand.u32 %s110, 1
        %s269 = scalar_lea.sflag [#allocation5], %s268
        %s270 = sand.u32 %s110, 1
        %s271 = smul.addr %s270, 128
        %s272 = scalar_lea.vmem [#allocation4], %s271
        // Predicated region
        $region45: #{vision_encoder_forward.11} parent=39 // pred_check
          %p273 = pneg %p123
        $region46: #{vision_encoder_forward.11} parent=39 // pred_check_branch
          %275 = sbr.rel (%p273) target = $region48
        $region47: #{vision_encoder_forward.11} parent=39 // pred_region
          %276 = dma.done %s269, 2048
        $region48: #{vision_encoder_forward.11} parent=39 // pred_fallthru
          _
        %s277 = sand.u32 %s42, 1
        %s278 = scalar_lea.sflag [#allocation3], %s277
        %s279 = sand.u32 %s42, 1
        %s280 = smul.addr %s279, 128
        %s281 = scalar_lea.vmem [#allocation2], %s280
        %p282 = pneg %p55
        %p283 = pneg %p52
        %p284 = pneg %p76
        %p285 = pneg %p73
        %p286 = pneg %p97
        %p287 = pneg %p94
        %s288 = sand.u32 %s110, 1
        %s289 = scalar_lea.sflag [#allocation5], %s288
        %s290 = sand.u32 %s110, 1
        %s291 = smul.addr %s290, 128
        %s292 = scalar_lea.vmem [#allocation4], %s291
        %p293 = pneg %p123
        %p294 = pneg %p120
        %s295 = smul.u32 2, %s27
        %p296 = scmp.lt.s32.totalorder %s295, 5
        %s297 = scalar_select %p296, %s295, 5
        %s298 = scalar_lea.vmem %s4, %s297
        %p299 = pneg %p149
        %p300 = pneg %p146
        %p301 = pneg %p177
        %p302 = pneg %p174
        %s303 = sand.u32 %s164, 1
        %s304 = sand.u32 %s164, 1
        %s305 = smul.addr %s304, 128
        %s306 = scalar_lea.vmem [#allocation6], %s305
        %s307 = smul.u32 16, %s26
        %s308 = smul.u32 2, %s27
        %s309 = smul.u32 2, %s27
        %p310 = scmp.lt.s32.totalorder %s309, 5
        %s311 = scalar_select %p310, %s309, 5
        %s312 = scalar_lea.vmem %s4, %s311
        %s313 = smul.u32 2, %s27
        %s314 = smul.u32 16, %s26
        %s315 = smul.u32 2, %s27
        %v317 = vld [vmem:[%s263] sm:$0xff]
        %v318 = vld [vmem:[%s263 + $0x8] sm:$0xff]
        %v319 = vld [vmem:[%s263 + $0x10] sm:$0xff]
        %v320 = vld [vmem:[%s263 + $0x18] sm:$0xff]
        %v321 = vld [vmem:[%s263 + $0x20] sm:$0xff]
        %v322 = vld [vmem:[%s263 + $0x28] sm:$0xff]
        %v323 = vld [vmem:[%s263 + $0x30] sm:$0xff]
        %v324 = vld [vmem:[%s263 + $0x38] sm:$0xff]
        %v325 = vld [vmem:[%s263 + $0x40] sm:$0xff]
        %v326 = vld [vmem:[%s263 + $0x48] sm:$0xff]
        %v327 = vld [vmem:[%s263 + $0x50] sm:$0xff]
        %v328 = vld [vmem:[%s263 + $0x58] sm:$0xff]
        %v329 = vld [vmem:[%s263 + $0x60] sm:$0xff]
        %v330 = vld [vmem:[%s263 + $0x68] sm:$0xff]
        %v331 = vld [vmem:[%s263 + $0x70] sm:$0xff]
        %v332 = vld [vmem:[%s263 + $0x78] sm:$0xff]
        %333 = vadd.xlane.f32.xlu0 %v317
        %v334 = vpop.xlane.xlu0 %333
        %335 = vadd.xlane.f32.xlu0 %v318
        %v336 = vpop.xlane.xlu0 %335
        %337 = vadd.xlane.f32.xlu0 %v319
        %v338 = vpop.xlane.xlu0 %337
        %339 = vadd.xlane.f32.xlu0 %v320
        %v340 = vpop.xlane.xlu0 %339
        %341 = vadd.xlane.f32.xlu0 %v321
        %v342 = vpop.xlane.xlu0 %341
        %343 = vadd.xlane.f32.xlu0 %v322
        %v344 = vpop.xlane.xlu0 %343
        %345 = vadd.xlane.f32.xlu0 %v323
        %v346 = vpop.xlane.xlu0 %345
        %347 = vadd.xlane.f32.xlu0 %v324
        %v348 = vpop.xlane.xlu0 %347
        %349 = vadd.xlane.f32.xlu0 %v325
        %v350 = vpop.xlane.xlu0 %349
        %351 = vadd.xlane.f32.xlu0 %v326
        %v352 = vpop.xlane.xlu0 %351
        %353 = vadd.xlane.f32.xlu0 %v327
        %v354 = vpop.xlane.xlu0 %353
        %355 = vadd.xlane.f32.xlu0 %v328
        %v356 = vpop.xlane.xlu0 %355
        %357 = vadd.xlane.f32.xlu0 %v329
        %v358 = vpop.xlane.xlu0 %357
        %359 = vadd.xlane.f32.xlu0 %v330
        %v360 = vpop.xlane.xlu0 %359
        %361 = vadd.xlane.f32.xlu0 %v331
        %v362 = vpop.xlane.xlu0 %361
        %363 = vadd.xlane.f32.xlu0 %v332
        %v364 = vpop.xlane.xlu0 %363
        %v365 = vrcp.pop 128.0
        %v366 = vmul.f32 %v334, %v365
        %v367 = vmul.f32 %v336, %v365
        %v368 = vmul.f32 %v338, %v365
        %v369 = vmul.f32 %v340, %v365
        %v370 = vmul.f32 %v342, %v365
        %v371 = vmul.f32 %v344, %v365
        %v372 = vmul.f32 %v346, %v365
        %v373 = vmul.f32 %v348, %v365
        %v374 = vmul.f32 %v350, %v365
        %v375 = vmul.f32 %v352, %v365
        %v376 = vmul.f32 %v354, %v365
        %v377 = vmul.f32 %v356, %v365
        %v378 = vmul.f32 %v358, %v365
        %v379 = vmul.f32 %v360, %v365
        %v380 = vmul.f32 %v362, %v365
        %v381 = vmul.f32 %v364, %v365
        %v382 = vsub.f32 %v317, %v366
        %v383 = vsub.f32 %v318, %v367
        %v384 = vsub.f32 %v319, %v368
        %v385 = vsub.f32 %v320, %v369
        %v386 = vsub.f32 %v321, %v370
        %v387 = vsub.f32 %v322, %v371
        %v388 = vsub.f32 %v323, %v372
        %v389 = vsub.f32 %v324, %v373
        %v390 = vsub.f32 %v325, %v374
        %v391 = vsub.f32 %v326, %v375
        %v392 = vsub.f32 %v327, %v376
        %v393 = vsub.f32 %v328, %v377
        %v394 = vsub.f32 %v329, %v378
        %v395 = vsub.f32 %v330, %v379
        %v396 = vsub.f32 %v331, %v380
        %v397 = vsub.f32 %v332, %v381
        %v398 = vmul.f32 %v382, %v382
        %v399 = vmul.f32 %v383, %v383
        %v400 = vmul.f32 %v384, %v384
        %v401 = vmul.f32 %v385, %v385
        %v402 = vmul.f32 %v386, %v386
        %v403 = vmul.f32 %v387, %v387
        %v404 = vmul.f32 %v388, %v388
        %v405 = vmul.f32 %v389, %v389
        %v406 = vmul.f32 %v390, %v390
        %v407 = vmul.f32 %v391, %v391
        %v408 = vmul.f32 %v392, %v392
        %v409 = vmul.f32 %v393, %v393
        %v410 = vmul.f32 %v394, %v394
        %v411 = vmul.f32 %v395, %v395
        %v412 = vmul.f32 %v396, %v396
        %v413 = vmul.f32 %v397, %v397
        %414 = vadd.xlane.f32.xlu0 %v398
        %v415 = vpop.xlane.xlu0 %414
        %416 = vadd.xlane.f32.xlu0 %v399
        %v417 = vpop.xlane.xlu0 %416
        %418 = vadd.xlane.f32.xlu0 %v400
        %v419 = vpop.xlane.xlu0 %418
        %420 = vadd.xlane.f32.xlu0 %v401
        %v421 = vpop.xlane.xlu0 %420
        %422 = vadd.xlane.f32.xlu0 %v402
        %v423 = vpop.xlane.xlu0 %422
        %424 = vadd.xlane.f32.xlu0 %v403
        %v425 = vpop.xlane.xlu0 %424
        %426 = vadd.xlane.f32.xlu0 %v404
        %v427 = vpop.xlane.xlu0 %426
        %428 = vadd.xlane.f32.xlu0 %v405
        %v429 = vpop.xlane.xlu0 %428
        %430 = vadd.xlane.f32.xlu0 %v406
        %v431 = vpop.xlane.xlu0 %430
        %432 = vadd.xlane.f32.xlu0 %v407
        %v433 = vpop.xlane.xlu0 %432
        %434 = vadd.xlane.f32.xlu0 %v408
        %v435 = vpop.xlane.xlu0 %434
        %436 = vadd.xlane.f32.xlu0 %v409
        %v437 = vpop.xlane.xlu0 %436
        %438 = vadd.xlane.f32.xlu0 %v410
        %v439 = vpop.xlane.xlu0 %438
        %440 = vadd.xlane.f32.xlu0 %v411
        %v441 = vpop.xlane.xlu0 %440
        %442 = vadd.xlane.f32.xlu0 %v412
        %v443 = vpop.xlane.xlu0 %442
        %444 = vadd.xlane.f32.xlu0 %v413
        %v445 = vpop.xlane.xlu0 %444
        %v446 = vmul.f32 %v415, %v365
        %v447 = vmul.f32 %v417, %v365
        %v448 = vmul.f32 %v419, %v365
        %v449 = vmul.f32 %v421, %v365
        %v450 = vmul.f32 %v423, %v365
        %v451 = vmul.f32 %v425, %v365
        %v452 = vmul.f32 %v427, %v365
        %v453 = vmul.f32 %v429, %v365
        %v454 = vmul.f32 %v431, %v365
        %v455 = vmul.f32 %v433, %v365
        %v456 = vmul.f32 %v435, %v365
        %v457 = vmul.f32 %v437, %v365
        %v458 = vmul.f32 %v439, %v365
        %v459 = vmul.f32 %v441, %v365
        %v460 = vmul.f32 %v443, %v365
        %v461 = vmul.f32 %v445, %v365
        %v462 = vadd.f32 %v446, 1e-05
        %v463 = vadd.f32 %v447, 1e-05
        %v464 = vadd.f32 %v448, 1e-05
        %v465 = vadd.f32 %v449, 1e-05
        %v466 = vadd.f32 %v450, 1e-05
        %v467 = vadd.f32 %v451, 1e-05
        %v468 = vadd.f32 %v452, 1e-05
        %v469 = vadd.f32 %v453, 1e-05
        %v470 = vadd.f32 %v454, 1e-05
        %v471 = vadd.f32 %v455, 1e-05
        %v472 = vadd.f32 %v456, 1e-05
        %v473 = vadd.f32 %v457, 1e-05
        %v474 = vadd.f32 %v458, 1e-05
        %v475 = vadd.f32 %v459, 1e-05
        %v476 = vadd.f32 %v460, 1e-05
        %v477 = vadd.f32 %v461, 1e-05
        %v478 = vrsqrt.pop %v462
        %v479 = vrsqrt.pop %v463
        %v480 = vrsqrt.pop %v464
        %v481 = vrsqrt.pop %v465
        %v482 = vrsqrt.pop %v466
        %v483 = vrsqrt.pop %v467
        %v484 = vrsqrt.pop %v468
        %v485 = vrsqrt.pop %v469
        %v486 = vrsqrt.pop %v470
        %v487 = vrsqrt.pop %v471
        %v488 = vrsqrt.pop %v472
        %v489 = vrsqrt.pop %v473
        %v490 = vrsqrt.pop %v474
        %v491 = vrsqrt.pop %v475
        %v492 = vrsqrt.pop %v476
        %v493 = vrsqrt.pop %v477
        %v494 = vmul.f32 %v382, %v478
        %v495 = vmul.f32 %v383, %v479
        %v496 = vmul.f32 %v384, %v480
        %v497 = vmul.f32 %v385, %v481
        %v498 = vmul.f32 %v386, %v482
        %v499 = vmul.f32 %v387, %v483
        %v500 = vmul.f32 %v388, %v484
        %v501 = vmul.f32 %v389, %v485
        %v502 = vmul.f32 %v390, %v486
        %v503 = vmul.f32 %v391, %v487
        %v504 = vmul.f32 %v392, %v488
        %v505 = vmul.f32 %v393, %v489
        %v506 = vmul.f32 %v394, %v490
        %v507 = vmul.f32 %v395, %v491
        %v508 = vmul.f32 %v396, %v492
        %v509 = vmul.f32 %v397, %v493
        %v510 = vld [vmem:[%s1] sm:$0x1]
        %v512 = vlaneseq
        %v513 = vshrl.u32 %v512, 7
        %v514 = vsub.s32 0, %v513
        %v515 = vrot.slane %v510, %v514
        %v517 = vmul.f32 %v494, %v515
        %v518 = vmul.f32 %v495, %v515
        %v519 = vmul.f32 %v496, %v515
        %v520 = vmul.f32 %v497, %v515
        %v521 = vmul.f32 %v498, %v515
        %v522 = vmul.f32 %v499, %v515
        %v523 = vmul.f32 %v500, %v515
        %v524 = vmul.f32 %v501, %v515
        %v525 = vmul.f32 %v502, %v515
        %v526 = vmul.f32 %v503, %v515
        %v527 = vmul.f32 %v504, %v515
        %v528 = vmul.f32 %v505, %v515
        %v529 = vmul.f32 %v506, %v515
        %v530 = vmul.f32 %v507, %v515
        %v531 = vmul.f32 %v508, %v515
        %v532 = vmul.f32 %v509, %v515
        %v533 = vld [vmem:[%s2] sm:$0x1]
        %v535 = vlaneseq
        %v536 = vshrl.u32 %v535, 7
        %v537 = vsub.s32 0, %v536
        %v538 = vrot.slane %v533, %v537
        %v540 = vadd.f32 %v517, %v538
        %v541 = vadd.f32 %v518, %v538
        %v542 = vadd.f32 %v519, %v538
        %v543 = vadd.f32 %v520, %v538
        %v544 = vadd.f32 %v521, %v538
        %v545 = vadd.f32 %v522, %v538
        %v546 = vadd.f32 %v523, %v538
        %v547 = vadd.f32 %v524, %v538
        %v548 = vadd.f32 %v525, %v538
        %v549 = vadd.f32 %v526, %v538
        %v550 = vadd.f32 %v527, %v538
        %v551 = vadd.f32 %v528, %v538
        %v552 = vadd.f32 %v529, %v538
        %v553 = vadd.f32 %v530, %v538
        %v554 = vadd.f32 %v531, %v538
        %v555 = vadd.f32 %v532, %v538
        %v556 = vpack.c.bf16 %v541, %v540
        %v557 = vpack.c.bf16 %v543, %v542
        %v558 = vpack.c.bf16 %v545, %v544
        %v559 = vpack.c.bf16 %v547, %v546
        %v560 = vpack.c.bf16 %v549, %v548
        %v561 = vpack.c.bf16 %v551, %v550
        %v562 = vpack.c.bf16 %v553, %v552
        %v563 = vpack.c.bf16 %v555, %v554
        %v564 = vld [vmem:[%s272] sm:$0xff]
        %v565 = vld [vmem:[%s272 + $0x8] sm:$0xff]
        %v566 = vld [vmem:[%s272 + $0x10] sm:$0xff]
        %v567 = vld [vmem:[%s272 + $0x18] sm:$0xff]
        %v568 = vld [vmem:[%s272 + $0x20] sm:$0xff]
        %v569 = vld [vmem:[%s272 + $0x28] sm:$0xff]
        %v570 = vld [vmem:[%s272 + $0x30] sm:$0xff]
        %v571 = vld [vmem:[%s272 + $0x38] sm:$0xff]
        %v572 = vld [vmem:[%s272 + $0x40] sm:$0xff]
        %v573 = vld [vmem:[%s272 + $0x48] sm:$0xff]
        %v574 = vld [vmem:[%s272 + $0x50] sm:$0xff]
        %v575 = vld [vmem:[%s272 + $0x58] sm:$0xff]
        %v576 = vld [vmem:[%s272 + $0x60] sm:$0xff]
        %v577 = vld [vmem:[%s272 + $0x68] sm:$0xff]
        %v578 = vld [vmem:[%s272 + $0x70] sm:$0xff]
        %v579 = vld [vmem:[%s272 + $0x78] sm:$0xff]
        %v580 = vld [vmem:[%s312] sm:$0x3]
        %v582 = vlaneseq
        %v583 = vshrl.u32 %v582, 7
        %v584 = vsub.s32 0, %v583
        %v585 = vrot.slane %v580, %v584
        %v586 = vlaneseq
        %v587 = vshrl.u32 %v586, 7
        %v588 = vsub.s32 1, %v587
        %v589 = vrot.slane %v580, %v588
        %v608 = vunpack.c.l.b16 %v564
        %v609 = vunpack.c.h.b16 %v564
        %v610 = vunpack.c.l.b16 %v565
        %v611 = vunpack.c.h.b16 %v565
        %v612 = vunpack.c.l.b16 %v566
        %v613 = vunpack.c.h.b16 %v566
        %v614 = vunpack.c.l.b16 %v567
        %v615 = vunpack.c.h.b16 %v567
        %v616 = vunpack.c.l.b16 %v568
        %v617 = vunpack.c.h.b16 %v568
        %v618 = vunpack.c.l.b16 %v569
        %v619 = vunpack.c.h.b16 %v569
        %v620 = vunpack.c.l.b16 %v570
        %v621 = vunpack.c.h.b16 %v570
        %v622 = vunpack.c.l.b16 %v571
        %v623 = vunpack.c.h.b16 %v571
        %v624 = vunpack.c.l.b16 %v572
        %v625 = vunpack.c.h.b16 %v572
        %v626 = vunpack.c.l.b16 %v573
        %v627 = vunpack.c.h.b16 %v573
        %v628 = vunpack.c.l.b16 %v574
        %v629 = vunpack.c.h.b16 %v574
        %v630 = vunpack.c.l.b16 %v575
        %v631 = vunpack.c.h.b16 %v575
        %v632 = vunpack.c.l.b16 %v576
        %v633 = vunpack.c.h.b16 %v576
        %v634 = vunpack.c.l.b16 %v577
        %v635 = vunpack.c.h.b16 %v577
        %v636 = vunpack.c.l.b16 %v578
        %v637 = vunpack.c.h.b16 %v578
        %v638 = vunpack.c.l.b16 %v579
        %v639 = vunpack.c.h.b16 %v579
        %v640 = vpack.c.b16 %v610, %v608
        %v641 = vpack.c.b16 %v611, %v609
        %v642 = vpack.c.b16 %v614, %v612
        %v643 = vpack.c.b16 %v615, %v613
        %v644 = vpack.c.b16 %v618, %v616
        %v645 = vpack.c.b16 %v619, %v617
        %v646 = vpack.c.b16 %v622, %v620
        %v647 = vpack.c.b16 %v623, %v621
        %v648 = vpack.c.b16 %v626, %v624
        %v649 = vpack.c.b16 %v627, %v625
        %v650 = vpack.c.b16 %v630, %v628
        %v651 = vpack.c.b16 %v631, %v629
        %v652 = vpack.c.b16 %v634, %v632
        %v653 = vpack.c.b16 %v635, %v633
        %v654 = vpack.c.b16 %v638, %v636
        %v655 = vpack.c.b16 %v639, %v637
        %672 = vmatprep.subr.bf16.mxu0 %v641
        %673 = vmatpush1.bf16.msra.mxu0 %v640
        %674 = vmatprep.subr.bf16.mxu0 %v643
        %675 = vmatpush1.bf16.msra.mxu0 %v642
        %676 = vmatprep.subr.bf16.mxu0 %v645
        %677 = vmatpush1.bf16.msra.mxu0 %v644
        %678 = vmatprep.subr.bf16.mxu0 %v647
        %679 = vmatpush1.bf16.msra.mxu0 %v646
        %680 = vmatprep.subr.bf16.mxu0 %v649
        %681 = vmatpush1.bf16.msra.mxu0 %v648
        %682 = vmatprep.subr.bf16.mxu0 %v651
        %683 = vmatpush1.bf16.msra.mxu0 %v650
        %684 = vmatprep.subr.bf16.mxu0 %v653
        %685 = vmatpush1.bf16.msra.mxu0 %v652
        %686 = vmatprep.subr.bf16.mxu0 %v655
        %687 = vmatpush1.bf16.msra.mxu0 %v654
        %688 = vmatprep.subr.bf16.mxu0 0
        %689 = vmatpush1.bf16.msra.mxu0 0
        %690 = vmatprep.subr.bf16.mxu0 0
        %691 = vmatpush1.bf16.msra.mxu0 0
        %692 = vmatprep.subr.bf16.mxu0 0
        %693 = vmatpush1.bf16.msra.mxu0 0
        %694 = vmatprep.subr.bf16.mxu0 0
        %695 = vmatpush1.bf16.msra.mxu0 0
        %696 = vmatprep.subr.bf16.mxu0 0
        %697 = vmatpush1.bf16.msra.mxu0 0
        %698 = vmatprep.subr.bf16.mxu0 0
        %699 = vmatpush1.bf16.msra.mxu0 0
        %700 = vmatprep.subr.bf16.mxu0 0
        %701 = vmatpush1.bf16.msra.mxu0 0
        %702 = vmatprep.subr.bf16.mxu0 0
        %703 = vmatpush1.bf16.msra.mxu0 0
        %704 = vmatprep.mubr.bf16.mxu0 0
        %705 = vmatmul.mubr.bf16.gmra.mrb[0].mxu0 %v556
        %v706 = vpop.f32.mrb[0].mxu0
        %v707 = vadd.f32 %v585, %v706
        %v708 = vpop.f32.mrb[0].mxu0
        %v709 = vadd.f32 %v589, %v708
        %v710 = vpop.f32.mrb[0].mxu0
        %v711 = vadd.f32 %v585, %v710
        %v712 = vpop.f32.mrb[0].mxu0
        %v713 = vadd.f32 %v589, %v712
        %714 = vmatprep.mubr.bf16.mxu0 0
        %715 = vmatmul.mubr.bf16.gmra.mrb[0].mxu0 %v557
        %v716 = vpop.f32.mrb[0].mxu0
        %v717 = vadd.f32 %v585, %v716
        %v718 = vpop.f32.mrb[0].mxu0
        %v719 = vadd.f32 %v589, %v718
        %v720 = vpop.f32.mrb[0].mxu0
        %v721 = vadd.f32 %v585, %v720
        %v722 = vpop.f32.mrb[0].mxu0
        %v723 = vadd.f32 %v589, %v722
        %724 = vmatprep.mubr.bf16.mxu0 0
        %725 = vmatmul.mubr.bf16.gmra.mrb[0].mxu0 %v558
        %v726 = vpop.f32.mrb[0].mxu0
        %v727 = vadd.f32 %v585, %v726
        %v728 = vpop.f32.mrb[0].mxu0
        %v729 = vadd.f32 %v589, %v728
        %v730 = vpop.f32.mrb[0].mxu0
        %v731 = vadd.f32 %v585, %v730
        %v732 = vpop.f32.mrb[0].mxu0
        %v733 = vadd.f32 %v589, %v732
        %734 = vmatprep.mubr.bf16.mxu0 0
        %735 = vmatmul.mubr.bf16.gmra.mrb[0].mxu0 %v559
        %v736 = vpop.f32.mrb[0].mxu0
        %v737 = vadd.f32 %v585, %v736
        %v738 = vpop.f32.mrb[0].mxu0
        %v739 = vadd.f32 %v589, %v738
        %v740 = vpop.f32.mrb[0].mxu0
        %v741 = vadd.f32 %v585, %v740
        %v742 = vpop.f32.mrb[0].mxu0
        %v743 = vadd.f32 %v589, %v742
        %744 = vmatprep.mubr.bf16.mxu0 0
        %745 = vmatmul.mubr.bf16.gmra.mrb[0].mxu0 %v560
        %v746 = vpop.f32.mrb[0].mxu0
        %v747 = vadd.f32 %v585, %v746
        %v748 = vpop.f32.mrb[0].mxu0
        %v749 = vadd.f32 %v589, %v748
        %v750 = vpop.f32.mrb[0].mxu0
        %v751 = vadd.f32 %v585, %v750
        %v752 = vpop.f32.mrb[0].mxu0
        %v753 = vadd.f32 %v589, %v752
        %754 = vmatprep.mubr.bf16.mxu0 0
        %755 = vmatmul.mubr.bf16.gmra.mrb[0].mxu0 %v561
        %v756 = vpop.f32.mrb[0].mxu0
        %v757 = vadd.f32 %v585, %v756
        %v758 = vpop.f32.mrb[0].mxu0
        %v759 = vadd.f32 %v589, %v758
        %v760 = vpop.f32.mrb[0].mxu0
        %v761 = vadd.f32 %v585, %v760
        %v762 = vpop.f32.mrb[0].mxu0
        %v763 = vadd.f32 %v589, %v762
        %764 = vmatprep.mubr.bf16.mxu0 0
        %765 = vmatmul.mubr.bf16.gmra.mrb[0].mxu0 %v562
        %v766 = vpop.f32.mrb[0].mxu0
        %v767 = vadd.f32 %v585, %v766
        %v768 = vpop.f32.mrb[0].mxu0
        %v769 = vadd.f32 %v589, %v768
        %v770 = vpop.f32.mrb[0].mxu0
        %v771 = vadd.f32 %v585, %v770
        %v772 = vpop.f32.mrb[0].mxu0
        %v773 = vadd.f32 %v589, %v772
        %774 = vmatprep.mubr.bf16.mxu0 0
        %775 = vmatmul.mubr.bf16.gmra.mrb[0].mxu0 %v563
        %v776 = vpop.f32.mrb[0].mxu0
        %v777 = vadd.f32 %v585, %v776
        %v778 = vpop.f32.mrb[0].mxu0
        %v779 = vadd.f32 %v589, %v778
        %v780 = vpop.f32.mrb[0].mxu0
        %v781 = vadd.f32 %v585, %v780
        %v782 = vpop.f32.mrb[0].mxu0
        %v783 = vadd.f32 %v589, %v782
        %784 = vdwg.mxu0
        %v785 = vpack.c.bf16 %v711, %v707
        %v786 = vpack.c.bf16 %v713, %v709
        %v787 = vpack.c.bf16 %v721, %v717
        %v788 = vpack.c.bf16 %v723, %v719
        %v789 = vpack.c.bf16 %v731, %v727
        %v790 = vpack.c.bf16 %v733, %v729
        %v791 = vpack.c.bf16 %v741, %v737
        %v792 = vpack.c.bf16 %v743, %v739
        %v793 = vpack.c.bf16 %v751, %v747
        %v794 = vpack.c.bf16 %v753, %v749
        %v795 = vpack.c.bf16 %v761, %v757
        %v796 = vpack.c.bf16 %v763, %v759
        %v797 = vpack.c.bf16 %v771, %v767
        %v798 = vpack.c.bf16 %v773, %v769
        %v799 = vpack.c.bf16 %v781, %v777
        %v800 = vpack.c.bf16 %v783, %v779
        %v817 = vunpack.c.l.b16 %v785
        %v818 = vunpack.c.l.b16 %v786
        %v819 = vunpack.c.h.b16 %v785
        %v820 = vunpack.c.h.b16 %v786
        %v821 = vunpack.c.l.b16 %v787
        %v822 = vunpack.c.l.b16 %v788
        %v823 = vunpack.c.h.b16 %v787
        %v824 = vunpack.c.h.b16 %v788
        %v825 = vunpack.c.l.b16 %v789
        %v826 = vunpack.c.l.b16 %v790
        %v827 = vunpack.c.h.b16 %v789
        %v828 = vunpack.c.h.b16 %v790
        %v829 = vunpack.c.l.b16 %v791
        %v830 = vunpack.c.l.b16 %v792
        %v831 = vunpack.c.h.b16 %v791
        %v832 = vunpack.c.h.b16 %v792
        %v833 = vunpack.c.l.b16 %v793
        %v834 = vunpack.c.l.b16 %v794
        %v835 = vunpack.c.h.b16 %v793
        %v836 = vunpack.c.h.b16 %v794
        %v837 = vunpack.c.l.b16 %v795
        %v838 = vunpack.c.l.b16 %v796
        %v839 = vunpack.c.h.b16 %v795
        %v840 = vunpack.c.h.b16 %v796
        %v841 = vunpack.c.l.b16 %v797
        %v842 = vunpack.c.l.b16 %v798
        %v843 = vunpack.c.h.b16 %v797
        %v844 = vunpack.c.h.b16 %v798
        %v845 = vunpack.c.l.b16 %v799
        %v846 = vunpack.c.l.b16 %v800
        %v847 = vunpack.c.h.b16 %v799
        %v848 = vunpack.c.h.b16 %v800
        %v849 = vpack.c.b16 %v818, %v817
        %v850 = vpack.c.b16 %v820, %v819
        %v851 = vpack.c.b16 %v822, %v821
        %v852 = vpack.c.b16 %v824, %v823
        %v853 = vpack.c.b16 %v826, %v825
        %v854 = vpack.c.b16 %v828, %v827
        %v855 = vpack.c.b16 %v830, %v829
        %v856 = vpack.c.b16 %v832, %v831
        %v857 = vpack.c.b16 %v834, %v833
        %v858 = vpack.c.b16 %v836, %v835
        %v859 = vpack.c.b16 %v838, %v837
        %v860 = vpack.c.b16 %v840, %v839
        %v861 = vpack.c.b16 %v842, %v841
        %v862 = vpack.c.b16 %v844, %v843
        %v863 = vpack.c.b16 %v846, %v845
        %v864 = vpack.c.b16 %v848, %v847
        %881 = vst [vmem:[%s306] sm:$0xff] %v849
        %882 = vst [vmem:[%s306 + $0x8] sm:$0xff] %v850
        %883 = vst [vmem:[%s306 + $0x10] sm:$0xff] %v851
        %884 = vst [vmem:[%s306 + $0x18] sm:$0xff] %v852
        %885 = vst [vmem:[%s306 + $0x20] sm:$0xff] %v853
        %886 = vst [vmem:[%s306 + $0x28] sm:$0xff] %v854
        %887 = vst [vmem:[%s306 + $0x30] sm:$0xff] %v855
        %888 = vst [vmem:[%s306 + $0x38] sm:$0xff] %v856
        %889 = vst [vmem:[%s306 + $0x40] sm:$0xff] %v857
        %890 = vst [vmem:[%s306 + $0x48] sm:$0xff] %v858
        %891 = vst [vmem:[%s306 + $0x50] sm:$0xff] %v859
        %892 = vst [vmem:[%s306 + $0x58] sm:$0xff] %v860
        %893 = vst [vmem:[%s306 + $0x60] sm:$0xff] %v861
        %894 = vst [vmem:[%s306 + $0x68] sm:$0xff] %v862
        %895 = vst [vmem:[%s306 + $0x70] sm:$0xff] %v863
        %896 = vst [vmem:[%s306 + $0x78] sm:$0xff] %v864
        %s897 = sand.u32 %s164, 1
        %s898 = sand.u32 %s164, 1
        %s899 = smul.addr %s898, 128
        %s900 = scalar_lea.vmem [#allocation6], %s899
        // Predicated region
        $region49: #{vision_encoder_forward.11} parent=39 // pred_check
          %p901 = pneg %p174
        $region50: #{vision_encoder_forward.11} parent=39 // pred_check_branch
          %903 = sbr.rel (%p901) target = $region52
        $region51: #{vision_encoder_forward.11} parent=39 // pred_region
          %s904 = smul.u32 16, %s26
          %s905 = smul.u32 2, %s27
          %s906 = smul.addr %s904, 6
          %s907 = sadd.s32 %s905, %s906
          %s908 = smul.addr %s907, 4
          %s909 = scalar_lea.vmem %s5, %s908
          // Predicated region
          $region53: #{vision_encoder_forward.11} parent=51 // pred_check
            _
          $region54: #{vision_encoder_forward.11} parent=51 // pred_check_branch
            %911 = sbr.rel (0) target = $region56
          $region55: #{vision_encoder_forward.11} parent=51 // pred_region
            // Predicated region
            $region57: #{vision_encoder_forward.11} parent=55 // pred_check
              _
            $region58: #{vision_encoder_forward.11} parent=55 // pred_check_branch
              %913 = sbr.rel (0) target = $region60
            $region59: #{vision_encoder_forward.11} parent=55 // pred_region
              // Predicated region
              $region72: #{vision_encoder_forward.11} parent=59 // pred_check
                _
              $region73: #{vision_encoder_forward.11} parent=59 // pred_check_branch
                %958 = sbr.rel (0) target = $region75
              $region74: #{vision_encoder_forward.11} parent=59 // pred_region
                loop: start=0, step=1, limit=1
                $region76: #{vision_encoder_forward.11} parent=74 // loop_pre_header
                  _
                $region77: #{vision_encoder_forward.11} parent=74 // loop_header
                  %s960 = sphi 0, %s964
                  %p961 = scmp.ge.s32.totalorder %s960, 1
                  %s965 = sphi %s900, %s900
                  %s966 = sphi %s909, %s909
                $region78: #{vision_encoder_forward.11} parent=74 // loop_header_branch
                  %963 = sbr.rel (%p961) target = $region82
                $region79: #{vision_encoder_forward.11} parent=74 // loop_body
                  %v967 = vld [vmem:[%s965] sm:$0xff]
                  %968 = vst [vmem:[%s966] sm:$0xff] %v967
                  %v969 = vld [vmem:[%s965 + $0x8] sm:$0xff]
                  %970 = vst [vmem:[%s966 + $0x18] sm:$0xff] %v969
                  %v971 = vld [vmem:[%s965 + $0x10] sm:$0xff]
                  %972 = vst [vmem:[%s966 + $0x30] sm:$0xff] %v971
                  %v973 = vld [vmem:[%s965 + $0x18] sm:$0xff]
                  %974 = vst [vmem:[%s966 + $0x48] sm:$0xff] %v973
                  %v975 = vld [vmem:[%s965 + $0x20] sm:$0xff]
                  %976 = vst [vmem:[%s966 + $0x60] sm:$0xff] %v975
                  %v977 = vld [vmem:[%s965 + $0x28] sm:$0xff]
                  %978 = vst [vmem:[%s966 + $0x78] sm:$0xff] %v977
                  %v979 = vld [vmem:[%s965 + $0x30] sm:$0xff]
                  %980 = vst [vmem:[%s966 + $0x90] sm:$0xff] %v979
                  %v981 = vld [vmem:[%s965 + $0x38] sm:$0xff]
                  %982 = vst [vmem:[%s966 + $0xa8] sm:$0xff] %v981
                  %v983 = vld [vmem:[%s965 + $0x40] sm:$0xff]
                  %984 = vst [vmem:[%s966 + $0xc0] sm:$0xff] %v983
                  %v985 = vld [vmem:[%s965 + $0x48] sm:$0xff]
                  %986 = vst [vmem:[%s966 + $0xd8] sm:$0xff] %v985
                  %v987 = vld [vmem:[%s965 + $0x50] sm:$0xff]
                  %988 = vst [vmem:[%s966 + $0xf0] sm:$0xff] %v987
                  %v989 = vld [vmem:[%s965 + $0x58] sm:$0xff]
                  %990 = vst [vmem:[%s966 + $0x108] sm:$0xff] %v989
                  %v991 = vld [vmem:[%s965 + $0x60] sm:$0xff]
                  %992 = vst [vmem:[%s966 + $0x120] sm:$0xff] %v991
                  %v993 = vld [vmem:[%s965 + $0x68] sm:$0xff]
                  %994 = vst [vmem:[%s966 + $0x138] sm:$0xff] %v993
                  %v995 = vld [vmem:[%s965 + $0x70] sm:$0xff]
                  %996 = vst [vmem:[%s966 + $0x150] sm:$0xff] %v995
                  %v997 = vld [vmem:[%s965 + $0x78] sm:$0xff]
                  %998 = vst [vmem:[%s966 + $0x168] sm:$0xff] %v997
                $region80: #{vision_encoder_forward.11} parent=74 // loop_footer
                  %s964 = sadd.s32 1, %s960
                $region81: #{vision_encoder_forward.11} parent=74 // loop_footer_branch
                  %959 = sbr.rel target = $region77
                $region82: #{vision_encoder_forward.11} parent=74 // loop_exit
                  _
              $region75: #{vision_encoder_forward.11} parent=59 // pred_fallthru
                _
              // Predicated region
              $region83: #{vision_encoder_forward.11} parent=59 // pred_check
                _
              $region84: #{vision_encoder_forward.11} parent=59 // pred_check_branch
                %1000 = sbr.rel target = $region86
              $region85: #{vision_encoder_forward.11} parent=59 // pred_region
                _
              $region86: #{vision_encoder_forward.11} parent=59 // pred_fallthru
                _
            $region60: #{vision_encoder_forward.11} parent=55 // pred_fallthru
              _
            // Predicated region
            $region61: #{vision_encoder_forward.11} parent=55 // pred_check
              _
            $region62: #{vision_encoder_forward.11} parent=55 // pred_check_branch
              %915 = sbr.rel target = $region64
            $region63: #{vision_encoder_forward.11} parent=55 // pred_region
              loop: start=0, step=1, limit=1
              $region65: #{vision_encoder_forward.11} parent=63 // loop_pre_header
                _
              $region66: #{vision_encoder_forward.11} parent=63 // loop_header
                %s918 = sphi 0, %s922
                %p919 = scmp.ge.s32.totalorder %s918, 1
                %s923 = sphi %s900, %s900
                %s924 = sphi %s909, %s909
              $region67: #{vision_encoder_forward.11} parent=63 // loop_header_branch
                %921 = sbr.rel (%p919) target = $region71
              $region68: #{vision_encoder_forward.11} parent=63 // loop_body
                %v925 = vld [vmem:[%s923] sm:$0xff]
                %926 = vst [vmem:[%s924] sm:$0xff] %v925
                %v927 = vld [vmem:[%s923 + $0x8] sm:$0xff]
                %928 = vst [vmem:[%s924 + $0x18] sm:$0xff] %v927
                %v929 = vld [vmem:[%s923 + $0x10] sm:$0xff]
                %930 = vst [vmem:[%s924 + $0x30] sm:$0xff] %v929
                %v931 = vld [vmem:[%s923 + $0x18] sm:$0xff]
                %932 = vst [vmem:[%s924 + $0x48] sm:$0xff] %v931
                %v933 = vld [vmem:[%s923 + $0x20] sm:$0xff]
                %934 = vst [vmem:[%s924 + $0x60] sm:$0xff] %v933
                %v935 = vld [vmem:[%s923 + $0x28] sm:$0xff]
                %936 = vst [vmem:[%s924 + $0x78] sm:$0xff] %v935
                %v937 = vld [vmem:[%s923 + $0x30] sm:$0xff]
                %938 = vst [vmem:[%s924 + $0x90] sm:$0xff] %v937
                %v939 = vld [vmem:[%s923 + $0x38] sm:$0xff]
                %940 = vst [vmem:[%s924 + $0xa8] sm:$0xff] %v939
                %v941 = vld [vmem:[%s923 + $0x40] sm:$0xff]
                %942 = vst [vmem:[%s924 + $0xc0] sm:$0xff] %v941
                %v943 = vld [vmem:[%s923 + $0x48] sm:$0xff]
                %944 = vst [vmem:[%s924 + $0xd8] sm:$0xff] %v943
                %v945 = vld [vmem:[%s923 + $0x50] sm:$0xff]
                %946 = vst [vmem:[%s924 + $0xf0] sm:$0xff] %v945
                %v947 = vld [vmem:[%s923 + $0x58] sm:$0xff]
                %948 = vst [vmem:[%s924 + $0x108] sm:$0xff] %v947
                %v949 = vld [vmem:[%s923 + $0x60] sm:$0xff]
                %950 = vst [vmem:[%s924 + $0x120] sm:$0xff] %v949
                %v951 = vld [vmem:[%s923 + $0x68] sm:$0xff]
                %952 = vst [vmem:[%s924 + $0x138] sm:$0xff] %v951
                %v953 = vld [vmem:[%s923 + $0x70] sm:$0xff]
                %954 = vst [vmem:[%s924 + $0x150] sm:$0xff] %v953
                %v955 = vld [vmem:[%s923 + $0x78] sm:$0xff]
                %956 = vst [vmem:[%s924 + $0x168] sm:$0xff] %v955
              $region69: #{vision_encoder_forward.11} parent=63 // loop_footer
                %s922 = sadd.s32 1, %s918
              $region70: #{vision_encoder_forward.11} parent=63 // loop_footer_branch
                %917 = sbr.rel target = $region66
              $region71: #{vision_encoder_forward.11} parent=63 // loop_exit
                _
            $region64: #{vision_encoder_forward.11} parent=55 // pred_fallthru
              _
          $region56: #{vision_encoder_forward.11} parent=51 // pred_fallthru
            _
          %1001 = vnop
        $region52: #{vision_encoder_forward.11} parent=39 // pred_fallthru
          _
      $region40: #{vision_encoder_forward.11} parent=5 // pred_fallthru
        _
      %p1002 = scmp.le.s32.totalorder 2, %s17
      // Predicated region
      $region87: #{vision_encoder_forward.11} parent=5 // pred_check
        %p1003 = pneg %p1002
      $region88: #{vision_encoder_forward.11} parent=5 // pred_check_branch
        %1005 = sbr.rel (%p1003) target = $region90
      $region89: #{vision_encoder_forward.11} parent=5 // pred_region
        %s1006 = ssub.s32 %s17, 2
        // Predicated region
        $region91: #{vision_encoder_forward.11} parent=89 // pred_check
          %p1007 = pneg %p180
        $region92: #{vision_encoder_forward.11} parent=89 // pred_check_branch
          %1009 = sbr.rel (%p1007) target = $region94
        $region93: #{vision_encoder_forward.11} parent=89 // pred_region
          %s1010 = sand.u32 %s165, 1
          %s1011 = sand.u32 %s165, 1
          %s1012 = smul.addr %s1011, 128
          %s1013 = scalar_lea.vmem [#allocation6], %s1012
        $region94: #{vision_encoder_forward.11} parent=89 // pred_fallthru
          _
      $region90: #{vision_encoder_forward.11} parent=5 // pred_fallthru
        _
    $region6: #{vision_encoder_forward.11} parent=1 // loop_footer
      %s21 = sadd.s32 1, %s17
    $region7: #{vision_encoder_forward.11} parent=1 // loop_footer_branch
      %16 = sbr.rel target = $region3
    $region8: #{vision_encoder_forward.11} parent=1 // loop_exit
      _
    %1014 = vsyncpa [#allocation3], 1
    %s1015 = scalar_lea.sflag [#allocation3], 1
    %1016 = vsyncpa %s1015, 1
    %1017 = vsyncpa [#allocation5], 1
    %s1018 = scalar_lea.sflag [#allocation5], 1
    %1019 = vsyncpa %s1018, 1

// kernel: vision_encoder_forward.14
$region0: #{vision_encoder_forward.14}
  #allocation0 [shape = 'u32[]', space=smem, size = 0x4, offset = 0x4, fixed_abs, tag = 'smem constant byte address 0x4 - core index']
  #allocation1 [shape = 'u32[144,128]{1,0:T(1,128)}', space=vmem, size = 0x12000, scoped, tag = 'internal scratch']
  %s0 = inlined_call_operand.vmem [shape: f32[512,128], index: 0, kind: input, shape index: {}]
  %s1 = inlined_call_operand.vmem [shape: f32[1,128], index: 1, kind: input, shape index: {}]
  %s2 = inlined_call_operand.vmem [shape: f32[1,128], index: 2, kind: input, shape index: {}]
  %s3 = inlined_call_operand.vmem [shape: bf16[128,512], index: 3, kind: input, shape index: {}]
  %s4 = inlined_call_operand.vmem [shape: f32[1,512], index: 4, kind: input, shape index: {}]
  %s5 = inlined_call_operand.vmem [shape: bf16[512,512], index: 5, kind: output, shape index: {}]
  %s6 = sld [smem:[#allocation0]]
  $region125: #{vision_encoder_forward.14} parent=0
    _
  %s8 = ssub.s32 1, %s6
  %s9 = scalar_select 0, %s8, %s6
  $region1: #{vision_encoder_forward.14} parent=0
    #allocation2 [shape = 'u8[131072]{0}', space=vmem, size = 0x20000, scoped, tag = 'input window, operand 3']
    #allocation3 [shape = 'u8[131072]{0}', space=vmem, size = 0x20000, scoped, tag = 'output window, operand 0']
    loop: start=0, step=1, limit=10
    $region2: #{vision_encoder_forward.14} parent=1 // loop_pre_header
      _
    $region3: #{vision_encoder_forward.14} parent=1 // loop_header
      %s11 = sphi 0, %s15
      %p12 = scmp.ge.s32.totalorder %s11, 10
      %s18 = sphi 0, %s30
      %s19 = sphi 0, %s26
      %s20 = sphi 0, %s18
      %s21 = sphi 0, %s19
      %s22 = sphi 0, %s20
      %s23 = sphi 0, %s21
      %s33 = sphi 0, %s35
      %s36 = sphi 0, %s33
      %s37 = sphi 0, %s36
      %s53 = sphi 0, %s37
      %s57 = sphi 0, %s57
      %s59 = sphi 0, %s57
      %s60 = sphi 0, %s59
      %s74 = sphi 0, %s60
      %s78 = sphi 0, %s78
      %s80 = sphi 0, %s78
      %s81 = sphi 0, %s80
      %s95 = sphi 0, %s81
      %s101 = sphi 0, %s103
      %s104 = sphi 0, %s101
      %s105 = sphi 0, %s104
      %s121 = sphi 0, %s105
      %s127 = sphi 0, %s129
      %s130 = sphi 0, %s127
      %s131 = sphi 0, %s130
      %s147 = sphi 0, %s131
      %s155 = sphi 0, %s157
      %s158 = sphi 0, %s155
      %s159 = sphi 0, %s158
      %s175 = sphi 0, %s159
    $region4: #{vision_encoder_forward.14} parent=1 // loop_header_branch
      %14 = sbr.rel (%p12) target = $region8
    $region5: #{vision_encoder_forward.14} parent=1 // loop_body
      %s16 = ssub.s32 %s11, 1
      %s17 = ssub.s32 %s11, 2
      %s24 = sadd.s32 1, %s19
      %p25 = scmp.ge.s32.totalorder %s24, 2
      %s26 = scalar_select %p25, 0, %s24
      %s27 = sadd.s32 1, %s18
      %s28 = scalar_select %p25, %s27, %s18
      %p29 = scmp.ge.s32.totalorder %s28, 4
      %s30 = scalar_select %p29, 0, %s28
      %s31 = ssub.s32 %s18, %s30
      %p32 = scmp.eq.s32.totalorder %s31, 0
      %s34 = sadd.s32 %s33, 1
      %s35 = scalar_select %p32, %s33, %s34
      %p38 = pneg %p32
      %p39 = scmp.eq.s32.totalorder %s11, 7
      %p40 = por %p38, %p39
      %p41 = scmp.ne.s32.totalorder %s33, %s36
      %p42 = scmp.eq.s32.totalorder %s11, 0
      %p43 = por %p41, %p42
      %p44 = scmp.ne.s32.totalorder %s33, %s36
      %p45 = scmp.eq.s32.totalorder %s16, 7
      %p46 = por %p44, %p45
      %p47 = scmp.ne.s32.totalorder %s36, %s37
      %p48 = scmp.eq.s32.totalorder %s16, 0
      %p49 = por %p47, %p48
      %p50 = scmp.ne.s32.totalorder %s36, %s37
      %p51 = scmp.eq.s32.totalorder %s17, 7
      %p52 = por %p50, %p51
      %p54 = scmp.ne.s32.totalorder %s37, %s53
      %p55 = scmp.eq.s32.totalorder %s17, 0
      %p56 = por %p54, %p55
      %s58 = sadd.s32 %s57, 1
      %p61 = scmp.eq.s32.totalorder %s11, 7
      %p62 = scmp.ne.s32.totalorder %s57, %s59
      %p63 = scmp.eq.s32.totalorder %s11, 0
      %p64 = por %p62, %p63
      %p65 = scmp.ne.s32.totalorder %s57, %s59
      %p66 = scmp.eq.s32.totalorder %s16, 7
      %p67 = por %p65, %p66
      %p68 = scmp.ne.s32.totalorder %s59, %s60
      %p69 = scmp.eq.s32.totalorder %s16, 0
      %p70 = por %p68, %p69
      %p71 = scmp.ne.s32.totalorder %s59, %s60
      %p72 = scmp.eq.s32.totalorder %s17, 7
      %p73 = por %p71, %p72
      %p75 = scmp.ne.s32.totalorder %s60, %s74
      %p76 = scmp.eq.s32.totalorder %s17, 0
      %p77 = por %p75, %p76
      %s79 = sadd.s32 %s78, 1
      %p82 = scmp.eq.s32.totalorder %s11, 7
      %p83 = scmp.ne.s32.totalorder %s78, %s80
      %p84 = scmp.eq.s32.totalorder %s11, 0
      %p85 = por %p83, %p84
      %p86 = scmp.ne.s32.totalorder %s78, %s80
      %p87 = scmp.eq.s32.totalorder %s16, 7
      %p88 = por %p86, %p87
      %p89 = scmp.ne.s32.totalorder %s80, %s81
      %p90 = scmp.eq.s32.totalorder %s16, 0
      %p91 = por %p89, %p90
      %p92 = scmp.ne.s32.totalorder %s80, %s81
      %p93 = scmp.eq.s32.totalorder %s17, 7
      %p94 = por %p92, %p93
      %p96 = scmp.ne.s32.totalorder %s81, %s95
      %p97 = scmp.eq.s32.totalorder %s17, 0
      %p98 = por %p96, %p97
      %s99 = ssub.s32 %s19, %s26
      %p100 = scmp.eq.s32.totalorder %s99, 0
      %s102 = sadd.s32 %s101, 1
      %s103 = scalar_select %p100, %s101, %s102
      %p106 = pneg %p100
      %p107 = scmp.eq.s32.totalorder %s11, 7
      %p108 = por %p106, %p107
      %p109 = scmp.ne.s32.totalorder %s101, %s104
      %p110 = scmp.eq.s32.totalorder %s11, 0
      %p111 = por %p109, %p110
      %p112 = scmp.ne.s32.totalorder %s101, %s104
      %p113 = scmp.eq.s32.totalorder %s16, 7
      %p114 = por %p112, %p113
      %p115 = scmp.ne.s32.totalorder %s104, %s105
      %p116 = scmp.eq.s32.totalorder %s16, 0
      %p117 = por %p115, %p116
      %p118 = scmp.ne.s32.totalorder %s104, %s105
      %p119 = scmp.eq.s32.totalorder %s17, 7
      %p120 = por %p118, %p119
      %p122 = scmp.ne.s32.totalorder %s105, %s121
      %p123 = scmp.eq.s32.totalorder %s17, 0
      %p124 = por %p122, %p123
      %s125 = ssub.s32 %s19, %s26
      %p126 = scmp.eq.s32.totalorder %s125, 0
      %s128 = sadd.s32 %s127, 1
      %s129 = scalar_select %p126, %s127, %s128
      %p132 = pneg %p126
      %p133 = scmp.eq.s32.totalorder %s11, 7
      %p134 = por %p132, %p133
      %p135 = scmp.ne.s32.totalorder %s127, %s130
      %p136 = scmp.eq.s32.totalorder %s11, 0
      %p137 = por %p135, %p136
      %p138 = scmp.ne.s32.totalorder %s127, %s130
      %p139 = scmp.eq.s32.totalorder %s16, 7
      %p140 = por %p138, %p139
      %p141 = scmp.ne.s32.totalorder %s130, %s131
      %p142 = scmp.eq.s32.totalorder %s16, 0
      %p143 = por %p141, %p142
      %p144 = scmp.ne.s32.totalorder %s130, %s131
      %p145 = scmp.eq.s32.totalorder %s17, 7
      %p146 = por %p144, %p145
      %p148 = scmp.ne.s32.totalorder %s131, %s147
      %p149 = scmp.eq.s32.totalorder %s17, 0
      %p150 = por %p148, %p149
      %s151 = ssub.s32 %s18, %s30
      %s152 = ssub.s32 %s19, %s26
      %s153 = sor.u32 %s151, %s152
      %p154 = scmp.eq.s32.totalorder %s153, 0
      %s156 = sadd.s32 %s155, 1
      %s157 = scalar_select %p154, %s155, %s156
      %p160 = pneg %p154
      %p161 = scmp.eq.s32.totalorder %s11, 7
      %p162 = por %p160, %p161
      %p163 = scmp.ne.s32.totalorder %s155, %s158
      %p164 = scmp.eq.s32.totalorder %s11, 0
      %p165 = por %p163, %p164
      %p166 = scmp.ne.s32.totalorder %s155, %s158
      %p167 = scmp.eq.s32.totalorder %s16, 7
      %p168 = por %p166, %p167
      %p169 = scmp.ne.s32.totalorder %s158, %s159
      %p170 = scmp.eq.s32.totalorder %s16, 0
      %p171 = por %p169, %p170
      %p172 = scmp.ne.s32.totalorder %s158, %s159
      %p173 = scmp.eq.s32.totalorder %s17, 7
      %p174 = por %p172, %p173
      %p176 = scmp.ne.s32.totalorder %s159, %s175
      %p177 = scmp.eq.s32.totalorder %s17, 0
      %p178 = por %p176, %p177
      %p179 = scmp.le.s32.totalorder 1, %s11
      %p180 = scmp.lt.s32.totalorder %s11, 9
      %p181 = pnand %p179, %p180
      %p182 = pneg %p181
      // Predicated region
      $region9: #{vision_encoder_forward.14} parent=5 // pred_check
        _
      $region10: #{vision_encoder_forward.14} parent=5 // pred_check_branch
        %184 = sbr.rel (%p181) target = $region12
      $region11: #{vision_encoder_forward.14} parent=5 // pred_region
        %s185 = ssub.s32 %s11, 1
        // Predicated region
        $region13: #{vision_encoder_forward.14} parent=11 // pred_check
          %p186 = pneg %p70
        $region14: #{vision_encoder_forward.14} parent=11 // pred_check_branch
          %188 = sbr.rel (%p186) target = $region16
        $region15: #{vision_encoder_forward.14} parent=11 // pred_region
          _
        $region16: #{vision_encoder_forward.14} parent=11 // pred_fallthru
          _
        // Predicated region
        $region17: #{vision_encoder_forward.14} parent=11 // pred_check
          %p189 = pneg %p91
        $region18: #{vision_encoder_forward.14} parent=11 // pred_check_branch
          %191 = sbr.rel (%p189) target = $region20
        $region19: #{vision_encoder_forward.14} parent=11 // pred_region
          _
        $region20: #{vision_encoder_forward.14} parent=11 // pred_fallthru
          _
      $region12: #{vision_encoder_forward.14} parent=5 // pred_fallthru
        _
      %p192 = scmp.lt.s32.totalorder %s11, 8
      // Predicated region
      $region21: #{vision_encoder_forward.14} parent=5 // pred_check
        %p193 = pneg %p192
      $region22: #{vision_encoder_forward.14} parent=5 // pred_check_branch
        %195 = sbr.rel (%p193) target = $region24
      $region23: #{vision_encoder_forward.14} parent=5 // pred_region
        // Predicated region
        $region25: #{vision_encoder_forward.14} parent=23 // pred_check
          %p196 = pneg %p43
        $region26: #{vision_encoder_forward.14} parent=23 // pred_check_branch
          %198 = sbr.rel (%p196) target = $region28
        $region27: #{vision_encoder_forward.14} parent=23 // pred_region
          %s199 = smul.u32 16, %s18
          %p200 = scmp.lt.s32.totalorder %s199, 63
          %s201 = scalar_select %p200, %s199, 63
          %s202 = smul.addr %s201, 8
          %s203 = scalar_lea.vmem %s0, %s202
          %s204 = smul.u32 16, %s18
        $region28: #{vision_encoder_forward.14} parent=23 // pred_fallthru
          _
        // Predicated region
        $region29: #{vision_encoder_forward.14} parent=23 // pred_check
          %p205 = pneg %p111
        $region30: #{vision_encoder_forward.14} parent=23 // pred_check_branch
          %207 = sbr.rel (%p205) target = $region32
        $region31: #{vision_encoder_forward.14} parent=23 // pred_region
          %s208 = sand.u32 %s101, 1
          %s209 = sand.u32 %s101, 1
          %s210 = smul.addr %s209, 128
          %s211 = scalar_lea.vmem [#allocation2], %s210
          %s212 = smul.u32 2, %s19
          %s213 = smul.addr %s212, 4
          %s214 = scalar_lea.vmem %s3, %s213
          // Predicated region
          $region33: #{vision_encoder_forward.14} parent=31 // pred_check
            _
          $region34: #{vision_encoder_forward.14} parent=31 // pred_check_branch
            %216 = sbr.rel (0) target = $region36
          $region35: #{vision_encoder_forward.14} parent=31 // pred_region
            // Predicated region
            $region37: #{vision_encoder_forward.14} parent=35 // pred_check
              _
            $region38: #{vision_encoder_forward.14} parent=35 // pred_check_branch
              %218 = sbr.rel (0) target = $region40
            $region39: #{vision_encoder_forward.14} parent=35 // pred_region
              // Predicated region
              $region52: #{vision_encoder_forward.14} parent=39 // pred_check
                _
              $region53: #{vision_encoder_forward.14} parent=39 // pred_check_branch
                %263 = sbr.rel (0) target = $region55
              $region54: #{vision_encoder_forward.14} parent=39 // pred_region
                loop: start=0, step=1, limit=1
                $region56: #{vision_encoder_forward.14} parent=54 // loop_pre_header
                  _
                $region57: #{vision_encoder_forward.14} parent=54 // loop_header
                  %s265 = sphi 0, %s269
                  %p266 = scmp.ge.s32.totalorder %s265, 1
                  %s270 = sphi %s214, %s214
                  %s271 = sphi %s211, %s211
                $region58: #{vision_encoder_forward.14} parent=54 // loop_header_branch
                  %268 = sbr.rel (%p266) target = $region62
                $region59: #{vision_encoder_forward.14} parent=54 // loop_body
                  %v272 = vld [vmem:[%s270] sm:$0xff]
                  %273 = vst [vmem:[%s271] sm:$0xff] %v272
                  %v274 = vld [vmem:[%s270 + $0x10] sm:$0xff]
                  %275 = vst [vmem:[%s271 + $0x8] sm:$0xff] %v274
                  %v276 = vld [vmem:[%s270 + $0x20] sm:$0xff]
                  %277 = vst [vmem:[%s271 + $0x10] sm:$0xff] %v276
                  %v278 = vld [vmem:[%s270 + $0x30] sm:$0xff]
                  %279 = vst [vmem:[%s271 + $0x18] sm:$0xff] %v278
                  %v280 = vld [vmem:[%s270 + $0x40] sm:$0xff]
                  %281 = vst [vmem:[%s271 + $0x20] sm:$0xff] %v280
                  %v282 = vld [vmem:[%s270 + $0x50] sm:$0xff]
                  %283 = vst [vmem:[%s271 + $0x28] sm:$0xff] %v282
                  %v284 = vld [vmem:[%s270 + $0x60] sm:$0xff]
                  %285 = vst [vmem:[%s271 + $0x30] sm:$0xff] %v284
                  %v286 = vld [vmem:[%s270 + $0x70] sm:$0xff]
                  %287 = vst [vmem:[%s271 + $0x38] sm:$0xff] %v286
                  %v288 = vld [vmem:[%s270 + $0x80] sm:$0xff]
                  %289 = vst [vmem:[%s271 + $0x40] sm:$0xff] %v288
                  %v290 = vld [vmem:[%s270 + $0x90] sm:$0xff]
                  %291 = vst [vmem:[%s271 + $0x48] sm:$0xff] %v290
                  %v292 = vld [vmem:[%s270 + $0xa0] sm:$0xff]
                  %293 = vst [vmem:[%s271 + $0x50] sm:$0xff] %v292
                  %v294 = vld [vmem:[%s270 + $0xb0] sm:$0xff]
                  %295 = vst [vmem:[%s271 + $0x58] sm:$0xff] %v294
                  %v296 = vld [vmem:[%s270 + $0xc0] sm:$0xff]
                  %297 = vst [vmem:[%s271 + $0x60] sm:$0xff] %v296
                  %v298 = vld [vmem:[%s270 + $0xd0] sm:$0xff]
                  %299 = vst [vmem:[%s271 + $0x68] sm:$0xff] %v298
                  %v300 = vld [vmem:[%s270 + $0xe0] sm:$0xff]
                  %301 = vst [vmem:[%s271 + $0x70] sm:$0xff] %v300
                  %v302 = vld [vmem:[%s270 + $0xf0] sm:$0xff]
                  %303 = vst [vmem:[%s271 + $0x78] sm:$0xff] %v302
                $region60: #{vision_encoder_forward.14} parent=54 // loop_footer
                  %s269 = sadd.s32 1, %s265
                $region61: #{vision_encoder_forward.14} parent=54 // loop_footer_branch
                  %264 = sbr.rel target = $region57
                $region62: #{vision_encoder_forward.14} parent=54 // loop_exit
                  _
              $region55: #{vision_encoder_forward.14} parent=39 // pred_fallthru
                _
              // Predicated region
              $region63: #{vision_encoder_forward.14} parent=39 // pred_check
                _
              $region64: #{vision_encoder_forward.14} parent=39 // pred_check_branch
                %305 = sbr.rel target = $region66
              $region65: #{vision_encoder_forward.14} parent=39 // pred_region
                _
              $region66: #{vision_encoder_forward.14} parent=39 // pred_fallthru
                _
            $region40: #{vision_encoder_forward.14} parent=35 // pred_fallthru
              _
            // Predicated region
            $region41: #{vision_encoder_forward.14} parent=35 // pred_check
              _
            $region42: #{vision_encoder_forward.14} parent=35 // pred_check_branch
              %220 = sbr.rel target = $region44
            $region43: #{vision_encoder_forward.14} parent=35 // pred_region
              loop: start=0, step=1, limit=1
              $region45: #{vision_encoder_forward.14} parent=43 // loop_pre_header
                _
              $region46: #{vision_encoder_forward.14} parent=43 // loop_header
                %s223 = sphi 0, %s227
                %p224 = scmp.ge.s32.totalorder %s223, 1
                %s228 = sphi %s214, %s214
                %s229 = sphi %s211, %s211
              $region47: #{vision_encoder_forward.14} parent=43 // loop_header_branch
                %226 = sbr.rel (%p224) target = $region51
              $region48: #{vision_encoder_forward.14} parent=43 // loop_body
                %v230 = vld [vmem:[%s228] sm:$0xff]
                %231 = vst [vmem:[%s229] sm:$0xff] %v230
                %v232 = vld [vmem:[%s228 + $0x10] sm:$0xff]
                %233 = vst [vmem:[%s229 + $0x8] sm:$0xff] %v232
                %v234 = vld [vmem:[%s228 + $0x20] sm:$0xff]
                %235 = vst [vmem:[%s229 + $0x10] sm:$0xff] %v234
                %v236 = vld [vmem:[%s228 + $0x30] sm:$0xff]
                %237 = vst [vmem:[%s229 + $0x18] sm:$0xff] %v236
                %v238 = vld [vmem:[%s228 + $0x40] sm:$0xff]
                %239 = vst [vmem:[%s229 + $0x20] sm:$0xff] %v238
                %v240 = vld [vmem:[%s228 + $0x50] sm:$0xff]
                %241 = vst [vmem:[%s229 + $0x28] sm:$0xff] %v240
                %v242 = vld [vmem:[%s228 + $0x60] sm:$0xff]
                %243 = vst [vmem:[%s229 + $0x30] sm:$0xff] %v242
                %v244 = vld [vmem:[%s228 + $0x70] sm:$0xff]
                %245 = vst [vmem:[%s229 + $0x38] sm:$0xff] %v244
                %v246 = vld [vmem:[%s228 + $0x80] sm:$0xff]
                %247 = vst [vmem:[%s229 + $0x40] sm:$0xff] %v246
                %v248 = vld [vmem:[%s228 + $0x90] sm:$0xff]
                %249 = vst [vmem:[%s229 + $0x48] sm:$0xff] %v248
                %v250 = vld [vmem:[%s228 + $0xa0] sm:$0xff]
                %251 = vst [vmem:[%s229 + $0x50] sm:$0xff] %v250
                %v252 = vld [vmem:[%s228 + $0xb0] sm:$0xff]
                %253 = vst [vmem:[%s229 + $0x58] sm:$0xff] %v252
                %v254 = vld [vmem:[%s228 + $0xc0] sm:$0xff]
                %255 = vst [vmem:[%s229 + $0x60] sm:$0xff] %v254
                %v256 = vld [vmem:[%s228 + $0xd0] sm:$0xff]
                %257 = vst [vmem:[%s229 + $0x68] sm:$0xff] %v256
                %v258 = vld [vmem:[%s228 + $0xe0] sm:$0xff]
                %259 = vst [vmem:[%s229 + $0x70] sm:$0xff] %v258
                %v260 = vld [vmem:[%s228 + $0xf0] sm:$0xff]
                %261 = vst [vmem:[%s229 + $0x78] sm:$0xff] %v260
              $region49: #{vision_encoder_forward.14} parent=43 // loop_footer
                %s227 = sadd.s32 1, %s223
              $region50: #{vision_encoder_forward.14} parent=43 // loop_footer_branch
                %222 = sbr.rel target = $region46
              $region51: #{vision_encoder_forward.14} parent=43 // loop_exit
                _
            $region44: #{vision_encoder_forward.14} parent=35 // pred_fallthru
              _
          $region36: #{vision_encoder_forward.14} parent=31 // pred_fallthru
            _
          %306 = vnop
        $region32: #{vision_encoder_forward.14} parent=23 // pred_fallthru
          _
        // Predicated region
        $region67: #{vision_encoder_forward.14} parent=23 // pred_check
          %p307 = pneg %p137
        $region68: #{vision_encoder_forward.14} parent=23 // pred_check_branch
          %309 = sbr.rel (%p307) target = $region70
        $region69: #{vision_encoder_forward.14} parent=23 // pred_region
          %s310 = smul.u32 2, %s19
          %p311 = scmp.lt.s32.totalorder %s310, 3
          %s312 = scalar_select %p311, %s310, 3
          %s313 = scalar_lea.vmem %s4, %s312
          %s314 = smul.u32 2, %s19
        $region70: #{vision_encoder_forward.14} parent=23 // pred_fallthru
          _
      $region24: #{vision_encoder_forward.14} parent=5 // pred_fallthru
        _
      %p315 = scmp.le.s32.totalorder 1, %s11
      %p316 = scmp.lt.s32.totalorder %s11, 9
      %p317 = pnand %p315, %p316
      %p318 = pneg %p317
      // Predicated region
      $region71: #{vision_encoder_forward.14} parent=5 // pred_check
        _
      $region72: #{vision_encoder_forward.14} parent=5 // pred_check_branch
        %320 = sbr.rel (%p317) target = $region74
      $region73: #{vision_encoder_forward.14} parent=5 // pred_region
        %s321 = ssub.s32 %s11, 1
        %s322 = sand.u32 %s104, 1
        %s323 = sand.u32 %s104, 1
        %s324 = smul.addr %s323, 128
        %s325 = scalar_lea.vmem [#allocation2], %s324
        // Predicated region
        $region75: #{vision_encoder_forward.14} parent=73 // pred_check
          %p326 = pneg %p117
        $region76: #{vision_encoder_forward.14} parent=73 // pred_check_branch
          %328 = sbr.rel (%p326) target = $region78
        $region77: #{vision_encoder_forward.14} parent=73 // pred_region
          _
        $region78: #{vision_encoder_forward.14} parent=73 // pred_fallthru
          _
        %s329 = smul.u32 16, %s20
        %p330 = scmp.lt.s32.totalorder %s329, 63
        %s331 = scalar_select %p330, %s329, 63
        %s332 = smul.addr %s331, 8
        %s333 = scalar_lea.vmem %s0, %s332
        %p334 = pneg %p49
        %p335 = pneg %p46
        %p336 = pneg %p70
        %p337 = pneg %p67
        %p338 = pneg %p91
        %p339 = pneg %p88
        %s340 = sand.u32 %s104, 1
        %s341 = sand.u32 %s104, 1
        %s342 = smul.addr %s341, 128
        %s343 = scalar_lea.vmem [#allocation2], %s342
        %p344 = pneg %p117
        %p345 = pneg %p114
        %s346 = smul.u32 2, %s21
        %p347 = scmp.lt.s32.totalorder %s346, 3
        %s348 = scalar_select %p347, %s346, 3
        %s349 = scalar_lea.vmem %s4, %s348
        %p350 = pneg %p143
        %p351 = pneg %p140
        %p352 = pneg %p171
        %p353 = pneg %p168
        %s354 = sand.u32 %s158, 1
        %s355 = sand.u32 %s158, 1
        %s356 = smul.addr %s355, 128
        %s357 = scalar_lea.vmem [#allocation3], %s356
        %s358 = smul.u32 16, %s20
        %p359 = scmp.lt.s32.totalorder %s358, 63
        %s360 = scalar_select %p359, %s358, 63
        %s361 = smul.addr %s360, 8
        %s362 = scalar_lea.vmem %s0, %s361
        %s363 = smul.u32 16, %s20
        %s364 = smul.u32 2, %s21
        %s365 = smul.u32 2, %s21
        %p366 = scmp.lt.s32.totalorder %s365, 3
        %s367 = scalar_select %p366, %s365, 3
        %s368 = scalar_lea.vmem %s4, %s367
        %s369 = smul.u32 2, %s21
        %s370 = smul.u32 16, %s20
        %s371 = smul.u32 2, %s21
        %v373 = vld [vmem:[%s362] sm:$0xff]
        %v374 = vld [vmem:[%s362 + $0x8] sm:$0xff]
        %v375 = vld [vmem:[%s362 + $0x10] sm:$0xff]
        %v376 = vld [vmem:[%s362 + $0x18] sm:$0xff]
        %v377 = vld [vmem:[%s362 + $0x20] sm:$0xff]
        %v378 = vld [vmem:[%s362 + $0x28] sm:$0xff]
        %v379 = vld [vmem:[%s362 + $0x30] sm:$0xff]
        %v380 = vld [vmem:[%s362 + $0x38] sm:$0xff]
        %v381 = vld [vmem:[%s362 + $0x40] sm:$0xff]
        %v382 = vld [vmem:[%s362 + $0x48] sm:$0xff]
        %v383 = vld [vmem:[%s362 + $0x50] sm:$0xff]
        %v384 = vld [vmem:[%s362 + $0x58] sm:$0xff]
        %v385 = vld [vmem:[%s362 + $0x60] sm:$0xff]
        %v386 = vld [vmem:[%s362 + $0x68] sm:$0xff]
        %v387 = vld [vmem:[%s362 + $0x70] sm:$0xff]
        %v388 = vld [vmem:[%s362 + $0x78] sm:$0xff]
        %389 = vadd.xlane.f32.xlu0 %v373
        %v390 = vpop.xlane.xlu0 %389
        %391 = vadd.xlane.f32.xlu0 %v374
        %v392 = vpop.xlane.xlu0 %391
        %393 = vadd.xlane.f32.xlu0 %v375
        %v394 = vpop.xlane.xlu0 %393
        %395 = vadd.xlane.f32.xlu0 %v376
        %v396 = vpop.xlane.xlu0 %395
        %397 = vadd.xlane.f32.xlu0 %v377
        %v398 = vpop.xlane.xlu0 %397
        %399 = vadd.xlane.f32.xlu0 %v378
        %v400 = vpop.xlane.xlu0 %399
        %401 = vadd.xlane.f32.xlu0 %v379
        %v402 = vpop.xlane.xlu0 %401
        %403 = vadd.xlane.f32.xlu0 %v380
        %v404 = vpop.xlane.xlu0 %403
        %405 = vadd.xlane.f32.xlu0 %v381
        %v406 = vpop.xlane.xlu0 %405
        %407 = vadd.xlane.f32.xlu0 %v382
        %v408 = vpop.xlane.xlu0 %407
        %409 = vadd.xlane.f32.xlu0 %v383
        %v410 = vpop.xlane.xlu0 %409
        %411 = vadd.xlane.f32.xlu0 %v384
        %v412 = vpop.xlane.xlu0 %411
        %413 = vadd.xlane.f32.xlu0 %v385
        %v414 = vpop.xlane.xlu0 %413
        %415 = vadd.xlane.f32.xlu0 %v386
        %v416 = vpop.xlane.xlu0 %415
        %417 = vadd.xlane.f32.xlu0 %v387
        %v418 = vpop.xlane.xlu0 %417
        %419 = vadd.xlane.f32.xlu0 %v388
        %v420 = vpop.xlane.xlu0 %419
        %v421 = vrcp.pop 128.0
        %v422 = vmul.f32 %v390, %v421
        %v423 = vmul.f32 %v392, %v421
        %v424 = vmul.f32 %v394, %v421
        %v425 = vmul.f32 %v396, %v421
        %v426 = vmul.f32 %v398, %v421
        %v427 = vmul.f32 %v400, %v421
        %v428 = vmul.f32 %v402, %v421
        %v429 = vmul.f32 %v404, %v421
        %v430 = vmul.f32 %v406, %v421
        %v431 = vmul.f32 %v408, %v421
        %v432 = vmul.f32 %v410, %v421
        %v433 = vmul.f32 %v412, %v421
        %v434 = vmul.f32 %v414, %v421
        %v435 = vmul.f32 %v416, %v421
        %v436 = vmul.f32 %v418, %v421
        %v437 = vmul.f32 %v420, %v421
        %v438 = vsub.f32 %v373, %v422
        %v439 = vsub.f32 %v374, %v423
        %v440 = vsub.f32 %v375, %v424
        %v441 = vsub.f32 %v376, %v425
        %v442 = vsub.f32 %v377, %v426
        %v443 = vsub.f32 %v378, %v427
        %v444 = vsub.f32 %v379, %v428
        %v445 = vsub.f32 %v380, %v429
        %v446 = vsub.f32 %v381, %v430
        %v447 = vsub.f32 %v382, %v431
        %v448 = vsub.f32 %v383, %v432
        %v449 = vsub.f32 %v384, %v433
        %v450 = vsub.f32 %v385, %v434
        %v451 = vsub.f32 %v386, %v435
        %v452 = vsub.f32 %v387, %v436
        %v453 = vsub.f32 %v388, %v437
        %v454 = vmul.f32 %v438, %v438
        %v455 = vmul.f32 %v439, %v439
        %v456 = vmul.f32 %v440, %v440
        %v457 = vmul.f32 %v441, %v441
        %v458 = vmul.f32 %v442, %v442
        %v459 = vmul.f32 %v443, %v443
        %v460 = vmul.f32 %v444, %v444
        %v461 = vmul.f32 %v445, %v445
        %v462 = vmul.f32 %v446, %v446
        %v463 = vmul.f32 %v447, %v447
        %v464 = vmul.f32 %v448, %v448
        %v465 = vmul.f32 %v449, %v449
        %v466 = vmul.f32 %v450, %v450
        %v467 = vmul.f32 %v451, %v451
        %v468 = vmul.f32 %v452, %v452
        %v469 = vmul.f32 %v453, %v453
        %470 = vadd.xlane.f32.xlu0 %v454
        %v471 = vpop.xlane.xlu0 %470
        %472 = vadd.xlane.f32.xlu0 %v455
        %v473 = vpop.xlane.xlu0 %472
        %474 = vadd.xlane.f32.xlu0 %v456
        %v475 = vpop.xlane.xlu0 %474
        %476 = vadd.xlane.f32.xlu0 %v457
        %v477 = vpop.xlane.xlu0 %476
        %478 = vadd.xlane.f32.xlu0 %v458
        %v479 = vpop.xlane.xlu0 %478
        %480 = vadd.xlane.f32.xlu0 %v459
        %v481 = vpop.xlane.xlu0 %480
        %482 = vadd.xlane.f32.xlu0 %v460
        %v483 = vpop.xlane.xlu0 %482
        %484 = vadd.xlane.f32.xlu0 %v461
        %v485 = vpop.xlane.xlu0 %484
        %486 = vadd.xlane.f32.xlu0 %v462
        %v487 = vpop.xlane.xlu0 %486
        %488 = vadd.xlane.f32.xlu0 %v463
        %v489 = vpop.xlane.xlu0 %488
        %490 = vadd.xlane.f32.xlu0 %v464
        %v491 = vpop.xlane.xlu0 %490
        %492 = vadd.xlane.f32.xlu0 %v465
        %v493 = vpop.xlane.xlu0 %492
        %494 = vadd.xlane.f32.xlu0 %v466
        %v495 = vpop.xlane.xlu0 %494
        %496 = vadd.xlane.f32.xlu0 %v467
        %v497 = vpop.xlane.xlu0 %496
        %498 = vadd.xlane.f32.xlu0 %v468
        %v499 = vpop.xlane.xlu0 %498
        %500 = vadd.xlane.f32.xlu0 %v469
        %v501 = vpop.xlane.xlu0 %500
        %v502 = vmul.f32 %v471, %v421
        %v503 = vmul.f32 %v473, %v421
        %v504 = vmul.f32 %v475, %v421
        %v505 = vmul.f32 %v477, %v421
        %v506 = vmul.f32 %v479, %v421
        %v507 = vmul.f32 %v481, %v421
        %v508 = vmul.f32 %v483, %v421
        %v509 = vmul.f32 %v485, %v421
        %v510 = vmul.f32 %v487, %v421
        %v511 = vmul.f32 %v489, %v421
        %v512 = vmul.f32 %v491, %v421
        %v513 = vmul.f32 %v493, %v421
        %v514 = vmul.f32 %v495, %v421
        %v515 = vmul.f32 %v497, %v421
        %v516 = vmul.f32 %v499, %v421
        %v517 = vmul.f32 %v501, %v421
        %v518 = vadd.f32 %v502, 1e-05
        %v519 = vadd.f32 %v503, 1e-05
        %v520 = vadd.f32 %v504, 1e-05
        %v521 = vadd.f32 %v505, 1e-05
        %v522 = vadd.f32 %v506, 1e-05
        %v523 = vadd.f32 %v507, 1e-05
        %v524 = vadd.f32 %v508, 1e-05
        %v525 = vadd.f32 %v509, 1e-05
        %v526 = vadd.f32 %v510, 1e-05
        %v527 = vadd.f32 %v511, 1e-05
        %v528 = vadd.f32 %v512, 1e-05
        %v529 = vadd.f32 %v513, 1e-05
        %v530 = vadd.f32 %v514, 1e-05
        %v531 = vadd.f32 %v515, 1e-05
        %v532 = vadd.f32 %v516, 1e-05
        %v533 = vadd.f32 %v517, 1e-05
        %v534 = vrsqrt.pop %v518
        %v535 = vrsqrt.pop %v519
        %v536 = vrsqrt.pop %v520
        %v537 = vrsqrt.pop %v521
        %v538 = vrsqrt.pop %v522
        %v539 = vrsqrt.pop %v523
        %v540 = vrsqrt.pop %v524
        %v541 = vrsqrt.pop %v525
        %v542 = vrsqrt.pop %v526
        %v543 = vrsqrt.pop %v527
        %v544 = vrsqrt.pop %v528
        %v545 = vrsqrt.pop %v529
        %v546 = vrsqrt.pop %v530
        %v547 = vrsqrt.pop %v531
        %v548 = vrsqrt.pop %v532
        %v549 = vrsqrt.pop %v533
        %v550 = vmul.f32 %v438, %v534
        %v551 = vmul.f32 %v439, %v535
        %v552 = vmul.f32 %v440, %v536
        %v553 = vmul.f32 %v441, %v537
        %v554 = vmul.f32 %v442, %v538
        %v555 = vmul.f32 %v443, %v539
        %v556 = vmul.f32 %v444, %v540
        %v557 = vmul.f32 %v445, %v541
        %v558 = vmul.f32 %v446, %v542
        %v559 = vmul.f32 %v447, %v543
        %v560 = vmul.f32 %v448, %v544
        %v561 = vmul.f32 %v449, %v545
        %v562 = vmul.f32 %v450, %v546
        %v563 = vmul.f32 %v451, %v547
        %v564 = vmul.f32 %v452, %v548
        %v565 = vmul.f32 %v453, %v549
        %v566 = vld [vmem:[%s1] sm:$0x1]
        %v568 = vlaneseq
        %v569 = vshrl.u32 %v568, 7
        %v570 = vsub.s32 0, %v569
        %v571 = vrot.slane %v566, %v570
        %v573 = vmul.f32 %v550, %v571
        %v574 = vmul.f32 %v551, %v571
        %v575 = vmul.f32 %v552, %v571
        %v576 = vmul.f32 %v553, %v571
        %v577 = vmul.f32 %v554, %v571
        %v578 = vmul.f32 %v555, %v571
        %v579 = vmul.f32 %v556, %v571
        %v580 = vmul.f32 %v557, %v571
        %v581 = vmul.f32 %v558, %v571
        %v582 = vmul.f32 %v559, %v571
        %v583 = vmul.f32 %v560, %v571
        %v584 = vmul.f32 %v561, %v571
        %v585 = vmul.f32 %v562, %v571
        %v586 = vmul.f32 %v563, %v571
        %v587 = vmul.f32 %v564, %v571
        %v588 = vmul.f32 %v565, %v571
        %v589 = vld [vmem:[%s2] sm:$0x1]
        %v591 = vlaneseq
        %v592 = vshrl.u32 %v591, 7
        %v593 = vsub.s32 0, %v592
        %v594 = vrot.slane %v589, %v593
        %v596 = vadd.f32 %v573, %v594
        %v597 = vadd.f32 %v574, %v594
        %v598 = vadd.f32 %v575, %v594
        %v599 = vadd.f32 %v576, %v594
        %v600 = vadd.f32 %v577, %v594
        %v601 = vadd.f32 %v578, %v594
        %v602 = vadd.f32 %v579, %v594
        %v603 = vadd.f32 %v580, %v594
        %v604 = vadd.f32 %v581, %v594
        %v605 = vadd.f32 %v582, %v594
        %v606 = vadd.f32 %v583, %v594
        %v607 = vadd.f32 %v584, %v594
        %v608 = vadd.f32 %v585, %v594
        %v609 = vadd.f32 %v586, %v594
        %v610 = vadd.f32 %v587, %v594
        %v611 = vadd.f32 %v588, %v594
        %v612 = vpack.c.bf16 %v597, %v596
        %v613 = vpack.c.bf16 %v599, %v598
        %v614 = vpack.c.bf16 %v601, %v600
        %v615 = vpack.c.bf16 %v603, %v602
        %v616 = vpack.c.bf16 %v605, %v604
        %v617 = vpack.c.bf16 %v607, %v606
        %v618 = vpack.c.bf16 %v609, %v608
        %v619 = vpack.c.bf16 %v611, %v610
        %v620 = vld [vmem:[%s325] sm:$0xff]
        %v621 = vld [vmem:[%s325 + $0x8] sm:$0xff]
        %v622 = vld [vmem:[%s325 + $0x10] sm:$0xff]
        %v623 = vld [vmem:[%s325 + $0x18] sm:$0xff]
        %v624 = vld [vmem:[%s325 + $0x20] sm:$0xff]
        %v625 = vld [vmem:[%s325 + $0x28] sm:$0xff]
        %v626 = vld [vmem:[%s325 + $0x30] sm:$0xff]
        %v627 = vld [vmem:[%s325 + $0x38] sm:$0xff]
        %v628 = vld [vmem:[%s325 + $0x40] sm:$0xff]
        %v629 = vld [vmem:[%s325 + $0x48] sm:$0xff]
        %v630 = vld [vmem:[%s325 + $0x50] sm:$0xff]
        %v631 = vld [vmem:[%s325 + $0x58] sm:$0xff]
        %v632 = vld [vmem:[%s325 + $0x60] sm:$0xff]
        %v633 = vld [vmem:[%s325 + $0x68] sm:$0xff]
        %v634 = vld [vmem:[%s325 + $0x70] sm:$0xff]
        %v635 = vld [vmem:[%s325 + $0x78] sm:$0xff]
        %v636 = vld [vmem:[%s368] sm:$0x3]
        %v638 = vlaneseq
        %v639 = vshrl.u32 %v638, 7
        %v640 = vsub.s32 0, %v639
        %v641 = vrot.slane %v636, %v640
        %v642 = vlaneseq
        %v643 = vshrl.u32 %v642, 7
        %v644 = vsub.s32 1, %v643
        %v645 = vrot.slane %v636, %v644
        %v664 = vunpack.c.l.b16 %v620
        %v665 = vunpack.c.h.b16 %v620
        %v666 = vunpack.c.l.b16 %v621
        %v667 = vunpack.c.h.b16 %v621
        %v668 = vunpack.c.l.b16 %v622
        %v669 = vunpack.c.h.b16 %v622
        %v670 = vunpack.c.l.b16 %v623
        %v671 = vunpack.c.h.b16 %v623
        %v672 = vunpack.c.l.b16 %v624
        %v673 = vunpack.c.h.b16 %v624
        %v674 = vunpack.c.l.b16 %v625
        %v675 = vunpack.c.h.b16 %v625
        %v676 = vunpack.c.l.b16 %v626
        %v677 = vunpack.c.h.b16 %v626
        %v678 = vunpack.c.l.b16 %v627
        %v679 = vunpack.c.h.b16 %v627
        %v680 = vunpack.c.l.b16 %v628
        %v681 = vunpack.c.h.b16 %v628
        %v682 = vunpack.c.l.b16 %v629
        %v683 = vunpack.c.h.b16 %v629
        %v684 = vunpack.c.l.b16 %v630
        %v685 = vunpack.c.h.b16 %v630
        %v686 = vunpack.c.l.b16 %v631
        %v687 = vunpack.c.h.b16 %v631
        %v688 = vunpack.c.l.b16 %v632
        %v689 = vunpack.c.h.b16 %v632
        %v690 = vunpack.c.l.b16 %v633
        %v691 = vunpack.c.h.b16 %v633
        %v692 = vunpack.c.l.b16 %v634
        %v693 = vunpack.c.h.b16 %v634
        %v694 = vunpack.c.l.b16 %v635
        %v695 = vunpack.c.h.b16 %v635
        %v696 = vpack.c.b16 %v666, %v664
        %v697 = vpack.c.b16 %v667, %v665
        %v698 = vpack.c.b16 %v670, %v668
        %v699 = vpack.c.b16 %v671, %v669
        %v700 = vpack.c.b16 %v674, %v672
        %v701 = vpack.c.b16 %v675, %v673
        %v702 = vpack.c.b16 %v678, %v676
        %v703 = vpack.c.b16 %v679, %v677
        %v704 = vpack.c.b16 %v682, %v680
        %v705 = vpack.c.b16 %v683, %v681
        %v706 = vpack.c.b16 %v686, %v684
        %v707 = vpack.c.b16 %v687, %v685
        %v708 = vpack.c.b16 %v690, %v688
        %v709 = vpack.c.b16 %v691, %v689
        %v710 = vpack.c.b16 %v694, %v692
        %v711 = vpack.c.b16 %v695, %v693
        %728 = vmatprep.subr.bf16.mxu0 %v697
        %729 = vmatpush1.bf16.msra.mxu0 %v696
        %730 = vmatprep.subr.bf16.mxu0 %v699
        %731 = vmatpush1.bf16.msra.mxu0 %v698
        %732 = vmatprep.subr.bf16.mxu0 %v701
        %733 = vmatpush1.bf16.msra.mxu0 %v700
        %734 = vmatprep.subr.bf16.mxu0 %v703
        %735 = vmatpush1.bf16.msra.mxu0 %v702
        %736 = vmatprep.subr.bf16.mxu0 %v705
        %737 = vmatpush1.bf16.msra.mxu0 %v704
        %738 = vmatprep.subr.bf16.mxu0 %v707
        %739 = vmatpush1.bf16.msra.mxu0 %v706
        %740 = vmatprep.subr.bf16.mxu0 %v709
        %741 = vmatpush1.bf16.msra.mxu0 %v708
        %742 = vmatprep.subr.bf16.mxu0 %v711
        %743 = vmatpush1.bf16.msra.mxu0 %v710
        %744 = vmatprep.subr.bf16.mxu0 0
        %745 = vmatpush1.bf16.msra.mxu0 0
        %746 = vmatprep.subr.bf16.mxu0 0
        %747 = vmatpush1.bf16.msra.mxu0 0
        %748 = vmatprep.subr.bf16.mxu0 0
        %749 = vmatpush1.bf16.msra.mxu0 0
        %750 = vmatprep.subr.bf16.mxu0 0
        %751 = vmatpush1.bf16.msra.mxu0 0
        %752 = vmatprep.subr.bf16.mxu0 0
        %753 = vmatpush1.bf16.msra.mxu0 0
        %754 = vmatprep.subr.bf16.mxu0 0
        %755 = vmatpush1.bf16.msra.mxu0 0
        %756 = vmatprep.subr.bf16.mxu0 0
        %757 = vmatpush1.bf16.msra.mxu0 0
        %758 = vmatprep.subr.bf16.mxu0 0
        %759 = vmatpush1.bf16.msra.mxu0 0
        %760 = vmatprep.mubr.bf16.mxu0 0
        %761 = vmatmul.mubr.bf16.gmra.mrb[0].mxu0 %v612
        %v762 = vpop.f32.mrb[0].mxu0
        %v763 = vadd.f32 %v641, %v762
        %v764 = vpop.f32.mrb[0].mxu0
        %v765 = vadd.f32 %v645, %v764
        %v766 = vpop.f32.mrb[0].mxu0
        %v767 = vadd.f32 %v641, %v766
        %v768 = vpop.f32.mrb[0].mxu0
        %v769 = vadd.f32 %v645, %v768
        %770 = vmatprep.mubr.bf16.mxu0 0
        %771 = vmatmul.mubr.bf16.gmra.mrb[0].mxu0 %v613
        %v772 = vpop.f32.mrb[0].mxu0
        %v773 = vadd.f32 %v641, %v772
        %v774 = vpop.f32.mrb[0].mxu0
        %v775 = vadd.f32 %v645, %v774
        %v776 = vpop.f32.mrb[0].mxu0
        %v777 = vadd.f32 %v641, %v776
        %v778 = vpop.f32.mrb[0].mxu0
        %v779 = vadd.f32 %v645, %v778
        %780 = vmatprep.mubr.bf16.mxu0 0
        %781 = vmatmul.mubr.bf16.gmra.mrb[0].mxu0 %v614
        %v782 = vpop.f32.mrb[0].mxu0
        %v783 = vadd.f32 %v641, %v782
        %v784 = vpop.f32.mrb[0].mxu0
        %v785 = vadd.f32 %v645, %v784
        %v786 = vpop.f32.mrb[0].mxu0
        %v787 = vadd.f32 %v641, %v786
        %v788 = vpop.f32.mrb[0].mxu0
        %v789 = vadd.f32 %v645, %v788
        %790 = vmatprep.mubr.bf16.mxu0 0
        %791 = vmatmul.mubr.bf16.gmra.mrb[0].mxu0 %v615
        %v792 = vpop.f32.mrb[0].mxu0
        %v793 = vadd.f32 %v641, %v792
        %v794 = vpop.f32.mrb[0].mxu0
        %v795 = vadd.f32 %v645, %v794
        %v796 = vpop.f32.mrb[0].mxu0
        %v797 = vadd.f32 %v641, %v796
        %v798 = vpop.f32.mrb[0].mxu0
        %v799 = vadd.f32 %v645, %v798
        %800 = vmatprep.mubr.bf16.mxu0 0
        %801 = vmatmul.mubr.bf16.gmra.mrb[0].mxu0 %v616
        %v802 = vpop.f32.mrb[0].mxu0
        %v803 = vadd.f32 %v641, %v802
        %v804 = vpop.f32.mrb[0].mxu0
        %v805 = vadd.f32 %v645, %v804
        %v806 = vpop.f32.mrb[0].mxu0
        %v807 = vadd.f32 %v641, %v806
        %v808 = vpop.f32.mrb[0].mxu0
        %v809 = vadd.f32 %v645, %v808
        %810 = vmatprep.mubr.bf16.mxu0 0
        %811 = vmatmul.mubr.bf16.gmra.mrb[0].mxu0 %v617
        %v812 = vpop.f32.mrb[0].mxu0
        %v813 = vadd.f32 %v641, %v812
        %v814 = vpop.f32.mrb[0].mxu0
        %v815 = vadd.f32 %v645, %v814
        %v816 = vpop.f32.mrb[0].mxu0
        %v817 = vadd.f32 %v641, %v816
        %v818 = vpop.f32.mrb[0].mxu0
        %v819 = vadd.f32 %v645, %v818
        %820 = vmatprep.mubr.bf16.mxu0 0
        %821 = vmatmul.mubr.bf16.gmra.mrb[0].mxu0 %v618
        %v822 = vpop.f32.mrb[0].mxu0
        %v823 = vadd.f32 %v641, %v822
        %v824 = vpop.f32.mrb[0].mxu0
        %v825 = vadd.f32 %v645, %v824
        %v826 = vpop.f32.mrb[0].mxu0
        %v827 = vadd.f32 %v641, %v826
        %v828 = vpop.f32.mrb[0].mxu0
        %v829 = vadd.f32 %v645, %v828
        %830 = vmatprep.mubr.bf16.mxu0 0
        %831 = vmatmul.mubr.bf16.gmra.mrb[0].mxu0 %v619
        %v832 = vpop.f32.mrb[0].mxu0
        %v833 = vadd.f32 %v641, %v832
        %v834 = vpop.f32.mrb[0].mxu0
        %v835 = vadd.f32 %v645, %v834
        %v836 = vpop.f32.mrb[0].mxu0
        %v837 = vadd.f32 %v641, %v836
        %v838 = vpop.f32.mrb[0].mxu0
        %v839 = vadd.f32 %v645, %v838
        %840 = vdwg.mxu0
        %v841 = vmul.f32 %v763, %v763
        %v842 = vmul.f32 %v765, %v765
        %v843 = vmul.f32 %v767, %v767
        %v844 = vmul.f32 %v769, %v769
        %v845 = vmul.f32 %v773, %v773
        %v846 = vmul.f32 %v775, %v775
        %v847 = vmul.f32 %v777, %v777
        %v848 = vmul.f32 %v779, %v779
        %v849 = vmul.f32 %v783, %v783
        %v850 = vmul.f32 %v785, %v785
        %v851 = vmul.f32 %v787, %v787
        %v852 = vmul.f32 %v789, %v789
        %v853 = vmul.f32 %v793, %v793
        %v854 = vmul.f32 %v795, %v795
        %v855 = vmul.f32 %v797, %v797
        %v856 = vmul.f32 %v799, %v799
        %v857 = vmul.f32 %v803, %v803
        %v858 = vmul.f32 %v805, %v805
        %v859 = vmul.f32 %v807, %v807
        %v860 = vmul.f32 %v809, %v809
        %v861 = vmul.f32 %v813, %v813
        %v862 = vmul.f32 %v815, %v815
        %v863 = vmul.f32 %v817, %v817
        %v864 = vmul.f32 %v819, %v819
        %v865 = vmul.f32 %v823, %v823
        %v866 = vmul.f32 %v825, %v825
        %v867 = vmul.f32 %v827, %v827
        %v868 = vmul.f32 %v829, %v829
        %v869 = vmul.f32 %v833, %v833
        %v870 = vmul.f32 %v835, %v835
        %v871 = vmul.f32 %v837, %v837
        %v872 = vmul.f32 %v839, %v839
        %v873 = vmul.f32 %v763, %v841
        %v874 = vmul.f32 %v765, %v842
        %v875 = vmul.f32 %v767, %v843
        %v876 = vmul.f32 %v769, %v844
        %v877 = vmul.f32 %v773, %v845
        %v878 = vmul.f32 %v775, %v846
        %v879 = vmul.f32 %v777, %v847
        %v880 = vmul.f32 %v779, %v848
        %v881 = vmul.f32 %v783, %v849
        %v882 = vmul.f32 %v785, %v850
        %v883 = vmul.f32 %v787, %v851
        %v884 = vmul.f32 %v789, %v852
        %v885 = vmul.f32 %v793, %v853
        %v886 = vmul.f32 %v795, %v854
        %v887 = vmul.f32 %v797, %v855
        %v888 = vmul.f32 %v799, %v856
        %v889 = vmul.f32 %v803, %v857
        %v890 = vmul.f32 %v805, %v858
        %v891 = vmul.f32 %v807, %v859
        %v892 = vmul.f32 %v809, %v860
        %v893 = vmul.f32 %v813, %v861
        %v894 = vmul.f32 %v815, %v862
        %v895 = vmul.f32 %v817, %v863
        %v896 = vmul.f32 %v819, %v864
        %v897 = vmul.f32 %v823, %v865
        %v898 = vmul.f32 %v825, %v866
        %v899 = vmul.f32 %v827, %v867
        %v900 = vmul.f32 %v829, %v868
        %v901 = vmul.f32 %v833, %v869
        %v902 = vmul.f32 %v835, %v870
        %v903 = vmul.f32 %v837, %v871
        %v904 = vmul.f32 %v839, %v872
        %v905 = vmul.f32 %v873, 0.044715
        %v906 = vmul.f32 %v874, 0.044715
        %v907 = vmul.f32 %v875, 0.044715
        %v908 = vmul.f32 %v876, 0.044715
        %v909 = vmul.f32 %v877, 0.044715
        %v910 = vmul.f32 %v878, 0.044715
        %v911 = vmul.f32 %v879, 0.044715
        %v912 = vmul.f32 %v880, 0.044715
        %v913 = vmul.f32 %v881, 0.044715
        %v914 = vmul.f32 %v882, 0.044715
        %v915 = vmul.f32 %v883, 0.044715
        %v916 = vmul.f32 %v884, 0.044715
        %v917 = vmul.f32 %v885, 0.044715
        %v918 = vmul.f32 %v886, 0.044715
        %v919 = vmul.f32 %v887, 0.044715
        %v920 = vmul.f32 %v888, 0.044715
        %v921 = vmul.f32 %v889, 0.044715
        %v922 = vmul.f32 %v890, 0.044715
        %v923 = vmul.f32 %v891, 0.044715
        %v924 = vmul.f32 %v892, 0.044715
        %v925 = vmul.f32 %v893, 0.044715
        %v926 = vmul.f32 %v894, 0.044715
        %v927 = vmul.f32 %v895, 0.044715
        %v928 = vmul.f32 %v896, 0.044715
        %v929 = vmul.f32 %v897, 0.044715
        %v930 = vmul.f32 %v898, 0.044715
        %v931 = vmul.f32 %v899, 0.044715
        %v932 = vmul.f32 %v900, 0.044715
        %v933 = vmul.f32 %v901, 0.044715
        %v934 = vmul.f32 %v902, 0.044715
        %v935 = vmul.f32 %v903, 0.044715
        %v936 = vmul.f32 %v904, 0.044715
        %v937 = vadd.f32 %v763, %v905
        %v938 = vadd.f32 %v765, %v906
        %v939 = vadd.f32 %v767, %v907
        %v940 = vadd.f32 %v769, %v908
        %v941 = vadd.f32 %v773, %v909
        %v942 = vadd.f32 %v775, %v910
        %v943 = vadd.f32 %v777, %v911
        %v944 = vadd.f32 %v779, %v912
        %v945 = vadd.f32 %v783, %v913
        %v946 = vadd.f32 %v785, %v914
        %v947 = vadd.f32 %v787, %v915
        %v948 = vadd.f32 %v789, %v916
        %v949 = vadd.f32 %v793, %v917
        %v950 = vadd.f32 %v795, %v918
        %v951 = vadd.f32 %v797, %v919
        %v952 = vadd.f32 %v799, %v920
        %v953 = vadd.f32 %v803, %v921
        %v954 = vadd.f32 %v805, %v922
        %v955 = vadd.f32 %v807, %v923
        %v956 = vadd.f32 %v809, %v924
        %v957 = vadd.f32 %v813, %v925
        %v958 = vadd.f32 %v815, %v926
        %v959 = vadd.f32 %v817, %v927
        %v960 = vadd.f32 %v819, %v928
        %v961 = vadd.f32 %v823, %v929
        %v962 = vadd.f32 %v825, %v930
        %v963 = vadd.f32 %v827, %v931
        %v964 = vadd.f32 %v829, %v932
        %v965 = vadd.f32 %v833, %v933
        %v966 = vadd.f32 %v835, %v934
        %v967 = vadd.f32 %v837, %v935
        %v968 = vadd.f32 %v839, %v936
        %v969 = vmul.f32 %v937, 0.7978846
        %v970 = vmul.f32 %v938, 0.7978846
        %v971 = vmul.f32 %v939, 0.7978846
        %v972 = vmul.f32 %v940, 0.7978846
        %v973 = vmul.f32 %v941, 0.7978846
        %v974 = vmul.f32 %v942, 0.7978846
        %v975 = vmul.f32 %v943, 0.7978846
        %v976 = vmul.f32 %v944, 0.7978846
        %v977 = vmul.f32 %v945, 0.7978846
        %v978 = vmul.f32 %v946, 0.7978846
        %v979 = vmul.f32 %v947, 0.7978846
        %v980 = vmul.f32 %v948, 0.7978846
        %v981 = vmul.f32 %v949, 0.7978846
        %v982 = vmul.f32 %v950, 0.7978846
        %v983 = vmul.f32 %v951, 0.7978846
        %v984 = vmul.f32 %v952, 0.7978846
        %v985 = vmul.f32 %v953, 0.7978846
        %v986 = vmul.f32 %v954, 0.7978846
        %v987 = vmul.f32 %v955, 0.7978846
        %v988 = vmul.f32 %v956, 0.7978846
        %v989 = vmul.f32 %v957, 0.7978846
        %v990 = vmul.f32 %v958, 0.7978846
        %v991 = vmul.f32 %v959, 0.7978846
        %v992 = vmul.f32 %v960, 0.7978846
        %v993 = vmul.f32 %v961, 0.7978846
        %v994 = vmul.f32 %v962, 0.7978846
        %v995 = vmul.f32 %v963, 0.7978846
        %v996 = vmul.f32 %v964, 0.7978846
        %v997 = vmul.f32 %v965, 0.7978846
        %v998 = vmul.f32 %v966, 0.7978846
        %v999 = vmul.f32 %v967, 0.7978846
        %v1000 = vmul.f32 %v968, 0.7978846
        %v1001 = vtanh.pop %v969
        %v1002 = vtanh.pop %v970
        %v1003 = vtanh.pop %v971
        %v1004 = vtanh.pop %v972
        %v1005 = vtanh.pop %v973
        %v1006 = vtanh.pop %v974
        %v1007 = vtanh.pop %v975
        %v1008 = vtanh.pop %v976
        %v1009 = vtanh.pop %v977
        %v1010 = vtanh.pop %v978
        %v1011 = vtanh.pop %v979
        %v1012 = vtanh.pop %v980
        %v1013 = vtanh.pop %v981
        %v1014 = vtanh.pop %v982
        %v1015 = vtanh.pop %v983
        %v1016 = vtanh.pop %v984
        %v1017 = vtanh.pop %v985
        %v1018 = vtanh.pop %v986
        %v1019 = vtanh.pop %v987
        %v1020 = vtanh.pop %v988
        %v1021 = vtanh.pop %v989
        %v1022 = vtanh.pop %v990
        %v1023 = vtanh.pop %v991
        %v1024 = vtanh.pop %v992
        %v1025 = vtanh.pop %v993
        %v1026 = vtanh.pop %v994
        %v1027 = vtanh.pop %v995
        %v1028 = vtanh.pop %v996
        %v1029 = vtanh.pop %v997
        %v1030 = vtanh.pop %v998
        %v1031 = vtanh.pop %v999
        %v1032 = vtanh.pop %v1000
        %v1033 = vadd.f32 %v1001, 1.0
        %v1034 = vadd.f32 %v1002, 1.0
        %v1035 = vadd.f32 %v1003, 1.0
        %v1036 = vadd.f32 %v1004, 1.0
        %v1037 = vadd.f32 %v1005, 1.0
        %v1038 = vadd.f32 %v1006, 1.0
        %v1039 = vadd.f32 %v1007, 1.0
        %v1040 = vadd.f32 %v1008, 1.0
        %v1041 = vadd.f32 %v1009, 1.0
        %v1042 = vadd.f32 %v1010, 1.0
        %v1043 = vadd.f32 %v1011, 1.0
        %v1044 = vadd.f32 %v1012, 1.0
        %v1045 = vadd.f32 %v1013, 1.0
        %v1046 = vadd.f32 %v1014, 1.0
        %v1047 = vadd.f32 %v1015, 1.0
        %v1048 = vadd.f32 %v1016, 1.0
        %v1049 = vadd.f32 %v1017, 1.0
        %v1050 = vadd.f32 %v1018, 1.0
        %v1051 = vadd.f32 %v1019, 1.0
        %v1052 = vadd.f32 %v1020, 1.0
        %v1053 = vadd.f32 %v1021, 1.0
        %v1054 = vadd.f32 %v1022, 1.0
        %v1055 = vadd.f32 %v1023, 1.0
        %v1056 = vadd.f32 %v1024, 1.0
        %v1057 = vadd.f32 %v1025, 1.0
        %v1058 = vadd.f32 %v1026, 1.0
        %v1059 = vadd.f32 %v1027, 1.0
        %v1060 = vadd.f32 %v1028, 1.0
        %v1061 = vadd.f32 %v1029, 1.0
        %v1062 = vadd.f32 %v1030, 1.0
        %v1063 = vadd.f32 %v1031, 1.0
        %v1064 = vadd.f32 %v1032, 1.0
        %v1065 = vmul.f32 %v1033, 0.5
        %v1066 = vmul.f32 %v1034, 0.5
        %v1067 = vmul.f32 %v1035, 0.5
        %v1068 = vmul.f32 %v1036, 0.5
        %v1069 = vmul.f32 %v1037, 0.5
        %v1070 = vmul.f32 %v1038, 0.5
        %v1071 = vmul.f32 %v1039, 0.5
        %v1072 = vmul.f32 %v1040, 0.5
        %v1073 = vmul.f32 %v1041, 0.5
        %v1074 = vmul.f32 %v1042, 0.5
        %v1075 = vmul.f32 %v1043, 0.5
        %v1076 = vmul.f32 %v1044, 0.5
        %v1077 = vmul.f32 %v1045, 0.5
        %v1078 = vmul.f32 %v1046, 0.5
        %v1079 = vmul.f32 %v1047, 0.5
        %v1080 = vmul.f32 %v1048, 0.5
        %v1081 = vmul.f32 %v1049, 0.5
        %v1082 = vmul.f32 %v1050, 0.5
        %v1083 = vmul.f32 %v1051, 0.5
        %v1084 = vmul.f32 %v1052, 0.5
        %v1085 = vmul.f32 %v1053, 0.5
        %v1086 = vmul.f32 %v1054, 0.5
        %v1087 = vmul.f32 %v1055, 0.5
        %v1088 = vmul.f32 %v1056, 0.5
        %v1089 = vmul.f32 %v1057, 0.5
        %v1090 = vmul.f32 %v1058, 0.5
        %v1091 = vmul.f32 %v1059, 0.5
        %v1092 = vmul.f32 %v1060, 0.5
        %v1093 = vmul.f32 %v1061, 0.5
        %v1094 = vmul.f32 %v1062, 0.5
        %v1095 = vmul.f32 %v1063, 0.5
        %v1096 = vmul.f32 %v1064, 0.5
        %v1097 = vmul.f32 %v763, %v1065
        %v1098 = vmul.f32 %v765, %v1066
        %v1099 = vmul.f32 %v767, %v1067
        %v1100 = vmul.f32 %v769, %v1068
        %v1101 = vmul.f32 %v773, %v1069
        %v1102 = vmul.f32 %v775, %v1070
        %v1103 = vmul.f32 %v777, %v1071
        %v1104 = vmul.f32 %v779, %v1072
        %v1105 = vmul.f32 %v783, %v1073
        %v1106 = vmul.f32 %v785, %v1074
        %v1107 = vmul.f32 %v787, %v1075
        %v1108 = vmul.f32 %v789, %v1076
        %v1109 = vmul.f32 %v793, %v1077
        %v1110 = vmul.f32 %v795, %v1078
        %v1111 = vmul.f32 %v797, %v1079
        %v1112 = vmul.f32 %v799, %v1080
        %v1113 = vmul.f32 %v803, %v1081
        %v1114 = vmul.f32 %v805, %v1082
        %v1115 = vmul.f32 %v807, %v1083
        %v1116 = vmul.f32 %v809, %v1084
        %v1117 = vmul.f32 %v813, %v1085
        %v1118 = vmul.f32 %v815, %v1086
        %v1119 = vmul.f32 %v817, %v1087
        %v1120 = vmul.f32 %v819, %v1088
        %v1121 = vmul.f32 %v823, %v1089
        %v1122 = vmul.f32 %v825, %v1090
        %v1123 = vmul.f32 %v827, %v1091
        %v1124 = vmul.f32 %v829, %v1092
        %v1125 = vmul.f32 %v833, %v1093
        %v1126 = vmul.f32 %v835, %v1094
        %v1127 = vmul.f32 %v837, %v1095
        %v1128 = vmul.f32 %v839, %v1096
        %v1129 = vpack.c.bf16 %v1099, %v1097
        %v1130 = vpack.c.bf16 %v1100, %v1098
        %v1131 = vpack.c.bf16 %v1103, %v1101
        %v1132 = vpack.c.bf16 %v1104, %v1102
        %v1133 = vpack.c.bf16 %v1107, %v1105
        %v1134 = vpack.c.bf16 %v1108, %v1106
        %v1135 = vpack.c.bf16 %v1111, %v1109
        %v1136 = vpack.c.bf16 %v1112, %v1110
        %v1137 = vpack.c.bf16 %v1115, %v1113
        %v1138 = vpack.c.bf16 %v1116, %v1114
        %v1139 = vpack.c.bf16 %v1119, %v1117
        %v1140 = vpack.c.bf16 %v1120, %v1118
        %v1141 = vpack.c.bf16 %v1123, %v1121
        %v1142 = vpack.c.bf16 %v1124, %v1122
        %v1143 = vpack.c.bf16 %v1127, %v1125
        %v1144 = vpack.c.bf16 %v1128, %v1126
        %v1161 = vunpack.c.l.b16 %v1129
        %v1162 = vunpack.c.l.b16 %v1130
        %v1163 = vunpack.c.h.b16 %v1129
        %v1164 = vunpack.c.h.b16 %v1130
        %v1165 = vunpack.c.l.b16 %v1131
        %v1166 = vunpack.c.l.b16 %v1132
        %v1167 = vunpack.c.h.b16 %v1131
        %v1168 = vunpack.c.h.b16 %v1132
        %v1169 = vunpack.c.l.b16 %v1133
        %v1170 = vunpack.c.l.b16 %v1134
        %v1171 = vunpack.c.h.b16 %v1133
        %v1172 = vunpack.c.h.b16 %v1134
        %v1173 = vunpack.c.l.b16 %v1135
        %v1174 = vunpack.c.l.b16 %v1136
        %v1175 = vunpack.c.h.b16 %v1135
        %v1176 = vunpack.c.h.b16 %v1136
        %v1177 = vunpack.c.l.b16 %v1137
        %v1178 = vunpack.c.l.b16 %v1138
        %v1179 = vunpack.c.h.b16 %v1137
        %v1180 = vunpack.c.h.b16 %v1138
        %v1181 = vunpack.c.l.b16 %v1139
        %v1182 = vunpack.c.l.b16 %v1140
        %v1183 = vunpack.c.h.b16 %v1139
        %v1184 = vunpack.c.h.b16 %v1140
        %v1185 = vunpack.c.l.b16 %v1141
        %v1186 = vunpack.c.l.b16 %v1142
        %v1187 = vunpack.c.h.b16 %v1141
        %v1188 = vunpack.c.h.b16 %v1142
        %v1189 = vunpack.c.l.b16 %v1143
        %v1190 = vunpack.c.l.b16 %v1144
        %v1191 = vunpack.c.h.b16 %v1143
        %v1192 = vunpack.c.h.b16 %v1144
        %v1193 = vpack.c.b16 %v1162, %v1161
        %v1194 = vpack.c.b16 %v1164, %v1163
        %v1195 = vpack.c.b16 %v1166, %v1165
        %v1196 = vpack.c.b16 %v1168, %v1167
        %v1197 = vpack.c.b16 %v1170, %v1169
        %v1198 = vpack.c.b16 %v1172, %v1171
        %v1199 = vpack.c.b16 %v1174, %v1173
        %v1200 = vpack.c.b16 %v1176, %v1175
        %v1201 = vpack.c.b16 %v1178, %v1177
        %v1202 = vpack.c.b16 %v1180, %v1179
        %v1203 = vpack.c.b16 %v1182, %v1181
        %v1204 = vpack.c.b16 %v1184, %v1183
        %v1205 = vpack.c.b16 %v1186, %v1185
        %v1206 = vpack.c.b16 %v1188, %v1187
        %v1207 = vpack.c.b16 %v1190, %v1189
        %v1208 = vpack.c.b16 %v1192, %v1191
        %1225 = vst [vmem:[%s357] sm:$0xff] %v1193
        %1226 = vst [vmem:[%s357 + $0x8] sm:$0xff] %v1194
        %1227 = vst [vmem:[%s357 + $0x10] sm:$0xff] %v1195
        %1228 = vst [vmem:[%s357 + $0x18] sm:$0xff] %v1196
        %1229 = vst [vmem:[%s357 + $0x20] sm:$0xff] %v1197
        %1230 = vst [vmem:[%s357 + $0x28] sm:$0xff] %v1198
        %1231 = vst [vmem:[%s357 + $0x30] sm:$0xff] %v1199
        %1232 = vst [vmem:[%s357 + $0x38] sm:$0xff] %v1200
        %1233 = vst [vmem:[%s357 + $0x40] sm:$0xff] %v1201
        %1234 = vst [vmem:[%s357 + $0x48] sm:$0xff] %v1202
        %1235 = vst [vmem:[%s357 + $0x50] sm:$0xff] %v1203
        %1236 = vst [vmem:[%s357 + $0x58] sm:$0xff] %v1204
        %1237 = vst [vmem:[%s357 + $0x60] sm:$0xff] %v1205
        %1238 = vst [vmem:[%s357 + $0x68] sm:$0xff] %v1206
        %1239 = vst [vmem:[%s357 + $0x70] sm:$0xff] %v1207
        %1240 = vst [vmem:[%s357 + $0x78] sm:$0xff] %v1208
        %s1241 = sand.u32 %s158, 1
        %s1242 = sand.u32 %s158, 1
        %s1243 = smul.addr %s1242, 128
        %s1244 = scalar_lea.vmem [#allocation3], %s1243
        // Predicated region
        $region79: #{vision_encoder_forward.14} parent=73 // pred_check
          %p1245 = pneg %p168
        $region80: #{vision_encoder_forward.14} parent=73 // pred_check_branch
          %1247 = sbr.rel (%p1245) target = $region82
        $region81: #{vision_encoder_forward.14} parent=73 // pred_region
          %s1248 = smul.u32 16, %s20
          %s1249 = smul.u32 2, %s21
          %s1250 = smul.addr %s1248, 4
          %s1251 = sadd.s32 %s1249, %s1250
          %s1252 = smul.addr %s1251, 4
          %s1253 = scalar_lea.vmem %s5, %s1252
          // Predicated region
          $region83: #{vision_encoder_forward.14} parent=81 // pred_check
            _
          $region84: #{vision_encoder_forward.14} parent=81 // pred_check_branch
            %1255 = sbr.rel (0) target = $region86
          $region85: #{vision_encoder_forward.14} parent=81 // pred_region
            // Predicated region
            $region87: #{vision_encoder_forward.14} parent=85 // pred_check
              _
            $region88: #{vision_encoder_forward.14} parent=85 // pred_check_branch
              %1257 = sbr.rel (0) target = $region90
            $region89: #{vision_encoder_forward.14} parent=85 // pred_region
              // Predicated region
              $region102: #{vision_encoder_forward.14} parent=89 // pred_check
                _
              $region103: #{vision_encoder_forward.14} parent=89 // pred_check_branch
                %1302 = sbr.rel (0) target = $region105
              $region104: #{vision_encoder_forward.14} parent=89 // pred_region
                loop: start=0, step=1, limit=1
                $region106: #{vision_encoder_forward.14} parent=104 // loop_pre_header
                  _
                $region107: #{vision_encoder_forward.14} parent=104 // loop_header
                  %s1304 = sphi 0, %s1308
                  %p1305 = scmp.ge.s32.totalorder %s1304, 1
                  %s1309 = sphi %s1244, %s1244
                  %s1310 = sphi %s1253, %s1253
                $region108: #{vision_encoder_forward.14} parent=104 // loop_header_branch
                  %1307 = sbr.rel (%p1305) target = $region112
                $region109: #{vision_encoder_forward.14} parent=104 // loop_body
                  %v1311 = vld [vmem:[%s1309] sm:$0xff]
                  %1312 = vst [vmem:[%s1310] sm:$0xff] %v1311
                  %v1313 = vld [vmem:[%s1309 + $0x8] sm:$0xff]
                  %1314 = vst [vmem:[%s1310 + $0x10] sm:$0xff] %v1313
                  %v1315 = vld [vmem:[%s1309 + $0x10] sm:$0xff]
                  %1316 = vst [vmem:[%s1310 + $0x20] sm:$0xff] %v1315
                  %v1317 = vld [vmem:[%s1309 + $0x18] sm:$0xff]
                  %1318 = vst [vmem:[%s1310 + $0x30] sm:$0xff] %v1317
                  %v1319 = vld [vmem:[%s1309 + $0x20] sm:$0xff]
                  %1320 = vst [vmem:[%s1310 + $0x40] sm:$0xff] %v1319
                  %v1321 = vld [vmem:[%s1309 + $0x28] sm:$0xff]
                  %1322 = vst [vmem:[%s1310 + $0x50] sm:$0xff] %v1321
                  %v1323 = vld [vmem:[%s1309 + $0x30] sm:$0xff]
                  %1324 = vst [vmem:[%s1310 + $0x60] sm:$0xff] %v1323
                  %v1325 = vld [vmem:[%s1309 + $0x38] sm:$0xff]
                  %1326 = vst [vmem:[%s1310 + $0x70] sm:$0xff] %v1325
                  %v1327 = vld [vmem:[%s1309 + $0x40] sm:$0xff]
                  %1328 = vst [vmem:[%s1310 + $0x80] sm:$0xff] %v1327
                  %v1329 = vld [vmem:[%s1309 + $0x48] sm:$0xff]
                  %1330 = vst [vmem:[%s1310 + $0x90] sm:$0xff] %v1329
                  %v1331 = vld [vmem:[%s1309 + $0x50] sm:$0xff]
                  %1332 = vst [vmem:[%s1310 + $0xa0] sm:$0xff] %v1331
                  %v1333 = vld [vmem:[%s1309 + $0x58] sm:$0xff]
                  %1334 = vst [vmem:[%s1310 + $0xb0] sm:$0xff] %v1333
                  %v1335 = vld [vmem:[%s1309 + $0x60] sm:$0xff]
                  %1336 = vst [vmem:[%s1310 + $0xc0] sm:$0xff] %v1335
                  %v1337 = vld [vmem:[%s1309 + $0x68] sm:$0xff]
                  %1338 = vst [vmem:[%s1310 + $0xd0] sm:$0xff] %v1337
                  %v1339 = vld [vmem:[%s1309 + $0x70] sm:$0xff]
                  %1340 = vst [vmem:[%s1310 + $0xe0] sm:$0xff] %v1339
                  %v1341 = vld [vmem:[%s1309 + $0x78] sm:$0xff]
                  %1342 = vst [vmem:[%s1310 + $0xf0] sm:$0xff] %v1341
                $region110: #{vision_encoder_forward.14} parent=104 // loop_footer
                  %s1308 = sadd.s32 1, %s1304
                $region111: #{vision_encoder_forward.14} parent=104 // loop_footer_branch
                  %1303 = sbr.rel target = $region107
                $region112: #{vision_encoder_forward.14} parent=104 // loop_exit
                  _
              $region105: #{vision_encoder_forward.14} parent=89 // pred_fallthru
                _
              // Predicated region
              $region113: #{vision_encoder_forward.14} parent=89 // pred_check
                _
              $region114: #{vision_encoder_forward.14} parent=89 // pred_check_branch
                %1344 = sbr.rel target = $region116
              $region115: #{vision_encoder_forward.14} parent=89 // pred_region
                _
              $region116: #{vision_encoder_forward.14} parent=89 // pred_fallthru
                _
            $region90: #{vision_encoder_forward.14} parent=85 // pred_fallthru
              _
            // Predicated region
            $region91: #{vision_encoder_forward.14} parent=85 // pred_check
              _
            $region92: #{vision_encoder_forward.14} parent=85 // pred_check_branch
              %1259 = sbr.rel target = $region94
            $region93: #{vision_encoder_forward.14} parent=85 // pred_region
              loop: start=0, step=1, limit=1
              $region95: #{vision_encoder_forward.14} parent=93 // loop_pre_header
                _
              $region96: #{vision_encoder_forward.14} parent=93 // loop_header
                %s1262 = sphi 0, %s1266
                %p1263 = scmp.ge.s32.totalorder %s1262, 1
                %s1267 = sphi %s1244, %s1244
                %s1268 = sphi %s1253, %s1253
              $region97: #{vision_encoder_forward.14} parent=93 // loop_header_branch
                %1265 = sbr.rel (%p1263) target = $region101
              $region98: #{vision_encoder_forward.14} parent=93 // loop_body
                %v1269 = vld [vmem:[%s1267] sm:$0xff]
                %1270 = vst [vmem:[%s1268] sm:$0xff] %v1269
                %v1271 = vld [vmem:[%s1267 + $0x8] sm:$0xff]
                %1272 = vst [vmem:[%s1268 + $0x10] sm:$0xff] %v1271
                %v1273 = vld [vmem:[%s1267 + $0x10] sm:$0xff]
                %1274 = vst [vmem:[%s1268 + $0x20] sm:$0xff] %v1273
                %v1275 = vld [vmem:[%s1267 + $0x18] sm:$0xff]
                %1276 = vst [vmem:[%s1268 + $0x30] sm:$0xff] %v1275
                %v1277 = vld [vmem:[%s1267 + $0x20] sm:$0xff]
                %1278 = vst [vmem:[%s1268 + $0x40] sm:$0xff] %v1277
                %v1279 = vld [vmem:[%s1267 + $0x28] sm:$0xff]
                %1280 = vst [vmem:[%s1268 + $0x50] sm:$0xff] %v1279
                %v1281 = vld [vmem:[%s1267 + $0x30] sm:$0xff]
                %1282 = vst [vmem:[%s1268 + $0x60] sm:$0xff] %v1281
                %v1283 = vld [vmem:[%s1267 + $0x38] sm:$0xff]
                %1284 = vst [vmem:[%s1268 + $0x70] sm:$0xff] %v1283
                %v1285 = vld [vmem:[%s1267 + $0x40] sm:$0xff]
                %1286 = vst [vmem:[%s1268 + $0x80] sm:$0xff] %v1285
                %v1287 = vld [vmem:[%s1267 + $0x48] sm:$0xff]
                %1288 = vst [vmem:[%s1268 + $0x90] sm:$0xff] %v1287
                %v1289 = vld [vmem:[%s1267 + $0x50] sm:$0xff]
                %1290 = vst [vmem:[%s1268 + $0xa0] sm:$0xff] %v1289
                %v1291 = vld [vmem:[%s1267 + $0x58] sm:$0xff]
                %1292 = vst [vmem:[%s1268 + $0xb0] sm:$0xff] %v1291
                %v1293 = vld [vmem:[%s1267 + $0x60] sm:$0xff]
                %1294 = vst [vmem:[%s1268 + $0xc0] sm:$0xff] %v1293
                %v1295 = vld [vmem:[%s1267 + $0x68] sm:$0xff]
                %1296 = vst [vmem:[%s1268 + $0xd0] sm:$0xff] %v1295
                %v1297 = vld [vmem:[%s1267 + $0x70] sm:$0xff]
                %1298 = vst [vmem:[%s1268 + $0xe0] sm:$0xff] %v1297
                %v1299 = vld [vmem:[%s1267 + $0x78] sm:$0xff]
                %1300 = vst [vmem:[%s1268 + $0xf0] sm:$0xff] %v1299
              $region99: #{vision_encoder_forward.14} parent=93 // loop_footer
                %s1266 = sadd.s32 1, %s1262
              $region100: #{vision_encoder_forward.14} parent=93 // loop_footer_branch
                %1261 = sbr.rel target = $region96
              $region101: #{vision_encoder_forward.14} parent=93 // loop_exit
                _
            $region94: #{vision_encoder_forward.14} parent=85 // pred_fallthru
              _
          $region86: #{vision_encoder_forward.14} parent=81 // pred_fallthru
            _
          %1345 = vnop
        $region82: #{vision_encoder_forward.14} parent=73 // pred_fallthru
          _
      $region74: #{vision_encoder_forward.14} parent=5 // pred_fallthru
        _
      %p1346 = scmp.le.s32.totalorder 2, %s11
      // Predicated region
      $region117: #{vision_encoder_forward.14} parent=5 // pred_check
        %p1347 = pneg %p1346
      $region118: #{vision_encoder_forward.14} parent=5 // pred_check_branch
        %1349 = sbr.rel (%p1347) target = $region120
      $region119: #{vision_encoder_forward.14} parent=5 // pred_region
        %s1350 = ssub.s32 %s11, 2
        // Predicated region
        $region121: #{vision_encoder_forward.14} parent=119 // pred_check
          %p1351 = pneg %p174
        $region122: #{vision_encoder_forward.14} parent=119 // pred_check_branch
          %1353 = sbr.rel (%p1351) target = $region124
        $region123: #{vision_encoder_forward.14} parent=119 // pred_region
          %s1354 = sand.u32 %s159, 1
          %s1355 = sand.u32 %s159, 1
          %s1356 = smul.addr %s1355, 128
          %s1357 = scalar_lea.vmem [#allocation3], %s1356
        $region124: #{vision_encoder_forward.14} parent=119 // pred_fallthru
          _
      $region120: #{vision_encoder_forward.14} parent=5 // pred_fallthru
        _
    $region6: #{vision_encoder_forward.14} parent=1 // loop_footer
      %s15 = sadd.s32 1, %s11
    $region7: #{vision_encoder_forward.14} parent=1 // loop_footer_branch
      %10 = sbr.rel target = $region3
    $region8: #{vision_encoder_forward.14} parent=1 // loop_exit
      _

// kernel: vision_encoder_forward.12
$region0: #{vision_encoder_forward.12}
  #allocation0 [shape = 'u32[]', space=smem, size = 0x4, offset = 0x4, fixed_abs, tag = 'smem constant byte address 0x4 - core index']
  #allocation1 [shape = 'u32[144,128]{1,0:T(1,128)}', space=vmem, size = 0x12000, scoped, tag = 'internal scratch']
  #allocation2 [shape = 'f32[128,1]{1,0:T(8,128)}', space=vmem, size = 0x10000, scoped, tag = 'scratch operand']
  #allocation3 [shape = 'f32[128,1]{1,0:T(8,128)}', space=vmem, size = 0x10000, scoped, tag = 'scratch operand']
  #allocation4 [shape = 'f32[128,128]{1,0:T(8,128)}', space=vmem, size = 0x10000, scoped, tag = 'scratch operand']
  %s0 = inlined_call_operand.vmem [shape: bf16[512,768], index: 0, kind: input, shape index: {}, may-alias: {0,1,2}]
  %s1 = inlined_call_operand.vmem [shape: bf16[512,768], index: 1, kind: input, shape index: {}, may-alias: {0,1,2}]
  %s2 = inlined_call_operand.vmem [shape: bf16[512,768], index: 2, kind: input, shape index: {}, may-alias: {0,1,2}]
  %s3 = inlined_call_operand.vmem [shape: bf16[512,256], index: 3, kind: output, shape index: {}]
  %s4 = sld [smem:[#allocation0]]
  $region213: #{vision_encoder_forward.12} parent=0
    _
  %s6 = ssub.s32 1, %s4
  %s7 = scalar_select 0, %s6, %s4
  $region1: #{vision_encoder_forward.12} parent=0
    #allocation5 [shape = 'u8[65536]{0}', space=vmem, size = 0x10000, scoped, tag = 'input window, operand 0']
    #allocation6 [shape = 'u8[65536]{0}', space=vmem, size = 0x10000, scoped, tag = 'input window, operand 1']
    #allocation7 [shape = 'u8[65536]{0}', space=vmem, size = 0x10000, scoped, tag = 'input window, operand 2']
    #allocation8 [shape = 'u8[65536]{0}', space=vmem, size = 0x10000, scoped, tag = 'output window, operand 0']
    loop: start=0, step=1, limit=18
    $region2: #{vision_encoder_forward.12} parent=1 // loop_pre_header
      _
    $region3: #{vision_encoder_forward.12} parent=1 // loop_header
      %s9 = sphi 0, %s13
      %p10 = scmp.ge.s32.totalorder %s9, 18
      %s16 = sphi 0, %s42
      %s17 = sphi 0, %s38
      %s18 = sphi 0, %s34
      %s19 = sphi 0, %s30
      %s20 = sphi 0, %s16
      %s21 = sphi 0, %s17
      %s22 = sphi 0, %s18
      %s23 = sphi 0, %s19
      %s24 = sphi 0, %s20
      %s25 = sphi 0, %s21
      %s26 = sphi 0, %s22
      %s27 = sphi 0, %s23
      %s51 = sphi 0, %s53
      %s54 = sphi 0, %s51
      %s55 = sphi 0, %s54
      %s71 = sphi 0, %s55
      %s85 = sphi 0, %s87
      %s88 = sphi 0, %s85
      %s89 = sphi 0, %s88
      %s105 = sphi 0, %s89
      %s119 = sphi 0, %s121
      %s122 = sphi 0, %s119
      %s123 = sphi 0, %s122
      %s139 = sphi 0, %s123
      %s151 = sphi 0, %s153
      %s154 = sphi 0, %s151
      %s155 = sphi 0, %s154
      %s171 = sphi 0, %s155
    $region4: #{vision_encoder_forward.12} parent=1 // loop_header_branch
      %12 = sbr.rel (%p10) target = $region8
    $region5: #{vision_encoder_forward.12} parent=1 // loop_body
      %s14 = ssub.s32 %s9, 1
      %s15 = ssub.s32 %s9, 2
      %s28 = sadd.s32 1, %s19
      %p29 = scmp.ge.s32.totalorder %s28, 2
      %s30 = scalar_select %p29, 0, %s28
      %s31 = sadd.s32 1, %s18
      %s32 = scalar_select %p29, %s31, %s18
      %p33 = scmp.ge.s32.totalorder %s32, 2
      %s34 = scalar_select %p33, 0, %s32
      %s35 = sadd.s32 1, %s17
      %s36 = scalar_select %p33, %s35, %s17
      %p37 = scmp.ge.s32.totalorder %s36, 2
      %s38 = scalar_select %p37, 0, %s36
      %s39 = sadd.s32 1, %s16
      %s40 = scalar_select %p37, %s39, %s16
      %p41 = scmp.ge.s32.totalorder %s40, 2
      %s42 = scalar_select %p41, 0, %s40
      %s43 = smul.u32 %s16, 2
      %s44 = sadd.s32 %s43, %s18
      %s45 = smul.u32 %s42, 2
      %s46 = sadd.s32 %s45, %s34
      %s47 = ssub.s32 %s44, %s46
      %s48 = ssub.s32 %s17, %s38
      %s49 = sor.u32 %s47, %s48
      %p50 = scmp.eq.s32.totalorder %s49, 0
      %s52 = sadd.s32 %s51, 1
      %s53 = scalar_select %p50, %s51, %s52
      %p56 = pneg %p50
      %p57 = scmp.eq.s32.totalorder %s9, 15
      %p58 = por %p56, %p57
      %p59 = scmp.ne.s32.totalorder %s51, %s54
      %p60 = scmp.eq.s32.totalorder %s9, 0
      %p61 = por %p59, %p60
      %p62 = scmp.ne.s32.totalorder %s51, %s54
      %p63 = scmp.eq.s32.totalorder %s14, 15
      %p64 = por %p62, %p63
      %p65 = scmp.ne.s32.totalorder %s54, %s55
      %p66 = scmp.eq.s32.totalorder %s14, 0
      %p67 = por %p65, %p66
      %p68 = scmp.ne.s32.totalorder %s54, %s55
      %p69 = scmp.eq.s32.totalorder %s15, 15
      %p70 = por %p68, %p69
      %p72 = scmp.ne.s32.totalorder %s55, %s71
      %p73 = scmp.eq.s32.totalorder %s15, 0
      %p74 = por %p72, %p73
      %s75 = smul.u32 %s16, 2
      %s76 = sadd.s32 %s75, %s19
      %s77 = sadd.s32 %s17, 2
      %s78 = smul.u32 %s42, 2
      %s79 = sadd.s32 %s78, %s30
      %s80 = sadd.s32 %s38, 2
      %s81 = ssub.s32 %s76, %s79
      %s82 = ssub.s32 %s77, %s80
      %s83 = sor.u32 %s81, %s82
      %p84 = scmp.eq.s32.totalorder %s83, 0
      %s86 = sadd.s32 %s85, 1
      %s87 = scalar_select %p84, %s85, %s86
      %p90 = pneg %p84
      %p91 = scmp.eq.s32.totalorder %s9, 15
      %p92 = por %p90, %p91
      %p93 = scmp.ne.s32.totalorder %s85, %s88
      %p94 = scmp.eq.s32.totalorder %s9, 0
      %p95 = por %p93, %p94
      %p96 = scmp.ne.s32.totalorder %s85, %s88
      %p97 = scmp.eq.s32.totalorder %s14, 15
      %p98 = por %p96, %p97
      %p99 = scmp.ne.s32.totalorder %s88, %s89
      %p100 = scmp.eq.s32.totalorder %s14, 0
      %p101 = por %p99, %p100
      %p102 = scmp.ne.s32.totalorder %s88, %s89
      %p103 = scmp.eq.s32.totalorder %s15, 15
      %p104 = por %p102, %p103
      %p106 = scmp.ne.s32.totalorder %s89, %s105
      %p107 = scmp.eq.s32.totalorder %s15, 0
      %p108 = por %p106, %p107
      %s109 = smul.u32 %s16, 2
      %s110 = sadd.s32 %s109, %s19
      %s111 = sadd.s32 %s17, 4
      %s112 = smul.u32 %s42, 2
      %s113 = sadd.s32 %s112, %s30
      %s114 = sadd.s32 %s38, 4
      %s115 = ssub.s32 %s110, %s113
      %s116 = ssub.s32 %s111, %s114
      %s117 = sor.u32 %s115, %s116
      %p118 = scmp.eq.s32.totalorder %s117, 0
      %s120 = sadd.s32 %s119, 1
      %s121 = scalar_select %p118, %s119, %s120
      %p124 = pneg %p118
      %p125 = scmp.eq.s32.totalorder %s9, 15
      %p126 = por %p124, %p125
      %p127 = scmp.ne.s32.totalorder %s119, %s122
      %p128 = scmp.eq.s32.totalorder %s9, 0
      %p129 = por %p127, %p128
      %p130 = scmp.ne.s32.totalorder %s119, %s122
      %p131 = scmp.eq.s32.totalorder %s14, 15
      %p132 = por %p130, %p131
      %p133 = scmp.ne.s32.totalorder %s122, %s123
      %p134 = scmp.eq.s32.totalorder %s14, 0
      %p135 = por %p133, %p134
      %p136 = scmp.ne.s32.totalorder %s122, %s123
      %p137 = scmp.eq.s32.totalorder %s15, 15
      %p138 = por %p136, %p137
      %p140 = scmp.ne.s32.totalorder %s123, %s139
      %p141 = scmp.eq.s32.totalorder %s15, 0
      %p142 = por %p140, %p141
      %s143 = smul.u32 %s16, 2
      %s144 = sadd.s32 %s143, %s18
      %s145 = smul.u32 %s42, 2
      %s146 = sadd.s32 %s145, %s34
      %s147 = ssub.s32 %s144, %s146
      %s148 = ssub.s32 %s17, %s38
      %s149 = sor.u32 %s147, %s148
      %p150 = scmp.eq.s32.totalorder %s149, 0
      %s152 = sadd.s32 %s151, 1
      %s153 = scalar_select %p150, %s151, %s152
      %p156 = pneg %p150
      %p157 = scmp.eq.s32.totalorder %s9, 15
      %p158 = por %p156, %p157
      %p159 = scmp.ne.s32.totalorder %s151, %s154
      %p160 = scmp.eq.s32.totalorder %s9, 0
      %p161 = por %p159, %p160
      %p162 = scmp.ne.s32.totalorder %s151, %s154
      %p163 = scmp.eq.s32.totalorder %s14, 15
      %p164 = por %p162, %p163
      %p165 = scmp.ne.s32.totalorder %s154, %s155
      %p166 = scmp.eq.s32.totalorder %s14, 0
      %p167 = por %p165, %p166
      %p168 = scmp.ne.s32.totalorder %s154, %s155
      %p169 = scmp.eq.s32.totalorder %s15, 15
      %p170 = por %p168, %p169
      %p172 = scmp.ne.s32.totalorder %s155, %s171
      %p173 = scmp.eq.s32.totalorder %s15, 0
      %p174 = por %p172, %p173
      %p175 = scmp.le.s32.totalorder 1, %s9
      %p176 = scmp.lt.s32.totalorder %s9, 17
      %p177 = pnand %p175, %p176
      %p178 = pneg %p177
      // Predicated region
      $region9: #{vision_encoder_forward.12} parent=5 // pred_check
        _
      $region10: #{vision_encoder_forward.12} parent=5 // pred_check_branch
        %180 = sbr.rel (%p177) target = $region12
      $region11: #{vision_encoder_forward.12} parent=5 // pred_region
        %s181 = ssub.s32 %s9, 1
      $region12: #{vision_encoder_forward.12} parent=5 // pred_fallthru
        _
      %p182 = scmp.lt.s32.totalorder %s9, 16
      // Predicated region
      $region13: #{vision_encoder_forward.12} parent=5 // pred_check
        %p183 = pneg %p182
      $region14: #{vision_encoder_forward.12} parent=5 // pred_check_branch
        %185 = sbr.rel (%p183) target = $region16
      $region15: #{vision_encoder_forward.12} parent=5 // pred_region
        // Predicated region
        $region17: #{vision_encoder_forward.12} parent=15 // pred_check
          %p186 = pneg %p61
        $region18: #{vision_encoder_forward.12} parent=15 // pred_check_branch
          %188 = sbr.rel (%p186) target = $region20
        $region19: #{vision_encoder_forward.12} parent=15 // pred_region
          %s189 = sand.u32 %s51, 1
          %s190 = sand.u32 %s51, 1
          %s191 = smul.addr %s190, 64
          %s192 = scalar_lea.vmem [#allocation5], %s191
          %s193 = smul.u32 %s16, 2
          %s194 = sadd.s32 %s193, %s18
          %s195 = smul.u32 16, %s194
          %s196 = smul.addr %s195, 6
          %s197 = sadd.s32 %s17, %s196
          %s198 = smul.addr %s197, 4
          %s199 = scalar_lea.vmem %s0, %s198
          // Predicated region
          $region21: #{vision_encoder_forward.12} parent=19 // pred_check
            _
          $region22: #{vision_encoder_forward.12} parent=19 // pred_check_branch
            %201 = sbr.rel (0) target = $region24
          $region23: #{vision_encoder_forward.12} parent=19 // pred_region
            // Predicated region
            $region25: #{vision_encoder_forward.12} parent=23 // pred_check
              _
            $region26: #{vision_encoder_forward.12} parent=23 // pred_check_branch
              %203 = sbr.rel target = $region28
            $region27: #{vision_encoder_forward.12} parent=23 // pred_region
              // Predicated region
              $region40: #{vision_encoder_forward.12} parent=27 // pred_check
                _
              $region41: #{vision_encoder_forward.12} parent=27 // pred_check_branch
                %248 = sbr.rel (0) target = $region43
              $region42: #{vision_encoder_forward.12} parent=27 // pred_region
                loop: start=0, step=1, limit=1
                $region44: #{vision_encoder_forward.12} parent=42 // loop_pre_header
                  _
                $region45: #{vision_encoder_forward.12} parent=42 // loop_header
                  %s250 = sphi 0, %s254
                  %p251 = scmp.ge.s32.totalorder %s250, 1
                  %s255 = sphi %s199, %s199
                  %s256 = sphi %s192, %s192
                $region46: #{vision_encoder_forward.12} parent=42 // loop_header_branch
                  %253 = sbr.rel (%p251) target = $region50
                $region47: #{vision_encoder_forward.12} parent=42 // loop_body
                  _
                $region48: #{vision_encoder_forward.12} parent=42 // loop_footer
                  %s254 = sadd.s32 1, %s250
                $region49: #{vision_encoder_forward.12} parent=42 // loop_footer_branch
                  %249 = sbr.rel target = $region45
                $region50: #{vision_encoder_forward.12} parent=42 // loop_exit
                  _
                loop: start=0, step=1, limit=1
                $region51: #{vision_encoder_forward.12} parent=42 // loop_pre_header
                  _
                $region52: #{vision_encoder_forward.12} parent=42 // loop_header
                  %s259 = sphi 0, %s263
                  %p260 = scmp.ge.s32.totalorder %s259, 1
                  %s264 = sphi %s199, %s199
                  %s265 = sphi %s192, %s192
                $region53: #{vision_encoder_forward.12} parent=42 // loop_header_branch
                  %262 = sbr.rel (%p260) target = $region57
                $region54: #{vision_encoder_forward.12} parent=42 // loop_body
                  %v266 = vld [vmem:[%s264] sm:$0xf]
                  %267 = vst [vmem:[%s265] sm:$0xf] %v266
                  %v268 = vld [vmem:[%s264 + $0x18] sm:$0xf]
                  %269 = vst [vmem:[%s265 + $0x4] sm:$0xf] %v268
                  %v270 = vld [vmem:[%s264 + $0x30] sm:$0xf]
                  %271 = vst [vmem:[%s265 + $0x8] sm:$0xf] %v270
                  %v272 = vld [vmem:[%s264 + $0x48] sm:$0xf]
                  %273 = vst [vmem:[%s265 + $0xc] sm:$0xf] %v272
                  %v274 = vld [vmem:[%s264 + $0x60] sm:$0xf]
                  %275 = vst [vmem:[%s265 + $0x10] sm:$0xf] %v274
                  %v276 = vld [vmem:[%s264 + $0x78] sm:$0xf]
                  %277 = vst [vmem:[%s265 + $0x14] sm:$0xf] %v276
                  %v278 = vld [vmem:[%s264 + $0x90] sm:$0xf]
                  %279 = vst [vmem:[%s265 + $0x18] sm:$0xf] %v278
                  %v280 = vld [vmem:[%s264 + $0xa8] sm:$0xf]
                  %281 = vst [vmem:[%s265 + $0x1c] sm:$0xf] %v280
                  %v282 = vld [vmem:[%s264 + $0xc0] sm:$0xf]
                  %283 = vst [vmem:[%s265 + $0x20] sm:$0xf] %v282
                  %v284 = vld [vmem:[%s264 + $0xd8] sm:$0xf]
                  %285 = vst [vmem:[%s265 + $0x24] sm:$0xf] %v284
                  %v286 = vld [vmem:[%s264 + $0xf0] sm:$0xf]
                  %287 = vst [vmem:[%s265 + $0x28] sm:$0xf] %v286
                  %v288 = vld [vmem:[%s264 + $0x108] sm:$0xf]
                  %289 = vst [vmem:[%s265 + $0x2c] sm:$0xf] %v288
                  %v290 = vld [vmem:[%s264 + $0x120] sm:$0xf]
                  %291 = vst [vmem:[%s265 + $0x30] sm:$0xf] %v290
                  %v292 = vld [vmem:[%s264 + $0x138] sm:$0xf]
                  %293 = vst [vmem:[%s265 + $0x34] sm:$0xf] %v292
                  %v294 = vld [vmem:[%s264 + $0x150] sm:$0xf]
                  %295 = vst [vmem:[%s265 + $0x38] sm:$0xf] %v294
                  %v296 = vld [vmem:[%s264 + $0x168] sm:$0xf]
                  %297 = vst [vmem:[%s265 + $0x3c] sm:$0xf] %v296
                $region55: #{vision_encoder_forward.12} parent=42 // loop_footer
                  %s263 = sadd.s32 1, %s259
                $region56: #{vision_encoder_forward.12} parent=42 // loop_footer_branch
                  %258 = sbr.rel target = $region52
                $region57: #{vision_encoder_forward.12} parent=42 // loop_exit
                  _
              $region43: #{vision_encoder_forward.12} parent=27 // pred_fallthru
                _
            $region28: #{vision_encoder_forward.12} parent=23 // pred_fallthru
              _
            // Predicated region
            $region29: #{vision_encoder_forward.12} parent=23 // pred_check
              _
            $region30: #{vision_encoder_forward.12} parent=23 // pred_check_branch
              %205 = sbr.rel (0) target = $region32
            $region31: #{vision_encoder_forward.12} parent=23 // pred_region
              loop: start=0, step=1, limit=1
              $region33: #{vision_encoder_forward.12} parent=31 // loop_pre_header
                _
              $region34: #{vision_encoder_forward.12} parent=31 // loop_header
                %s208 = sphi 0, %s212
                %p209 = scmp.ge.s32.totalorder %s208, 1
                %s213 = sphi %s199, %s199
                %s214 = sphi %s192, %s192
              $region35: #{vision_encoder_forward.12} parent=31 // loop_header_branch
                %211 = sbr.rel (%p209) target = $region39
              $region36: #{vision_encoder_forward.12} parent=31 // loop_body
                %v215 = vld [vmem:[%s213] sm:$0xf]
                %216 = vst [vmem:[%s214] sm:$0xf] %v215
                %v217 = vld [vmem:[%s213 + $0x18] sm:$0xf]
                %218 = vst [vmem:[%s214 + $0x4] sm:$0xf] %v217
                %v219 = vld [vmem:[%s213 + $0x30] sm:$0xf]
                %220 = vst [vmem:[%s214 + $0x8] sm:$0xf] %v219
                %v221 = vld [vmem:[%s213 + $0x48] sm:$0xf]
                %222 = vst [vmem:[%s214 + $0xc] sm:$0xf] %v221
                %v223 = vld [vmem:[%s213 + $0x60] sm:$0xf]
                %224 = vst [vmem:[%s214 + $0x10] sm:$0xf] %v223
                %v225 = vld [vmem:[%s213 + $0x78] sm:$0xf]
                %226 = vst [vmem:[%s214 + $0x14] sm:$0xf] %v225
                %v227 = vld [vmem:[%s213 + $0x90] sm:$0xf]
                %228 = vst [vmem:[%s214 + $0x18] sm:$0xf] %v227
                %v229 = vld [vmem:[%s213 + $0xa8] sm:$0xf]
                %230 = vst [vmem:[%s214 + $0x1c] sm:$0xf] %v229
                %v231 = vld [vmem:[%s213 + $0xc0] sm:$0xf]
                %232 = vst [vmem:[%s214 + $0x20] sm:$0xf] %v231
                %v233 = vld [vmem:[%s213 + $0xd8] sm:$0xf]
                %234 = vst [vmem:[%s214 + $0x24] sm:$0xf] %v233
                %v235 = vld [vmem:[%s213 + $0xf0] sm:$0xf]
                %236 = vst [vmem:[%s214 + $0x28] sm:$0xf] %v235
                %v237 = vld [vmem:[%s213 + $0x108] sm:$0xf]
                %238 = vst [vmem:[%s214 + $0x2c] sm:$0xf] %v237
                %v239 = vld [vmem:[%s213 + $0x120] sm:$0xf]
                %240 = vst [vmem:[%s214 + $0x30] sm:$0xf] %v239
                %v241 = vld [vmem:[%s213 + $0x138] sm:$0xf]
                %242 = vst [vmem:[%s214 + $0x34] sm:$0xf] %v241
                %v243 = vld [vmem:[%s213 + $0x150] sm:$0xf]
                %244 = vst [vmem:[%s214 + $0x38] sm:$0xf] %v243
                %v245 = vld [vmem:[%s213 + $0x168] sm:$0xf]
                %246 = vst [vmem:[%s214 + $0x3c] sm:$0xf] %v245
              $region37: #{vision_encoder_forward.12} parent=31 // loop_footer
                %s212 = sadd.s32 1, %s208
              $region38: #{vision_encoder_forward.12} parent=31 // loop_footer_branch
                %207 = sbr.rel target = $region34
              $region39: #{vision_encoder_forward.12} parent=31 // loop_exit
                _
            $region32: #{vision_encoder_forward.12} parent=23 // pred_fallthru
              _
          $region24: #{vision_encoder_forward.12} parent=19 // pred_fallthru
            _
          %298 = vnop
        $region20: #{vision_encoder_forward.12} parent=15 // pred_fallthru
          _
        // Predicated region
        $region58: #{vision_encoder_forward.12} parent=15 // pred_check
          %p299 = pneg %p95
        $region59: #{vision_encoder_forward.12} parent=15 // pred_check_branch
          %301 = sbr.rel (%p299) target = $region61
        $region60: #{vision_encoder_forward.12} parent=15 // pred_region
          %s302 = sand.u32 %s85, 1
          %s303 = sand.u32 %s85, 1
          %s304 = smul.addr %s303, 64
          %s305 = scalar_lea.vmem [#allocation6], %s304
          %s306 = smul.u32 %s16, 2
          %s307 = sadd.s32 %s306, %s19
          %s308 = sadd.s32 %s17, 2
          %s309 = smul.u32 16, %s307
          %s310 = smul.addr %s309, 6
          %s311 = sadd.s32 %s308, %s310
          %s312 = smul.addr %s311, 4
          %s313 = scalar_lea.vmem %s1, %s312
          // Predicated region
          $region62: #{vision_encoder_forward.12} parent=60 // pred_check
            _
          $region63: #{vision_encoder_forward.12} parent=60 // pred_check_branch
            %315 = sbr.rel (0) target = $region65
          $region64: #{vision_encoder_forward.12} parent=60 // pred_region
            // Predicated region
            $region66: #{vision_encoder_forward.12} parent=64 // pred_check
              _
            $region67: #{vision_encoder_forward.12} parent=64 // pred_check_branch
              %317 = sbr.rel target = $region69
            $region68: #{vision_encoder_forward.12} parent=64 // pred_region
              // Predicated region
              $region81: #{vision_encoder_forward.12} parent=68 // pred_check
                _
              $region82: #{vision_encoder_forward.12} parent=68 // pred_check_branch
                %362 = sbr.rel (0) target = $region84
              $region83: #{vision_encoder_forward.12} parent=68 // pred_region
                loop: start=0, step=1, limit=1
                $region85: #{vision_encoder_forward.12} parent=83 // loop_pre_header
                  _
                $region86: #{vision_encoder_forward.12} parent=83 // loop_header
                  %s364 = sphi 0, %s368
                  %p365 = scmp.ge.s32.totalorder %s364, 1
                  %s369 = sphi %s313, %s313
                  %s370 = sphi %s305, %s305
                $region87: #{vision_encoder_forward.12} parent=83 // loop_header_branch
                  %367 = sbr.rel (%p365) target = $region91
                $region88: #{vision_encoder_forward.12} parent=83 // loop_body
                  _
                $region89: #{vision_encoder_forward.12} parent=83 // loop_footer
                  %s368 = sadd.s32 1, %s364
                $region90: #{vision_encoder_forward.12} parent=83 // loop_footer_branch
                  %363 = sbr.rel target = $region86
                $region91: #{vision_encoder_forward.12} parent=83 // loop_exit
                  _
                loop: start=0, step=1, limit=1
                $region92: #{vision_encoder_forward.12} parent=83 // loop_pre_header
                  _
                $region93: #{vision_encoder_forward.12} parent=83 // loop_header
                  %s373 = sphi 0, %s377
                  %p374 = scmp.ge.s32.totalorder %s373, 1
                  %s378 = sphi %s313, %s313
                  %s379 = sphi %s305, %s305
                $region94: #{vision_encoder_forward.12} parent=83 // loop_header_branch
                  %376 = sbr.rel (%p374) target = $region98
                $region95: #{vision_encoder_forward.12} parent=83 // loop_body
                  %v380 = vld [vmem:[%s378] sm:$0xf]
                  %381 = vst [vmem:[%s379] sm:$0xf] %v380
                  %v382 = vld [vmem:[%s378 + $0x18] sm:$0xf]
                  %383 = vst [vmem:[%s379 + $0x4] sm:$0xf] %v382
                  %v384 = vld [vmem:[%s378 + $0x30] sm:$0xf]
                  %385 = vst [vmem:[%s379 + $0x8] sm:$0xf] %v384
                  %v386 = vld [vmem:[%s378 + $0x48] sm:$0xf]
                  %387 = vst [vmem:[%s379 + $0xc] sm:$0xf] %v386
                  %v388 = vld [vmem:[%s378 + $0x60] sm:$0xf]
                  %389 = vst [vmem:[%s379 + $0x10] sm:$0xf] %v388
                  %v390 = vld [vmem:[%s378 + $0x78] sm:$0xf]
                  %391 = vst [vmem:[%s379 + $0x14] sm:$0xf] %v390
                  %v392 = vld [vmem:[%s378 + $0x90] sm:$0xf]
                  %393 = vst [vmem:[%s379 + $0x18] sm:$0xf] %v392
                  %v394 = vld [vmem:[%s378 + $0xa8] sm:$0xf]
                  %395 = vst [vmem:[%s379 + $0x1c] sm:$0xf] %v394
                  %v396 = vld [vmem:[%s378 + $0xc0] sm:$0xf]
                  %397 = vst [vmem:[%s379 + $0x20] sm:$0xf] %v396
                  %v398 = vld [vmem:[%s378 + $0xd8] sm:$0xf]
                  %399 = vst [vmem:[%s379 + $0x24] sm:$0xf] %v398
                  %v400 = vld [vmem:[%s378 + $0xf0] sm:$0xf]
                  %401 = vst [vmem:[%s379 + $0x28] sm:$0xf] %v400
                  %v402 = vld [vmem:[%s378 + $0x108] sm:$0xf]
                  %403 = vst [vmem:[%s379 + $0x2c] sm:$0xf] %v402
                  %v404 = vld [vmem:[%s378 + $0x120] sm:$0xf]
                  %405 = vst [vmem:[%s379 + $0x30] sm:$0xf] %v404
                  %v406 = vld [vmem:[%s378 + $0x138] sm:$0xf]
                  %407 = vst [vmem:[%s379 + $0x34] sm:$0xf] %v406
                  %v408 = vld [vmem:[%s378 + $0x150] sm:$0xf]
                  %409 = vst [vmem:[%s379 + $0x38] sm:$0xf] %v408
                  %v410 = vld [vmem:[%s378 + $0x168] sm:$0xf]
                  %411 = vst [vmem:[%s379 + $0x3c] sm:$0xf] %v410
                $region96: #{vision_encoder_forward.12} parent=83 // loop_footer
                  %s377 = sadd.s32 1, %s373
                $region97: #{vision_encoder_forward.12} parent=83 // loop_footer_branch
                  %372 = sbr.rel target = $region93
                $region98: #{vision_encoder_forward.12} parent=83 // loop_exit
                  _
              $region84: #{vision_encoder_forward.12} parent=68 // pred_fallthru
                _
            $region69: #{vision_encoder_forward.12} parent=64 // pred_fallthru
              _
            // Predicated region
            $region70: #{vision_encoder_forward.12} parent=64 // pred_check
              _
            $region71: #{vision_encoder_forward.12} parent=64 // pred_check_branch
              %319 = sbr.rel (0) target = $region73
            $region72: #{vision_encoder_forward.12} parent=64 // pred_region
              loop: start=0, step=1, limit=1
              $region74: #{vision_encoder_forward.12} parent=72 // loop_pre_header
                _
              $region75: #{vision_encoder_forward.12} parent=72 // loop_header
                %s322 = sphi 0, %s326
                %p323 = scmp.ge.s32.totalorder %s322, 1
                %s327 = sphi %s313, %s313
                %s328 = sphi %s305, %s305
              $region76: #{vision_encoder_forward.12} parent=72 // loop_header_branch
                %325 = sbr.rel (%p323) target = $region80
              $region77: #{vision_encoder_forward.12} parent=72 // loop_body
                %v329 = vld [vmem:[%s327] sm:$0xf]
                %330 = vst [vmem:[%s328] sm:$0xf] %v329
                %v331 = vld [vmem:[%s327 + $0x18] sm:$0xf]
                %332 = vst [vmem:[%s328 + $0x4] sm:$0xf] %v331
                %v333 = vld [vmem:[%s327 + $0x30] sm:$0xf]
                %334 = vst [vmem:[%s328 + $0x8] sm:$0xf] %v333
                %v335 = vld [vmem:[%s327 + $0x48] sm:$0xf]
                %336 = vst [vmem:[%s328 + $0xc] sm:$0xf] %v335
                %v337 = vld [vmem:[%s327 + $0x60] sm:$0xf]
                %338 = vst [vmem:[%s328 + $0x10] sm:$0xf] %v337
                %v339 = vld [vmem:[%s327 + $0x78] sm:$0xf]
                %340 = vst [vmem:[%s328 + $0x14] sm:$0xf] %v339
                %v341 = vld [vmem:[%s327 + $0x90] sm:$0xf]
                %342 = vst [vmem:[%s328 + $0x18] sm:$0xf] %v341
                %v343 = vld [vmem:[%s327 + $0xa8] sm:$0xf]
                %344 = vst [vmem:[%s328 + $0x1c] sm:$0xf] %v343
                %v345 = vld [vmem:[%s327 + $0xc0] sm:$0xf]
                %346 = vst [vmem:[%s328 + $0x20] sm:$0xf] %v345
                %v347 = vld [vmem:[%s327 + $0xd8] sm:$0xf]
                %348 = vst [vmem:[%s328 + $0x24] sm:$0xf] %v347
                %v349 = vld [vmem:[%s327 + $0xf0] sm:$0xf]
                %350 = vst [vmem:[%s328 + $0x28] sm:$0xf] %v349
                %v351 = vld [vmem:[%s327 + $0x108] sm:$0xf]
                %352 = vst [vmem:[%s328 + $0x2c] sm:$0xf] %v351
                %v353 = vld [vmem:[%s327 + $0x120] sm:$0xf]
                %354 = vst [vmem:[%s328 + $0x30] sm:$0xf] %v353
                %v355 = vld [vmem:[%s327 + $0x138] sm:$0xf]
                %356 = vst [vmem:[%s328 + $0x34] sm:$0xf] %v355
                %v357 = vld [vmem:[%s327 + $0x150] sm:$0xf]
                %358 = vst [vmem:[%s328 + $0x38] sm:$0xf] %v357
                %v359 = vld [vmem:[%s327 + $0x168] sm:$0xf]
                %360 = vst [vmem:[%s328 + $0x3c] sm:$0xf] %v359
              $region78: #{vision_encoder_forward.12} parent=72 // loop_footer
                %s326 = sadd.s32 1, %s322
              $region79: #{vision_encoder_forward.12} parent=72 // loop_footer_branch
                %321 = sbr.rel target = $region75
              $region80: #{vision_encoder_forward.12} parent=72 // loop_exit
                _
            $region73: #{vision_encoder_forward.12} parent=64 // pred_fallthru
              _
          $region65: #{vision_encoder_forward.12} parent=60 // pred_fallthru
            _
          %412 = vnop
        $region61: #{vision_encoder_forward.12} parent=15 // pred_fallthru
          _
        // Predicated region
        $region99: #{vision_encoder_forward.12} parent=15 // pred_check
          %p413 = pneg %p129
        $region100: #{vision_encoder_forward.12} parent=15 // pred_check_branch
          %415 = sbr.rel (%p413) target = $region102
        $region101: #{vision_encoder_forward.12} parent=15 // pred_region
          %s416 = sand.u32 %s119, 1
          %s417 = sand.u32 %s119, 1
          %s418 = smul.addr %s417, 64
          %s419 = scalar_lea.vmem [#allocation7], %s418
          %s420 = smul.u32 %s16, 2
          %s421 = sadd.s32 %s420, %s19
          %s422 = sadd.s32 %s17, 4
          %s423 = smul.u32 16, %s421
          %s424 = smul.addr %s423, 6
          %s425 = sadd.s32 %s422, %s424
          %s426 = smul.addr %s425, 4
          %s427 = scalar_lea.vmem %s2, %s426
          // Predicated region
          $region103: #{vision_encoder_forward.12} parent=101 // pred_check
            _
          $region104: #{vision_encoder_forward.12} parent=101 // pred_check_branch
            %429 = sbr.rel (0) target = $region106
          $region105: #{vision_encoder_forward.12} parent=101 // pred_region
            // Predicated region
            $region107: #{vision_encoder_forward.12} parent=105 // pred_check
              _
            $region108: #{vision_encoder_forward.12} parent=105 // pred_check_branch
              %431 = sbr.rel target = $region110
            $region109: #{vision_encoder_forward.12} parent=105 // pred_region
              // Predicated region
              $region122: #{vision_encoder_forward.12} parent=109 // pred_check
                _
              $region123: #{vision_encoder_forward.12} parent=109 // pred_check_branch
                %476 = sbr.rel (0) target = $region125
              $region124: #{vision_encoder_forward.12} parent=109 // pred_region
                loop: start=0, step=1, limit=1
                $region126: #{vision_encoder_forward.12} parent=124 // loop_pre_header
                  _
                $region127: #{vision_encoder_forward.12} parent=124 // loop_header
                  %s478 = sphi 0, %s482
                  %p479 = scmp.ge.s32.totalorder %s478, 1
                  %s483 = sphi %s427, %s427
                  %s484 = sphi %s419, %s419
                $region128: #{vision_encoder_forward.12} parent=124 // loop_header_branch
                  %481 = sbr.rel (%p479) target = $region132
                $region129: #{vision_encoder_forward.12} parent=124 // loop_body
                  _
                $region130: #{vision_encoder_forward.12} parent=124 // loop_footer
                  %s482 = sadd.s32 1, %s478
                $region131: #{vision_encoder_forward.12} parent=124 // loop_footer_branch
                  %477 = sbr.rel target = $region127
                $region132: #{vision_encoder_forward.12} parent=124 // loop_exit
                  _
                loop: start=0, step=1, limit=1
                $region133: #{vision_encoder_forward.12} parent=124 // loop_pre_header
                  _
                $region134: #{vision_encoder_forward.12} parent=124 // loop_header
                  %s487 = sphi 0, %s491
                  %p488 = scmp.ge.s32.totalorder %s487, 1
                  %s492 = sphi %s427, %s427
                  %s493 = sphi %s419, %s419
                $region135: #{vision_encoder_forward.12} parent=124 // loop_header_branch
                  %490 = sbr.rel (%p488) target = $region139
                $region136: #{vision_encoder_forward.12} parent=124 // loop_body
                  %v494 = vld [vmem:[%s492] sm:$0xf]
                  %495 = vst [vmem:[%s493] sm:$0xf] %v494
                  %v496 = vld [vmem:[%s492 + $0x18] sm:$0xf]
                  %497 = vst [vmem:[%s493 + $0x4] sm:$0xf] %v496
                  %v498 = vld [vmem:[%s492 + $0x30] sm:$0xf]
                  %499 = vst [vmem:[%s493 + $0x8] sm:$0xf] %v498
                  %v500 = vld [vmem:[%s492 + $0x48] sm:$0xf]
                  %501 = vst [vmem:[%s493 + $0xc] sm:$0xf] %v500
                  %v502 = vld [vmem:[%s492 + $0x60] sm:$0xf]
                  %503 = vst [vmem:[%s493 + $0x10] sm:$0xf] %v502
                  %v504 = vld [vmem:[%s492 + $0x78] sm:$0xf]
                  %505 = vst [vmem:[%s493 + $0x14] sm:$0xf] %v504
                  %v506 = vld [vmem:[%s492 + $0x90] sm:$0xf]
                  %507 = vst [vmem:[%s493 + $0x18] sm:$0xf] %v506
                  %v508 = vld [vmem:[%s492 + $0xa8] sm:$0xf]
                  %509 = vst [vmem:[%s493 + $0x1c] sm:$0xf] %v508
                  %v510 = vld [vmem:[%s492 + $0xc0] sm:$0xf]
                  %511 = vst [vmem:[%s493 + $0x20] sm:$0xf] %v510
                  %v512 = vld [vmem:[%s492 + $0xd8] sm:$0xf]
                  %513 = vst [vmem:[%s493 + $0x24] sm:$0xf] %v512
                  %v514 = vld [vmem:[%s492 + $0xf0] sm:$0xf]
                  %515 = vst [vmem:[%s493 + $0x28] sm:$0xf] %v514
                  %v516 = vld [vmem:[%s492 + $0x108] sm:$0xf]
                  %517 = vst [vmem:[%s493 + $0x2c] sm:$0xf] %v516
                  %v518 = vld [vmem:[%s492 + $0x120] sm:$0xf]
                  %519 = vst [vmem:[%s493 + $0x30] sm:$0xf] %v518
                  %v520 = vld [vmem:[%s492 + $0x138] sm:$0xf]
                  %521 = vst [vmem:[%s493 + $0x34] sm:$0xf] %v520
                  %v522 = vld [vmem:[%s492 + $0x150] sm:$0xf]
                  %523 = vst [vmem:[%s493 + $0x38] sm:$0xf] %v522
                  %v524 = vld [vmem:[%s492 + $0x168] sm:$0xf]
                  %525 = vst [vmem:[%s493 + $0x3c] sm:$0xf] %v524
                $region137: #{vision_encoder_forward.12} parent=124 // loop_footer
                  %s491 = sadd.s32 1, %s487
                $region138: #{vision_encoder_forward.12} parent=124 // loop_footer_branch
                  %486 = sbr.rel target = $region134
                $region139: #{vision_encoder_forward.12} parent=124 // loop_exit
                  _
              $region125: #{vision_encoder_forward.12} parent=109 // pred_fallthru
                _
            $region110: #{vision_encoder_forward.12} parent=105 // pred_fallthru
              _
            // Predicated region
            $region111: #{vision_encoder_forward.12} parent=105 // pred_check
              _
            $region112: #{vision_encoder_forward.12} parent=105 // pred_check_branch
              %433 = sbr.rel (0) target = $region114
            $region113: #{vision_encoder_forward.12} parent=105 // pred_region
              loop: start=0, step=1, limit=1
              $region115: #{vision_encoder_forward.12} parent=113 // loop_pre_header
                _
              $region116: #{vision_encoder_forward.12} parent=113 // loop_header
                %s436 = sphi 0, %s440
                %p437 = scmp.ge.s32.totalorder %s436, 1
                %s441 = sphi %s427, %s427
                %s442 = sphi %s419, %s419
              $region117: #{vision_encoder_forward.12} parent=113 // loop_header_branch
                %439 = sbr.rel (%p437) target = $region121
              $region118: #{vision_encoder_forward.12} parent=113 // loop_body
                %v443 = vld [vmem:[%s441] sm:$0xf]
                %444 = vst [vmem:[%s442] sm:$0xf] %v443
                %v445 = vld [vmem:[%s441 + $0x18] sm:$0xf]
                %446 = vst [vmem:[%s442 + $0x4] sm:$0xf] %v445
                %v447 = vld [vmem:[%s441 + $0x30] sm:$0xf]
                %448 = vst [vmem:[%s442 + $0x8] sm:$0xf] %v447
                %v449 = vld [vmem:[%s441 + $0x48] sm:$0xf]
                %450 = vst [vmem:[%s442 + $0xc] sm:$0xf] %v449
                %v451 = vld [vmem:[%s441 + $0x60] sm:$0xf]
                %452 = vst [vmem:[%s442 + $0x10] sm:$0xf] %v451
                %v453 = vld [vmem:[%s441 + $0x78] sm:$0xf]
                %454 = vst [vmem:[%s442 + $0x14] sm:$0xf] %v453
                %v455 = vld [vmem:[%s441 + $0x90] sm:$0xf]
                %456 = vst [vmem:[%s442 + $0x18] sm:$0xf] %v455
                %v457 = vld [vmem:[%s441 + $0xa8] sm:$0xf]
                %458 = vst [vmem:[%s442 + $0x1c] sm:$0xf] %v457
                %v459 = vld [vmem:[%s441 + $0xc0] sm:$0xf]
                %460 = vst [vmem:[%s442 + $0x20] sm:$0xf] %v459
                %v461 = vld [vmem:[%s441 + $0xd8] sm:$0xf]
                %462 = vst [vmem:[%s442 + $0x24] sm:$0xf] %v461
                %v463 = vld [vmem:[%s441 + $0xf0] sm:$0xf]
                %464 = vst [vmem:[%s442 + $0x28] sm:$0xf] %v463
                %v465 = vld [vmem:[%s441 + $0x108] sm:$0xf]
                %466 = vst [vmem:[%s442 + $0x2c] sm:$0xf] %v465
                %v467 = vld [vmem:[%s441 + $0x120] sm:$0xf]
                %468 = vst [vmem:[%s442 + $0x30] sm:$0xf] %v467
                %v469 = vld [vmem:[%s441 + $0x138] sm:$0xf]
                %470 = vst [vmem:[%s442 + $0x34] sm:$0xf] %v469
                %v471 = vld [vmem:[%s441 + $0x150] sm:$0xf]
                %472 = vst [vmem:[%s442 + $0x38] sm:$0xf] %v471
                %v473 = vld [vmem:[%s441 + $0x168] sm:$0xf]
                %474 = vst [vmem:[%s442 + $0x3c] sm:$0xf] %v473
              $region119: #{vision_encoder_forward.12} parent=113 // loop_footer
                %s440 = sadd.s32 1, %s436
              $region120: #{vision_encoder_forward.12} parent=113 // loop_footer_branch
                %435 = sbr.rel target = $region116
              $region121: #{vision_encoder_forward.12} parent=113 // loop_exit
                _
            $region114: #{vision_encoder_forward.12} parent=105 // pred_fallthru
              _
          $region106: #{vision_encoder_forward.12} parent=101 // pred_fallthru
            _
          %526 = vnop
        $region102: #{vision_encoder_forward.12} parent=15 // pred_fallthru
          _
      $region16: #{vision_encoder_forward.12} parent=5 // pred_fallthru
        _
      %p527 = scmp.le.s32.totalorder 1, %s9
      %p528 = scmp.lt.s32.totalorder %s9, 17
      %p529 = pnand %p527, %p528
      %p530 = pneg %p529
      // Predicated region
      $region140: #{vision_encoder_forward.12} parent=5 // pred_check
        _
      $region141: #{vision_encoder_forward.12} parent=5 // pred_check_branch
        %532 = sbr.rel (%p529) target = $region143
      $region142: #{vision_encoder_forward.12} parent=5 // pred_region
        %s533 = ssub.s32 %s9, 1
        %s534 = sand.u32 %s54, 1
        %s535 = sand.u32 %s54, 1
        %s536 = smul.addr %s535, 64
        %s537 = scalar_lea.vmem [#allocation5], %s536
        // Predicated region
        $region144: #{vision_encoder_forward.12} parent=142 // pred_check
          %p538 = pneg %p67
        $region145: #{vision_encoder_forward.12} parent=142 // pred_check_branch
          %540 = sbr.rel (%p538) target = $region147
        $region146: #{vision_encoder_forward.12} parent=142 // pred_region
          _
        $region147: #{vision_encoder_forward.12} parent=142 // pred_fallthru
          _
        %s541 = sand.u32 %s88, 1
        %s542 = sand.u32 %s88, 1
        %s543 = smul.addr %s542, 64
        %s544 = scalar_lea.vmem [#allocation6], %s543
        // Predicated region
        $region148: #{vision_encoder_forward.12} parent=142 // pred_check
          %p545 = pneg %p101
        $region149: #{vision_encoder_forward.12} parent=142 // pred_check_branch
          %547 = sbr.rel (%p545) target = $region151
        $region150: #{vision_encoder_forward.12} parent=142 // pred_region
          _
        $region151: #{vision_encoder_forward.12} parent=142 // pred_fallthru
          _
        %s548 = sand.u32 %s122, 1
        %s549 = sand.u32 %s122, 1
        %s550 = smul.addr %s549, 64
        %s551 = scalar_lea.vmem [#allocation7], %s550
        // Predicated region
        $region152: #{vision_encoder_forward.12} parent=142 // pred_check
          %p552 = pneg %p135
        $region153: #{vision_encoder_forward.12} parent=142 // pred_check_branch
          %554 = sbr.rel (%p552) target = $region155
        $region154: #{vision_encoder_forward.12} parent=142 // pred_region
          _
        $region155: #{vision_encoder_forward.12} parent=142 // pred_fallthru
          _
        %s555 = sand.u32 %s54, 1
        %s556 = sand.u32 %s54, 1
        %s557 = smul.addr %s556, 64
        %s558 = scalar_lea.vmem [#allocation5], %s557
        %p559 = pneg %p67
        %p560 = pneg %p64
        %s561 = sand.u32 %s88, 1
        %s562 = sand.u32 %s88, 1
        %s563 = smul.addr %s562, 64
        %s564 = scalar_lea.vmem [#allocation6], %s563
        %p565 = pneg %p101
        %p566 = pneg %p98
        %s567 = sand.u32 %s122, 1
        %s568 = sand.u32 %s122, 1
        %s569 = smul.addr %s568, 64
        %s570 = scalar_lea.vmem [#allocation7], %s569
        %p571 = pneg %p135
        %p572 = pneg %p132
        %p573 = pneg %p167
        %p574 = pneg %p164
        %s575 = sand.u32 %s154, 1
        %s576 = sand.u32 %s154, 1
        %s577 = smul.addr %s576, 64
        %s578 = scalar_lea.vmem [#allocation8], %s577
        %s579 = smul.u32 %s20, 2
        %s580 = sadd.s32 %s579, %s22
        %s581 = smul.u32 16, %s580
        %s582 = smul.u32 %s20, 2
        %s583 = sadd.s32 %s582, %s23
        %s584 = sadd.s32 %s21, 2
        %s585 = smul.u32 16, %s583
        %s586 = smul.u32 %s20, 2
        %s587 = sadd.s32 %s586, %s23
        %s588 = sadd.s32 %s21, 4
        %s589 = smul.u32 16, %s587
        %s590 = smul.u32 %s20, 2
        %s591 = sadd.s32 %s590, %s22
        %s592 = smul.u32 16, %s591
        %p594 = scmp.eq.s32.totalorder %s23, 0
        // Predicated region
        $region156: #{vision_encoder_forward.12} parent=142 // pred_check
          %p595 = pneg %p594
        $region157: #{vision_encoder_forward.12} parent=142 // pred_check_branch
          %597 = sbr.rel (%p595) target = $region159
        $region158: #{vision_encoder_forward.12} parent=142 // pred_region
          %vm598 = vcmask 7168
          %599 = vst.msk [vmem:[#allocation2] sm:$0xff] %vm598, -inf
          %600 = vst.msk [vmem:[#allocation2 + $0x8] sm:$0xff] %vm598, -inf
          %601 = vst.msk [vmem:[#allocation2 + $0x10] sm:$0xff] %vm598, -inf
          %602 = vst.msk [vmem:[#allocation2 + $0x18] sm:$0xff] %vm598, -inf
          %603 = vst.msk [vmem:[#allocation2 + $0x20] sm:$0xff] %vm598, -inf
          %604 = vst.msk [vmem:[#allocation2 + $0x28] sm:$0xff] %vm598, -inf
          %605 = vst.msk [vmem:[#allocation2 + $0x30] sm:$0xff] %vm598, -inf
          %606 = vst.msk [vmem:[#allocation2 + $0x38] sm:$0xff] %vm598, -inf
          %607 = vst.msk [vmem:[#allocation2 + $0x40] sm:$0xff] %vm598, -inf
          %608 = vst.msk [vmem:[#allocation2 + $0x48] sm:$0xff] %vm598, -inf
          %609 = vst.msk [vmem:[#allocation2 + $0x50] sm:$0xff] %vm598, -inf
          %610 = vst.msk [vmem:[#allocation2 + $0x58] sm:$0xff] %vm598, -inf
          %611 = vst.msk [vmem:[#allocation2 + $0x60] sm:$0xff] %vm598, -inf
          %612 = vst.msk [vmem:[#allocation2 + $0x68] sm:$0xff] %vm598, -inf
          %613 = vst.msk [vmem:[#allocation2 + $0x70] sm:$0xff] %vm598, -inf
          %614 = vst.msk [vmem:[#allocation2 + $0x78] sm:$0xff] %vm598, -inf
          %615 = vst.msk [vmem:[#allocation3] sm:$0xff] %vm598, 0.0
          %616 = vst.msk [vmem:[#allocation3 + $0x8] sm:$0xff] %vm598, 0.0
          %617 = vst.msk [vmem:[#allocation3 + $0x10] sm:$0xff] %vm598, 0.0
          %618 = vst.msk [vmem:[#allocation3 + $0x18] sm:$0xff] %vm598, 0.0
          %619 = vst.msk [vmem:[#allocation3 + $0x20] sm:$0xff] %vm598, 0.0
          %620 = vst.msk [vmem:[#allocation3 + $0x28] sm:$0xff] %vm598, 0.0
          %621 = vst.msk [vmem:[#allocation3 + $0x30] sm:$0xff] %vm598, 0.0
          %622 = vst.msk [vmem:[#allocation3 + $0x38] sm:$0xff] %vm598, 0.0
          %623 = vst.msk [vmem:[#allocation3 + $0x40] sm:$0xff] %vm598, 0.0
          %624 = vst.msk [vmem:[#allocation3 + $0x48] sm:$0xff] %vm598, 0.0
          %625 = vst.msk [vmem:[#allocation3 + $0x50] sm:$0xff] %vm598, 0.0
          %626 = vst.msk [vmem:[#allocation3 + $0x58] sm:$0xff] %vm598, 0.0
          %627 = vst.msk [vmem:[#allocation3 + $0x60] sm:$0xff] %vm598, 0.0
          %628 = vst.msk [vmem:[#allocation3 + $0x68] sm:$0xff] %vm598, 0.0
          %629 = vst.msk [vmem:[#allocation3 + $0x70] sm:$0xff] %vm598, 0.0
          %630 = vst.msk [vmem:[#allocation3 + $0x78] sm:$0xff] %vm598, 0.0
          %631 = vst [vmem:[#allocation4] sm:$0xff] 0.0
          %632 = vst [vmem:[#allocation4 + $0x8] sm:$0xff] 0.0
          %633 = vst [vmem:[#allocation4 + $0x10] sm:$0xff] 0.0
          %634 = vst [vmem:[#allocation4 + $0x18] sm:$0xff] 0.0
          %635 = vst [vmem:[#allocation4 + $0x20] sm:$0xff] 0.0
          %636 = vst [vmem:[#allocation4 + $0x28] sm:$0xff] 0.0
          %637 = vst [vmem:[#allocation4 + $0x30] sm:$0xff] 0.0
          %638 = vst [vmem:[#allocation4 + $0x38] sm:$0xff] 0.0
          %639 = vst [vmem:[#allocation4 + $0x40] sm:$0xff] 0.0
          %640 = vst [vmem:[#allocation4 + $0x48] sm:$0xff] 0.0
          %641 = vst [vmem:[#allocation4 + $0x50] sm:$0xff] 0.0
          %642 = vst [vmem:[#allocation4 + $0x58] sm:$0xff] 0.0
          %643 = vst [vmem:[#allocation4 + $0x60] sm:$0xff] 0.0
          %644 = vst [vmem:[#allocation4 + $0x68] sm:$0xff] 0.0
          %645 = vst [vmem:[#allocation4 + $0x70] sm:$0xff] 0.0
          %646 = vst [vmem:[#allocation4 + $0x78] sm:$0xff] 0.0
        $region159: #{vision_encoder_forward.12} parent=142 // pred_fallthru
          _
        %v647 = vld [vmem:[%s537] sm:$0xf]
        %v648 = vld [vmem:[%s537 + $0x4] sm:$0xf]
        %v649 = vld [vmem:[%s537 + $0x8] sm:$0xf]
        %v650 = vld [vmem:[%s537 + $0xc] sm:$0xf]
        %v651 = vld [vmem:[%s537 + $0x10] sm:$0xf]
        %v652 = vld [vmem:[%s537 + $0x14] sm:$0xf]
        %v653 = vld [vmem:[%s537 + $0x18] sm:$0xf]
        %v654 = vld [vmem:[%s537 + $0x1c] sm:$0xf]
        %v655 = vld [vmem:[%s537 + $0x20] sm:$0xf]
        %v656 = vld [vmem:[%s537 + $0x24] sm:$0xf]
        %v657 = vld [vmem:[%s537 + $0x28] sm:$0xf]
        %v658 = vld [vmem:[%s537 + $0x2c] sm:$0xf]
        %v659 = vld [vmem:[%s537 + $0x30] sm:$0xf]
        %v660 = vld [vmem:[%s537 + $0x34] sm:$0xf]
        %v661 = vld [vmem:[%s537 + $0x38] sm:$0xf]
        %v662 = vld [vmem:[%s537 + $0x3c] sm:$0xf]
        %v663 = vld [vmem:[%s544] sm:$0xf]
        %v664 = vld [vmem:[%s544 + $0x4] sm:$0xf]
        %v665 = vld [vmem:[%s544 + $0x8] sm:$0xf]
        %v666 = vld [vmem:[%s544 + $0xc] sm:$0xf]
        %v667 = vld [vmem:[%s544 + $0x10] sm:$0xf]
        %v668 = vld [vmem:[%s544 + $0x14] sm:$0xf]
        %v669 = vld [vmem:[%s544 + $0x18] sm:$0xf]
        %v670 = vld [vmem:[%s544 + $0x1c] sm:$0xf]
        %v671 = vld [vmem:[%s544 + $0x20] sm:$0xf]
        %v672 = vld [vmem:[%s544 + $0x24] sm:$0xf]
        %v673 = vld [vmem:[%s544 + $0x28] sm:$0xf]
        %v674 = vld [vmem:[%s544 + $0x2c] sm:$0xf]
        %v675 = vld [vmem:[%s544 + $0x30] sm:$0xf]
        %v676 = vld [vmem:[%s544 + $0x34] sm:$0xf]
        %v677 = vld [vmem:[%s544 + $0x38] sm:$0xf]
        %v678 = vld [vmem:[%s544 + $0x3c] sm:$0xf]
        %v695 = vunpack.c.l.b16 %v647
        %v696 = vunpack.c.l.b16 %v648
        %v697 = vunpack.c.l.b16 %v649
        %v698 = vunpack.c.l.b16 %v650
        %v699 = vunpack.c.l.b16 %v651
        %v700 = vunpack.c.l.b16 %v652
        %v701 = vunpack.c.l.b16 %v653
        %v702 = vunpack.c.l.b16 %v654
        %v703 = vunpack.c.l.b16 %v655
        %v704 = vunpack.c.l.b16 %v656
        %v705 = vunpack.c.l.b16 %v657
        %v706 = vunpack.c.l.b16 %v658
        %v707 = vunpack.c.l.b16 %v659
        %v708 = vunpack.c.l.b16 %v660
        %v709 = vunpack.c.l.b16 %v661
        %v710 = vunpack.c.l.b16 %v662
        %v711 = vpack.c.b16 %v696, %v695
        %v712 = vpack.c.b16 %v698, %v697
        %v713 = vpack.c.b16 %v700, %v699
        %v714 = vpack.c.b16 %v702, %v701
        %v715 = vpack.c.b16 %v704, %v703
        %v716 = vpack.c.b16 %v706, %v705
        %v717 = vpack.c.b16 %v708, %v707
        %v718 = vpack.c.b16 %v710, %v709
        %v743 = vunpack.c.l.b16 %v663
        %v744 = vunpack.c.l.b16 %v664
        %v745 = vunpack.c.l.b16 %v665
        %v746 = vunpack.c.l.b16 %v666
        %v747 = vunpack.c.l.b16 %v667
        %v748 = vunpack.c.l.b16 %v668
        %v749 = vunpack.c.l.b16 %v669
        %v750 = vunpack.c.l.b16 %v670
        %v751 = vunpack.c.l.b16 %v671
        %v752 = vunpack.c.l.b16 %v672
        %v753 = vunpack.c.l.b16 %v673
        %v754 = vunpack.c.l.b16 %v674
        %v755 = vunpack.c.l.b16 %v675
        %v756 = vunpack.c.l.b16 %v676
        %v757 = vunpack.c.l.b16 %v677
        %v758 = vunpack.c.l.b16 %v678
        %v759 = vpack.c.b16 %v744, %v743
        %v760 = vpack.c.b16 %v746, %v745
        %v761 = vpack.c.b16 %v748, %v747
        %v762 = vpack.c.b16 %v750, %v749
        %v763 = vpack.c.b16 %v752, %v751
        %v764 = vpack.c.b16 %v754, %v753
        %v765 = vpack.c.b16 %v756, %v755
        %v766 = vpack.c.b16 %v758, %v757
        %775 = vmatprep.subr.bf16.mxu0 0
        %776 = vmatpush1.bf16.xpose.msra.mxu0 %v759
        %777 = vmatprep.subr.bf16.mxu0 0
        %778 = vmatpush1.bf16.xpose.msra.mxu0 %v760
        %779 = vmatprep.subr.bf16.mxu0 0
        %780 = vmatpush1.bf16.xpose.msra.mxu0 %v761
        %781 = vmatprep.subr.bf16.mxu0 0
        %782 = vmatpush1.bf16.xpose.msra.mxu0 %v762
        %783 = vmatprep.subr.bf16.mxu0 0
        %784 = vmatpush1.bf16.xpose.msra.mxu0 %v763
        %785 = vmatprep.subr.bf16.mxu0 0
        %786 = vmatpush1.bf16.xpose.msra.mxu0 %v764
        %787 = vmatprep.subr.bf16.mxu0 0
        %788 = vmatpush1.bf16.xpose.msra.mxu0 %v765
        %789 = vmatprep.subr.bf16.mxu0 0
        %790 = vmatpush1.bf16.xpose.msra.mxu0 %v766
        %791 = vmatprep.subr.bf16.mxu0 0
        %792 = vmatpush1.bf16.xpose.msra.mxu0 0
        %793 = vmatprep.subr.bf16.mxu0 0
        %794 = vmatpush1.bf16.xpose.msra.mxu0 0
        %795 = vmatprep.subr.bf16.mxu0 0
        %796 = vmatpush1.bf16.xpose.msra.mxu0 0
        %797 = vmatprep.subr.bf16.mxu0 0
        %798 = vmatpush1.bf16.xpose.msra.mxu0 0
        %799 = vmatprep.subr.bf16.mxu0 0
        %800 = vmatpush1.bf16.xpose.msra.mxu0 0
        %801 = vmatprep.subr.bf16.mxu0 0
        %802 = vmatpush1.bf16.xpose.msra.mxu0 0
        %803 = vmatprep.subr.bf16.mxu0 0
        %804 = vmatpush1.bf16.xpose.msra.mxu0 0
        %805 = vmatprep.subr.bf16.mxu0 0
        %806 = vmatpush1.bf16.xpose.msra.mxu0 0
        %807 = vmatprep.mubr.bf16.mxu0 0
        %808 = vmatmul.mubr.bf16.gmra.mrb[0].mxu0 %v711
        %v809 = vpop.f32.mrb[0].mxu0
        %v810 = vadd.f32 0.0, %v809
        %v811 = vpop.f32.mrb[0].mxu0
        %v812 = vpop.f32.mrb[0].mxu0
        %v813 = vadd.f32 0.0, %v812
        %v814 = vpop.f32.mrb[0].mxu0
        %815 = vmatprep.mubr.bf16.mxu0 0
        %816 = vmatmul.mubr.bf16.gmra.mrb[0].mxu0 %v712
        %v817 = vpop.f32.mrb[0].mxu0
        %v818 = vadd.f32 0.0, %v817
        %v819 = vpop.f32.mrb[0].mxu0
        %v820 = vpop.f32.mrb[0].mxu0
        %v821 = vadd.f32 0.0, %v820
        %v822 = vpop.f32.mrb[0].mxu0
        %823 = vmatprep.mubr.bf16.mxu0 0
        %824 = vmatmul.mubr.bf16.gmra.mrb[0].mxu0 %v713
        %v825 = vpop.f32.mrb[0].mxu0
        %v826 = vadd.f32 0.0, %v825
        %v827 = vpop.f32.mrb[0].mxu0
        %v828 = vpop.f32.mrb[0].mxu0
        %v829 = vadd.f32 0.0, %v828
        %v830 = vpop.f32.mrb[0].mxu0
        %831 = vmatprep.mubr.bf16.mxu0 0
        %832 = vmatmul.mubr.bf16.gmra.mrb[0].mxu0 %v714
        %v833 = vpop.f32.mrb[0].mxu0
        %v834 = vadd.f32 0.0, %v833
        %v835 = vpop.f32.mrb[0].mxu0
        %v836 = vpop.f32.mrb[0].mxu0
        %v837 = vadd.f32 0.0, %v836
        %v838 = vpop.f32.mrb[0].mxu0
        %839 = vmatprep.mubr.bf16.mxu0 0
        %840 = vmatmul.mubr.bf16.gmra.mrb[0].mxu0 %v715
        %v841 = vpop.f32.mrb[0].mxu0
        %v842 = vadd.f32 0.0, %v841
        %v843 = vpop.f32.mrb[0].mxu0
        %v844 = vpop.f32.mrb[0].mxu0
        %v845 = vadd.f32 0.0, %v844
        %v846 = vpop.f32.mrb[0].mxu0
        %847 = vmatprep.mubr.bf16.mxu0 0
        %848 = vmatmul.mubr.bf16.gmra.mrb[0].mxu0 %v716
        %v849 = vpop.f32.mrb[0].mxu0
        %v850 = vadd.f32 0.0, %v849
        %v851 = vpop.f32.mrb[0].mxu0
        %v852 = vpop.f32.mrb[0].mxu0
        %v853 = vadd.f32 0.0, %v852
        %v854 = vpop.f32.mrb[0].mxu0
        %855 = vmatprep.mubr.bf16.mxu0 0
        %856 = vmatmul.mubr.bf16.gmra.mrb[0].mxu0 %v717
        %v857 = vpop.f32.mrb[0].mxu0
        %v858 = vadd.f32 0.0, %v857
        %v859 = vpop.f32.mrb[0].mxu0
        %v860 = vpop.f32.mrb[0].mxu0
        %v861 = vadd.f32 0.0, %v860
        %v862 = vpop.f32.mrb[0].mxu0
        %863 = vmatprep.mubr.bf16.mxu0 0
        %864 = vmatmul.mubr.bf16.gmra.mrb[0].mxu0 %v718
        %v865 = vpop.f32.mrb[0].mxu0
        %v866 = vadd.f32 0.0, %v865
        %v867 = vpop.f32.mrb[0].mxu0
        %v868 = vpop.f32.mrb[0].mxu0
        %v869 = vadd.f32 0.0, %v868
        %v870 = vpop.f32.mrb[0].mxu0
        %871 = vdwg.mxu0
        %v872 = vmul.f32 %v810, 0.088388346
        %v873 = vmul.f32 %v813, 0.088388346
        %v874 = vmul.f32 %v818, 0.088388346
        %v875 = vmul.f32 %v821, 0.088388346
        %v876 = vmul.f32 %v826, 0.088388346
        %v877 = vmul.f32 %v829, 0.088388346
        %v878 = vmul.f32 %v834, 0.088388346
        %v879 = vmul.f32 %v837, 0.088388346
        %v880 = vmul.f32 %v842, 0.088388346
        %v881 = vmul.f32 %v845, 0.088388346
        %v882 = vmul.f32 %v850, 0.088388346
        %v883 = vmul.f32 %v853, 0.088388346
        %v884 = vmul.f32 %v858, 0.088388346
        %v885 = vmul.f32 %v861, 0.088388346
        %v886 = vmul.f32 %v866, 0.088388346
        %v887 = vmul.f32 %v869, 0.088388346
        %v888 = vld [vmem:[#allocation2] sm:$0xff]
        %v889 = vld [vmem:[#allocation2 + $0x8] sm:$0xff]
        %v890 = vld [vmem:[#allocation2 + $0x10] sm:$0xff]
        %v891 = vld [vmem:[#allocation2 + $0x18] sm:$0xff]
        %v892 = vld [vmem:[#allocation2 + $0x20] sm:$0xff]
        %v893 = vld [vmem:[#allocation2 + $0x28] sm:$0xff]
        %v894 = vld [vmem:[#allocation2 + $0x30] sm:$0xff]
        %v895 = vld [vmem:[#allocation2 + $0x38] sm:$0xff]
        %v896 = vld [vmem:[#allocation2 + $0x40] sm:$0xff]
        %v897 = vld [vmem:[#allocation2 + $0x48] sm:$0xff]
        %v898 = vld [vmem:[#allocation2 + $0x50] sm:$0xff]
        %v899 = vld [vmem:[#allocation2 + $0x58] sm:$0xff]
        %v900 = vld [vmem:[#allocation2 + $0x60] sm:$0xff]
        %v901 = vld [vmem:[#allocation2 + $0x68] sm:$0xff]
        %v902 = vld [vmem:[#allocation2 + $0x70] sm:$0xff]
        %v903 = vld [vmem:[#allocation2 + $0x78] sm:$0xff]
        %904 = vmax.xlane.f32.xlu0 %v872
        %v905 = vpop.xlane.xlu0 %904
        %906 = vmax.xlane.f32.xlu0 %v873
        %v907 = vpop.xlane.xlu0 %906
        %908 = vmax.xlane.f32.xlu0 %v874
        %v909 = vpop.xlane.xlu0 %908
        %910 = vmax.xlane.f32.xlu0 %v875
        %v911 = vpop.xlane.xlu0 %910
        %912 = vmax.xlane.f32.xlu0 %v876
        %v913 = vpop.xlane.xlu0 %912
        %914 = vmax.xlane.f32.xlu0 %v877
        %v915 = vpop.xlane.xlu0 %914
        %916 = vmax.xlane.f32.xlu0 %v878
        %v917 = vpop.xlane.xlu0 %916
        %918 = vmax.xlane.f32.xlu0 %v879
        %v919 = vpop.xlane.xlu0 %918
        %920 = vmax.xlane.f32.xlu0 %v880
        %v921 = vpop.xlane.xlu0 %920
        %922 = vmax.xlane.f32.xlu0 %v881
        %v923 = vpop.xlane.xlu0 %922
        %924 = vmax.xlane.f32.xlu0 %v882
        %v925 = vpop.xlane.xlu0 %924
        %926 = vmax.xlane.f32.xlu0 %v883
        %v927 = vpop.xlane.xlu0 %926
        %928 = vmax.xlane.f32.xlu0 %v884
        %v929 = vpop.xlane.xlu0 %928
        %930 = vmax.xlane.f32.xlu0 %v885
        %v931 = vpop.xlane.xlu0 %930
        %932 = vmax.xlane.f32.xlu0 %v886
        %v933 = vpop.xlane.xlu0 %932
        %934 = vmax.xlane.f32.xlu0 %v887
        %v935 = vpop.xlane.xlu0 %934
        %v936 = vmax.f32 %v888, %v905
        %v937 = vmax.f32 %v889, %v907
        %v938 = vmax.f32 %v890, %v909
        %v939 = vmax.f32 %v891, %v911
        %v940 = vmax.f32 %v892, %v913
        %v941 = vmax.f32 %v893, %v915
        %v942 = vmax.f32 %v894, %v917
        %v943 = vmax.f32 %v895, %v919
        %v944 = vmax.f32 %v896, %v921
        %v945 = vmax.f32 %v897, %v923
        %v946 = vmax.f32 %v898, %v925
        %v947 = vmax.f32 %v899, %v927
        %v948 = vmax.f32 %v900, %v929
        %v949 = vmax.f32 %v901, %v931
        %v950 = vmax.f32 %v902, %v933
        %v951 = vmax.f32 %v903, %v935
        %v952 = vsub.f32 %v888, %v936
        %v953 = vsub.f32 %v889, %v937
        %v954 = vsub.f32 %v890, %v938
        %v955 = vsub.f32 %v891, %v939
        %v956 = vsub.f32 %v892, %v940
        %v957 = vsub.f32 %v893, %v941
        %v958 = vsub.f32 %v894, %v942
        %v959 = vsub.f32 %v895, %v943
        %v960 = vsub.f32 %v896, %v944
        %v961 = vsub.f32 %v897, %v945
        %v962 = vsub.f32 %v898, %v946
        %v963 = vsub.f32 %v899, %v947
        %v964 = vsub.f32 %v900, %v948
        %v965 = vsub.f32 %v901, %v949
        %v966 = vsub.f32 %v902, %v950
        %v967 = vsub.f32 %v903, %v951
        %v968 = vmul.f32 %v952, 1.442695
        %v969 = vpow.pop %v968
        %v970 = vmul.f32 %v953, 1.442695
        %v971 = vpow.pop %v970
        %v972 = vmul.f32 %v954, 1.442695
        %v973 = vpow.pop %v972
        %v974 = vmul.f32 %v955, 1.442695
        %v975 = vpow.pop %v974
        %v976 = vmul.f32 %v956, 1.442695
        %v977 = vpow.pop %v976
        %v978 = vmul.f32 %v957, 1.442695
        %v979 = vpow.pop %v978
        %v980 = vmul.f32 %v958, 1.442695
        %v981 = vpow.pop %v980
        %v982 = vmul.f32 %v959, 1.442695
        %v983 = vpow.pop %v982
        %v984 = vmul.f32 %v960, 1.442695
        %v985 = vpow.pop %v984
        %v986 = vmul.f32 %v961, 1.442695
        %v987 = vpow.pop %v986
        %v988 = vmul.f32 %v962, 1.442695
        %v989 = vpow.pop %v988
        %v990 = vmul.f32 %v963, 1.442695
        %v991 = vpow.pop %v990
        %v992 = vmul.f32 %v964, 1.442695
        %v993 = vpow.pop %v992
        %v994 = vmul.f32 %v965, 1.442695
        %v995 = vpow.pop %v994
        %v996 = vmul.f32 %v966, 1.442695
        %v997 = vpow.pop %v996
        %v998 = vmul.f32 %v967, 1.442695
        %v999 = vpow.pop %v998
        %1001 = vset.pattern.permute.xlu0 0
        %1002 = vperm.xlu0 %1001, %v936
        %v1003 = vpop.permute.xlu0 %1002
        %1006 = vset.pattern.permute.xlu0 0
        %1007 = vperm.xlu0 %1006, %v937
        %v1008 = vpop.permute.xlu0 %1007
        %1011 = vset.pattern.permute.xlu0 0
        %1012 = vperm.xlu0 %1011, %v938
        %v1013 = vpop.permute.xlu0 %1012
        %1016 = vset.pattern.permute.xlu0 0
        %1017 = vperm.xlu0 %1016, %v939
        %v1018 = vpop.permute.xlu0 %1017
        %1021 = vset.pattern.permute.xlu0 0
        %1022 = vperm.xlu0 %1021, %v940
        %v1023 = vpop.permute.xlu0 %1022
        %1026 = vset.pattern.permute.xlu0 0
        %1027 = vperm.xlu0 %1026, %v941
        %v1028 = vpop.permute.xlu0 %1027
        %1031 = vset.pattern.permute.xlu0 0
        %1032 = vperm.xlu0 %1031, %v942
        %v1033 = vpop.permute.xlu0 %1032
        %1036 = vset.pattern.permute.xlu0 0
        %1037 = vperm.xlu0 %1036, %v943
        %v1038 = vpop.permute.xlu0 %1037
        %1041 = vset.pattern.permute.xlu0 0
        %1042 = vperm.xlu0 %1041, %v944
        %v1043 = vpop.permute.xlu0 %1042
        %1046 = vset.pattern.permute.xlu0 0
        %1047 = vperm.xlu0 %1046, %v945
        %v1048 = vpop.permute.xlu0 %1047
        %1051 = vset.pattern.permute.xlu0 0
        %1052 = vperm.xlu0 %1051, %v946
        %v1053 = vpop.permute.xlu0 %1052
        %1056 = vset.pattern.permute.xlu0 0
        %1057 = vperm.xlu0 %1056, %v947
        %v1058 = vpop.permute.xlu0 %1057
        %1061 = vset.pattern.permute.xlu0 0
        %1062 = vperm.xlu0 %1061, %v948
        %v1063 = vpop.permute.xlu0 %1062
        %1066 = vset.pattern.permute.xlu0 0
        %1067 = vperm.xlu0 %1066, %v949
        %v1068 = vpop.permute.xlu0 %1067
        %1071 = vset.pattern.permute.xlu0 0
        %1072 = vperm.xlu0 %1071, %v950
        %v1073 = vpop.permute.xlu0 %1072
        %1076 = vset.pattern.permute.xlu0 0
        %1077 = vperm.xlu0 %1076, %v951
        %v1078 = vpop.permute.xlu0 %1077
        %v1080 = vsub.f32 %v872, %v1003
        %v1081 = vsub.f32 %v873, %v1008
        %v1082 = vsub.f32 %v874, %v1013
        %v1083 = vsub.f32 %v875, %v1018
        %v1084 = vsub.f32 %v876, %v1023
        %v1085 = vsub.f32 %v877, %v1028
        %v1086 = vsub.f32 %v878, %v1033
        %v1087 = vsub.f32 %v879, %v1038
        %v1088 = vsub.f32 %v880, %v1043
        %v1089 = vsub.f32 %v881, %v1048
        %v1090 = vsub.f32 %v882, %v1053
        %v1091 = vsub.f32 %v883, %v1058
        %v1092 = vsub.f32 %v884, %v1063
        %v1093 = vsub.f32 %v885, %v1068
        %v1094 = vsub.f32 %v886, %v1073
        %v1095 = vsub.f32 %v887, %v1078
        %v1096 = vmul.f32 %v1080, 1.442695
        %v1097 = vpow.pop %v1096
        %v1098 = vmul.f32 %v1081, 1.442695
        %v1099 = vpow.pop %v1098
        %v1100 = vmul.f32 %v1082, 1.442695
        %v1101 = vpow.pop %v1100
        %v1102 = vmul.f32 %v1083, 1.442695
        %v1103 = vpow.pop %v1102
        %v1104 = vmul.f32 %v1084, 1.442695
        %v1105 = vpow.pop %v1104
        %v1106 = vmul.f32 %v1085, 1.442695
        %v1107 = vpow.pop %v1106
        %v1108 = vmul.f32 %v1086, 1.442695
        %v1109 = vpow.pop %v1108
        %v1110 = vmul.f32 %v1087, 1.442695
        %v1111 = vpow.pop %v1110
        %v1112 = vmul.f32 %v1088, 1.442695
        %v1113 = vpow.pop %v1112
        %v1114 = vmul.f32 %v1089, 1.442695
        %v1115 = vpow.pop %v1114
        %v1116 = vmul.f32 %v1090, 1.442695
        %v1117 = vpow.pop %v1116
        %v1118 = vmul.f32 %v1091, 1.442695
        %v1119 = vpow.pop %v1118
        %v1120 = vmul.f32 %v1092, 1.442695
        %v1121 = vpow.pop %v1120
        %v1122 = vmul.f32 %v1093, 1.442695
        %v1123 = vpow.pop %v1122
        %v1124 = vmul.f32 %v1094, 1.442695
        %v1125 = vpow.pop %v1124
        %v1126 = vmul.f32 %v1095, 1.442695
        %v1127 = vpow.pop %v1126
        %v1128 = vld [vmem:[#allocation3] sm:$0xff]
        %v1129 = vld [vmem:[#allocation3 + $0x8] sm:$0xff]
        %v1130 = vld [vmem:[#allocation3 + $0x10] sm:$0xff]
        %v1131 = vld [vmem:[#allocation3 + $0x18] sm:$0xff]
        %v1132 = vld [vmem:[#allocation3 + $0x20] sm:$0xff]
        %v1133 = vld [vmem:[#allocation3 + $0x28] sm:$0xff]
        %v1134 = vld [vmem:[#allocation3 + $0x30] sm:$0xff]
        %v1135 = vld [vmem:[#allocation3 + $0x38] sm:$0xff]
        %v1136 = vld [vmem:[#allocation3 + $0x40] sm:$0xff]
        %v1137 = vld [vmem:[#allocation3 + $0x48] sm:$0xff]
        %v1138 = vld [vmem:[#allocation3 + $0x50] sm:$0xff]
        %v1139 = vld [vmem:[#allocation3 + $0x58] sm:$0xff]
        %v1140 = vld [vmem:[#allocation3 + $0x60] sm:$0xff]
        %v1141 = vld [vmem:[#allocation3 + $0x68] sm:$0xff]
        %v1142 = vld [vmem:[#allocation3 + $0x70] sm:$0xff]
        %v1143 = vld [vmem:[#allocation3 + $0x78] sm:$0xff]
        %v1144 = vmul.f32 %v969, %v1128
        %v1145 = vmul.f32 %v971, %v1129
        %v1146 = vmul.f32 %v973, %v1130
        %v1147 = vmul.f32 %v975, %v1131
        %v1148 = vmul.f32 %v977, %v1132
        %v1149 = vmul.f32 %v979, %v1133
        %v1150 = vmul.f32 %v981, %v1134
        %v1151 = vmul.f32 %v983, %v1135
        %v1152 = vmul.f32 %v985, %v1136
        %v1153 = vmul.f32 %v987, %v1137
        %v1154 = vmul.f32 %v989, %v1138
        %v1155 = vmul.f32 %v991, %v1139
        %v1156 = vmul.f32 %v993, %v1140
        %v1157 = vmul.f32 %v995, %v1141
        %v1158 = vmul.f32 %v997, %v1142
        %v1159 = vmul.f32 %v999, %v1143
        %1160 = vadd.xlane.f32.xlu0 %v1097
        %v1161 = vpop.xlane.xlu0 %1160
        %1162 = vadd.xlane.f32.xlu0 %v1099
        %v1163 = vpop.xlane.xlu0 %1162
        %1164 = vadd.xlane.f32.xlu0 %v1101
        %v1165 = vpop.xlane.xlu0 %1164
        %1166 = vadd.xlane.f32.xlu0 %v1103
        %v1167 = vpop.xlane.xlu0 %1166
        %1168 = vadd.xlane.f32.xlu0 %v1105
        %v1169 = vpop.xlane.xlu0 %1168
        %1170 = vadd.xlane.f32.xlu0 %v1107
        %v1171 = vpop.xlane.xlu0 %1170
        %1172 = vadd.xlane.f32.xlu0 %v1109
        %v1173 = vpop.xlane.xlu0 %1172
        %1174 = vadd.xlane.f32.xlu0 %v1111
        %v1175 = vpop.xlane.xlu0 %1174
        %1176 = vadd.xlane.f32.xlu0 %v1113
        %v1177 = vpop.xlane.xlu0 %1176
        %1178 = vadd.xlane.f32.xlu0 %v1115
        %v1179 = vpop.xlane.xlu0 %1178
        %1180 = vadd.xlane.f32.xlu0 %v1117
        %v1181 = vpop.xlane.xlu0 %1180
        %1182 = vadd.xlane.f32.xlu0 %v1119
        %v1183 = vpop.xlane.xlu0 %1182
        %1184 = vadd.xlane.f32.xlu0 %v1121
        %v1185 = vpop.xlane.xlu0 %1184
        %1186 = vadd.xlane.f32.xlu0 %v1123
        %v1187 = vpop.xlane.xlu0 %1186
        %1188 = vadd.xlane.f32.xlu0 %v1125
        %v1189 = vpop.xlane.xlu0 %1188
        %1190 = vadd.xlane.f32.xlu0 %v1127
        %v1191 = vpop.xlane.xlu0 %1190
        %v1192 = vadd.f32 %v1144, %v1161
        %v1193 = vadd.f32 %v1145, %v1163
        %v1194 = vadd.f32 %v1146, %v1165
        %v1195 = vadd.f32 %v1147, %v1167
        %v1196 = vadd.f32 %v1148, %v1169
        %v1197 = vadd.f32 %v1149, %v1171
        %v1198 = vadd.f32 %v1150, %v1173
        %v1199 = vadd.f32 %v1151, %v1175
        %v1200 = vadd.f32 %v1152, %v1177
        %v1201 = vadd.f32 %v1153, %v1179
        %v1202 = vadd.f32 %v1154, %v1181
        %v1203 = vadd.f32 %v1155, %v1183
        %v1204 = vadd.f32 %v1156, %v1185
        %v1205 = vadd.f32 %v1157, %v1187
        %v1206 = vadd.f32 %v1158, %v1189
        %v1207 = vadd.f32 %v1159, %v1191
        %vm1208 = vcmask 7168
        %1209 = vst.msk [vmem:[#allocation3] sm:$0xff] %vm1208, %v1192
        %1210 = vst.msk [vmem:[#allocation3 + $0x8] sm:$0xff] %vm1208, %v1193
        %1211 = vst.msk [vmem:[#allocation3 + $0x10] sm:$0xff] %vm1208, %v1194
        %1212 = vst.msk [vmem:[#allocation3 + $0x18] sm:$0xff] %vm1208, %v1195
        %1213 = vst.msk [vmem:[#allocation3 + $0x20] sm:$0xff] %vm1208, %v1196
        %1214 = vst.msk [vmem:[#allocation3 + $0x28] sm:$0xff] %vm1208, %v1197
        %1215 = vst.msk [vmem:[#allocation3 + $0x30] sm:$0xff] %vm1208, %v1198
        %1216 = vst.msk [vmem:[#allocation3 + $0x38] sm:$0xff] %vm1208, %v1199
        %1217 = vst.msk [vmem:[#allocation3 + $0x40] sm:$0xff] %vm1208, %v1200
        %1218 = vst.msk [vmem:[#allocation3 + $0x48] sm:$0xff] %vm1208, %v1201
        %1219 = vst.msk [vmem:[#allocation3 + $0x50] sm:$0xff] %vm1208, %v1202
        %1220 = vst.msk [vmem:[#allocation3 + $0x58] sm:$0xff] %vm1208, %v1203
        %1221 = vst.msk [vmem:[#allocation3 + $0x60] sm:$0xff] %vm1208, %v1204
        %1222 = vst.msk [vmem:[#allocation3 + $0x68] sm:$0xff] %vm1208, %v1205
        %1223 = vst.msk [vmem:[#allocation3 + $0x70] sm:$0xff] %vm1208, %v1206
        %1224 = vst.msk [vmem:[#allocation3 + $0x78] sm:$0xff] %vm1208, %v1207
        %v1225 = vld [vmem:[#allocation4] sm:$0xff]
        %v1226 = vld [vmem:[#allocation4 + $0x8] sm:$0xff]
        %v1227 = vld [vmem:[#allocation4 + $0x10] sm:$0xff]
        %v1228 = vld [vmem:[#allocation4 + $0x18] sm:$0xff]
        %v1229 = vld [vmem:[#allocation4 + $0x20] sm:$0xff]
        %v1230 = vld [vmem:[#allocation4 + $0x28] sm:$0xff]
        %v1231 = vld [vmem:[#allocation4 + $0x30] sm:$0xff]
        %v1232 = vld [vmem:[#allocation4 + $0x38] sm:$0xff]
        %v1233 = vld [vmem:[#allocation4 + $0x40] sm:$0xff]
        %v1234 = vld [vmem:[#allocation4 + $0x48] sm:$0xff]
        %v1235 = vld [vmem:[#allocation4 + $0x50] sm:$0xff]
        %v1236 = vld [vmem:[#allocation4 + $0x58] sm:$0xff]
        %v1237 = vld [vmem:[#allocation4 + $0x60] sm:$0xff]
        %v1238 = vld [vmem:[#allocation4 + $0x68] sm:$0xff]
        %v1239 = vld [vmem:[#allocation4 + $0x70] sm:$0xff]
        %v1240 = vld [vmem:[#allocation4 + $0x78] sm:$0xff]
        %1242 = vset.pattern.permute.xlu0 0
        %1243 = vperm.xlu0 %1242, %v969
        %v1244 = vpop.permute.xlu0 %1243
        %1247 = vset.pattern.permute.xlu0 0
        %1248 = vperm.xlu0 %1247, %v971
        %v1249 = vpop.permute.xlu0 %1248
        %1252 = vset.pattern.permute.xlu0 0
        %1253 = vperm.xlu0 %1252, %v973
        %v1254 = vpop.permute.xlu0 %1253
        %1257 = vset.pattern.permute.xlu0 0
        %1258 = vperm.xlu0 %1257, %v975
        %v1259 = vpop.permute.xlu0 %1258
        %1262 = vset.pattern.permute.xlu0 0
        %1263 = vperm.xlu0 %1262, %v977
        %v1264 = vpop.permute.xlu0 %1263
        %1267 = vset.pattern.permute.xlu0 0
        %1268 = vperm.xlu0 %1267, %v979
        %v1269 = vpop.permute.xlu0 %1268
        %1272 = vset.pattern.permute.xlu0 0
        %1273 = vperm.xlu0 %1272, %v981
        %v1274 = vpop.permute.xlu0 %1273
        %1277 = vset.pattern.permute.xlu0 0
        %1278 = vperm.xlu0 %1277, %v983
        %v1279 = vpop.permute.xlu0 %1278
        %1282 = vset.pattern.permute.xlu0 0
        %1283 = vperm.xlu0 %1282, %v985
        %v1284 = vpop.permute.xlu0 %1283
        %1287 = vset.pattern.permute.xlu0 0
        %1288 = vperm.xlu0 %1287, %v987
        %v1289 = vpop.permute.xlu0 %1288
        %1292 = vset.pattern.permute.xlu0 0
        %1293 = vperm.xlu0 %1292, %v989
        %v1294 = vpop.permute.xlu0 %1293
        %1297 = vset.pattern.permute.xlu0 0
        %1298 = vperm.xlu0 %1297, %v991
        %v1299 = vpop.permute.xlu0 %1298
        %1302 = vset.pattern.permute.xlu0 0
        %1303 = vperm.xlu0 %1302, %v993
        %v1304 = vpop.permute.xlu0 %1303
        %1307 = vset.pattern.permute.xlu0 0
        %1308 = vperm.xlu0 %1307, %v995
        %v1309 = vpop.permute.xlu0 %1308
        %1312 = vset.pattern.permute.xlu0 0
        %1313 = vperm.xlu0 %1312, %v997
        %v1314 = vpop.permute.xlu0 %1313
        %1317 = vset.pattern.permute.xlu0 0
        %1318 = vperm.xlu0 %1317, %v999
        %v1319 = vpop.permute.xlu0 %1318
        %v1321 = vmul.f32 %v1244, %v1225
        %v1322 = vmul.f32 %v1249, %v1226
        %v1323 = vmul.f32 %v1254, %v1227
        %v1324 = vmul.f32 %v1259, %v1228
        %v1325 = vmul.f32 %v1264, %v1229
        %v1326 = vmul.f32 %v1269, %v1230
        %v1327 = vmul.f32 %v1274, %v1231
        %v1328 = vmul.f32 %v1279, %v1232
        %v1329 = vmul.f32 %v1284, %v1233
        %v1330 = vmul.f32 %v1289, %v1234
        %v1331 = vmul.f32 %v1294, %v1235
        %v1332 = vmul.f32 %v1299, %v1236
        %v1333 = vmul.f32 %v1304, %v1237
        %v1334 = vmul.f32 %v1309, %v1238
        %v1335 = vmul.f32 %v1314, %v1239
        %v1336 = vmul.f32 %v1319, %v1240
        %v1337 = vpack.c.bf16 %v1099, %v1097
        %v1338 = vpack.c.bf16 %v1103, %v1101
        %v1339 = vpack.c.bf16 %v1107, %v1105
        %v1340 = vpack.c.bf16 %v1111, %v1109
        %v1341 = vpack.c.bf16 %v1115, %v1113
        %v1342 = vpack.c.bf16 %v1119, %v1117
        %v1343 = vpack.c.bf16 %v1123, %v1121
        %v1344 = vpack.c.bf16 %v1127, %v1125
        %v1345 = vld [vmem:[%s551] sm:$0xf]
        %v1346 = vld [vmem:[%s551 + $0x4] sm:$0xf]
        %v1347 = vld [vmem:[%s551 + $0x8] sm:$0xf]
        %v1348 = vld [vmem:[%s551 + $0xc] sm:$0xf]
        %v1349 = vld [vmem:[%s551 + $0x10] sm:$0xf]
        %v1350 = vld [vmem:[%s551 + $0x14] sm:$0xf]
        %v1351 = vld [vmem:[%s551 + $0x18] sm:$0xf]
        %v1352 = vld [vmem:[%s551 + $0x1c] sm:$0xf]
        %v1353 = vld [vmem:[%s551 + $0x20] sm:$0xf]
        %v1354 = vld [vmem:[%s551 + $0x24] sm:$0xf]
        %v1355 = vld [vmem:[%s551 + $0x28] sm:$0xf]
        %v1356 = vld [vmem:[%s551 + $0x2c] sm:$0xf]
        %v1357 = vld [vmem:[%s551 + $0x30] sm:$0xf]
        %v1358 = vld [vmem:[%s551 + $0x34] sm:$0xf]
        %v1359 = vld [vmem:[%s551 + $0x38] sm:$0xf]
        %v1360 = vld [vmem:[%s551 + $0x3c] sm:$0xf]
        %v1377 = vunpack.c.l.b16 %v1345
        %v1378 = vunpack.c.l.b16 %v1346
        %v1379 = vunpack.c.l.b16 %v1347
        %v1380 = vunpack.c.l.b16 %v1348
        %v1381 = vunpack.c.l.b16 %v1349
        %v1382 = vunpack.c.l.b16 %v1350
        %v1383 = vunpack.c.l.b16 %v1351
        %v1384 = vunpack.c.l.b16 %v1352
        %v1385 = vunpack.c.l.b16 %v1353
        %v1386 = vunpack.c.l.b16 %v1354
        %v1387 = vunpack.c.l.b16 %v1355
        %v1388 = vunpack.c.l.b16 %v1356
        %v1389 = vunpack.c.l.b16 %v1357
        %v1390 = vunpack.c.l.b16 %v1358
        %v1391 = vunpack.c.l.b16 %v1359
        %v1392 = vunpack.c.l.b16 %v1360
        %v1393 = vpack.c.b16 %v1378, %v1377
        %v1394 = vpack.c.b16 %v1380, %v1379
        %v1395 = vpack.c.b16 %v1382, %v1381
        %v1396 = vpack.c.b16 %v1384, %v1383
        %v1397 = vpack.c.b16 %v1386, %v1385
        %v1398 = vpack.c.b16 %v1388, %v1387
        %v1399 = vpack.c.b16 %v1390, %v1389
        %v1400 = vpack.c.b16 %v1392, %v1391
        %1409 = vmatprep.subr.bf16.mxu0 0
        %1410 = vmatpush1.bf16.msra.mxu0 %v1393
        %1411 = vmatprep.subr.bf16.mxu0 0
        %1412 = vmatpush1.bf16.msra.mxu0 %v1394
        %1413 = vmatprep.subr.bf16.mxu0 0
        %1414 = vmatpush1.bf16.msra.mxu0 %v1395
        %1415 = vmatprep.subr.bf16.mxu0 0
        %1416 = vmatpush1.bf16.msra.mxu0 %v1396
        %1417 = vmatprep.subr.bf16.mxu0 0
        %1418 = vmatpush1.bf16.msra.mxu0 %v1397
        %1419 = vmatprep.subr.bf16.mxu0 0
        %1420 = vmatpush1.bf16.msra.mxu0 %v1398
        %1421 = vmatprep.subr.bf16.mxu0 0
        %1422 = vmatpush1.bf16.msra.mxu0 %v1399
        %1423 = vmatprep.subr.bf16.mxu0 0
        %1424 = vmatpush1.bf16.msra.mxu0 %v1400
        %1425 = vmatprep.subr.bf16.mxu0 0
        %1426 = vmatpush1.bf16.msra.mxu0 0
        %1427 = vmatprep.subr.bf16.mxu0 0
        %1428 = vmatpush1.bf16.msra.mxu0 0
        %1429 = vmatprep.subr.bf16.mxu0 0
        %1430 = vmatpush1.bf16.msra.mxu0 0
        %1431 = vmatprep.subr.bf16.mxu0 0
        %1432 = vmatpush1.bf16.msra.mxu0 0
        %1433 = vmatprep.subr.bf16.mxu0 0
        %1434 = vmatpush1.bf16.msra.mxu0 0
        %1435 = vmatprep.subr.bf16.mxu0 0
        %1436 = vmatpush1.bf16.msra.mxu0 0
        %1437 = vmatprep.subr.bf16.mxu0 0
        %1438 = vmatpush1.bf16.msra.mxu0 0
        %1439 = vmatprep.subr.bf16.mxu0 0
        %1440 = vmatpush1.bf16.msra.mxu0 0
        %1441 = vmatprep.mubr.bf16.mxu0 0
        %1442 = vmatmul.mubr.bf16.gmra.mrb[0].mxu0 %v1337
        %v1443 = vpop.f32.mrb[0].mxu0
        %v1444 = vadd.f32 0.0, %v1443
        %v1445 = vpop.f32.mrb[0].mxu0
        %v1446 = vpop.f32.mrb[0].mxu0
        %v1447 = vadd.f32 0.0, %v1446
        %v1448 = vpop.f32.mrb[0].mxu0
        %1449 = vmatprep.mubr.bf16.mxu0 0
        %1450 = vmatmul.mubr.bf16.gmra.mrb[0].mxu0 %v1338
        %v1451 = vpop.f32.mrb[0].mxu0
        %v1452 = vadd.f32 0.0, %v1451
        %v1453 = vpop.f32.mrb[0].mxu0
        %v1454 = vpop.f32.mrb[0].mxu0
        %v1455 = vadd.f32 0.0, %v1454
        %v1456 = vpop.f32.mrb[0].mxu0
        %1457 = vmatprep.mubr.bf16.mxu0 0
        %1458 = vmatmul.mubr.bf16.gmra.mrb[0].mxu0 %v1339
        %v1459 = vpop.f32.mrb[0].mxu0
        %v1460 = vadd.f32 0.0, %v1459
        %v1461 = vpop.f32.mrb[0].mxu0
        %v1462 = vpop.f32.mrb[0].mxu0
        %v1463 = vadd.f32 0.0, %v1462
        %v1464 = vpop.f32.mrb[0].mxu0
        %1465 = vmatprep.mubr.bf16.mxu0 0
        %1466 = vmatmul.mubr.bf16.gmra.mrb[0].mxu0 %v1340
        %v1467 = vpop.f32.mrb[0].mxu0
        %v1468 = vadd.f32 0.0, %v1467
        %v1469 = vpop.f32.mrb[0].mxu0
        %v1470 = vpop.f32.mrb[0].mxu0
        %v1471 = vadd.f32 0.0, %v1470
        %v1472 = vpop.f32.mrb[0].mxu0
        %1473 = vmatprep.mubr.bf16.mxu0 0
        %1474 = vmatmul.mubr.bf16.gmra.mrb[0].mxu0 %v1341
        %v1475 = vpop.f32.mrb[0].mxu0
        %v1476 = vadd.f32 0.0, %v1475
        %v1477 = vpop.f32.mrb[0].mxu0
        %v1478 = vpop.f32.mrb[0].mxu0
        %v1479 = vadd.f32 0.0, %v1478
        %v1480 = vpop.f32.mrb[0].mxu0
        %1481 = vmatprep.mubr.bf16.mxu0 0
        %1482 = vmatmul.mubr.bf16.gmra.mrb[0].mxu0 %v1342
        %v1483 = vpop.f32.mrb[0].mxu0
        %v1484 = vadd.f32 0.0, %v1483
        %v1485 = vpop.f32.mrb[0].mxu0
        %v1486 = vpop.f32.mrb[0].mxu0
        %v1487 = vadd.f32 0.0, %v1486
        %v1488 = vpop.f32.mrb[0].mxu0
        %1489 = vmatprep.mubr.bf16.mxu0 0
        %1490 = vmatmul.mubr.bf16.gmra.mrb[0].mxu0 %v1343
        %v1491 = vpop.f32.mrb[0].mxu0
        %v1492 = vadd.f32 0.0, %v1491
        %v1493 = vpop.f32.mrb[0].mxu0
        %v1494 = vpop.f32.mrb[0].mxu0
        %v1495 = vadd.f32 0.0, %v1494
        %v1496 = vpop.f32.mrb[0].mxu0
        %1497 = vmatprep.mubr.bf16.mxu0 0
        %1498 = vmatmul.mubr.bf16.gmra.mrb[0].mxu0 %v1344
        %v1499 = vpop.f32.mrb[0].mxu0
        %v1500 = vadd.f32 0.0, %v1499
        %v1501 = vpop.f32.mrb[0].mxu0
        %v1502 = vpop.f32.mrb[0].mxu0
        %v1503 = vadd.f32 0.0, %v1502
        %v1504 = vpop.f32.mrb[0].mxu0
        %1505 = vdwg.mxu0
        %v1506 = vadd.f32 %v1321, %v1444
        %v1507 = vadd.f32 %v1322, %v1447
        %v1508 = vadd.f32 %v1323, %v1452
        %v1509 = vadd.f32 %v1324, %v1455
        %v1510 = vadd.f32 %v1325, %v1460
        %v1511 = vadd.f32 %v1326, %v1463
        %v1512 = vadd.f32 %v1327, %v1468
        %v1513 = vadd.f32 %v1328, %v1471
        %v1514 = vadd.f32 %v1329, %v1476
        %v1515 = vadd.f32 %v1330, %v1479
        %v1516 = vadd.f32 %v1331, %v1484
        %v1517 = vadd.f32 %v1332, %v1487
        %v1518 = vadd.f32 %v1333, %v1492
        %v1519 = vadd.f32 %v1334, %v1495
        %v1520 = vadd.f32 %v1335, %v1500
        %v1521 = vadd.f32 %v1336, %v1503
        %1522 = vst [vmem:[#allocation4] sm:$0xff] %v1506
        %1523 = vst [vmem:[#allocation4 + $0x8] sm:$0xff] %v1507
        %1524 = vst [vmem:[#allocation4 + $0x10] sm:$0xff] %v1508
        %1525 = vst [vmem:[#allocation4 + $0x18] sm:$0xff] %v1509
        %1526 = vst [vmem:[#allocation4 + $0x20] sm:$0xff] %v1510
        %1527 = vst [vmem:[#allocation4 + $0x28] sm:$0xff] %v1511
        %1528 = vst [vmem:[#allocation4 + $0x30] sm:$0xff] %v1512
        %1529 = vst [vmem:[#allocation4 + $0x38] sm:$0xff] %v1513
        %1530 = vst [vmem:[#allocation4 + $0x40] sm:$0xff] %v1514
        %1531 = vst [vmem:[#allocation4 + $0x48] sm:$0xff] %v1515
        %1532 = vst [vmem:[#allocation4 + $0x50] sm:$0xff] %v1516
        %1533 = vst [vmem:[#allocation4 + $0x58] sm:$0xff] %v1517
        %1534 = vst [vmem:[#allocation4 + $0x60] sm:$0xff] %v1518
        %1535 = vst [vmem:[#allocation4 + $0x68] sm:$0xff] %v1519
        %1536 = vst [vmem:[#allocation4 + $0x70] sm:$0xff] %v1520
        %1537 = vst [vmem:[#allocation4 + $0x78] sm:$0xff] %v1521
        %1538 = vst.msk [vmem:[#allocation2] sm:$0xff] %vm1208, %v936
        %1539 = vst.msk [vmem:[#allocation2 + $0x8] sm:$0xff] %vm1208, %v937
        %1540 = vst.msk [vmem:[#allocation2 + $0x10] sm:$0xff] %vm1208, %v938
        %1541 = vst.msk [vmem:[#allocation2 + $0x18] sm:$0xff] %vm1208, %v939
        %1542 = vst.msk [vmem:[#allocation2 + $0x20] sm:$0xff] %vm1208, %v940
        %1543 = vst.msk [vmem:[#allocation2 + $0x28] sm:$0xff] %vm1208, %v941
        %1544 = vst.msk [vmem:[#allocation2 + $0x30] sm:$0xff] %vm1208, %v942
        %1545 = vst.msk [vmem:[#allocation2 + $0x38] sm:$0xff] %vm1208, %v943
        %1546 = vst.msk [vmem:[#allocation2 + $0x40] sm:$0xff] %vm1208, %v944
        %1547 = vst.msk [vmem:[#allocation2 + $0x48] sm:$0xff] %vm1208, %v945
        %1548 = vst.msk [vmem:[#allocation2 + $0x50] sm:$0xff] %vm1208, %v946
        %1549 = vst.msk [vmem:[#allocation2 + $0x58] sm:$0xff] %vm1208, %v947
        %1550 = vst.msk [vmem:[#allocation2 + $0x60] sm:$0xff] %vm1208, %v948
        %1551 = vst.msk [vmem:[#allocation2 + $0x68] sm:$0xff] %vm1208, %v949
        %1552 = vst.msk [vmem:[#allocation2 + $0x70] sm:$0xff] %vm1208, %v950
        %1553 = vst.msk [vmem:[#allocation2 + $0x78] sm:$0xff] %vm1208, %v951
        %p1554 = scmp.eq.s32.totalorder %s23, 1
        // Predicated region
        $region160: #{vision_encoder_forward.12} parent=142 // pred_check
          %p1555 = pneg %p1554
        $region161: #{vision_encoder_forward.12} parent=142 // pred_check_branch
          %1557 = sbr.rel (%p1555) target = $region163
        $region162: #{vision_encoder_forward.12} parent=142 // pred_region
          %v1558 = vld [vmem:[#allocation3] sm:$0xff]
          %v1559 = vld [vmem:[#allocation3 + $0x8] sm:$0xff]
          %v1560 = vld [vmem:[#allocation3 + $0x10] sm:$0xff]
          %v1561 = vld [vmem:[#allocation3 + $0x18] sm:$0xff]
          %v1562 = vld [vmem:[#allocation3 + $0x20] sm:$0xff]
          %v1563 = vld [vmem:[#allocation3 + $0x28] sm:$0xff]
          %v1564 = vld [vmem:[#allocation3 + $0x30] sm:$0xff]
          %v1565 = vld [vmem:[#allocation3 + $0x38] sm:$0xff]
          %v1566 = vld [vmem:[#allocation3 + $0x40] sm:$0xff]
          %v1567 = vld [vmem:[#allocation3 + $0x48] sm:$0xff]
          %v1568 = vld [vmem:[#allocation3 + $0x50] sm:$0xff]
          %v1569 = vld [vmem:[#allocation3 + $0x58] sm:$0xff]
          %v1570 = vld [vmem:[#allocation3 + $0x60] sm:$0xff]
          %v1571 = vld [vmem:[#allocation3 + $0x68] sm:$0xff]
          %v1572 = vld [vmem:[#allocation3 + $0x70] sm:$0xff]
          %v1573 = vld [vmem:[#allocation3 + $0x78] sm:$0xff]
          %v1574 = vrcp.pop %v1558
          %v1575 = vrcp.pop %v1559
          %v1576 = vrcp.pop %v1560
          %v1577 = vrcp.pop %v1561
          %v1578 = vrcp.pop %v1562
          %v1579 = vrcp.pop %v1563
          %v1580 = vrcp.pop %v1564
          %v1581 = vrcp.pop %v1565
          %v1582 = vrcp.pop %v1566
          %v1583 = vrcp.pop %v1567
          %v1584 = vrcp.pop %v1568
          %v1585 = vrcp.pop %v1569
          %v1586 = vrcp.pop %v1570
          %v1587 = vrcp.pop %v1571
          %v1588 = vrcp.pop %v1572
          %v1589 = vrcp.pop %v1573
          %v1590 = vld [vmem:[#allocation4] sm:$0xff]
          %v1591 = vld [vmem:[#allocation4 + $0x8] sm:$0xff]
          %v1592 = vld [vmem:[#allocation4 + $0x10] sm:$0xff]
          %v1593 = vld [vmem:[#allocation4 + $0x18] sm:$0xff]
          %v1594 = vld [vmem:[#allocation4 + $0x20] sm:$0xff]
          %v1595 = vld [vmem:[#allocation4 + $0x28] sm:$0xff]
          %v1596 = vld [vmem:[#allocation4 + $0x30] sm:$0xff]
          %v1597 = vld [vmem:[#allocation4 + $0x38] sm:$0xff]
          %v1598 = vld [vmem:[#allocation4 + $0x40] sm:$0xff]
          %v1599 = vld [vmem:[#allocation4 + $0x48] sm:$0xff]
          %v1600 = vld [vmem:[#allocation4 + $0x50] sm:$0xff]
          %v1601 = vld [vmem:[#allocation4 + $0x58] sm:$0xff]
          %v1602 = vld [vmem:[#allocation4 + $0x60] sm:$0xff]
          %v1603 = vld [vmem:[#allocation4 + $0x68] sm:$0xff]
          %v1604 = vld [vmem:[#allocation4 + $0x70] sm:$0xff]
          %v1605 = vld [vmem:[#allocation4 + $0x78] sm:$0xff]
          %1607 = vset.pattern.permute.xlu0 0
          %1608 = vperm.xlu0 %1607, %v1574
          %v1609 = vpop.permute.xlu0 %1608
          %1612 = vset.pattern.permute.xlu0 0
          %1613 = vperm.xlu0 %1612, %v1575
          %v1614 = vpop.permute.xlu0 %1613
          %1617 = vset.pattern.permute.xlu0 0
          %1618 = vperm.xlu0 %1617, %v1576
          %v1619 = vpop.permute.xlu0 %1618
          %1622 = vset.pattern.permute.xlu0 0
          %1623 = vperm.xlu0 %1622, %v1577
          %v1624 = vpop.permute.xlu0 %1623
          %1627 = vset.pattern.permute.xlu0 0
          %1628 = vperm.xlu0 %1627, %v1578
          %v1629 = vpop.permute.xlu0 %1628
          %1632 = vset.pattern.permute.xlu0 0
          %1633 = vperm.xlu0 %1632, %v1579
          %v1634 = vpop.permute.xlu0 %1633
          %1637 = vset.pattern.permute.xlu0 0
          %1638 = vperm.xlu0 %1637, %v1580
          %v1639 = vpop.permute.xlu0 %1638
          %1642 = vset.pattern.permute.xlu0 0
          %1643 = vperm.xlu0 %1642, %v1581
          %v1644 = vpop.permute.xlu0 %1643
          %1647 = vset.pattern.permute.xlu0 0
          %1648 = vperm.xlu0 %1647, %v1582
          %v1649 = vpop.permute.xlu0 %1648
          %1652 = vset.pattern.permute.xlu0 0
          %1653 = vperm.xlu0 %1652, %v1583
          %v1654 = vpop.permute.xlu0 %1653
          %1657 = vset.pattern.permute.xlu0 0
          %1658 = vperm.xlu0 %1657, %v1584
          %v1659 = vpop.permute.xlu0 %1658
          %1662 = vset.pattern.permute.xlu0 0
          %1663 = vperm.xlu0 %1662, %v1585
          %v1664 = vpop.permute.xlu0 %1663
          %1667 = vset.pattern.permute.xlu0 0
          %1668 = vperm.xlu0 %1667, %v1586
          %v1669 = vpop.permute.xlu0 %1668
          %1672 = vset.pattern.permute.xlu0 0
          %1673 = vperm.xlu0 %1672, %v1587
          %v1674 = vpop.permute.xlu0 %1673
          %1677 = vset.pattern.permute.xlu0 0
          %1678 = vperm.xlu0 %1677, %v1588
          %v1679 = vpop.permute.xlu0 %1678
          %1682 = vset.pattern.permute.xlu0 0
          %1683 = vperm.xlu0 %1682, %v1589
          %v1684 = vpop.permute.xlu0 %1683
          %v1686 = vmul.f32 %v1590, %v1609
          %v1687 = vmul.f32 %v1591, %v1614
          %v1688 = vmul.f32 %v1592, %v1619
          %v1689 = vmul.f32 %v1593, %v1624
          %v1690 = vmul.f32 %v1594, %v1629
          %v1691 = vmul.f32 %v1595, %v1634
          %v1692 = vmul.f32 %v1596, %v1639
          %v1693 = vmul.f32 %v1597, %v1644
          %v1694 = vmul.f32 %v1598, %v1649
          %v1695 = vmul.f32 %v1599, %v1654
          %v1696 = vmul.f32 %v1600, %v1659
          %v1697 = vmul.f32 %v1601, %v1664
          %v1698 = vmul.f32 %v1602, %v1669
          %v1699 = vmul.f32 %v1603, %v1674
          %v1700 = vmul.f32 %v1604, %v1679
          %v1701 = vmul.f32 %v1605, %v1684
          %v1702 = vpack.c.bf16 %v1687, %v1686
          %v1703 = vpack.c.bf16 %v1689, %v1688
          %v1704 = vpack.c.bf16 %v1691, %v1690
          %v1705 = vpack.c.bf16 %v1693, %v1692
          %v1706 = vpack.c.bf16 %v1695, %v1694
          %v1707 = vpack.c.bf16 %v1697, %v1696
          %v1708 = vpack.c.bf16 %v1699, %v1698
          %v1709 = vpack.c.bf16 %v1701, %v1700
          %v1718 = vunpack.c.l.b16 %v1702
          %v1719 = vunpack.c.h.b16 %v1702
          %v1720 = vunpack.c.l.b16 %v1703
          %v1721 = vunpack.c.h.b16 %v1703
          %v1722 = vunpack.c.l.b16 %v1704
          %v1723 = vunpack.c.h.b16 %v1704
          %v1724 = vunpack.c.l.b16 %v1705
          %v1725 = vunpack.c.h.b16 %v1705
          %v1726 = vunpack.c.l.b16 %v1706
          %v1727 = vunpack.c.h.b16 %v1706
          %v1728 = vunpack.c.l.b16 %v1707
          %v1729 = vunpack.c.h.b16 %v1707
          %v1730 = vunpack.c.l.b16 %v1708
          %v1731 = vunpack.c.h.b16 %v1708
          %v1732 = vunpack.c.l.b16 %v1709
          %v1733 = vunpack.c.h.b16 %v1709
          %v1734 = vpack.c.b16 %v1718, %v1718
          %v1735 = vpack.c.b16 %v1719, %v1719
          %v1736 = vpack.c.b16 %v1720, %v1720
          %v1737 = vpack.c.b16 %v1721, %v1721
          %v1738 = vpack.c.b16 %v1722, %v1722
          %v1739 = vpack.c.b16 %v1723, %v1723
          %v1740 = vpack.c.b16 %v1724, %v1724
          %v1741 = vpack.c.b16 %v1725, %v1725
          %v1742 = vpack.c.b16 %v1726, %v1726
          %v1743 = vpack.c.b16 %v1727, %v1727
          %v1744 = vpack.c.b16 %v1728, %v1728
          %v1745 = vpack.c.b16 %v1729, %v1729
          %v1746 = vpack.c.b16 %v1730, %v1730
          %v1747 = vpack.c.b16 %v1731, %v1731
          %v1748 = vpack.c.b16 %v1732, %v1732
          %v1749 = vpack.c.b16 %v1733, %v1733
          %1766 = vst [vmem:[%s578] sm:$0xf] %v1734
          %1767 = vst [vmem:[%s578 + $0x4] sm:$0xf] %v1735
          %1768 = vst [vmem:[%s578 + $0x8] sm:$0xf] %v1736
          %1769 = vst [vmem:[%s578 + $0xc] sm:$0xf] %v1737
          %1770 = vst [vmem:[%s578 + $0x10] sm:$0xf] %v1738
          %1771 = vst [vmem:[%s578 + $0x14] sm:$0xf] %v1739
          %1772 = vst [vmem:[%s578 + $0x18] sm:$0xf] %v1740
          %1773 = vst [vmem:[%s578 + $0x1c] sm:$0xf] %v1741
          %1774 = vst [vmem:[%s578 + $0x20] sm:$0xf] %v1742
          %1775 = vst [vmem:[%s578 + $0x24] sm:$0xf] %v1743
          %1776 = vst [vmem:[%s578 + $0x28] sm:$0xf] %v1744
          %1777 = vst [vmem:[%s578 + $0x2c] sm:$0xf] %v1745
          %1778 = vst [vmem:[%s578 + $0x30] sm:$0xf] %v1746
          %1779 = vst [vmem:[%s578 + $0x34] sm:$0xf] %v1747
          %1780 = vst [vmem:[%s578 + $0x38] sm:$0xf] %v1748
          %1781 = vst [vmem:[%s578 + $0x3c] sm:$0xf] %v1749
        $region163: #{vision_encoder_forward.12} parent=142 // pred_fallthru
          _
        %s1782 = sand.u32 %s154, 1
        %s1783 = sand.u32 %s154, 1
        %s1784 = smul.addr %s1783, 64
        %s1785 = scalar_lea.vmem [#allocation8], %s1784
        // Predicated region
        $region164: #{vision_encoder_forward.12} parent=142 // pred_check
          %p1786 = pneg %p164
        $region165: #{vision_encoder_forward.12} parent=142 // pred_check_branch
          %1788 = sbr.rel (%p1786) target = $region167
        $region166: #{vision_encoder_forward.12} parent=142 // pred_region
          %s1789 = smul.u32 %s20, 2
          %s1790 = sadd.s32 %s1789, %s22
          %s1791 = smul.u32 16, %s1790
          %s1792 = smul.addr %s1791, 2
          %s1793 = sadd.s32 %s21, %s1792
          %s1794 = smul.addr %s1793, 4
          %s1795 = scalar_lea.vmem %s3, %s1794
          // Predicated region
          $region168: #{vision_encoder_forward.12} parent=166 // pred_check
            _
          $region169: #{vision_encoder_forward.12} parent=166 // pred_check_branch
            %1797 = sbr.rel (0) target = $region171
          $region170: #{vision_encoder_forward.12} parent=166 // pred_region
            // Predicated region
            $region172: #{vision_encoder_forward.12} parent=170 // pred_check
              _
            $region173: #{vision_encoder_forward.12} parent=170 // pred_check_branch
              %1799 = sbr.rel target = $region175
            $region174: #{vision_encoder_forward.12} parent=170 // pred_region
              // Predicated region
              $region187: #{vision_encoder_forward.12} parent=174 // pred_check
                _
              $region188: #{vision_encoder_forward.12} parent=174 // pred_check_branch
                %1844 = sbr.rel (0) target = $region190
              $region189: #{vision_encoder_forward.12} parent=174 // pred_region
                loop: start=0, step=1, limit=1
                $region191: #{vision_encoder_forward.12} parent=189 // loop_pre_header
                  _
                $region192: #{vision_encoder_forward.12} parent=189 // loop_header
                  %s1846 = sphi 0, %s1850
                  %p1847 = scmp.ge.s32.totalorder %s1846, 1
                  %s1851 = sphi %s1785, %s1785
                  %s1852 = sphi %s1795, %s1795
                $region193: #{vision_encoder_forward.12} parent=189 // loop_header_branch
                  %1849 = sbr.rel (%p1847) target = $region197
                $region194: #{vision_encoder_forward.12} parent=189 // loop_body
                  _
                $region195: #{vision_encoder_forward.12} parent=189 // loop_footer
                  %s1850 = sadd.s32 1, %s1846
                $region196: #{vision_encoder_forward.12} parent=189 // loop_footer_branch
                  %1845 = sbr.rel target = $region192
                $region197: #{vision_encoder_forward.12} parent=189 // loop_exit
                  _
                loop: start=0, step=1, limit=1
                $region198: #{vision_encoder_forward.12} parent=189 // loop_pre_header
                  _
                $region199: #{vision_encoder_forward.12} parent=189 // loop_header
                  %s1855 = sphi 0, %s1859
                  %p1856 = scmp.ge.s32.totalorder %s1855, 1
                  %s1860 = sphi %s1785, %s1785
                  %s1861 = sphi %s1795, %s1795
                $region200: #{vision_encoder_forward.12} parent=189 // loop_header_branch
                  %1858 = sbr.rel (%p1856) target = $region204
                $region201: #{vision_encoder_forward.12} parent=189 // loop_body
                  %v1862 = vld [vmem:[%s1860] sm:$0xf]
                  %1863 = vst [vmem:[%s1861] sm:$0xf] %v1862
                  %v1864 = vld [vmem:[%s1860 + $0x4] sm:$0xf]
                  %1865 = vst [vmem:[%s1861 + $0x8] sm:$0xf] %v1864
                  %v1866 = vld [vmem:[%s1860 + $0x8] sm:$0xf]
                  %1867 = vst [vmem:[%s1861 + $0x10] sm:$0xf] %v1866
                  %v1868 = vld [vmem:[%s1860 + $0xc] sm:$0xf]
                  %1869 = vst [vmem:[%s1861 + $0x18] sm:$0xf] %v1868
                  %v1870 = vld [vmem:[%s1860 + $0x10] sm:$0xf]
                  %1871 = vst [vmem:[%s1861 + $0x20] sm:$0xf] %v1870
                  %v1872 = vld [vmem:[%s1860 + $0x14] sm:$0xf]
                  %1873 = vst [vmem:[%s1861 + $0x28] sm:$0xf] %v1872
                  %v1874 = vld [vmem:[%s1860 + $0x18] sm:$0xf]
                  %1875 = vst [vmem:[%s1861 + $0x30] sm:$0xf] %v1874
                  %v1876 = vld [vmem:[%s1860 + $0x1c] sm:$0xf]
                  %1877 = vst [vmem:[%s1861 + $0x38] sm:$0xf] %v1876
                  %v1878 = vld [vmem:[%s1860 + $0x20] sm:$0xf]
                  %1879 = vst [vmem:[%s1861 + $0x40] sm:$0xf] %v1878
                  %v1880 = vld [vmem:[%s1860 + $0x24] sm:$0xf]
                  %1881 = vst [vmem:[%s1861 + $0x48] sm:$0xf] %v1880
                  %v1882 = vld [vmem:[%s1860 + $0x28] sm:$0xf]
                  %1883 = vst [vmem:[%s1861 + $0x50] sm:$0xf] %v1882
                  %v1884 = vld [vmem:[%s1860 + $0x2c] sm:$0xf]
                  %1885 = vst [vmem:[%s1861 + $0x58] sm:$0xf] %v1884
                  %v1886 = vld [vmem:[%s1860 + $0x30] sm:$0xf]
                  %1887 = vst [vmem:[%s1861 + $0x60] sm:$0xf] %v1886
                  %v1888 = vld [vmem:[%s1860 + $0x34] sm:$0xf]
                  %1889 = vst [vmem:[%s1861 + $0x68] sm:$0xf] %v1888
                  %v1890 = vld [vmem:[%s1860 + $0x38] sm:$0xf]
                  %1891 = vst [vmem:[%s1861 + $0x70] sm:$0xf] %v1890
                  %v1892 = vld [vmem:[%s1860 + $0x3c] sm:$0xf]
                  %1893 = vst [vmem:[%s1861 + $0x78] sm:$0xf] %v1892
                $region202: #{vision_encoder_forward.12} parent=189 // loop_footer
                  %s1859 = sadd.s32 1, %s1855
                $region203: #{vision_encoder_forward.12} parent=189 // loop_footer_branch
                  %1854 = sbr.rel target = $region199
                $region204: #{vision_encoder_forward.12} parent=189 // loop_exit
                  _
              $region190: #{vision_encoder_forward.12} parent=174 // pred_fallthru
                _
            $region175: #{vision_encoder_forward.12} parent=170 // pred_fallthru
              _
            // Predicated region
            $region176: #{vision_encoder_forward.12} parent=170 // pred_check
              _
            $region177: #{vision_encoder_forward.12} parent=170 // pred_check_branch
              %1801 = sbr.rel (0) target = $region179
            $region178: #{vision_encoder_forward.12} parent=170 // pred_region
              loop: start=0, step=1, limit=1
              $region180: #{vision_encoder_forward.12} parent=178 // loop_pre_header
                _
              $region181: #{vision_encoder_forward.12} parent=178 // loop_header
                %s1804 = sphi 0, %s1808
                %p1805 = scmp.ge.s32.totalorder %s1804, 1
                %s1809 = sphi %s1785, %s1785
                %s1810 = sphi %s1795, %s1795
              $region182: #{vision_encoder_forward.12} parent=178 // loop_header_branch
                %1807 = sbr.rel (%p1805) target = $region186
              $region183: #{vision_encoder_forward.12} parent=178 // loop_body
                %v1811 = vld [vmem:[%s1809] sm:$0xf]
                %1812 = vst [vmem:[%s1810] sm:$0xf] %v1811
                %v1813 = vld [vmem:[%s1809 + $0x4] sm:$0xf]
                %1814 = vst [vmem:[%s1810 + $0x8] sm:$0xf] %v1813
                %v1815 = vld [vmem:[%s1809 + $0x8] sm:$0xf]
                %1816 = vst [vmem:[%s1810 + $0x10] sm:$0xf] %v1815
                %v1817 = vld [vmem:[%s1809 + $0xc] sm:$0xf]
                %1818 = vst [vmem:[%s1810 + $0x18] sm:$0xf] %v1817
                %v1819 = vld [vmem:[%s1809 + $0x10] sm:$0xf]
                %1820 = vst [vmem:[%s1810 + $0x20] sm:$0xf] %v1819
                %v1821 = vld [vmem:[%s1809 + $0x14] sm:$0xf]
                %1822 = vst [vmem:[%s1810 + $0x28] sm:$0xf] %v1821
                %v1823 = vld [vmem:[%s1809 + $0x18] sm:$0xf]
                %1824 = vst [vmem:[%s1810 + $0x30] sm:$0xf] %v1823
                %v1825 = vld [vmem:[%s1809 + $0x1c] sm:$0xf]
                %1826 = vst [vmem:[%s1810 + $0x38] sm:$0xf] %v1825
                %v1827 = vld [vmem:[%s1809 + $0x20] sm:$0xf]
                %1828 = vst [vmem:[%s1810 + $0x40] sm:$0xf] %v1827
                %v1829 = vld [vmem:[%s1809 + $0x24] sm:$0xf]
                %1830 = vst [vmem:[%s1810 + $0x48] sm:$0xf] %v1829
                %v1831 = vld [vmem:[%s1809 + $0x28] sm:$0xf]
                %1832 = vst [vmem:[%s1810 + $0x50] sm:$0xf] %v1831
                %v1833 = vld [vmem:[%s1809 + $0x2c] sm:$0xf]
                %1834 = vst [vmem:[%s1810 + $0x58] sm:$0xf] %v1833
                %v1835 = vld [vmem:[%s1809 + $0x30] sm:$0xf]
                %1836 = vst [vmem:[%s1810 + $0x60] sm:$0xf] %v1835
                %v1837 = vld [vmem:[%s1809 + $0x34] sm:$0xf]
                %1838 = vst [vmem:[%s1810 + $0x68] sm:$0xf] %v1837
                %v1839 = vld [vmem:[%s1809 + $0x38] sm:$0xf]
                %1840 = vst [vmem:[%s1810 + $0x70] sm:$0xf] %v1839
                %v1841 = vld [vmem:[%s1809 + $0x3c] sm:$0xf]
                %1842 = vst [vmem:[%s1810 + $0x78] sm:$0xf] %v1841
              $region184: #{vision_encoder_forward.12} parent=178 // loop_footer
                %s1808 = sadd.s32 1, %s1804
              $region185: #{vision_encoder_forward.12} parent=178 // loop_footer_branch
                %1803 = sbr.rel target = $region181
              $region186: #{vision_encoder_forward.12} parent=178 // loop_exit
                _
            $region179: #{vision_encoder_forward.12} parent=170 // pred_fallthru
              _
          $region171: #{vision_encoder_forward.12} parent=166 // pred_fallthru
            _
          %1894 = vnop
        $region167: #{vision_encoder_forward.12} parent=142 // pred_fallthru
          _
      $region143: #{vision_encoder_forward.12} parent=5 // pred_fallthru
        _
      %p1895 = scmp.le.s32.totalorder 2, %s9
      // Predicated region
      $region205: #{vision_encoder_forward.12} parent=5 // pred_check
        %p1896 = pneg %p1895
      $region206: #{vision_encoder_forward.12} parent=5 // pred_check_branch
        %1898 = sbr.rel (%p1896) target = $region208
      $region207: #{vision_encoder_forward.12} parent=5 // pred_region
        %s1899 = ssub.s32 %s9, 2
        // Predicated region
        $region209: #{vision_encoder_forward.12} parent=207 // pred_check
          %p1900 = pneg %p170
        $region210: #{vision_encoder_forward.12} parent=207 // pred_check_branch
          %1902 = sbr.rel (%p1900) target = $region212
        $region211: #{vision_encoder_forward.12} parent=207 // pred_region
          %s1903 = sand.u32 %s155, 1
          %s1904 = sand.u32 %s155, 1
          %s1905 = smul.addr %s1904, 64
          %s1906 = scalar_lea.vmem [#allocation8], %s1905
        $region212: #{vision_encoder_forward.12} parent=207 // pred_fallthru
          _
      $region208: #{vision_encoder_forward.12} parent=5 // pred_fallthru
        _
    $region6: #{vision_encoder_forward.12} parent=1 // loop_footer
      %s13 = sadd.s32 1, %s9
    $region7: #{vision_encoder_forward.12} parent=1 // loop_footer_branch
      %8 = sbr.rel target = $region3
    $region8: #{vision_encoder_forward.12} parent=1 // loop_exit
      _

// kernel: vision_encoder_forward.15
$region0: #{vision_encoder_forward.15}
  #allocation0 [shape = 'u32[]', space=smem, size = 0x4, offset = 0x4, fixed_abs, tag = 'smem constant byte address 0x4 - core index']
  #allocation1 [shape = 'u32[144,128]{1,0:T(1,128)}', space=vmem, size = 0x12000, scoped, tag = 'internal scratch']
  #allocation2 [shape = 'f32[128,128]{1,0:T(8,128)}', space=vmem, size = 0x10000, scoped, tag = 'scratch operand']
  %s0 = inlined_call_operand.vmem [shape: bf16[512,512], index: 0, kind: input, shape index: {}]
  %s1 = inlined_call_operand.vmem [shape: bf16[512,128], index: 1, kind: input, shape index: {}]
  %s2 = inlined_call_operand.vmem [shape: f32[1,128], index: 2, kind: input, shape index: {}]
  %s3 = inlined_call_operand.vmem [shape: f32[512,128], index: 3, kind: input, shape index: {}]
  %s4 = inlined_call_operand.vmem [shape: f32[512,128], index: 4, kind: output, shape index: {}]
  %s5 = sld [smem:[#allocation0]]
  $region95: #{vision_encoder_forward.15} parent=0
    _
  %s7 = ssub.s32 1, %s5
  %s8 = scalar_select 0, %s7, %s5
  $region1: #{vision_encoder_forward.15} parent=0
    #allocation3 [shape = 'u8[131072]{0}', space=vmem, size = 0x20000, scoped, tag = 'input window, operand 0']
    loop: start=0, step=1, limit=10
    $region2: #{vision_encoder_forward.15} parent=1 // loop_pre_header
      _
    $region3: #{vision_encoder_forward.15} parent=1 // loop_header
      %s10 = sphi 0, %s14
      %p11 = scmp.ge.s32.totalorder %s10, 10
      %s17 = sphi 0, %s36
      %s18 = sphi 0, %s32
      %s19 = sphi 0, %s28
      %s20 = sphi 0, %s17
      %s21 = sphi 0, %s18
      %s22 = sphi 0, %s19
      %s23 = sphi 0, %s20
      %s24 = sphi 0, %s21
      %s25 = sphi 0, %s22
      %s41 = sphi 0, %s43
      %s44 = sphi 0, %s41
      %s45 = sphi 0, %s44
      %s61 = sphi 0, %s45
      %s69 = sphi 0, %s71
      %s72 = sphi 0, %s69
      %s73 = sphi 0, %s72
      %s89 = sphi 0, %s73
      %s95 = sphi 0, %s97
      %s98 = sphi 0, %s95
      %s99 = sphi 0, %s98
      %s115 = sphi 0, %s99
      %s123 = sphi 0, %s125
      %s126 = sphi 0, %s123
      %s127 = sphi 0, %s126
      %s143 = sphi 0, %s127
      %s151 = sphi 0, %s153
      %s154 = sphi 0, %s151
      %s155 = sphi 0, %s154
      %s171 = sphi 0, %s155
    $region4: #{vision_encoder_forward.15} parent=1 // loop_header_branch
      %13 = sbr.rel (%p11) target = $region8
    $region5: #{vision_encoder_forward.15} parent=1 // loop_body
      %s15 = ssub.s32 %s10, 1
      %s16 = ssub.s32 %s10, 2
      %s26 = sadd.s32 1, %s19
      %p27 = scmp.ge.s32.totalorder %s26, 2
      %s28 = scalar_select %p27, 0, %s26
      %s29 = sadd.s32 1, %s18
      %s30 = scalar_select %p27, %s29, %s18
      %p31 = scmp.ge.s32.totalorder %s30, 1
      %s32 = scalar_select %p31, 0, %s30
      %s33 = sadd.s32 1, %s17
      %s34 = scalar_select %p31, %s33, %s17
      %p35 = scmp.ge.s32.totalorder %s34, 4
      %s36 = scalar_select %p35, 0, %s34
      %s37 = ssub.s32 %s17, %s36
      %s38 = ssub.s32 %s19, %s28
      %s39 = sor.u32 %s37, %s38
      %p40 = scmp.eq.s32.totalorder %s39, 0
      %s42 = sadd.s32 %s41, 1
      %s43 = scalar_select %p40, %s41, %s42
      %p46 = pneg %p40
      %p47 = scmp.eq.s32.totalorder %s10, 7
      %p48 = por %p46, %p47
      %p49 = scmp.ne.s32.totalorder %s41, %s44
      %p50 = scmp.eq.s32.totalorder %s10, 0
      %p51 = por %p49, %p50
      %p52 = scmp.ne.s32.totalorder %s41, %s44
      %p53 = scmp.eq.s32.totalorder %s15, 7
      %p54 = por %p52, %p53
      %p55 = scmp.ne.s32.totalorder %s44, %s45
      %p56 = scmp.eq.s32.totalorder %s15, 0
      %p57 = por %p55, %p56
      %p58 = scmp.ne.s32.totalorder %s44, %s45
      %p59 = scmp.eq.s32.totalorder %s16, 7
      %p60 = por %p58, %p59
      %p62 = scmp.ne.s32.totalorder %s45, %s61
      %p63 = scmp.eq.s32.totalorder %s16, 0
      %p64 = por %p62, %p63
      %s65 = ssub.s32 %s19, %s28
      %s66 = ssub.s32 %s18, %s32
      %s67 = sor.u32 %s65, %s66
      %p68 = scmp.eq.s32.totalorder %s67, 0
      %s70 = sadd.s32 %s69, 1
      %s71 = scalar_select %p68, %s69, %s70
      %p74 = pneg %p68
      %p75 = scmp.eq.s32.totalorder %s10, 7
      %p76 = por %p74, %p75
      %p77 = scmp.ne.s32.totalorder %s69, %s72
      %p78 = scmp.eq.s32.totalorder %s10, 0
      %p79 = por %p77, %p78
      %p80 = scmp.ne.s32.totalorder %s69, %s72
      %p81 = scmp.eq.s32.totalorder %s15, 7
      %p82 = por %p80, %p81
      %p83 = scmp.ne.s32.totalorder %s72, %s73
      %p84 = scmp.eq.s32.totalorder %s15, 0
      %p85 = por %p83, %p84
      %p86 = scmp.ne.s32.totalorder %s72, %s73
      %p87 = scmp.eq.s32.totalorder %s16, 7
      %p88 = por %p86, %p87
      %p90 = scmp.ne.s32.totalorder %s73, %s89
      %p91 = scmp.eq.s32.totalorder %s16, 0
      %p92 = por %p90, %p91
      %s93 = ssub.s32 %s18, %s32
      %p94 = scmp.eq.s32.totalorder %s93, 0
      %s96 = sadd.s32 %s95, 1
      %s97 = scalar_select %p94, %s95, %s96
      %p100 = pneg %p94
      %p101 = scmp.eq.s32.totalorder %s10, 7
      %p102 = por %p100, %p101
      %p103 = scmp.ne.s32.totalorder %s95, %s98
      %p104 = scmp.eq.s32.totalorder %s10, 0
      %p105 = por %p103, %p104
      %p106 = scmp.ne.s32.totalorder %s95, %s98
      %p107 = scmp.eq.s32.totalorder %s15, 7
      %p108 = por %p106, %p107
      %p109 = scmp.ne.s32.totalorder %s98, %s99
      %p110 = scmp.eq.s32.totalorder %s15, 0
      %p111 = por %p109, %p110
      %p112 = scmp.ne.s32.totalorder %s98, %s99
      %p113 = scmp.eq.s32.totalorder %s16, 7
      %p114 = por %p112, %p113
      %p116 = scmp.ne.s32.totalorder %s99, %s115
      %p117 = scmp.eq.s32.totalorder %s16, 0
      %p118 = por %p116, %p117
      %s119 = ssub.s32 %s17, %s36
      %s120 = ssub.s32 %s18, %s32
      %s121 = sor.u32 %s119, %s120
      %p122 = scmp.eq.s32.totalorder %s121, 0
      %s124 = sadd.s32 %s123, 1
      %s125 = scalar_select %p122, %s123, %s124
      %p128 = pneg %p122
      %p129 = scmp.eq.s32.totalorder %s10, 7
      %p130 = por %p128, %p129
      %p131 = scmp.ne.s32.totalorder %s123, %s126
      %p132 = scmp.eq.s32.totalorder %s10, 0
      %p133 = por %p131, %p132
      %p134 = scmp.ne.s32.totalorder %s123, %s126
      %p135 = scmp.eq.s32.totalorder %s15, 7
      %p136 = por %p134, %p135
      %p137 = scmp.ne.s32.totalorder %s126, %s127
      %p138 = scmp.eq.s32.totalorder %s15, 0
      %p139 = por %p137, %p138
      %p140 = scmp.ne.s32.totalorder %s126, %s127
      %p141 = scmp.eq.s32.totalorder %s16, 7
      %p142 = por %p140, %p141
      %p144 = scmp.ne.s32.totalorder %s127, %s143
      %p145 = scmp.eq.s32.totalorder %s16, 0
      %p146 = por %p144, %p145
      %s147 = ssub.s32 %s17, %s36
      %s148 = ssub.s32 %s18, %s32
      %s149 = sor.u32 %s147, %s148
      %p150 = scmp.eq.s32.totalorder %s149, 0
      %s152 = sadd.s32 %s151, 1
      %s153 = scalar_select %p150, %s151, %s152
      %p156 = pneg %p150
      %p157 = scmp.eq.s32.totalorder %s10, 7
      %p158 = por %p156, %p157
      %p159 = scmp.ne.s32.totalorder %s151, %s154
      %p160 = scmp.eq.s32.totalorder %s10, 0
      %p161 = por %p159, %p160
      %p162 = scmp.ne.s32.totalorder %s151, %s154
      %p163 = scmp.eq.s32.totalorder %s15, 7
      %p164 = por %p162, %p163
      %p165 = scmp.ne.s32.totalorder %s154, %s155
      %p166 = scmp.eq.s32.totalorder %s15, 0
      %p167 = por %p165, %p166
      %p168 = scmp.ne.s32.totalorder %s154, %s155
      %p169 = scmp.eq.s32.totalorder %s16, 7
      %p170 = por %p168, %p169
      %p172 = scmp.ne.s32.totalorder %s155, %s171
      %p173 = scmp.eq.s32.totalorder %s16, 0
      %p174 = por %p172, %p173
      %p175 = scmp.le.s32.totalorder 1, %s10
      %p176 = scmp.lt.s32.totalorder %s10, 9
      %p177 = pnand %p175, %p176
      %p178 = pneg %p177
      // Predicated region
      $region9: #{vision_encoder_forward.15} parent=5 // pred_check
        _
      $region10: #{vision_encoder_forward.15} parent=5 // pred_check_branch
        %180 = sbr.rel (%p177) target = $region12
      $region11: #{vision_encoder_forward.15} parent=5 // pred_region
        %s181 = ssub.s32 %s10, 1
        // Predicated region
        $region13: #{vision_encoder_forward.15} parent=11 // pred_check
          %p182 = pneg %p111
        $region14: #{vision_encoder_forward.15} parent=11 // pred_check_branch
          %184 = sbr.rel (%p182) target = $region16
        $region15: #{vision_encoder_forward.15} parent=11 // pred_region
          %p185 = scmp.lt.s32.totalorder %s21, 0
          %s186 = scalar_select %p185, %s21, 0
          %s187 = scalar_lea.vmem %s2, %s186
        $region16: #{vision_encoder_forward.15} parent=11 // pred_fallthru
          _
      $region12: #{vision_encoder_forward.15} parent=5 // pred_fallthru
        _
      %p188 = scmp.lt.s32.totalorder %s10, 8
      // Predicated region
      $region17: #{vision_encoder_forward.15} parent=5 // pred_check
        %p189 = pneg %p188
      $region18: #{vision_encoder_forward.15} parent=5 // pred_check_branch
        %191 = sbr.rel (%p189) target = $region20
      $region19: #{vision_encoder_forward.15} parent=5 // pred_region
        // Predicated region
        $region21: #{vision_encoder_forward.15} parent=19 // pred_check
          %p192 = pneg %p51
        $region22: #{vision_encoder_forward.15} parent=19 // pred_check_branch
          %194 = sbr.rel (%p192) target = $region24
        $region23: #{vision_encoder_forward.15} parent=19 // pred_region
          %s195 = sand.u32 %s41, 1
          %s196 = sand.u32 %s41, 1
          %s197 = smul.addr %s196, 128
          %s198 = scalar_lea.vmem [#allocation3], %s197
          %s199 = smul.u32 16, %s17
          %s200 = smul.u32 2, %s19
          %s201 = smul.addr %s199, 4
          %s202 = sadd.s32 %s200, %s201
          %s203 = smul.addr %s202, 4
          %s204 = scalar_lea.vmem %s0, %s203
          // Predicated region
          $region25: #{vision_encoder_forward.15} parent=23 // pred_check
            _
          $region26: #{vision_encoder_forward.15} parent=23 // pred_check_branch
            %206 = sbr.rel (0) target = $region28
          $region27: #{vision_encoder_forward.15} parent=23 // pred_region
            // Predicated region
            $region29: #{vision_encoder_forward.15} parent=27 // pred_check
              _
            $region30: #{vision_encoder_forward.15} parent=27 // pred_check_branch
              %208 = sbr.rel (0) target = $region32
            $region31: #{vision_encoder_forward.15} parent=27 // pred_region
              // Predicated region
              $region44: #{vision_encoder_forward.15} parent=31 // pred_check
                _
              $region45: #{vision_encoder_forward.15} parent=31 // pred_check_branch
                %253 = sbr.rel (0) target = $region47
              $region46: #{vision_encoder_forward.15} parent=31 // pred_region
                loop: start=0, step=1, limit=1
                $region48: #{vision_encoder_forward.15} parent=46 // loop_pre_header
                  _
                $region49: #{vision_encoder_forward.15} parent=46 // loop_header
                  %s255 = sphi 0, %s259
                  %p256 = scmp.ge.s32.totalorder %s255, 1
                  %s260 = sphi %s204, %s204
                  %s261 = sphi %s198, %s198
                $region50: #{vision_encoder_forward.15} parent=46 // loop_header_branch
                  %258 = sbr.rel (%p256) target = $region54
                $region51: #{vision_encoder_forward.15} parent=46 // loop_body
                  %v262 = vld [vmem:[%s260] sm:$0xff]
                  %263 = vst [vmem:[%s261] sm:$0xff] %v262
                  %v264 = vld [vmem:[%s260 + $0x10] sm:$0xff]
                  %265 = vst [vmem:[%s261 + $0x8] sm:$0xff] %v264
                  %v266 = vld [vmem:[%s260 + $0x20] sm:$0xff]
                  %267 = vst [vmem:[%s261 + $0x10] sm:$0xff] %v266
                  %v268 = vld [vmem:[%s260 + $0x30] sm:$0xff]
                  %269 = vst [vmem:[%s261 + $0x18] sm:$0xff] %v268
                  %v270 = vld [vmem:[%s260 + $0x40] sm:$0xff]
                  %271 = vst [vmem:[%s261 + $0x20] sm:$0xff] %v270
                  %v272 = vld [vmem:[%s260 + $0x50] sm:$0xff]
                  %273 = vst [vmem:[%s261 + $0x28] sm:$0xff] %v272
                  %v274 = vld [vmem:[%s260 + $0x60] sm:$0xff]
                  %275 = vst [vmem:[%s261 + $0x30] sm:$0xff] %v274
                  %v276 = vld [vmem:[%s260 + $0x70] sm:$0xff]
                  %277 = vst [vmem:[%s261 + $0x38] sm:$0xff] %v276
                  %v278 = vld [vmem:[%s260 + $0x80] sm:$0xff]
                  %279 = vst [vmem:[%s261 + $0x40] sm:$0xff] %v278
                  %v280 = vld [vmem:[%s260 + $0x90] sm:$0xff]
                  %281 = vst [vmem:[%s261 + $0x48] sm:$0xff] %v280
                  %v282 = vld [vmem:[%s260 + $0xa0] sm:$0xff]
                  %283 = vst [vmem:[%s261 + $0x50] sm:$0xff] %v282
                  %v284 = vld [vmem:[%s260 + $0xb0] sm:$0xff]
                  %285 = vst [vmem:[%s261 + $0x58] sm:$0xff] %v284
                  %v286 = vld [vmem:[%s260 + $0xc0] sm:$0xff]
                  %287 = vst [vmem:[%s261 + $0x60] sm:$0xff] %v286
                  %v288 = vld [vmem:[%s260 + $0xd0] sm:$0xff]
                  %289 = vst [vmem:[%s261 + $0x68] sm:$0xff] %v288
                  %v290 = vld [vmem:[%s260 + $0xe0] sm:$0xff]
                  %291 = vst [vmem:[%s261 + $0x70] sm:$0xff] %v290
                  %v292 = vld [vmem:[%s260 + $0xf0] sm:$0xff]
                  %293 = vst [vmem:[%s261 + $0x78] sm:$0xff] %v292
                $region52: #{vision_encoder_forward.15} parent=46 // loop_footer
                  %s259 = sadd.s32 1, %s255
                $region53: #{vision_encoder_forward.15} parent=46 // loop_footer_branch
                  %254 = sbr.rel target = $region49
                $region54: #{vision_encoder_forward.15} parent=46 // loop_exit
                  _
              $region47: #{vision_encoder_forward.15} parent=31 // pred_fallthru
                _
              // Predicated region
              $region55: #{vision_encoder_forward.15} parent=31 // pred_check
                _
              $region56: #{vision_encoder_forward.15} parent=31 // pred_check_branch
                %295 = sbr.rel target = $region58
              $region57: #{vision_encoder_forward.15} parent=31 // pred_region
                _
              $region58: #{vision_encoder_forward.15} parent=31 // pred_fallthru
                _
            $region32: #{vision_encoder_forward.15} parent=27 // pred_fallthru
              _
            // Predicated region
            $region33: #{vision_encoder_forward.15} parent=27 // pred_check
              _
            $region34: #{vision_encoder_forward.15} parent=27 // pred_check_branch
              %210 = sbr.rel target = $region36
            $region35: #{vision_encoder_forward.15} parent=27 // pred_region
              loop: start=0, step=1, limit=1
              $region37: #{vision_encoder_forward.15} parent=35 // loop_pre_header
                _
              $region38: #{vision_encoder_forward.15} parent=35 // loop_header
                %s213 = sphi 0, %s217
                %p214 = scmp.ge.s32.totalorder %s213, 1
                %s218 = sphi %s204, %s204
                %s219 = sphi %s198, %s198
              $region39: #{vision_encoder_forward.15} parent=35 // loop_header_branch
                %216 = sbr.rel (%p214) target = $region43
              $region40: #{vision_encoder_forward.15} parent=35 // loop_body
                %v220 = vld [vmem:[%s218] sm:$0xff]
                %221 = vst [vmem:[%s219] sm:$0xff] %v220
                %v222 = vld [vmem:[%s218 + $0x10] sm:$0xff]
                %223 = vst [vmem:[%s219 + $0x8] sm:$0xff] %v222
                %v224 = vld [vmem:[%s218 + $0x20] sm:$0xff]
                %225 = vst [vmem:[%s219 + $0x10] sm:$0xff] %v224
                %v226 = vld [vmem:[%s218 + $0x30] sm:$0xff]
                %227 = vst [vmem:[%s219 + $0x18] sm:$0xff] %v226
                %v228 = vld [vmem:[%s218 + $0x40] sm:$0xff]
                %229 = vst [vmem:[%s219 + $0x20] sm:$0xff] %v228
                %v230 = vld [vmem:[%s218 + $0x50] sm:$0xff]
                %231 = vst [vmem:[%s219 + $0x28] sm:$0xff] %v230
                %v232 = vld [vmem:[%s218 + $0x60] sm:$0xff]
                %233 = vst [vmem:[%s219 + $0x30] sm:$0xff] %v232
                %v234 = vld [vmem:[%s218 + $0x70] sm:$0xff]
                %235 = vst [vmem:[%s219 + $0x38] sm:$0xff] %v234
                %v236 = vld [vmem:[%s218 + $0x80] sm:$0xff]
                %237 = vst [vmem:[%s219 + $0x40] sm:$0xff] %v236
                %v238 = vld [vmem:[%s218 + $0x90] sm:$0xff]
                %239 = vst [vmem:[%s219 + $0x48] sm:$0xff] %v238
                %v240 = vld [vmem:[%s218 + $0xa0] sm:$0xff]
                %241 = vst [vmem:[%s219 + $0x50] sm:$0xff] %v240
                %v242 = vld [vmem:[%s218 + $0xb0] sm:$0xff]
                %243 = vst [vmem:[%s219 + $0x58] sm:$0xff] %v242
                %v244 = vld [vmem:[%s218 + $0xc0] sm:$0xff]
                %245 = vst [vmem:[%s219 + $0x60] sm:$0xff] %v244
                %v246 = vld [vmem:[%s218 + $0xd0] sm:$0xff]
                %247 = vst [vmem:[%s219 + $0x68] sm:$0xff] %v246
                %v248 = vld [vmem:[%s218 + $0xe0] sm:$0xff]
                %249 = vst [vmem:[%s219 + $0x70] sm:$0xff] %v248
                %v250 = vld [vmem:[%s218 + $0xf0] sm:$0xff]
                %251 = vst [vmem:[%s219 + $0x78] sm:$0xff] %v250
              $region41: #{vision_encoder_forward.15} parent=35 // loop_footer
                %s217 = sadd.s32 1, %s213
              $region42: #{vision_encoder_forward.15} parent=35 // loop_footer_branch
                %212 = sbr.rel target = $region38
              $region43: #{vision_encoder_forward.15} parent=35 // loop_exit
                _
            $region36: #{vision_encoder_forward.15} parent=27 // pred_fallthru
              _
          $region28: #{vision_encoder_forward.15} parent=23 // pred_fallthru
            _
          %296 = vnop
        $region24: #{vision_encoder_forward.15} parent=19 // pred_fallthru
          _
        // Predicated region
        $region59: #{vision_encoder_forward.15} parent=19 // pred_check
          %p297 = pneg %p79
        $region60: #{vision_encoder_forward.15} parent=19 // pred_check_branch
          %299 = sbr.rel (%p297) target = $region62
        $region61: #{vision_encoder_forward.15} parent=19 // pred_region
          %s300 = smul.u32 32, %s19
          %p301 = scmp.lt.s32.totalorder %s300, 63
          %s302 = scalar_select %p301, %s300, 63
          %p303 = scmp.lt.s32.totalorder %s18, 0
          %s304 = scalar_select %p303, %s18, 0
          %s305 = sadd.s32 %s304, %s302
          %s306 = smul.addr %s305, 4
          %s307 = scalar_lea.vmem %s1, %s306
          %s308 = smul.u32 32, %s19
        $region62: #{vision_encoder_forward.15} parent=19 // pred_fallthru
          _
        // Predicated region
        $region63: #{vision_encoder_forward.15} parent=19 // pred_check
          %p309 = pneg %p133
        $region64: #{vision_encoder_forward.15} parent=19 // pred_check_branch
          %311 = sbr.rel (%p309) target = $region66
        $region65: #{vision_encoder_forward.15} parent=19 // pred_region
          %s312 = smul.u32 16, %s17
          %p313 = scmp.lt.s32.totalorder %s312, 63
          %s314 = scalar_select %p313, %s312, 63
          %p315 = scmp.lt.s32.totalorder %s18, 0
          %s316 = scalar_select %p315, %s18, 0
          %s317 = sadd.s32 %s316, %s314
          %s318 = smul.addr %s317, 8
          %s319 = scalar_lea.vmem %s3, %s318
          %s320 = smul.u32 16, %s17
        $region66: #{vision_encoder_forward.15} parent=19 // pred_fallthru
          _
      $region20: #{vision_encoder_forward.15} parent=5 // pred_fallthru
        _
      %p321 = scmp.le.s32.totalorder 1, %s10
      %p322 = scmp.lt.s32.totalorder %s10, 9
      %p323 = pnand %p321, %p322
      %p324 = pneg %p323
      // Predicated region
      $region67: #{vision_encoder_forward.15} parent=5 // pred_check
        _
      $region68: #{vision_encoder_forward.15} parent=5 // pred_check_branch
        %326 = sbr.rel (%p323) target = $region70
      $region69: #{vision_encoder_forward.15} parent=5 // pred_region
        %s327 = ssub.s32 %s10, 1
        %s328 = sand.u32 %s44, 1
        %s329 = sand.u32 %s44, 1
        %s330 = smul.addr %s329, 128
        %s331 = scalar_lea.vmem [#allocation3], %s330
        // Predicated region
        $region71: #{vision_encoder_forward.15} parent=69 // pred_check
          %p332 = pneg %p57
        $region72: #{vision_encoder_forward.15} parent=69 // pred_check_branch
          %334 = sbr.rel (%p332) target = $region74
        $region73: #{vision_encoder_forward.15} parent=69 // pred_region
          _
        $region74: #{vision_encoder_forward.15} parent=69 // pred_fallthru
          _
        %s335 = sand.u32 %s44, 1
        %s336 = sand.u32 %s44, 1
        %s337 = smul.addr %s336, 128
        %s338 = scalar_lea.vmem [#allocation3], %s337
        %p339 = pneg %p57
        %p340 = pneg %p54
        %s341 = smul.u32 32, %s22
        %p342 = scmp.lt.s32.totalorder %s341, 63
        %s343 = scalar_select %p342, %s341, 63
        %p344 = scmp.lt.s32.totalorder %s21, 0
        %s345 = scalar_select %p344, %s21, 0
        %s346 = sadd.s32 %s345, %s343
        %s347 = smul.addr %s346, 4
        %s348 = scalar_lea.vmem %s1, %s347
        %p349 = pneg %p85
        %p350 = pneg %p82
        %p351 = scmp.lt.s32.totalorder %s21, 0
        %s352 = scalar_select %p351, %s21, 0
        %s353 = scalar_lea.vmem %s2, %s352
        %p354 = pneg %p111
        %p355 = pneg %p108
        %s356 = smul.u32 16, %s20
        %p357 = scmp.lt.s32.totalorder %s356, 63
        %s358 = scalar_select %p357, %s356, 63
        %p359 = scmp.lt.s32.totalorder %s21, 0
        %s360 = scalar_select %p359, %s21, 0
        %s361 = sadd.s32 %s360, %s358
        %s362 = smul.addr %s361, 8
        %s363 = scalar_lea.vmem %s3, %s362
        %p364 = pneg %p139
        %p365 = pneg %p136
        %p366 = pneg %p167
        %p367 = pneg %p164
        %s368 = smul.u32 16, %s20
        %p369 = scmp.lt.s32.totalorder %s368, 63
        %s370 = scalar_select %p369, %s368, 63
        %p371 = scmp.lt.s32.totalorder %s21, 0
        %s372 = scalar_select %p371, %s21, 0
        %s373 = sadd.s32 %s372, %s370
        %s374 = smul.addr %s373, 8
        %s375 = scalar_lea.vmem %s4, %s374
        %s376 = smul.u32 16, %s20
        %s377 = smul.u32 2, %s22
        %s378 = smul.u32 32, %s22
        %p379 = scmp.lt.s32.totalorder %s378, 63
        %s380 = scalar_select %p379, %s378, 63
        %p381 = scmp.lt.s32.totalorder %s21, 0
        %s382 = scalar_select %p381, %s21, 0
        %s383 = sadd.s32 %s382, %s380
        %s384 = smul.addr %s383, 4
        %s385 = scalar_lea.vmem %s1, %s384
        %s386 = smul.u32 32, %s22
        %p387 = scmp.lt.s32.totalorder %s21, 0
        %s388 = scalar_select %p387, %s21, 0
        %s389 = scalar_lea.vmem %s2, %s388
        %s390 = smul.u32 16, %s20
        %p391 = scmp.lt.s32.totalorder %s390, 63
        %s392 = scalar_select %p391, %s390, 63
        %p393 = scmp.lt.s32.totalorder %s21, 0
        %s394 = scalar_select %p393, %s21, 0
        %s395 = sadd.s32 %s394, %s392
        %s396 = smul.addr %s395, 8
        %s397 = scalar_lea.vmem %s3, %s396
        %s398 = smul.u32 16, %s20
        %s399 = smul.u32 16, %s20
        %p400 = scmp.lt.s32.totalorder %s399, 63
        %s401 = scalar_select %p400, %s399, 63
        %p402 = scmp.lt.s32.totalorder %s21, 0
        %s403 = scalar_select %p402, %s21, 0
        %s404 = sadd.s32 %s403, %s401
        %s405 = smul.addr %s404, 8
        %s406 = scalar_lea.vmem %s4, %s405
        %s407 = smul.u32 16, %s20
        %p409 = scmp.eq.s32.totalorder %s22, 0
        // Predicated region
        $region75: #{vision_encoder_forward.15} parent=69 // pred_check
          %p410 = pneg %p409
        $region76: #{vision_encoder_forward.15} parent=69 // pred_check_branch
          %412 = sbr.rel (%p410) target = $region78
        $region77: #{vision_encoder_forward.15} parent=69 // pred_region
          %413 = vst [vmem:[#allocation2] sm:$0xff] 0.0
          %414 = vst [vmem:[#allocation2 + $0x8] sm:$0xff] 0.0
          %415 = vst [vmem:[#allocation2 + $0x10] sm:$0xff] 0.0
          %416 = vst [vmem:[#allocation2 + $0x18] sm:$0xff] 0.0
          %417 = vst [vmem:[#allocation2 + $0x20] sm:$0xff] 0.0
          %418 = vst [vmem:[#allocation2 + $0x28] sm:$0xff] 0.0
          %419 = vst [vmem:[#allocation2 + $0x30] sm:$0xff] 0.0
          %420 = vst [vmem:[#allocation2 + $0x38] sm:$0xff] 0.0
          %421 = vst [vmem:[#allocation2 + $0x40] sm:$0xff] 0.0
          %422 = vst [vmem:[#allocation2 + $0x48] sm:$0xff] 0.0
          %423 = vst [vmem:[#allocation2 + $0x50] sm:$0xff] 0.0
          %424 = vst [vmem:[#allocation2 + $0x58] sm:$0xff] 0.0
          %425 = vst [vmem:[#allocation2 + $0x60] sm:$0xff] 0.0
          %426 = vst [vmem:[#allocation2 + $0x68] sm:$0xff] 0.0
          %427 = vst [vmem:[#allocation2 + $0x70] sm:$0xff] 0.0
          %428 = vst [vmem:[#allocation2 + $0x78] sm:$0xff] 0.0
        $region78: #{vision_encoder_forward.15} parent=69 // pred_fallthru
          _
        %v429 = vld [vmem:[#allocation2] sm:$0xff]
        %v430 = vld [vmem:[#allocation2 + $0x8] sm:$0xff]
        %v431 = vld [vmem:[#allocation2 + $0x10] sm:$0xff]
        %v432 = vld [vmem:[#allocation2 + $0x18] sm:$0xff]
        %v433 = vld [vmem:[#allocation2 + $0x20] sm:$0xff]
        %v434 = vld [vmem:[#allocation2 + $0x28] sm:$0xff]
        %v435 = vld [vmem:[#allocation2 + $0x30] sm:$0xff]
        %v436 = vld [vmem:[#allocation2 + $0x38] sm:$0xff]
        %v437 = vld [vmem:[#allocation2 + $0x40] sm:$0xff]
        %v438 = vld [vmem:[#allocation2 + $0x48] sm:$0xff]
        %v439 = vld [vmem:[#allocation2 + $0x50] sm:$0xff]
        %v440 = vld [vmem:[#allocation2 + $0x58] sm:$0xff]
        %v441 = vld [vmem:[#allocation2 + $0x60] sm:$0xff]
        %v442 = vld [vmem:[#allocation2 + $0x68] sm:$0xff]
        %v443 = vld [vmem:[#allocation2 + $0x70] sm:$0xff]
        %v444 = vld [vmem:[#allocation2 + $0x78] sm:$0xff]
        %v445 = vld [vmem:[%s331] sm:$0xff]
        %v446 = vld [vmem:[%s331 + $0x8] sm:$0xff]
        %v447 = vld [vmem:[%s331 + $0x10] sm:$0xff]
        %v448 = vld [vmem:[%s331 + $0x18] sm:$0xff]
        %v449 = vld [vmem:[%s331 + $0x20] sm:$0xff]
        %v450 = vld [vmem:[%s331 + $0x28] sm:$0xff]
        %v451 = vld [vmem:[%s331 + $0x30] sm:$0xff]
        %v452 = vld [vmem:[%s331 + $0x38] sm:$0xff]
        %v453 = vld [vmem:[%s331 + $0x40] sm:$0xff]
        %v454 = vld [vmem:[%s331 + $0x48] sm:$0xff]
        %v455 = vld [vmem:[%s331 + $0x50] sm:$0xff]
        %v456 = vld [vmem:[%s331 + $0x58] sm:$0xff]
        %v457 = vld [vmem:[%s331 + $0x60] sm:$0xff]
        %v458 = vld [vmem:[%s331 + $0x68] sm:$0xff]
        %v459 = vld [vmem:[%s331 + $0x70] sm:$0xff]
        %v460 = vld [vmem:[%s331 + $0x78] sm:$0xff]
        %v461 = vld [vmem:[%s385] sm:$0xf]
        %v462 = vld [vmem:[%s385 + $0x4] sm:$0xf]
        %v463 = vld [vmem:[%s385 + $0x8] sm:$0xf]
        %v464 = vld [vmem:[%s385 + $0xc] sm:$0xf]
        %v465 = vld [vmem:[%s385 + $0x10] sm:$0xf]
        %v466 = vld [vmem:[%s385 + $0x14] sm:$0xf]
        %v467 = vld [vmem:[%s385 + $0x18] sm:$0xf]
        %v468 = vld [vmem:[%s385 + $0x1c] sm:$0xf]
        %v469 = vld [vmem:[%s385 + $0x20] sm:$0xf]
        %v470 = vld [vmem:[%s385 + $0x24] sm:$0xf]
        %v471 = vld [vmem:[%s385 + $0x28] sm:$0xf]
        %v472 = vld [vmem:[%s385 + $0x2c] sm:$0xf]
        %v473 = vld [vmem:[%s385 + $0x30] sm:$0xf]
        %v474 = vld [vmem:[%s385 + $0x34] sm:$0xf]
        %v475 = vld [vmem:[%s385 + $0x38] sm:$0xf]
        %v476 = vld [vmem:[%s385 + $0x3c] sm:$0xf]
        %v477 = vld [vmem:[%s385 + $0x40] sm:$0xf]
        %v478 = vld [vmem:[%s385 + $0x44] sm:$0xf]
        %v479 = vld [vmem:[%s385 + $0x48] sm:$0xf]
        %v480 = vld [vmem:[%s385 + $0x4c] sm:$0xf]
        %v481 = vld [vmem:[%s385 + $0x50] sm:$0xf]
        %v482 = vld [vmem:[%s385 + $0x54] sm:$0xf]
        %v483 = vld [vmem:[%s385 + $0x58] sm:$0xf]
        %v484 = vld [vmem:[%s385 + $0x5c] sm:$0xf]
        %v485 = vld [vmem:[%s385 + $0x60] sm:$0xf]
        %v486 = vld [vmem:[%s385 + $0x64] sm:$0xf]
        %v487 = vld [vmem:[%s385 + $0x68] sm:$0xf]
        %v488 = vld [vmem:[%s385 + $0x6c] sm:$0xf]
        %v489 = vld [vmem:[%s385 + $0x70] sm:$0xf]
        %v490 = vld [vmem:[%s385 + $0x74] sm:$0xf]
        %v491 = vld [vmem:[%s385 + $0x78] sm:$0xf]
        %v492 = vld [vmem:[%s385 + $0x7c] sm:$0xf]
        %v509 = vunpack.c.l.b16 %v445
        %v510 = vunpack.c.h.b16 %v445
        %v511 = vunpack.c.l.b16 %v446
        %v512 = vunpack.c.h.b16 %v446
        %v513 = vunpack.c.l.b16 %v447
        %v514 = vunpack.c.h.b16 %v447
        %v515 = vunpack.c.l.b16 %v448
        %v516 = vunpack.c.h.b16 %v448
        %v517 = vunpack.c.l.b16 %v449
        %v518 = vunpack.c.h.b16 %v449
        %v519 = vunpack.c.l.b16 %v450
        %v520 = vunpack.c.h.b16 %v450
        %v521 = vunpack.c.l.b16 %v451
        %v522 = vunpack.c.h.b16 %v451
        %v523 = vunpack.c.l.b16 %v452
        %v524 = vunpack.c.h.b16 %v452
        %v525 = vunpack.c.l.b16 %v453
        %v526 = vunpack.c.h.b16 %v453
        %v527 = vunpack.c.l.b16 %v454
        %v528 = vunpack.c.h.b16 %v454
        %v529 = vunpack.c.l.b16 %v455
        %v530 = vunpack.c.h.b16 %v455
        %v531 = vunpack.c.l.b16 %v456
        %v532 = vunpack.c.h.b16 %v456
        %v533 = vunpack.c.l.b16 %v457
        %v534 = vunpack.c.h.b16 %v457
        %v535 = vunpack.c.l.b16 %v458
        %v536 = vunpack.c.h.b16 %v458
        %v537 = vunpack.c.l.b16 %v459
        %v538 = vunpack.c.h.b16 %v459
        %v539 = vunpack.c.l.b16 %v460
        %v540 = vunpack.c.h.b16 %v460
        %v541 = vpack.c.b16 %v511, %v509
        %v542 = vpack.c.b16 %v512, %v510
        %v543 = vpack.c.b16 %v515, %v513
        %v544 = vpack.c.b16 %v516, %v514
        %v545 = vpack.c.b16 %v519, %v517
        %v546 = vpack.c.b16 %v520, %v518
        %v547 = vpack.c.b16 %v523, %v521
        %v548 = vpack.c.b16 %v524, %v522
        %v549 = vpack.c.b16 %v527, %v525
        %v550 = vpack.c.b16 %v528, %v526
        %v551 = vpack.c.b16 %v531, %v529
        %v552 = vpack.c.b16 %v532, %v530
        %v553 = vpack.c.b16 %v535, %v533
        %v554 = vpack.c.b16 %v536, %v534
        %v555 = vpack.c.b16 %v539, %v537
        %v556 = vpack.c.b16 %v540, %v538
        %v605 = vunpack.c.l.b16 %v461
        %v606 = vunpack.c.l.b16 %v462
        %v607 = vunpack.c.l.b16 %v463
        %v608 = vunpack.c.l.b16 %v464
        %v609 = vunpack.c.l.b16 %v465
        %v610 = vunpack.c.l.b16 %v466
        %v611 = vunpack.c.l.b16 %v467
        %v612 = vunpack.c.l.b16 %v468
        %v613 = vunpack.c.l.b16 %v469
        %v614 = vunpack.c.l.b16 %v470
        %v615 = vunpack.c.l.b16 %v471
        %v616 = vunpack.c.l.b16 %v472
        %v617 = vunpack.c.l.b16 %v473
        %v618 = vunpack.c.l.b16 %v474
        %v619 = vunpack.c.l.b16 %v475
        %v620 = vunpack.c.l.b16 %v476
        %v621 = vunpack.c.l.b16 %v477
        %v622 = vunpack.c.l.b16 %v478
        %v623 = vunpack.c.l.b16 %v479
        %v624 = vunpack.c.l.b16 %v480
        %v625 = vunpack.c.l.b16 %v481
        %v626 = vunpack.c.l.b16 %v482
        %v627 = vunpack.c.l.b16 %v483
        %v628 = vunpack.c.l.b16 %v484
        %v629 = vunpack.c.l.b16 %v485
        %v630 = vunpack.c.l.b16 %v486
        %v631 = vunpack.c.l.b16 %v487
        %v632 = vunpack.c.l.b16 %v488
        %v633 = vunpack.c.l.b16 %v489
        %v634 = vunpack.c.l.b16 %v490
        %v635 = vunpack.c.l.b16 %v491
        %v636 = vunpack.c.l.b16 %v492
        %v637 = vpack.c.b16 %v606, %v605
        %v638 = vpack.c.b16 %v608, %v607
        %v639 = vpack.c.b16 %v610, %v609
        %v640 = vpack.c.b16 %v612, %v611
        %v641 = vpack.c.b16 %v614, %v613
        %v642 = vpack.c.b16 %v616, %v615
        %v643 = vpack.c.b16 %v618, %v617
        %v644 = vpack.c.b16 %v620, %v619
        %v645 = vpack.c.b16 %v622, %v621
        %v646 = vpack.c.b16 %v624, %v623
        %v647 = vpack.c.b16 %v626, %v625
        %v648 = vpack.c.b16 %v628, %v627
        %v649 = vpack.c.b16 %v630, %v629
        %v650 = vpack.c.b16 %v632, %v631
        %v651 = vpack.c.b16 %v634, %v633
        %v652 = vpack.c.b16 %v636, %v635
        %669 = vmatprep.subr.bf16.mxu0 0
        %670 = vmatpush1.bf16.msra.mxu0 %v637
        %671 = vmatprep.subr.bf16.mxu0 0
        %672 = vmatpush1.bf16.msra.mxu0 %v638
        %673 = vmatprep.subr.bf16.mxu0 0
        %674 = vmatpush1.bf16.msra.mxu0 %v639
        %675 = vmatprep.subr.bf16.mxu0 0
        %676 = vmatpush1.bf16.msra.mxu0 %v640
        %677 = vmatprep.subr.bf16.mxu0 0
        %678 = vmatpush1.bf16.msra.mxu0 %v641
        %679 = vmatprep.subr.bf16.mxu0 0
        %680 = vmatpush1.bf16.msra.mxu0 %v642
        %681 = vmatprep.subr.bf16.mxu0 0
        %682 = vmatpush1.bf16.msra.mxu0 %v643
        %683 = vmatprep.subr.bf16.mxu0 0
        %684 = vmatpush1.bf16.msra.mxu0 %v644
        %685 = vmatprep.subr.bf16.mxu0 0
        %686 = vmatpush1.bf16.msra.mxu0 %v645
        %687 = vmatprep.subr.bf16.mxu0 0
        %688 = vmatpush1.bf16.msra.mxu0 %v646
        %689 = vmatprep.subr.bf16.mxu0 0
        %690 = vmatpush1.bf16.msra.mxu0 %v647
        %691 = vmatprep.subr.bf16.mxu0 0
        %692 = vmatpush1.bf16.msra.mxu0 %v648
        %693 = vmatprep.subr.bf16.mxu0 0
        %694 = vmatpush1.bf16.msra.mxu0 %v649
        %695 = vmatprep.subr.bf16.mxu0 0
        %696 = vmatpush1.bf16.msra.mxu0 %v650
        %697 = vmatprep.subr.bf16.mxu0 0
        %698 = vmatpush1.bf16.msra.mxu0 %v651
        %699 = vmatprep.subr.bf16.mxu0 0
        %700 = vmatpush1.bf16.msra.mxu0 %v652
        %701 = vmatprep.mubr.bf16.mxu0 %v542
        %702 = vmatmul.mubr.bf16.gmra.mrb[0].mxu0 %v541
        %v703 = vpop.f32.mrb[0].mxu0
        %v704 = vadd.f32 0.0, %v703
        %v705 = vpop.f32.mrb[0].mxu0
        %v706 = vpop.f32.mrb[0].mxu0
        %v707 = vadd.f32 0.0, %v706
        %v708 = vpop.f32.mrb[0].mxu0
        %709 = vmatprep.mubr.bf16.mxu0 %v544
        %710 = vmatmul.mubr.bf16.gmra.mrb[0].mxu0 %v543
        %v711 = vpop.f32.mrb[0].mxu0
        %v712 = vadd.f32 0.0, %v711
        %v713 = vpop.f32.mrb[0].mxu0
        %v714 = vpop.f32.mrb[0].mxu0
        %v715 = vadd.f32 0.0, %v714
        %v716 = vpop.f32.mrb[0].mxu0
        %717 = vmatprep.mubr.bf16.mxu0 %v546
        %718 = vmatmul.mubr.bf16.gmra.mrb[0].mxu0 %v545
        %v719 = vpop.f32.mrb[0].mxu0
        %v720 = vadd.f32 0.0, %v719
        %v721 = vpop.f32.mrb[0].mxu0
        %v722 = vpop.f32.mrb[0].mxu0
        %v723 = vadd.f32 0.0, %v722
        %v724 = vpop.f32.mrb[0].mxu0
        %725 = vmatprep.mubr.bf16.mxu0 %v548
        %726 = vmatmul.mubr.bf16.gmra.mrb[0].mxu0 %v547
        %v727 = vpop.f32.mrb[0].mxu0
        %v728 = vadd.f32 0.0, %v727
        %v729 = vpop.f32.mrb[0].mxu0
        %v730 = vpop.f32.mrb[0].mxu0
        %v731 = vadd.f32 0.0, %v730
        %v732 = vpop.f32.mrb[0].mxu0
        %733 = vmatprep.mubr.bf16.mxu0 %v550
        %734 = vmatmul.mubr.bf16.gmra.mrb[0].mxu0 %v549
        %v735 = vpop.f32.mrb[0].mxu0
        %v736 = vadd.f32 0.0, %v735
        %v737 = vpop.f32.mrb[0].mxu0
        %v738 = vpop.f32.mrb[0].mxu0
        %v739 = vadd.f32 0.0, %v738
        %v740 = vpop.f32.mrb[0].mxu0
        %741 = vmatprep.mubr.bf16.mxu0 %v552
        %742 = vmatmul.mubr.bf16.gmra.mrb[0].mxu0 %v551
        %v743 = vpop.f32.mrb[0].mxu0
        %v744 = vadd.f32 0.0, %v743
        %v745 = vpop.f32.mrb[0].mxu0
        %v746 = vpop.f32.mrb[0].mxu0
        %v747 = vadd.f32 0.0, %v746
        %v748 = vpop.f32.mrb[0].mxu0
        %749 = vmatprep.mubr.bf16.mxu0 %v554
        %750 = vmatmul.mubr.bf16.gmra.mrb[0].mxu0 %v553
        %v751 = vpop.f32.mrb[0].mxu0
        %v752 = vadd.f32 0.0, %v751
        %v753 = vpop.f32.mrb[0].mxu0
        %v754 = vpop.f32.mrb[0].mxu0
        %v755 = vadd.f32 0.0, %v754
        %v756 = vpop.f32.mrb[0].mxu0
        %757 = vmatprep.mubr.bf16.mxu0 %v556
        %758 = vmatmul.mubr.bf16.gmra.mrb[0].mxu0 %v555
        %v759 = vpop.f32.mrb[0].mxu0
        %v760 = vadd.f32 0.0, %v759
        %v761 = vpop.f32.mrb[0].mxu0
        %v762 = vpop.f32.mrb[0].mxu0
        %v763 = vadd.f32 0.0, %v762
        %v764 = vpop.f32.mrb[0].mxu0
        %765 = vdwg.mxu0
        %v766 = vadd.f32 %v429, %v704
        %v767 = vadd.f32 %v430, %v707
        %v768 = vadd.f32 %v431, %v712
        %v769 = vadd.f32 %v432, %v715
        %v770 = vadd.f32 %v433, %v720
        %v771 = vadd.f32 %v434, %v723
        %v772 = vadd.f32 %v435, %v728
        %v773 = vadd.f32 %v436, %v731
        %v774 = vadd.f32 %v437, %v736
        %v775 = vadd.f32 %v438, %v739
        %v776 = vadd.f32 %v439, %v744
        %v777 = vadd.f32 %v440, %v747
        %v778 = vadd.f32 %v441, %v752
        %v779 = vadd.f32 %v442, %v755
        %v780 = vadd.f32 %v443, %v760
        %v781 = vadd.f32 %v444, %v763
        %782 = vst [vmem:[#allocation2] sm:$0xff] %v766
        %783 = vst [vmem:[#allocation2 + $0x8] sm:$0xff] %v767
        %784 = vst [vmem:[#allocation2 + $0x10] sm:$0xff] %v768
        %785 = vst [vmem:[#allocation2 + $0x18] sm:$0xff] %v769
        %786 = vst [vmem:[#allocation2 + $0x20] sm:$0xff] %v770
        %787 = vst [vmem:[#allocation2 + $0x28] sm:$0xff] %v771
        %788 = vst [vmem:[#allocation2 + $0x30] sm:$0xff] %v772
        %789 = vst [vmem:[#allocation2 + $0x38] sm:$0xff] %v773
        %790 = vst [vmem:[#allocation2 + $0x40] sm:$0xff] %v774
        %791 = vst [vmem:[#allocation2 + $0x48] sm:$0xff] %v775
        %792 = vst [vmem:[#allocation2 + $0x50] sm:$0xff] %v776
        %793 = vst [vmem:[#allocation2 + $0x58] sm:$0xff] %v777
        %794 = vst [vmem:[#allocation2 + $0x60] sm:$0xff] %v778
        %795 = vst [vmem:[#allocation2 + $0x68] sm:$0xff] %v779
        %796 = vst [vmem:[#allocation2 + $0x70] sm:$0xff] %v780
        %797 = vst [vmem:[#allocation2 + $0x78] sm:$0xff] %v781
        %p798 = scmp.eq.s32.totalorder %s22, 1
        // Predicated region
        $region79: #{vision_encoder_forward.15} parent=69 // pred_check
          %p799 = pneg %p798
        $region80: #{vision_encoder_forward.15} parent=69 // pred_check_branch
          %801 = sbr.rel (%p799) target = $region82
        $region81: #{vision_encoder_forward.15} parent=69 // pred_region
          %v802 = vld [vmem:[#allocation2] sm:$0xff]
          %v803 = vld [vmem:[#allocation2 + $0x8] sm:$0xff]
          %v804 = vld [vmem:[#allocation2 + $0x10] sm:$0xff]
          %v805 = vld [vmem:[#allocation2 + $0x18] sm:$0xff]
          %v806 = vld [vmem:[#allocation2 + $0x20] sm:$0xff]
          %v807 = vld [vmem:[#allocation2 + $0x28] sm:$0xff]
          %v808 = vld [vmem:[#allocation2 + $0x30] sm:$0xff]
          %v809 = vld [vmem:[#allocation2 + $0x38] sm:$0xff]
          %v810 = vld [vmem:[#allocation2 + $0x40] sm:$0xff]
          %v811 = vld [vmem:[#allocation2 + $0x48] sm:$0xff]
          %v812 = vld [vmem:[#allocation2 + $0x50] sm:$0xff]
          %v813 = vld [vmem:[#allocation2 + $0x58] sm:$0xff]
          %v814 = vld [vmem:[#allocation2 + $0x60] sm:$0xff]
          %v815 = vld [vmem:[#allocation2 + $0x68] sm:$0xff]
          %v816 = vld [vmem:[#allocation2 + $0x70] sm:$0xff]
          %v817 = vld [vmem:[#allocation2 + $0x78] sm:$0xff]
          %v818 = vld [vmem:[%s389] sm:$0x1]
          %v820 = vlaneseq
          %v821 = vshrl.u32 %v820, 7
          %v822 = vsub.s32 0, %v821
          %v823 = vrot.slane %v818, %v822
          %v825 = vadd.f32 %v802, %v823
          %v826 = vadd.f32 %v803, %v823
          %v827 = vadd.f32 %v804, %v823
          %v828 = vadd.f32 %v805, %v823
          %v829 = vadd.f32 %v806, %v823
          %v830 = vadd.f32 %v807, %v823
          %v831 = vadd.f32 %v808, %v823
          %v832 = vadd.f32 %v809, %v823
          %v833 = vadd.f32 %v810, %v823
          %v834 = vadd.f32 %v811, %v823
          %v835 = vadd.f32 %v812, %v823
          %v836 = vadd.f32 %v813, %v823
          %v837 = vadd.f32 %v814, %v823
          %v838 = vadd.f32 %v815, %v823
          %v839 = vadd.f32 %v816, %v823
          %v840 = vadd.f32 %v817, %v823
          %v841 = vld [vmem:[%s397] sm:$0xff]
          %v842 = vld [vmem:[%s397 + $0x8] sm:$0xff]
          %v843 = vld [vmem:[%s397 + $0x10] sm:$0xff]
          %v844 = vld [vmem:[%s397 + $0x18] sm:$0xff]
          %v845 = vld [vmem:[%s397 + $0x20] sm:$0xff]
          %v846 = vld [vmem:[%s397 + $0x28] sm:$0xff]
          %v847 = vld [vmem:[%s397 + $0x30] sm:$0xff]
          %v848 = vld [vmem:[%s397 + $0x38] sm:$0xff]
          %v849 = vld [vmem:[%s397 + $0x40] sm:$0xff]
          %v850 = vld [vmem:[%s397 + $0x48] sm:$0xff]
          %v851 = vld [vmem:[%s397 + $0x50] sm:$0xff]
          %v852 = vld [vmem:[%s397 + $0x58] sm:$0xff]
          %v853 = vld [vmem:[%s397 + $0x60] sm:$0xff]
          %v854 = vld [vmem:[%s397 + $0x68] sm:$0xff]
          %v855 = vld [vmem:[%s397 + $0x70] sm:$0xff]
          %v856 = vld [vmem:[%s397 + $0x78] sm:$0xff]
          %v857 = vadd.f32 %v825, %v841
          %v858 = vadd.f32 %v826, %v842
          %v859 = vadd.f32 %v827, %v843
          %v860 = vadd.f32 %v828, %v844
          %v861 = vadd.f32 %v829, %v845
          %v862 = vadd.f32 %v830, %v846
          %v863 = vadd.f32 %v831, %v847
          %v864 = vadd.f32 %v832, %v848
          %v865 = vadd.f32 %v833, %v849
          %v866 = vadd.f32 %v834, %v850
          %v867 = vadd.f32 %v835, %v851
          %v868 = vadd.f32 %v836, %v852
          %v869 = vadd.f32 %v837, %v853
          %v870 = vadd.f32 %v838, %v854
          %v871 = vadd.f32 %v839, %v855
          %v872 = vadd.f32 %v840, %v856
          %873 = vst [vmem:[%s406] sm:$0xff] %v857
          %874 = vst [vmem:[%s406 + $0x8] sm:$0xff] %v858
          %875 = vst [vmem:[%s406 + $0x10] sm:$0xff] %v859
          %876 = vst [vmem:[%s406 + $0x18] sm:$0xff] %v860
          %877 = vst [vmem:[%s406 + $0x20] sm:$0xff] %v861
          %878 = vst [vmem:[%s406 + $0x28] sm:$0xff] %v862
          %879 = vst [vmem:[%s406 + $0x30] sm:$0xff] %v863
          %880 = vst [vmem:[%s406 + $0x38] sm:$0xff] %v864
          %881 = vst [vmem:[%s406 + $0x40] sm:$0xff] %v865
          %882 = vst [vmem:[%s406 + $0x48] sm:$0xff] %v866
          %883 = vst [vmem:[%s406 + $0x50] sm:$0xff] %v867
          %884 = vst [vmem:[%s406 + $0x58] sm:$0xff] %v868
          %885 = vst [vmem:[%s406 + $0x60] sm:$0xff] %v869
          %886 = vst [vmem:[%s406 + $0x68] sm:$0xff] %v870
          %887 = vst [vmem:[%s406 + $0x70] sm:$0xff] %v871
          %888 = vst [vmem:[%s406 + $0x78] sm:$0xff] %v872
        $region82: #{vision_encoder_forward.15} parent=69 // pred_fallthru
          _
        %s889 = smul.u32 16, %s20
        %p890 = scmp.lt.s32.totalorder %s889, 63
        %s891 = scalar_select %p890, %s889, 63
        %p892 = scmp.lt.s32.totalorder %s21, 0
        %s893 = scalar_select %p892, %s21, 0
        %s894 = sadd.s32 %s893, %s891
        %s895 = smul.addr %s894, 8
        %s896 = scalar_lea.vmem %s4, %s895
        // Predicated region
        $region83: #{vision_encoder_forward.15} parent=69 // pred_check
          %p897 = pneg %p164
        $region84: #{vision_encoder_forward.15} parent=69 // pred_check_branch
          %899 = sbr.rel (%p897) target = $region86
        $region85: #{vision_encoder_forward.15} parent=69 // pred_region
          %s900 = smul.u32 16, %s20
        $region86: #{vision_encoder_forward.15} parent=69 // pred_fallthru
          _
      $region70: #{vision_encoder_forward.15} parent=5 // pred_fallthru
        _
      %p901 = scmp.le.s32.totalorder 2, %s10
      // Predicated region
      $region87: #{vision_encoder_forward.15} parent=5 // pred_check
        %p902 = pneg %p901
      $region88: #{vision_encoder_forward.15} parent=5 // pred_check_branch
        %904 = sbr.rel (%p902) target = $region90
      $region89: #{vision_encoder_forward.15} parent=5 // pred_region
        %s905 = ssub.s32 %s10, 2
        // Predicated region
        $region91: #{vision_encoder_forward.15} parent=89 // pred_check
          %p906 = pneg %p170
        $region92: #{vision_encoder_forward.15} parent=89 // pred_check_branch
          %908 = sbr.rel (%p906) target = $region94
        $region93: #{vision_encoder_forward.15} parent=89 // pred_region
          %s909 = smul.u32 16, %s23
          %p910 = scmp.lt.s32.totalorder %s909, 63
          %s911 = scalar_select %p910, %s909, 63
          %p912 = scmp.lt.s32.totalorder %s24, 0
          %s913 = scalar_select %p912, %s24, 0
          %s914 = sadd.s32 %s913, %s911
          %s915 = smul.addr %s914, 8
          %s916 = scalar_lea.vmem %s4, %s915
        $region94: #{vision_encoder_forward.15} parent=89 // pred_fallthru
          _
      $region90: #{vision_encoder_forward.15} parent=5 // pred_fallthru
        _
    $region6: #{vision_encoder_forward.15} parent=1 // loop_footer
      %s14 = sadd.s32 1, %s10
    $region7: #{vision_encoder_forward.15} parent=1 // loop_footer_branch
      %9 = sbr.rel target = $region3
    $region8: #{vision_encoder_forward.15} parent=1 // loop_exit
      _

// kernel: vision_encoder_forward.16
$region0: #{vision_encoder_forward.16}
  #allocation0 [shape = 'u32[]', space=smem, size = 0x4, offset = 0x4, fixed_abs, tag = 'smem constant byte address 0x4 - core index']
  #allocation1 [shape = 'u32[144,128]{1,0:T(1,128)}', space=vmem, size = 0x12000, scoped, tag = 'internal scratch']
  %s0 = inlined_call_operand.vmem [shape: f32[512,128], index: 0, kind: input, shape index: {}]
  %s1 = inlined_call_operand.vmem [shape: f32[1,128], index: 1, kind: input, shape index: {}]
  %s2 = inlined_call_operand.vmem [shape: f32[1,128], index: 2, kind: input, shape index: {}]
  %s3 = inlined_call_operand.vmem [shape: bf16[128,768], index: 3, kind: input, shape index: {}]
  %s4 = inlined_call_operand.vmem [shape: f32[1,768], index: 4, kind: input, shape index: {}]
  %s5 = inlined_call_operand.vmem [shape: bf16[512,768], index: 5, kind: output, shape index: {}]
  %s6 = sld [smem:[#allocation0]]
  $region125: #{vision_encoder_forward.16} parent=0
    _
  %s8 = ssub.s32 1, %s6
  %s9 = scalar_select 0, %s8, %s6
  $region1: #{vision_encoder_forward.16} parent=0
    #allocation2 [shape = 'u8[131072]{0}', space=vmem, size = 0x20000, scoped, tag = 'input window, operand 3']
    #allocation3 [shape = 'u8[131072]{0}', space=vmem, size = 0x20000, scoped, tag = 'output window, operand 0']
    loop: start=0, step=1, limit=14
    $region2: #{vision_encoder_forward.16} parent=1 // loop_pre_header
      _
    $region3: #{vision_encoder_forward.16} parent=1 // loop_header
      %s11 = sphi 0, %s15
      %p12 = scmp.ge.s32.totalorder %s11, 14
      %s18 = sphi 0, %s30
      %s19 = sphi 0, %s26
      %s20 = sphi 0, %s18
      %s21 = sphi 0, %s19
      %s22 = sphi 0, %s20
      %s23 = sphi 0, %s21
      %s33 = sphi 0, %s35
      %s36 = sphi 0, %s33
      %s37 = sphi 0, %s36
      %s53 = sphi 0, %s37
      %s57 = sphi 0, %s57
      %s59 = sphi 0, %s57
      %s60 = sphi 0, %s59
      %s74 = sphi 0, %s60
      %s78 = sphi 0, %s78
      %s80 = sphi 0, %s78
      %s81 = sphi 0, %s80
      %s95 = sphi 0, %s81
      %s101 = sphi 0, %s103
      %s104 = sphi 0, %s101
      %s105 = sphi 0, %s104
      %s121 = sphi 0, %s105
      %s127 = sphi 0, %s129
      %s130 = sphi 0, %s127
      %s131 = sphi 0, %s130
      %s147 = sphi 0, %s131
      %s155 = sphi 0, %s157
      %s158 = sphi 0, %s155
      %s159 = sphi 0, %s158
      %s175 = sphi 0, %s159
    $region4: #{vision_encoder_forward.16} parent=1 // loop_header_branch
      %14 = sbr.rel (%p12) target = $region8
    $region5: #{vision_encoder_forward.16} parent=1 // loop_body
      %s16 = ssub.s32 %s11, 1
      %s17 = ssub.s32 %s11, 2
      %s24 = sadd.s32 1, %s19
      %p25 = scmp.ge.s32.totalorder %s24, 3
      %s26 = scalar_select %p25, 0, %s24
      %s27 = sadd.s32 1, %s18
      %s28 = scalar_select %p25, %s27, %s18
      %p29 = scmp.ge.s32.totalorder %s28, 4
      %s30 = scalar_select %p29, 0, %s28
      %s31 = ssub.s32 %s18, %s30
      %p32 = scmp.eq.s32.totalorder %s31, 0
      %s34 = sadd.s32 %s33, 1
      %s35 = scalar_select %p32, %s33, %s34
      %p38 = pneg %p32
      %p39 = scmp.eq.s32.totalorder %s11, 11
      %p40 = por %p38, %p39
      %p41 = scmp.ne.s32.totalorder %s33, %s36
      %p42 = scmp.eq.s32.totalorder %s11, 0
      %p43 = por %p41, %p42
      %p44 = scmp.ne.s32.totalorder %s33, %s36
      %p45 = scmp.eq.s32.totalorder %s16, 11
      %p46 = por %p44, %p45
      %p47 = scmp.ne.s32.totalorder %s36, %s37
      %p48 = scmp.eq.s32.totalorder %s16, 0
      %p49 = por %p47, %p48
      %p50 = scmp.ne.s32.totalorder %s36, %s37
      %p51 = scmp.eq.s32.totalorder %s17, 11
      %p52 = por %p50, %p51
      %p54 = scmp.ne.s32.totalorder %s37, %s53
      %p55 = scmp.eq.s32.totalorder %s17, 0
      %p56 = por %p54, %p55
      %s58 = sadd.s32 %s57, 1
      %p61 = scmp.eq.s32.totalorder %s11, 11
      %p62 = scmp.ne.s32.totalorder %s57, %s59
      %p63 = scmp.eq.s32.totalorder %s11, 0
      %p64 = por %p62, %p63
      %p65 = scmp.ne.s32.totalorder %s57, %s59
      %p66 = scmp.eq.s32.totalorder %s16, 11
      %p67 = por %p65, %p66
      %p68 = scmp.ne.s32.totalorder %s59, %s60
      %p69 = scmp.eq.s32.totalorder %s16, 0
      %p70 = por %p68, %p69
      %p71 = scmp.ne.s32.totalorder %s59, %s60
      %p72 = scmp.eq.s32.totalorder %s17, 11
      %p73 = por %p71, %p72
      %p75 = scmp.ne.s32.totalorder %s60, %s74
      %p76 = scmp.eq.s32.totalorder %s17, 0
      %p77 = por %p75, %p76
      %s79 = sadd.s32 %s78, 1
      %p82 = scmp.eq.s32.totalorder %s11, 11
      %p83 = scmp.ne.s32.totalorder %s78, %s80
      %p84 = scmp.eq.s32.totalorder %s11, 0
      %p85 = por %p83, %p84
      %p86 = scmp.ne.s32.totalorder %s78, %s80
      %p87 = scmp.eq.s32.totalorder %s16, 11
      %p88 = por %p86, %p87
      %p89 = scmp.ne.s32.totalorder %s80, %s81
      %p90 = scmp.eq.s32.totalorder %s16, 0
      %p91 = por %p89, %p90
      %p92 = scmp.ne.s32.totalorder %s80, %s81
      %p93 = scmp.eq.s32.totalorder %s17, 11
      %p94 = por %p92, %p93
      %p96 = scmp.ne.s32.totalorder %s81, %s95
      %p97 = scmp.eq.s32.totalorder %s17, 0
      %p98 = por %p96, %p97
      %s99 = ssub.s32 %s19, %s26
      %p100 = scmp.eq.s32.totalorder %s99, 0
      %s102 = sadd.s32 %s101, 1
      %s103 = scalar_select %p100, %s101, %s102
      %p106 = pneg %p100
      %p107 = scmp.eq.s32.totalorder %s11, 11
      %p108 = por %p106, %p107
      %p109 = scmp.ne.s32.totalorder %s101, %s104
      %p110 = scmp.eq.s32.totalorder %s11, 0
      %p111 = por %p109, %p110
      %p112 = scmp.ne.s32.totalorder %s101, %s104
      %p113 = scmp.eq.s32.totalorder %s16, 11
      %p114 = por %p112, %p113
      %p115 = scmp.ne.s32.totalorder %s104, %s105
      %p116 = scmp.eq.s32.totalorder %s16, 0
      %p117 = por %p115, %p116
      %p118 = scmp.ne.s32.totalorder %s104, %s105
      %p119 = scmp.eq.s32.totalorder %s17, 11
      %p120 = por %p118, %p119
      %p122 = scmp.ne.s32.totalorder %s105, %s121
      %p123 = scmp.eq.s32.totalorder %s17, 0
      %p124 = por %p122, %p123
      %s125 = ssub.s32 %s19, %s26
      %p126 = scmp.eq.s32.totalorder %s125, 0
      %s128 = sadd.s32 %s127, 1
      %s129 = scalar_select %p126, %s127, %s128
      %p132 = pneg %p126
      %p133 = scmp.eq.s32.totalorder %s11, 11
      %p134 = por %p132, %p133
      %p135 = scmp.ne.s32.totalorder %s127, %s130
      %p136 = scmp.eq.s32.totalorder %s11, 0
      %p137 = por %p135, %p136
      %p138 = scmp.ne.s32.totalorder %s127, %s130
      %p139 = scmp.eq.s32.totalorder %s16, 11
      %p140 = por %p138, %p139
      %p141 = scmp.ne.s32.totalorder %s130, %s131
      %p142 = scmp.eq.s32.totalorder %s16, 0
      %p143 = por %p141, %p142
      %p144 = scmp.ne.s32.totalorder %s130, %s131
      %p145 = scmp.eq.s32.totalorder %s17, 11
      %p146 = por %p144, %p145
      %p148 = scmp.ne.s32.totalorder %s131, %s147
      %p149 = scmp.eq.s32.totalorder %s17, 0
      %p150 = por %p148, %p149
      %s151 = ssub.s32 %s18, %s30
      %s152 = ssub.s32 %s19, %s26
      %s153 = sor.u32 %s151, %s152
      %p154 = scmp.eq.s32.totalorder %s153, 0
      %s156 = sadd.s32 %s155, 1
      %s157 = scalar_select %p154, %s155, %s156
      %p160 = pneg %p154
      %p161 = scmp.eq.s32.totalorder %s11, 11
      %p162 = por %p160, %p161
      %p163 = scmp.ne.s32.totalorder %s155, %s158
      %p164 = scmp.eq.s32.totalorder %s11, 0
      %p165 = por %p163, %p164
      %p166 = scmp.ne.s32.totalorder %s155, %s158
      %p167 = scmp.eq.s32.totalorder %s16, 11
      %p168 = por %p166, %p167
      %p169 = scmp.ne.s32.totalorder %s158, %s159
      %p170 = scmp.eq.s32.totalorder %s16, 0
      %p171 = por %p169, %p170
      %p172 = scmp.ne.s32.totalorder %s158, %s159
      %p173 = scmp.eq.s32.totalorder %s17, 11
      %p174 = por %p172, %p173
      %p176 = scmp.ne.s32.totalorder %s159, %s175
      %p177 = scmp.eq.s32.totalorder %s17, 0
      %p178 = por %p176, %p177
      %p179 = scmp.le.s32.totalorder 1, %s11
      %p180 = scmp.lt.s32.totalorder %s11, 13
      %p181 = pnand %p179, %p180
      %p182 = pneg %p181
      // Predicated region
      $region9: #{vision_encoder_forward.16} parent=5 // pred_check
        _
      $region10: #{vision_encoder_forward.16} parent=5 // pred_check_branch
        %184 = sbr.rel (%p181) target = $region12
      $region11: #{vision_encoder_forward.16} parent=5 // pred_region
        %s185 = ssub.s32 %s11, 1
        // Predicated region
        $region13: #{vision_encoder_forward.16} parent=11 // pred_check
          %p186 = pneg %p70
        $region14: #{vision_encoder_forward.16} parent=11 // pred_check_branch
          %188 = sbr.rel (%p186) target = $region16
        $region15: #{vision_encoder_forward.16} parent=11 // pred_region
          _
        $region16: #{vision_encoder_forward.16} parent=11 // pred_fallthru
          _
        // Predicated region
        $region17: #{vision_encoder_forward.16} parent=11 // pred_check
          %p189 = pneg %p91
        $region18: #{vision_encoder_forward.16} parent=11 // pred_check_branch
          %191 = sbr.rel (%p189) target = $region20
        $region19: #{vision_encoder_forward.16} parent=11 // pred_region
          _
        $region20: #{vision_encoder_forward.16} parent=11 // pred_fallthru
          _
      $region12: #{vision_encoder_forward.16} parent=5 // pred_fallthru
        _
      %p192 = scmp.lt.s32.totalorder %s11, 12
      // Predicated region
      $region21: #{vision_encoder_forward.16} parent=5 // pred_check
        %p193 = pneg %p192
      $region22: #{vision_encoder_forward.16} parent=5 // pred_check_branch
        %195 = sbr.rel (%p193) target = $region24
      $region23: #{vision_encoder_forward.16} parent=5 // pred_region
        // Predicated region
        $region25: #{vision_encoder_forward.16} parent=23 // pred_check
          %p196 = pneg %p43
        $region26: #{vision_encoder_forward.16} parent=23 // pred_check_branch
          %198 = sbr.rel (%p196) target = $region28
        $region27: #{vision_encoder_forward.16} parent=23 // pred_region
          %s199 = smul.u32 16, %s18
          %p200 = scmp.lt.s32.totalorder %s199, 63
          %s201 = scalar_select %p200, %s199, 63
          %s202 = smul.addr %s201, 8
          %s203 = scalar_lea.vmem %s0, %s202
          %s204 = smul.u32 16, %s18
        $region28: #{vision_encoder_forward.16} parent=23 // pred_fallthru
          _
        // Predicated region
        $region29: #{vision_encoder_forward.16} parent=23 // pred_check
          %p205 = pneg %p111
        $region30: #{vision_encoder_forward.16} parent=23 // pred_check_branch
          %207 = sbr.rel (%p205) target = $region32
        $region31: #{vision_encoder_forward.16} parent=23 // pred_region
          %s208 = sand.u32 %s101, 1
          %s209 = sand.u32 %s101, 1
          %s210 = smul.addr %s209, 128
          %s211 = scalar_lea.vmem [#allocation2], %s210
          %s212 = smul.u32 2, %s19
          %s213 = smul.addr %s212, 4
          %s214 = scalar_lea.vmem %s3, %s213
          // Predicated region
          $region33: #{vision_encoder_forward.16} parent=31 // pred_check
            _
          $region34: #{vision_encoder_forward.16} parent=31 // pred_check_branch
            %216 = sbr.rel (0) target = $region36
          $region35: #{vision_encoder_forward.16} parent=31 // pred_region
            // Predicated region
            $region37: #{vision_encoder_forward.16} parent=35 // pred_check
              _
            $region38: #{vision_encoder_forward.16} parent=35 // pred_check_branch
              %218 = sbr.rel (0) target = $region40
            $region39: #{vision_encoder_forward.16} parent=35 // pred_region
              // Predicated region
              $region52: #{vision_encoder_forward.16} parent=39 // pred_check
                _
              $region53: #{vision_encoder_forward.16} parent=39 // pred_check_branch
                %263 = sbr.rel (0) target = $region55
              $region54: #{vision_encoder_forward.16} parent=39 // pred_region
                loop: start=0, step=1, limit=1
                $region56: #{vision_encoder_forward.16} parent=54 // loop_pre_header
                  _
                $region57: #{vision_encoder_forward.16} parent=54 // loop_header
                  %s265 = sphi 0, %s269
                  %p266 = scmp.ge.s32.totalorder %s265, 1
                  %s270 = sphi %s214, %s214
                  %s271 = sphi %s211, %s211
                $region58: #{vision_encoder_forward.16} parent=54 // loop_header_branch
                  %268 = sbr.rel (%p266) target = $region62
                $region59: #{vision_encoder_forward.16} parent=54 // loop_body
                  %v272 = vld [vmem:[%s270] sm:$0xff]
                  %273 = vst [vmem:[%s271] sm:$0xff] %v272
                  %v274 = vld [vmem:[%s270 + $0x18] sm:$0xff]
                  %275 = vst [vmem:[%s271 + $0x8] sm:$0xff] %v274
                  %v276 = vld [vmem:[%s270 + $0x30] sm:$0xff]
                  %277 = vst [vmem:[%s271 + $0x10] sm:$0xff] %v276
                  %v278 = vld [vmem:[%s270 + $0x48] sm:$0xff]
                  %279 = vst [vmem:[%s271 + $0x18] sm:$0xff] %v278
                  %v280 = vld [vmem:[%s270 + $0x60] sm:$0xff]
                  %281 = vst [vmem:[%s271 + $0x20] sm:$0xff] %v280
                  %v282 = vld [vmem:[%s270 + $0x78] sm:$0xff]
                  %283 = vst [vmem:[%s271 + $0x28] sm:$0xff] %v282
                  %v284 = vld [vmem:[%s270 + $0x90] sm:$0xff]
                  %285 = vst [vmem:[%s271 + $0x30] sm:$0xff] %v284
                  %v286 = vld [vmem:[%s270 + $0xa8] sm:$0xff]
                  %287 = vst [vmem:[%s271 + $0x38] sm:$0xff] %v286
                  %v288 = vld [vmem:[%s270 + $0xc0] sm:$0xff]
                  %289 = vst [vmem:[%s271 + $0x40] sm:$0xff] %v288
                  %v290 = vld [vmem:[%s270 + $0xd8] sm:$0xff]
                  %291 = vst [vmem:[%s271 + $0x48] sm:$0xff] %v290
                  %v292 = vld [vmem:[%s270 + $0xf0] sm:$0xff]
                  %293 = vst [vmem:[%s271 + $0x50] sm:$0xff] %v292
                  %v294 = vld [vmem:[%s270 + $0x108] sm:$0xff]
                  %295 = vst [vmem:[%s271 + $0x58] sm:$0xff] %v294
                  %v296 = vld [vmem:[%s270 + $0x120] sm:$0xff]
                  %297 = vst [vmem:[%s271 + $0x60] sm:$0xff] %v296
                  %v298 = vld [vmem:[%s270 + $0x138] sm:$0xff]
                  %299 = vst [vmem:[%s271 + $0x68] sm:$0xff] %v298
                  %v300 = vld [vmem:[%s270 + $0x150] sm:$0xff]
                  %301 = vst [vmem:[%s271 + $0x70] sm:$0xff] %v300
                  %v302 = vld [vmem:[%s270 + $0x168] sm:$0xff]
                  %303 = vst [vmem:[%s271 + $0x78] sm:$0xff] %v302
                $region60: #{vision_encoder_forward.16} parent=54 // loop_footer
                  %s269 = sadd.s32 1, %s265
                $region61: #{vision_encoder_forward.16} parent=54 // loop_footer_branch
                  %264 = sbr.rel target = $region57
                $region62: #{vision_encoder_forward.16} parent=54 // loop_exit
                  _
              $region55: #{vision_encoder_forward.16} parent=39 // pred_fallthru
                _
              // Predicated region
              $region63: #{vision_encoder_forward.16} parent=39 // pred_check
                _
              $region64: #{vision_encoder_forward.16} parent=39 // pred_check_branch
                %305 = sbr.rel target = $region66
              $region65: #{vision_encoder_forward.16} parent=39 // pred_region
                _
              $region66: #{vision_encoder_forward.16} parent=39 // pred_fallthru
                _
            $region40: #{vision_encoder_forward.16} parent=35 // pred_fallthru
              _
            // Predicated region
            $region41: #{vision_encoder_forward.16} parent=35 // pred_check
              _
            $region42: #{vision_encoder_forward.16} parent=35 // pred_check_branch
              %220 = sbr.rel target = $region44
            $region43: #{vision_encoder_forward.16} parent=35 // pred_region
              loop: start=0, step=1, limit=1
              $region45: #{vision_encoder_forward.16} parent=43 // loop_pre_header
                _
              $region46: #{vision_encoder_forward.16} parent=43 // loop_header
                %s223 = sphi 0, %s227
                %p224 = scmp.ge.s32.totalorder %s223, 1
                %s228 = sphi %s214, %s214
                %s229 = sphi %s211, %s211
              $region47: #{vision_encoder_forward.16} parent=43 // loop_header_branch
                %226 = sbr.rel (%p224) target = $region51
              $region48: #{vision_encoder_forward.16} parent=43 // loop_body
                %v230 = vld [vmem:[%s228] sm:$0xff]
                %231 = vst [vmem:[%s229] sm:$0xff] %v230
                %v232 = vld [vmem:[%s228 + $0x18] sm:$0xff]
                %233 = vst [vmem:[%s229 + $0x8] sm:$0xff] %v232
                %v234 = vld [vmem:[%s228 + $0x30] sm:$0xff]
                %235 = vst [vmem:[%s229 + $0x10] sm:$0xff] %v234
                %v236 = vld [vmem:[%s228 + $0x48] sm:$0xff]
                %237 = vst [vmem:[%s229 + $0x18] sm:$0xff] %v236
                %v238 = vld [vmem:[%s228 + $0x60] sm:$0xff]
                %239 = vst [vmem:[%s229 + $0x20] sm:$0xff] %v238
                %v240 = vld [vmem:[%s228 + $0x78] sm:$0xff]
                %241 = vst [vmem:[%s229 + $0x28] sm:$0xff] %v240
                %v242 = vld [vmem:[%s228 + $0x90] sm:$0xff]
                %243 = vst [vmem:[%s229 + $0x30] sm:$0xff] %v242
                %v244 = vld [vmem:[%s228 + $0xa8] sm:$0xff]
                %245 = vst [vmem:[%s229 + $0x38] sm:$0xff] %v244
                %v246 = vld [vmem:[%s228 + $0xc0] sm:$0xff]
                %247 = vst [vmem:[%s229 + $0x40] sm:$0xff] %v246
                %v248 = vld [vmem:[%s228 + $0xd8] sm:$0xff]
                %249 = vst [vmem:[%s229 + $0x48] sm:$0xff] %v248
                %v250 = vld [vmem:[%s228 + $0xf0] sm:$0xff]
                %251 = vst [vmem:[%s229 + $0x50] sm:$0xff] %v250
                %v252 = vld [vmem:[%s228 + $0x108] sm:$0xff]
                %253 = vst [vmem:[%s229 + $0x58] sm:$0xff] %v252
                %v254 = vld [vmem:[%s228 + $0x120] sm:$0xff]
                %255 = vst [vmem:[%s229 + $0x60] sm:$0xff] %v254
                %v256 = vld [vmem:[%s228 + $0x138] sm:$0xff]
                %257 = vst [vmem:[%s229 + $0x68] sm:$0xff] %v256
                %v258 = vld [vmem:[%s228 + $0x150] sm:$0xff]
                %259 = vst [vmem:[%s229 + $0x70] sm:$0xff] %v258
                %v260 = vld [vmem:[%s228 + $0x168] sm:$0xff]
                %261 = vst [vmem:[%s229 + $0x78] sm:$0xff] %v260
              $region49: #{vision_encoder_forward.16} parent=43 // loop_footer
                %s227 = sadd.s32 1, %s223
              $region50: #{vision_encoder_forward.16} parent=43 // loop_footer_branch
                %222 = sbr.rel target = $region46
              $region51: #{vision_encoder_forward.16} parent=43 // loop_exit
                _
            $region44: #{vision_encoder_forward.16} parent=35 // pred_fallthru
              _
          $region36: #{vision_encoder_forward.16} parent=31 // pred_fallthru
            _
          %306 = vnop
        $region32: #{vision_encoder_forward.16} parent=23 // pred_fallthru
          _
        // Predicated region
        $region67: #{vision_encoder_forward.16} parent=23 // pred_check
          %p307 = pneg %p137
        $region68: #{vision_encoder_forward.16} parent=23 // pred_check_branch
          %309 = sbr.rel (%p307) target = $region70
        $region69: #{vision_encoder_forward.16} parent=23 // pred_region
          %s310 = smul.u32 2, %s19
          %p311 = scmp.lt.s32.totalorder %s310, 5
          %s312 = scalar_select %p311, %s310, 5
          %s313 = scalar_lea.vmem %s4, %s312
          %s314 = smul.u32 2, %s19
        $region70: #{vision_encoder_forward.16} parent=23 // pred_fallthru
          _
      $region24: #{vision_encoder_forward.16} parent=5 // pred_fallthru
        _
      %p315 = scmp.le.s32.totalorder 1, %s11
      %p316 = scmp.lt.s32.totalorder %s11, 13
      %p317 = pnand %p315, %p316
      %p318 = pneg %p317
      // Predicated region
      $region71: #{vision_encoder_forward.16} parent=5 // pred_check
        _
      $region72: #{vision_encoder_forward.16} parent=5 // pred_check_branch
        %320 = sbr.rel (%p317) target = $region74
      $region73: #{vision_encoder_forward.16} parent=5 // pred_region
        %s321 = ssub.s32 %s11, 1
        %s322 = sand.u32 %s104, 1
        %s323 = sand.u32 %s104, 1
        %s324 = smul.addr %s323, 128
        %s325 = scalar_lea.vmem [#allocation2], %s324
        // Predicated region
        $region75: #{vision_encoder_forward.16} parent=73 // pred_check
          %p326 = pneg %p117
        $region76: #{vision_encoder_forward.16} parent=73 // pred_check_branch
          %328 = sbr.rel (%p326) target = $region78
        $region77: #{vision_encoder_forward.16} parent=73 // pred_region
          _
        $region78: #{vision_encoder_forward.16} parent=73 // pred_fallthru
          _
        %s329 = smul.u32 16, %s20
        %p330 = scmp.lt.s32.totalorder %s329, 63
        %s331 = scalar_select %p330, %s329, 63
        %s332 = smul.addr %s331, 8
        %s333 = scalar_lea.vmem %s0, %s332
        %p334 = pneg %p49
        %p335 = pneg %p46
        %p336 = pneg %p70
        %p337 = pneg %p67
        %p338 = pneg %p91
        %p339 = pneg %p88
        %s340 = sand.u32 %s104, 1
        %s341 = sand.u32 %s104, 1
        %s342 = smul.addr %s341, 128
        %s343 = scalar_lea.vmem [#allocation2], %s342
        %p344 = pneg %p117
        %p345 = pneg %p114
        %s346 = smul.u32 2, %s21
        %p347 = scmp.lt.s32.totalorder %s346, 5
        %s348 = scalar_select %p347, %s346, 5
        %s349 = scalar_lea.vmem %s4, %s348
        %p350 = pneg %p143
        %p351 = pneg %p140
        %p352 = pneg %p171
        %p353 = pneg %p168
        %s354 = sand.u32 %s158, 1
        %s355 = sand.u32 %s158, 1
        %s356 = smul.addr %s355, 128
        %s357 = scalar_lea.vmem [#allocation3], %s356
        %s358 = smul.u32 16, %s20
        %p359 = scmp.lt.s32.totalorder %s358, 63
        %s360 = scalar_select %p359, %s358, 63
        %s361 = smul.addr %s360, 8
        %s362 = scalar_lea.vmem %s0, %s361
        %s363 = smul.u32 16, %s20
        %s364 = smul.u32 2, %s21
        %s365 = smul.u32 2, %s21
        %p366 = scmp.lt.s32.totalorder %s365, 5
        %s367 = scalar_select %p366, %s365, 5
        %s368 = scalar_lea.vmem %s4, %s367
        %s369 = smul.u32 2, %s21
        %s370 = smul.u32 16, %s20
        %s371 = smul.u32 2, %s21
        %v373 = vld [vmem:[%s362] sm:$0xff]
        %v374 = vld [vmem:[%s362 + $0x8] sm:$0xff]
        %v375 = vld [vmem:[%s362 + $0x10] sm:$0xff]
        %v376 = vld [vmem:[%s362 + $0x18] sm:$0xff]
        %v377 = vld [vmem:[%s362 + $0x20] sm:$0xff]
        %v378 = vld [vmem:[%s362 + $0x28] sm:$0xff]
        %v379 = vld [vmem:[%s362 + $0x30] sm:$0xff]
        %v380 = vld [vmem:[%s362 + $0x38] sm:$0xff]
        %v381 = vld [vmem:[%s362 + $0x40] sm:$0xff]
        %v382 = vld [vmem:[%s362 + $0x48] sm:$0xff]
        %v383 = vld [vmem:[%s362 + $0x50] sm:$0xff]
        %v384 = vld [vmem:[%s362 + $0x58] sm:$0xff]
        %v385 = vld [vmem:[%s362 + $0x60] sm:$0xff]
        %v386 = vld [vmem:[%s362 + $0x68] sm:$0xff]
        %v387 = vld [vmem:[%s362 + $0x70] sm:$0xff]
        %v388 = vld [vmem:[%s362 + $0x78] sm:$0xff]
        %389 = vadd.xlane.f32.xlu0 %v373
        %v390 = vpop.xlane.xlu0 %389
        %391 = vadd.xlane.f32.xlu0 %v374
        %v392 = vpop.xlane.xlu0 %391
        %393 = vadd.xlane.f32.xlu0 %v375
        %v394 = vpop.xlane.xlu0 %393
        %395 = vadd.xlane.f32.xlu0 %v376
        %v396 = vpop.xlane.xlu0 %395
        %397 = vadd.xlane.f32.xlu0 %v377
        %v398 = vpop.xlane.xlu0 %397
        %399 = vadd.xlane.f32.xlu0 %v378
        %v400 = vpop.xlane.xlu0 %399
        %401 = vadd.xlane.f32.xlu0 %v379
        %v402 = vpop.xlane.xlu0 %401
        %403 = vadd.xlane.f32.xlu0 %v380
        %v404 = vpop.xlane.xlu0 %403
        %405 = vadd.xlane.f32.xlu0 %v381
        %v406 = vpop.xlane.xlu0 %405
        %407 = vadd.xlane.f32.xlu0 %v382
        %v408 = vpop.xlane.xlu0 %407
        %409 = vadd.xlane.f32.xlu0 %v383
        %v410 = vpop.xlane.xlu0 %409
        %411 = vadd.xlane.f32.xlu0 %v384
        %v412 = vpop.xlane.xlu0 %411
        %413 = vadd.xlane.f32.xlu0 %v385
        %v414 = vpop.xlane.xlu0 %413
        %415 = vadd.xlane.f32.xlu0 %v386
        %v416 = vpop.xlane.xlu0 %415
        %417 = vadd.xlane.f32.xlu0 %v387
        %v418 = vpop.xlane.xlu0 %417
        %419 = vadd.xlane.f32.xlu0 %v388
        %v420 = vpop.xlane.xlu0 %419
        %v421 = vrcp.pop 128.0
        %v422 = vmul.f32 %v390, %v421
        %v423 = vmul.f32 %v392, %v421
        %v424 = vmul.f32 %v394, %v421
        %v425 = vmul.f32 %v396, %v421
        %v426 = vmul.f32 %v398, %v421
        %v427 = vmul.f32 %v400, %v421
        %v428 = vmul.f32 %v402, %v421
        %v429 = vmul.f32 %v404, %v421
        %v430 = vmul.f32 %v406, %v421
        %v431 = vmul.f32 %v408, %v421
        %v432 = vmul.f32 %v410, %v421
        %v433 = vmul.f32 %v412, %v421
        %v434 = vmul.f32 %v414, %v421
        %v435 = vmul.f32 %v416, %v421
        %v436 = vmul.f32 %v418, %v421
        %v437 = vmul.f32 %v420, %v421
        %v438 = vsub.f32 %v373, %v422
        %v439 = vsub.f32 %v374, %v423
        %v440 = vsub.f32 %v375, %v424
        %v441 = vsub.f32 %v376, %v425
        %v442 = vsub.f32 %v377, %v426
        %v443 = vsub.f32 %v378, %v427
        %v444 = vsub.f32 %v379, %v428
        %v445 = vsub.f32 %v380, %v429
        %v446 = vsub.f32 %v381, %v430
        %v447 = vsub.f32 %v382, %v431
        %v448 = vsub.f32 %v383, %v432
        %v449 = vsub.f32 %v384, %v433
        %v450 = vsub.f32 %v385, %v434
        %v451 = vsub.f32 %v386, %v435
        %v452 = vsub.f32 %v387, %v436
        %v453 = vsub.f32 %v388, %v437
        %v454 = vmul.f32 %v438, %v438
        %v455 = vmul.f32 %v439, %v439
        %v456 = vmul.f32 %v440, %v440
        %v457 = vmul.f32 %v441, %v441
        %v458 = vmul.f32 %v442, %v442
        %v459 = vmul.f32 %v443, %v443
        %v460 = vmul.f32 %v444, %v444
        %v461 = vmul.f32 %v445, %v445
        %v462 = vmul.f32 %v446, %v446
        %v463 = vmul.f32 %v447, %v447
        %v464 = vmul.f32 %v448, %v448
        %v465 = vmul.f32 %v449, %v449
        %v466 = vmul.f32 %v450, %v450
        %v467 = vmul.f32 %v451, %v451
        %v468 = vmul.f32 %v452, %v452
        %v469 = vmul.f32 %v453, %v453
        %470 = vadd.xlane.f32.xlu0 %v454
        %v471 = vpop.xlane.xlu0 %470
        %472 = vadd.xlane.f32.xlu0 %v455
        %v473 = vpop.xlane.xlu0 %472
        %474 = vadd.xlane.f32.xlu0 %v456
        %v475 = vpop.xlane.xlu0 %474
        %476 = vadd.xlane.f32.xlu0 %v457
        %v477 = vpop.xlane.xlu0 %476
        %478 = vadd.xlane.f32.xlu0 %v458
        %v479 = vpop.xlane.xlu0 %478
        %480 = vadd.xlane.f32.xlu0 %v459
        %v481 = vpop.xlane.xlu0 %480
        %482 = vadd.xlane.f32.xlu0 %v460
        %v483 = vpop.xlane.xlu0 %482
        %484 = vadd.xlane.f32.xlu0 %v461
        %v485 = vpop.xlane.xlu0 %484
        %486 = vadd.xlane.f32.xlu0 %v462
        %v487 = vpop.xlane.xlu0 %486
        %488 = vadd.xlane.f32.xlu0 %v463
        %v489 = vpop.xlane.xlu0 %488
        %490 = vadd.xlane.f32.xlu0 %v464
        %v491 = vpop.xlane.xlu0 %490
        %492 = vadd.xlane.f32.xlu0 %v465
        %v493 = vpop.xlane.xlu0 %492
        %494 = vadd.xlane.f32.xlu0 %v466
        %v495 = vpop.xlane.xlu0 %494
        %496 = vadd.xlane.f32.xlu0 %v467
        %v497 = vpop.xlane.xlu0 %496
        %498 = vadd.xlane.f32.xlu0 %v468
        %v499 = vpop.xlane.xlu0 %498
        %500 = vadd.xlane.f32.xlu0 %v469
        %v501 = vpop.xlane.xlu0 %500
        %v502 = vmul.f32 %v471, %v421
        %v503 = vmul.f32 %v473, %v421
        %v504 = vmul.f32 %v475, %v421
        %v505 = vmul.f32 %v477, %v421
        %v506 = vmul.f32 %v479, %v421
        %v507 = vmul.f32 %v481, %v421
        %v508 = vmul.f32 %v483, %v421
        %v509 = vmul.f32 %v485, %v421
        %v510 = vmul.f32 %v487, %v421
        %v511 = vmul.f32 %v489, %v421
        %v512 = vmul.f32 %v491, %v421
        %v513 = vmul.f32 %v493, %v421
        %v514 = vmul.f32 %v495, %v421
        %v515 = vmul.f32 %v497, %v421
        %v516 = vmul.f32 %v499, %v421
        %v517 = vmul.f32 %v501, %v421
        %v518 = vadd.f32 %v502, 1e-05
        %v519 = vadd.f32 %v503, 1e-05
        %v520 = vadd.f32 %v504, 1e-05
        %v521 = vadd.f32 %v505, 1e-05
        %v522 = vadd.f32 %v506, 1e-05
        %v523 = vadd.f32 %v507, 1e-05
        %v524 = vadd.f32 %v508, 1e-05
        %v525 = vadd.f32 %v509, 1e-05
        %v526 = vadd.f32 %v510, 1e-05
        %v527 = vadd.f32 %v511, 1e-05
        %v528 = vadd.f32 %v512, 1e-05
        %v529 = vadd.f32 %v513, 1e-05
        %v530 = vadd.f32 %v514, 1e-05
        %v531 = vadd.f32 %v515, 1e-05
        %v532 = vadd.f32 %v516, 1e-05
        %v533 = vadd.f32 %v517, 1e-05
        %v534 = vrsqrt.pop %v518
        %v535 = vrsqrt.pop %v519
        %v536 = vrsqrt.pop %v520
        %v537 = vrsqrt.pop %v521
        %v538 = vrsqrt.pop %v522
        %v539 = vrsqrt.pop %v523
        %v540 = vrsqrt.pop %v524
        %v541 = vrsqrt.pop %v525
        %v542 = vrsqrt.pop %v526
        %v543 = vrsqrt.pop %v527
        %v544 = vrsqrt.pop %v528
        %v545 = vrsqrt.pop %v529
        %v546 = vrsqrt.pop %v530
        %v547 = vrsqrt.pop %v531
        %v548 = vrsqrt.pop %v532
        %v549 = vrsqrt.pop %v533
        %v550 = vmul.f32 %v438, %v534
        %v551 = vmul.f32 %v439, %v535
        %v552 = vmul.f32 %v440, %v536
        %v553 = vmul.f32 %v441, %v537
        %v554 = vmul.f32 %v442, %v538
        %v555 = vmul.f32 %v443, %v539
        %v556 = vmul.f32 %v444, %v540
        %v557 = vmul.f32 %v445, %v541
        %v558 = vmul.f32 %v446, %v542
        %v559 = vmul.f32 %v447, %v543
        %v560 = vmul.f32 %v448, %v544
        %v561 = vmul.f32 %v449, %v545
        %v562 = vmul.f32 %v450, %v546
        %v563 = vmul.f32 %v451, %v547
        %v564 = vmul.f32 %v452, %v548
        %v565 = vmul.f32 %v453, %v549
        %v566 = vld [vmem:[%s1] sm:$0x1]
        %v568 = vlaneseq
        %v569 = vshrl.u32 %v568, 7
        %v570 = vsub.s32 0, %v569
        %v571 = vrot.slane %v566, %v570
        %v573 = vmul.f32 %v550, %v571
        %v574 = vmul.f32 %v551, %v571
        %v575 = vmul.f32 %v552, %v571
        %v576 = vmul.f32 %v553, %v571
        %v577 = vmul.f32 %v554, %v571
        %v578 = vmul.f32 %v555, %v571
        %v579 = vmul.f32 %v556, %v571
        %v580 = vmul.f32 %v557, %v571
        %v581 = vmul.f32 %v558, %v571
        %v582 = vmul.f32 %v559, %v571
        %v583 = vmul.f32 %v560, %v571
        %v584 = vmul.f32 %v561, %v571
        %v585 = vmul.f32 %v562, %v571
        %v586 = vmul.f32 %v563, %v571
        %v587 = vmul.f32 %v564, %v571
        %v588 = vmul.f32 %v565, %v571
        %v589 = vld [vmem:[%s2] sm:$0x1]
        %v591 = vlaneseq
        %v592 = vshrl.u32 %v591, 7
        %v593 = vsub.s32 0, %v592
        %v594 = vrot.slane %v589, %v593
        %v596 = vadd.f32 %v573, %v594
        %v597 = vadd.f32 %v574, %v594
        %v598 = vadd.f32 %v575, %v594
        %v599 = vadd.f32 %v576, %v594
        %v600 = vadd.f32 %v577, %v594
        %v601 = vadd.f32 %v578, %v594
        %v602 = vadd.f32 %v579, %v594
        %v603 = vadd.f32 %v580, %v594
        %v604 = vadd.f32 %v581, %v594
        %v605 = vadd.f32 %v582, %v594
        %v606 = vadd.f32 %v583, %v594
        %v607 = vadd.f32 %v584, %v594
        %v608 = vadd.f32 %v585, %v594
        %v609 = vadd.f32 %v586, %v594
        %v610 = vadd.f32 %v587, %v594
        %v611 = vadd.f32 %v588, %v594
        %v612 = vpack.c.bf16 %v597, %v596
        %v613 = vpack.c.bf16 %v599, %v598
        %v614 = vpack.c.bf16 %v601, %v600
        %v615 = vpack.c.bf16 %v603, %v602
        %v616 = vpack.c.bf16 %v605, %v604
        %v617 = vpack.c.bf16 %v607, %v606
        %v618 = vpack.c.bf16 %v609, %v608
        %v619 = vpack.c.bf16 %v611, %v610
        %v620 = vld [vmem:[%s325] sm:$0xff]
        %v621 = vld [vmem:[%s325 + $0x8] sm:$0xff]
        %v622 = vld [vmem:[%s325 + $0x10] sm:$0xff]
        %v623 = vld [vmem:[%s325 + $0x18] sm:$0xff]
        %v624 = vld [vmem:[%s325 + $0x20] sm:$0xff]
        %v625 = vld [vmem:[%s325 + $0x28] sm:$0xff]
        %v626 = vld [vmem:[%s325 + $0x30] sm:$0xff]
        %v627 = vld [vmem:[%s325 + $0x38] sm:$0xff]
        %v628 = vld [vmem:[%s325 + $0x40] sm:$0xff]
        %v629 = vld [vmem:[%s325 + $0x48] sm:$0xff]
        %v630 = vld [vmem:[%s325 + $0x50] sm:$0xff]
        %v631 = vld [vmem:[%s325 + $0x58] sm:$0xff]
        %v632 = vld [vmem:[%s325 + $0x60] sm:$0xff]
        %v633 = vld [vmem:[%s325 + $0x68] sm:$0xff]
        %v634 = vld [vmem:[%s325 + $0x70] sm:$0xff]
        %v635 = vld [vmem:[%s325 + $0x78] sm:$0xff]
        %v636 = vld [vmem:[%s368] sm:$0x3]
        %v638 = vlaneseq
        %v639 = vshrl.u32 %v638, 7
        %v640 = vsub.s32 0, %v639
        %v641 = vrot.slane %v636, %v640
        %v642 = vlaneseq
        %v643 = vshrl.u32 %v642, 7
        %v644 = vsub.s32 1, %v643
        %v645 = vrot.slane %v636, %v644
        %v664 = vunpack.c.l.b16 %v620
        %v665 = vunpack.c.h.b16 %v620
        %v666 = vunpack.c.l.b16 %v621
        %v667 = vunpack.c.h.b16 %v621
        %v668 = vunpack.c.l.b16 %v622
        %v669 = vunpack.c.h.b16 %v622
        %v670 = vunpack.c.l.b16 %v623
        %v671 = vunpack.c.h.b16 %v623
        %v672 = vunpack.c.l.b16 %v624
        %v673 = vunpack.c.h.b16 %v624
        %v674 = vunpack.c.l.b16 %v625
        %v675 = vunpack.c.h.b16 %v625
        %v676 = vunpack.c.l.b16 %v626
        %v677 = vunpack.c.h.b16 %v626
        %v678 = vunpack.c.l.b16 %v627
        %v679 = vunpack.c.h.b16 %v627
        %v680 = vunpack.c.l.b16 %v628
        %v681 = vunpack.c.h.b16 %v628
        %v682 = vunpack.c.l.b16 %v629
        %v683 = vunpack.c.h.b16 %v629
        %v684 = vunpack.c.l.b16 %v630
        %v685 = vunpack.c.h.b16 %v630
        %v686 = vunpack.c.l.b16 %v631
        %v687 = vunpack.c.h.b16 %v631
        %v688 = vunpack.c.l.b16 %v632
        %v689 = vunpack.c.h.b16 %v632
        %v690 = vunpack.c.l.b16 %v633
        %v691 = vunpack.c.h.b16 %v633
        %v692 = vunpack.c.l.b16 %v634
        %v693 = vunpack.c.h.b16 %v634
        %v694 = vunpack.c.l.b16 %v635
        %v695 = vunpack.c.h.b16 %v635
        %v696 = vpack.c.b16 %v666, %v664
        %v697 = vpack.c.b16 %v667, %v665
        %v698 = vpack.c.b16 %v670, %v668
        %v699 = vpack.c.b16 %v671, %v669
        %v700 = vpack.c.b16 %v674, %v672
        %v701 = vpack.c.b16 %v675, %v673
        %v702 = vpack.c.b16 %v678, %v676
        %v703 = vpack.c.b16 %v679, %v677
        %v704 = vpack.c.b16 %v682, %v680
        %v705 = vpack.c.b16 %v683, %v681
        %v706 = vpack.c.b16 %v686, %v684
        %v707 = vpack.c.b16 %v687, %v685
        %v708 = vpack.c.b16 %v690, %v688
        %v709 = vpack.c.b16 %v691, %v689
        %v710 = vpack.c.b16 %v694, %v692
        %v711 = vpack.c.b16 %v695, %v693
        %728 = vmatprep.subr.bf16.mxu0 %v697
        %729 = vmatpush1.bf16.msra.mxu0 %v696
        %730 = vmatprep.subr.bf16.mxu0 %v699
        %731 = vmatpush1.bf16.msra.mxu0 %v698
        %732 = vmatprep.subr.bf16.mxu0 %v701
        %733 = vmatpush1.bf16.msra.mxu0 %v700
        %734 = vmatprep.subr.bf16.mxu0 %v703
        %735 = vmatpush1.bf16.msra.mxu0 %v702
        %736 = vmatprep.subr.bf16.mxu0 %v705
        %737 = vmatpush1.bf16.msra.mxu0 %v704
        %738 = vmatprep.subr.bf16.mxu0 %v707
        %739 = vmatpush1.bf16.msra.mxu0 %v706
        %740 = vmatprep.subr.bf16.mxu0 %v709
        %741 = vmatpush1.bf16.msra.mxu0 %v708
        %742 = vmatprep.subr.bf16.mxu0 %v711
        %743 = vmatpush1.bf16.msra.mxu0 %v710
        %744 = vmatprep.subr.bf16.mxu0 0
        %745 = vmatpush1.bf16.msra.mxu0 0
        %746 = vmatprep.subr.bf16.mxu0 0
        %747 = vmatpush1.bf16.msra.mxu0 0
        %748 = vmatprep.subr.bf16.mxu0 0
        %749 = vmatpush1.bf16.msra.mxu0 0
        %750 = vmatprep.subr.bf16.mxu0 0
        %751 = vmatpush1.bf16.msra.mxu0 0
        %752 = vmatprep.subr.bf16.mxu0 0
        %753 = vmatpush1.bf16.msra.mxu0 0
        %754 = vmatprep.subr.bf16.mxu0 0
        %755 = vmatpush1.bf16.msra.mxu0 0
        %756 = vmatprep.subr.bf16.mxu0 0
        %757 = vmatpush1.bf16.msra.mxu0 0
        %758 = vmatprep.subr.bf16.mxu0 0
        %759 = vmatpush1.bf16.msra.mxu0 0
        %760 = vmatprep.mubr.bf16.mxu0 0
        %761 = vmatmul.mubr.bf16.gmra.mrb[0].mxu0 %v612
        %v762 = vpop.f32.mrb[0].mxu0
        %v763 = vadd.f32 %v641, %v762
        %v764 = vpop.f32.mrb[0].mxu0
        %v765 = vadd.f32 %v645, %v764
        %v766 = vpop.f32.mrb[0].mxu0
        %v767 = vadd.f32 %v641, %v766
        %v768 = vpop.f32.mrb[0].mxu0
        %v769 = vadd.f32 %v645, %v768
        %770 = vmatprep.mubr.bf16.mxu0 0
        %771 = vmatmul.mubr.bf16.gmra.mrb[0].mxu0 %v613
        %v772 = vpop.f32.mrb[0].mxu0
        %v773 = vadd.f32 %v641, %v772
        %v774 = vpop.f32.mrb[0].mxu0
        %v775 = vadd.f32 %v645, %v774
        %v776 = vpop.f32.mrb[0].mxu0
        %v777 = vadd.f32 %v641, %v776
        %v778 = vpop.f32.mrb[0].mxu0
        %v779 = vadd.f32 %v645, %v778
        %780 = vmatprep.mubr.bf16.mxu0 0
        %781 = vmatmul.mubr.bf16.gmra.mrb[0].mxu0 %v614
        %v782 = vpop.f32.mrb[0].mxu0
        %v783 = vadd.f32 %v641, %v782
        %v784 = vpop.f32.mrb[0].mxu0
        %v785 = vadd.f32 %v645, %v784
        %v786 = vpop.f32.mrb[0].mxu0
        %v787 = vadd.f32 %v641, %v786
        %v788 = vpop.f32.mrb[0].mxu0
        %v789 = vadd.f32 %v645, %v788
        %790 = vmatprep.mubr.bf16.mxu0 0
        %791 = vmatmul.mubr.bf16.gmra.mrb[0].mxu0 %v615
        %v792 = vpop.f32.mrb[0].mxu0
        %v793 = vadd.f32 %v641, %v792
        %v794 = vpop.f32.mrb[0].mxu0
        %v795 = vadd.f32 %v645, %v794
        %v796 = vpop.f32.mrb[0].mxu0
        %v797 = vadd.f32 %v641, %v796
        %v798 = vpop.f32.mrb[0].mxu0
        %v799 = vadd.f32 %v645, %v798
        %800 = vmatprep.mubr.bf16.mxu0 0
        %801 = vmatmul.mubr.bf16.gmra.mrb[0].mxu0 %v616
        %v802 = vpop.f32.mrb[0].mxu0
        %v803 = vadd.f32 %v641, %v802
        %v804 = vpop.f32.mrb[0].mxu0
        %v805 = vadd.f32 %v645, %v804
        %v806 = vpop.f32.mrb[0].mxu0
        %v807 = vadd.f32 %v641, %v806
        %v808 = vpop.f32.mrb[0].mxu0
        %v809 = vadd.f32 %v645, %v808
        %810 = vmatprep.mubr.bf16.mxu0 0
        %811 = vmatmul.mubr.bf16.gmra.mrb[0].mxu0 %v617
        %v812 = vpop.f32.mrb[0].mxu0
        %v813 = vadd.f32 %v641, %v812
        %v814 = vpop.f32.mrb[0].mxu0
        %v815 = vadd.f32 %v645, %v814
        %v816 = vpop.f32.mrb[0].mxu0
        %v817 = vadd.f32 %v641, %v816
        %v818 = vpop.f32.mrb[0].mxu0
        %v819 = vadd.f32 %v645, %v818
        %820 = vmatprep.mubr.bf16.mxu0 0
        %821 = vmatmul.mubr.bf16.gmra.mrb[0].mxu0 %v618
        %v822 = vpop.f32.mrb[0].mxu0
        %v823 = vadd.f32 %v641, %v822
        %v824 = vpop.f32.mrb[0].mxu0
        %v825 = vadd.f32 %v645, %v824
        %v826 = vpop.f32.mrb[0].mxu0
        %v827 = vadd.f32 %v641, %v826
        %v828 = vpop.f32.mrb[0].mxu0
        %v829 = vadd.f32 %v645, %v828
        %830 = vmatprep.mubr.bf16.mxu0 0
        %831 = vmatmul.mubr.bf16.gmra.mrb[0].mxu0 %v619
        %v832 = vpop.f32.mrb[0].mxu0
        %v833 = vadd.f32 %v641, %v832
        %v834 = vpop.f32.mrb[0].mxu0
        %v835 = vadd.f32 %v645, %v834
        %v836 = vpop.f32.mrb[0].mxu0
        %v837 = vadd.f32 %v641, %v836
        %v838 = vpop.f32.mrb[0].mxu0
        %v839 = vadd.f32 %v645, %v838
        %840 = vdwg.mxu0
        %v841 = vpack.c.bf16 %v767, %v763
        %v842 = vpack.c.bf16 %v769, %v765
        %v843 = vpack.c.bf16 %v777, %v773
        %v844 = vpack.c.bf16 %v779, %v775
        %v845 = vpack.c.bf16 %v787, %v783
        %v846 = vpack.c.bf16 %v789, %v785
        %v847 = vpack.c.bf16 %v797, %v793
        %v848 = vpack.c.bf16 %v799, %v795
        %v849 = vpack.c.bf16 %v807, %v803
        %v850 = vpack.c.bf16 %v809, %v805
        %v851 = vpack.c.bf16 %v817, %v813
        %v852 = vpack.c.bf16 %v819, %v815
        %v853 = vpack.c.bf16 %v827, %v823
        %v854 = vpack.c.bf16 %v829, %v825
        %v855 = vpack.c.bf16 %v837, %v833
        %v856 = vpack.c.bf16 %v839, %v835
        %v873 = vunpack.c.l.b16 %v841
        %v874 = vunpack.c.l.b16 %v842
        %v875 = vunpack.c.h.b16 %v841
        %v876 = vunpack.c.h.b16 %v842
        %v877 = vunpack.c.l.b16 %v843
        %v878 = vunpack.c.l.b16 %v844
        %v879 = vunpack.c.h.b16 %v843
        %v880 = vunpack.c.h.b16 %v844
        %v881 = vunpack.c.l.b16 %v845
        %v882 = vunpack.c.l.b16 %v846
        %v883 = vunpack.c.h.b16 %v845
        %v884 = vunpack.c.h.b16 %v846
        %v885 = vunpack.c.l.b16 %v847
        %v886 = vunpack.c.l.b16 %v848
        %v887 = vunpack.c.h.b16 %v847
        %v888 = vunpack.c.h.b16 %v848
        %v889 = vunpack.c.l.b16 %v849
        %v890 = vunpack.c.l.b16 %v850
        %v891 = vunpack.c.h.b16 %v849
        %v892 = vunpack.c.h.b16 %v850
        %v893 = vunpack.c.l.b16 %v851
        %v894 = vunpack.c.l.b16 %v852
        %v895 = vunpack.c.h.b16 %v851
        %v896 = vunpack.c.h.b16 %v852
        %v897 = vunpack.c.l.b16 %v853
        %v898 = vunpack.c.l.b16 %v854
        %v899 = vunpack.c.h.b16 %v853
        %v900 = vunpack.c.h.b16 %v854
        %v901 = vunpack.c.l.b16 %v855
        %v902 = vunpack.c.l.b16 %v856
        %v903 = vunpack.c.h.b16 %v855
        %v904 = vunpack.c.h.b16 %v856
        %v905 = vpack.c.b16 %v874, %v873
        %v906 = vpack.c.b16 %v876, %v875
        %v907 = vpack.c.b16 %v878, %v877
        %v908 = vpack.c.b16 %v880, %v879
        %v909 = vpack.c.b16 %v882, %v881
        %v910 = vpack.c.b16 %v884, %v883
        %v911 = vpack.c.b16 %v886, %v885
        %v912 = vpack.c.b16 %v888, %v887
        %v913 = vpack.c.b16 %v890, %v889
        %v914 = vpack.c.b16 %v892, %v891
        %v915 = vpack.c.b16 %v894, %v893
        %v916 = vpack.c.b16 %v896, %v895
        %v917 = vpack.c.b16 %v898, %v897
        %v918 = vpack.c.b16 %v900, %v899
        %v919 = vpack.c.b16 %v902, %v901
        %v920 = vpack.c.b16 %v904, %v903
        %937 = vst [vmem:[%s357] sm:$0xff] %v905
        %938 = vst [vmem:[%s357 + $0x8] sm:$0xff] %v906
        %939 = vst [vmem:[%s357 + $0x10] sm:$0xff] %v907
        %940 = vst [vmem:[%s357 + $0x18] sm:$0xff] %v908
        %941 = vst [vmem:[%s357 + $0x20] sm:$0xff] %v909
        %942 = vst [vmem:[%s357 + $0x28] sm:$0xff] %v910
        %943 = vst [vmem:[%s357 + $0x30] sm:$0xff] %v911
        %944 = vst [vmem:[%s357 + $0x38] sm:$0xff] %v912
        %945 = vst [vmem:[%s357 + $0x40] sm:$0xff] %v913
        %946 = vst [vmem:[%s357 + $0x48] sm:$0xff] %v914
        %947 = vst [vmem:[%s357 + $0x50] sm:$0xff] %v915
        %948 = vst [vmem:[%s357 + $0x58] sm:$0xff] %v916
        %949 = vst [vmem:[%s357 + $0x60] sm:$0xff] %v917
        %950 = vst [vmem:[%s357 + $0x68] sm:$0xff] %v918
        %951 = vst [vmem:[%s357 + $0x70] sm:$0xff] %v919
        %952 = vst [vmem:[%s357 + $0x78] sm:$0xff] %v920
        %s953 = sand.u32 %s158, 1
        %s954 = sand.u32 %s158, 1
        %s955 = smul.addr %s954, 128
        %s956 = scalar_lea.vmem [#allocation3], %s955
        // Predicated region
        $region79: #{vision_encoder_forward.16} parent=73 // pred_check
          %p957 = pneg %p168
        $region80: #{vision_encoder_forward.16} parent=73 // pred_check_branch
          %959 = sbr.rel (%p957) target = $region82
        $region81: #{vision_encoder_forward.16} parent=73 // pred_region
          %s960 = smul.u32 16, %s20
          %s961 = smul.u32 2, %s21
          %s962 = smul.addr %s960, 6
          %s963 = sadd.s32 %s961, %s962
          %s964 = smul.addr %s963, 4
          %s965 = scalar_lea.vmem %s5, %s964
          // Predicated region
          $region83: #{vision_encoder_forward.16} parent=81 // pred_check
            _
          $region84: #{vision_encoder_forward.16} parent=81 // pred_check_branch
            %967 = sbr.rel (0) target = $region86
          $region85: #{vision_encoder_forward.16} parent=81 // pred_region
            // Predicated region
            $region87: #{vision_encoder_forward.16} parent=85 // pred_check
              _
            $region88: #{vision_encoder_forward.16} parent=85 // pred_check_branch
              %969 = sbr.rel (0) target = $region90
            $region89: #{vision_encoder_forward.16} parent=85 // pred_region
              // Predicated region
              $region102: #{vision_encoder_forward.16} parent=89 // pred_check
                _
              $region103: #{vision_encoder_forward.16} parent=89 // pred_check_branch
                %1014 = sbr.rel (0) target = $region105
              $region104: #{vision_encoder_forward.16} parent=89 // pred_region
                loop: start=0, step=1, limit=1
                $region106: #{vision_encoder_forward.16} parent=104 // loop_pre_header
                  _
                $region107: #{vision_encoder_forward.16} parent=104 // loop_header
                  %s1016 = sphi 0, %s1020
                  %p1017 = scmp.ge.s32.totalorder %s1016, 1
                  %s1021 = sphi %s956, %s956
                  %s1022 = sphi %s965, %s965
                $region108: #{vision_encoder_forward.16} parent=104 // loop_header_branch
                  %1019 = sbr.rel (%p1017) target = $region112
                $region109: #{vision_encoder_forward.16} parent=104 // loop_body
                  %v1023 = vld [vmem:[%s1021] sm:$0xff]
                  %1024 = vst [vmem:[%s1022] sm:$0xff] %v1023
                  %v1025 = vld [vmem:[%s1021 + $0x8] sm:$0xff]
                  %1026 = vst [vmem:[%s1022 + $0x18] sm:$0xff] %v1025
                  %v1027 = vld [vmem:[%s1021 + $0x10] sm:$0xff]
                  %1028 = vst [vmem:[%s1022 + $0x30] sm:$0xff] %v1027
                  %v1029 = vld [vmem:[%s1021 + $0x18] sm:$0xff]
                  %1030 = vst [vmem:[%s1022 + $0x48] sm:$0xff] %v1029
                  %v1031 = vld [vmem:[%s1021 + $0x20] sm:$0xff]
                  %1032 = vst [vmem:[%s1022 + $0x60] sm:$0xff] %v1031
                  %v1033 = vld [vmem:[%s1021 + $0x28] sm:$0xff]
                  %1034 = vst [vmem:[%s1022 + $0x78] sm:$0xff] %v1033
                  %v1035 = vld [vmem:[%s1021 + $0x30] sm:$0xff]
                  %1036 = vst [vmem:[%s1022 + $0x90] sm:$0xff] %v1035
                  %v1037 = vld [vmem:[%s1021 + $0x38] sm:$0xff]
                  %1038 = vst [vmem:[%s1022 + $0xa8] sm:$0xff] %v1037
                  %v1039 = vld [vmem:[%s1021 + $0x40] sm:$0xff]
                  %1040 = vst [vmem:[%s1022 + $0xc0] sm:$0xff] %v1039
                  %v1041 = vld [vmem:[%s1021 + $0x48] sm:$0xff]
                  %1042 = vst [vmem:[%s1022 + $0xd8] sm:$0xff] %v1041
                  %v1043 = vld [vmem:[%s1021 + $0x50] sm:$0xff]
                  %1044 = vst [vmem:[%s1022 + $0xf0] sm:$0xff] %v1043
                  %v1045 = vld [vmem:[%s1021 + $0x58] sm:$0xff]
                  %1046 = vst [vmem:[%s1022 + $0x108] sm:$0xff] %v1045
                  %v1047 = vld [vmem:[%s1021 + $0x60] sm:$0xff]
                  %1048 = vst [vmem:[%s1022 + $0x120] sm:$0xff] %v1047
                  %v1049 = vld [vmem:[%s1021 + $0x68] sm:$0xff]
                  %1050 = vst [vmem:[%s1022 + $0x138] sm:$0xff] %v1049
                  %v1051 = vld [vmem:[%s1021 + $0x70] sm:$0xff]
                  %1052 = vst [vmem:[%s1022 + $0x150] sm:$0xff] %v1051
                  %v1053 = vld [vmem:[%s1021 + $0x78] sm:$0xff]
                  %1054 = vst [vmem:[%s1022 + $0x168] sm:$0xff] %v1053
                $region110: #{vision_encoder_forward.16} parent=104 // loop_footer
                  %s1020 = sadd.s32 1, %s1016
                $region111: #{vision_encoder_forward.16} parent=104 // loop_footer_branch
                  %1015 = sbr.rel target = $region107
                $region112: #{vision_encoder_forward.16} parent=104 // loop_exit
                  _
              $region105: #{vision_encoder_forward.16} parent=89 // pred_fallthru
                _
              // Predicated region
              $region113: #{vision_encoder_forward.16} parent=89 // pred_check
                _
              $region114: #{vision_encoder_forward.16} parent=89 // pred_check_branch
                %1056 = sbr.rel target = $region116
              $region115: #{vision_encoder_forward.16} parent=89 // pred_region
                _
              $region116: #{vision_encoder_forward.16} parent=89 // pred_fallthru
                _
            $region90: #{vision_encoder_forward.16} parent=85 // pred_fallthru
              _
            // Predicated region
            $region91: #{vision_encoder_forward.16} parent=85 // pred_check
              _
            $region92: #{vision_encoder_forward.16} parent=85 // pred_check_branch
              %971 = sbr.rel target = $region94
            $region93: #{vision_encoder_forward.16} parent=85 // pred_region
              loop: start=0, step=1, limit=1
              $region95: #{vision_encoder_forward.16} parent=93 // loop_pre_header
                _
              $region96: #{vision_encoder_forward.16} parent=93 // loop_header
                %s974 = sphi 0, %s978
                %p975 = scmp.ge.s32.totalorder %s974, 1
                %s979 = sphi %s956, %s956
                %s980 = sphi %s965, %s965
              $region97: #{vision_encoder_forward.16} parent=93 // loop_header_branch
                %977 = sbr.rel (%p975) target = $region101
              $region98: #{vision_encoder_forward.16} parent=93 // loop_body
                %v981 = vld [vmem:[%s979] sm:$0xff]
                %982 = vst [vmem:[%s980] sm:$0xff] %v981
                %v983 = vld [vmem:[%s979 + $0x8] sm:$0xff]
                %984 = vst [vmem:[%s980 + $0x18] sm:$0xff] %v983
                %v985 = vld [vmem:[%s979 + $0x10] sm:$0xff]
                %986 = vst [vmem:[%s980 + $0x30] sm:$0xff] %v985
                %v987 = vld [vmem:[%s979 + $0x18] sm:$0xff]
                %988 = vst [vmem:[%s980 + $0x48] sm:$0xff] %v987
                %v989 = vld [vmem:[%s979 + $0x20] sm:$0xff]
                %990 = vst [vmem:[%s980 + $0x60] sm:$0xff] %v989
                %v991 = vld [vmem:[%s979 + $0x28] sm:$0xff]
                %992 = vst [vmem:[%s980 + $0x78] sm:$0xff] %v991
                %v993 = vld [vmem:[%s979 + $0x30] sm:$0xff]
                %994 = vst [vmem:[%s980 + $0x90] sm:$0xff] %v993
                %v995 = vld [vmem:[%s979 + $0x38] sm:$0xff]
                %996 = vst [vmem:[%s980 + $0xa8] sm:$0xff] %v995
                %v997 = vld [vmem:[%s979 + $0x40] sm:$0xff]
                %998 = vst [vmem:[%s980 + $0xc0] sm:$0xff] %v997
                %v999 = vld [vmem:[%s979 + $0x48] sm:$0xff]
                %1000 = vst [vmem:[%s980 + $0xd8] sm:$0xff] %v999
                %v1001 = vld [vmem:[%s979 + $0x50] sm:$0xff]
                %1002 = vst [vmem:[%s980 + $0xf0] sm:$0xff] %v1001
                %v1003 = vld [vmem:[%s979 + $0x58] sm:$0xff]
                %1004 = vst [vmem:[%s980 + $0x108] sm:$0xff] %v1003
                %v1005 = vld [vmem:[%s979 + $0x60] sm:$0xff]
                %1006 = vst [vmem:[%s980 + $0x120] sm:$0xff] %v1005
                %v1007 = vld [vmem:[%s979 + $0x68] sm:$0xff]
                %1008 = vst [vmem:[%s980 + $0x138] sm:$0xff] %v1007
                %v1009 = vld [vmem:[%s979 + $0x70] sm:$0xff]
                %1010 = vst [vmem:[%s980 + $0x150] sm:$0xff] %v1009
                %v1011 = vld [vmem:[%s979 + $0x78] sm:$0xff]
                %1012 = vst [vmem:[%s980 + $0x168] sm:$0xff] %v1011
              $region99: #{vision_encoder_forward.16} parent=93 // loop_footer
                %s978 = sadd.s32 1, %s974
              $region100: #{vision_encoder_forward.16} parent=93 // loop_footer_branch
                %973 = sbr.rel target = $region96
              $region101: #{vision_encoder_forward.16} parent=93 // loop_exit
                _
            $region94: #{vision_encoder_forward.16} parent=85 // pred_fallthru
              _
          $region86: #{vision_encoder_forward.16} parent=81 // pred_fallthru
            _
          %1057 = vnop
        $region82: #{vision_encoder_forward.16} parent=73 // pred_fallthru
          _
      $region74: #{vision_encoder_forward.16} parent=5 // pred_fallthru
        _
      %p1058 = scmp.le.s32.totalorder 2, %s11
      // Predicated region
      $region117: #{vision_encoder_forward.16} parent=5 // pred_check
        %p1059 = pneg %p1058
      $region118: #{vision_encoder_forward.16} parent=5 // pred_check_branch
        %1061 = sbr.rel (%p1059) target = $region120
      $region119: #{vision_encoder_forward.16} parent=5 // pred_region
        %s1062 = ssub.s32 %s11, 2
        // Predicated region
        $region121: #{vision_encoder_forward.16} parent=119 // pred_check
          %p1063 = pneg %p174
        $region122: #{vision_encoder_forward.16} parent=119 // pred_check_branch
          %1065 = sbr.rel (%p1063) target = $region124
        $region123: #{vision_encoder_forward.16} parent=119 // pred_region
          %s1066 = sand.u32 %s159, 1
          %s1067 = sand.u32 %s159, 1
          %s1068 = smul.addr %s1067, 128
          %s1069 = scalar_lea.vmem [#allocation3], %s1068
        $region124: #{vision_encoder_forward.16} parent=119 // pred_fallthru
          _
      $region120: #{vision_encoder_forward.16} parent=5 // pred_fallthru
        _
    $region6: #{vision_encoder_forward.16} parent=1 // loop_footer
      %s15 = sadd.s32 1, %s11
    $region7: #{vision_encoder_forward.16} parent=1 // loop_footer_branch
      %10 = sbr.rel target = $region3
    $region8: #{vision_encoder_forward.16} parent=1 // loop_exit
      _

// kernel: vision_encoder_forward.21
$region0: #{vision_encoder_forward.21}
  #allocation0 [shape = 'u32[]', space=smem, size = 0x4, offset = 0x4, fixed_abs, tag = 'smem constant byte address 0x4 - core index']
  #allocation1 [shape = 'u32[144,128]{1,0:T(1,128)}', space=vmem, size = 0x12000, scoped, tag = 'internal scratch']
  %s0 = inlined_call_operand.vmem [shape: f32[512,128], index: 0, kind: input, shape index: {}]
  %s1 = inlined_call_operand.vmem [shape: f32[1,128], index: 1, kind: input, shape index: {}]
  %s2 = inlined_call_operand.vmem [shape: f32[1,128], index: 2, kind: input, shape index: {}]
  %s3 = inlined_call_operand.hbm [shape: f32[512,128], index: 3, kind: output, shape index: {}]
  %s4 = sld [smem:[#allocation0]]
  $region45: #{vision_encoder_forward.21} parent=0
    _
  %s6 = ssub.s32 1, %s4
  %s7 = scalar_select 0, %s6, %s4
  $region1: #{vision_encoder_forward.21} parent=0
    #allocation2 [shape = 'u8[131072]{0}', space=vmem, size = 0x20000, scoped, tag = 'output window, operand 0']
    #allocation3 [shape = 's32[2]{0}', space=sflag, size = 0x8, scoped, tag = 'scoped memory for vision_encoder_forward.21']
    %8 = vsyncpa [#allocation3], 0
    %s9 = scalar_lea.sflag [#allocation3], 1
    %10 = vsyncpa %s9, 0
    loop: start=0, step=1, limit=6
    $region2: #{vision_encoder_forward.21} parent=1 // loop_pre_header
      _
    $region3: #{vision_encoder_forward.21} parent=1 // loop_header
      %s12 = sphi 0, %s16
      %p13 = scmp.ge.s32.totalorder %s12, 6
      %s22 = sphi 0, %s24
      %s25 = sphi 0, %s22
      %s26 = sphi 0, %s25
      %s42 = sphi 0, %s26
      %s46 = sphi 0, %s46
      %s48 = sphi 0, %s46
      %s49 = sphi 0, %s48
      %s63 = sphi 0, %s49
      %s67 = sphi 0, %s67
      %s69 = sphi 0, %s67
      %s70 = sphi 0, %s69
      %s84 = sphi 0, %s70
      %s90 = sphi 0, %s92
      %s93 = sphi 0, %s90
      %s94 = sphi 0, %s93
      %s110 = sphi 0, %s94
    $region4: #{vision_encoder_forward.21} parent=1 // loop_header_branch
      %15 = sbr.rel (%p13) target = $region8
    $region5: #{vision_encoder_forward.21} parent=1 // loop_body
      %s17 = ssub.s32 %s12, 1
      %s18 = ssub.s32 %s12, 2
      %s19 = sadd.s32 %s12, 1
      %s20 = ssub.s32 %s12, %s19
      %p21 = scmp.eq.s32.totalorder %s20, 0
      %s23 = sadd.s32 %s22, 1
      %s24 = scalar_select %p21, %s22, %s23
      %p27 = pneg %p21
      %p28 = scmp.eq.s32.totalorder %s12, 3
      %p29 = por %p27, %p28
      %p30 = scmp.ne.s32.totalorder %s22, %s25
      %p31 = scmp.eq.s32.totalorder %s12, 0
      %p32 = por %p30, %p31
      %p33 = scmp.ne.s32.totalorder %s22, %s25
      %p34 = scmp.eq.s32.totalorder %s17, 3
      %p35 = por %p33, %p34
      %p36 = scmp.ne.s32.totalorder %s25, %s26
      %p37 = scmp.eq.s32.totalorder %s17, 0
      %p38 = por %p36, %p37
      %p39 = scmp.ne.s32.totalorder %s25, %s26
      %p40 = scmp.eq.s32.totalorder %s18, 3
      %p41 = por %p39, %p40
      %p43 = scmp.ne.s32.totalorder %s26, %s42
      %p44 = scmp.eq.s32.totalorder %s18, 0
      %p45 = por %p43, %p44
      %s47 = sadd.s32 %s46, 1
      %p50 = scmp.eq.s32.totalorder %s12, 3
      %p51 = scmp.ne.s32.totalorder %s46, %s48
      %p52 = scmp.eq.s32.totalorder %s12, 0
      %p53 = por %p51, %p52
      %p54 = scmp.ne.s32.totalorder %s46, %s48
      %p55 = scmp.eq.s32.totalorder %s17, 3
      %p56 = por %p54, %p55
      %p57 = scmp.ne.s32.totalorder %s48, %s49
      %p58 = scmp.eq.s32.totalorder %s17, 0
      %p59 = por %p57, %p58
      %p60 = scmp.ne.s32.totalorder %s48, %s49
      %p61 = scmp.eq.s32.totalorder %s18, 3
      %p62 = por %p60, %p61
      %p64 = scmp.ne.s32.totalorder %s49, %s63
      %p65 = scmp.eq.s32.totalorder %s18, 0
      %p66 = por %p64, %p65
      %s68 = sadd.s32 %s67, 1
      %p71 = scmp.eq.s32.totalorder %s12, 3
      %p72 = scmp.ne.s32.totalorder %s67, %s69
      %p73 = scmp.eq.s32.totalorder %s12, 0
      %p74 = por %p72, %p73
      %p75 = scmp.ne.s32.totalorder %s67, %s69
      %p76 = scmp.eq.s32.totalorder %s17, 3
      %p77 = por %p75, %p76
      %p78 = scmp.ne.s32.totalorder %s69, %s70
      %p79 = scmp.eq.s32.totalorder %s17, 0
      %p80 = por %p78, %p79
      %p81 = scmp.ne.s32.totalorder %s69, %s70
      %p82 = scmp.eq.s32.totalorder %s18, 3
      %p83 = por %p81, %p82
      %p85 = scmp.ne.s32.totalorder %s70, %s84
      %p86 = scmp.eq.s32.totalorder %s18, 0
      %p87 = por %p85, %p86
      %s88 = ssub.s32 %s12, %s19
      %p89 = scmp.eq.s32.totalorder %s88, 0
      %s91 = sadd.s32 %s90, 1
      %s92 = scalar_select %p89, %s90, %s91
      %p95 = pneg %p89
      %p96 = scmp.eq.s32.totalorder %s12, 3
      %p97 = por %p95, %p96
      %p98 = scmp.ne.s32.totalorder %s90, %s93
      %p99 = scmp.eq.s32.totalorder %s12, 0
      %p100 = por %p98, %p99
      %p101 = scmp.ne.s32.totalorder %s90, %s93
      %p102 = scmp.eq.s32.totalorder %s17, 3
      %p103 = por %p101, %p102
      %p104 = scmp.ne.s32.totalorder %s93, %s94
      %p105 = scmp.eq.s32.totalorder %s17, 0
      %p106 = por %p104, %p105
      %p107 = scmp.ne.s32.totalorder %s93, %s94
      %p108 = scmp.eq.s32.totalorder %s18, 3
      %p109 = por %p107, %p108
      %p111 = scmp.ne.s32.totalorder %s94, %s110
      %p112 = scmp.eq.s32.totalorder %s18, 0
      %p113 = por %p111, %p112
      %p114 = scmp.le.s32.totalorder 1, %s12
      %p115 = scmp.lt.s32.totalorder %s12, 5
      %p116 = pnand %p114, %p115
      %p117 = pneg %p116
      // Predicated region
      $region9: #{vision_encoder_forward.21} parent=5 // pred_check
        _
      $region10: #{vision_encoder_forward.21} parent=5 // pred_check_branch
        %119 = sbr.rel (%p116) target = $region12
      $region11: #{vision_encoder_forward.21} parent=5 // pred_region
        %s120 = ssub.s32 %s12, 1
        // Predicated region
        $region13: #{vision_encoder_forward.21} parent=11 // pred_check
          %p121 = pneg %p59
        $region14: #{vision_encoder_forward.21} parent=11 // pred_check_branch
          %123 = sbr.rel (%p121) target = $region16
        $region15: #{vision_encoder_forward.21} parent=11 // pred_region
          _
        $region16: #{vision_encoder_forward.21} parent=11 // pred_fallthru
          _
        // Predicated region
        $region17: #{vision_encoder_forward.21} parent=11 // pred_check
          %p124 = pneg %p80
        $region18: #{vision_encoder_forward.21} parent=11 // pred_check_branch
          %126 = sbr.rel (%p124) target = $region20
        $region19: #{vision_encoder_forward.21} parent=11 // pred_region
          _
        $region20: #{vision_encoder_forward.21} parent=11 // pred_fallthru
          _
      $region12: #{vision_encoder_forward.21} parent=5 // pred_fallthru
        _
      %p127 = scmp.lt.s32.totalorder %s12, 4
      // Predicated region
      $region21: #{vision_encoder_forward.21} parent=5 // pred_check
        %p128 = pneg %p127
      $region22: #{vision_encoder_forward.21} parent=5 // pred_check_branch
        %130 = sbr.rel (%p128) target = $region24
      $region23: #{vision_encoder_forward.21} parent=5 // pred_region
        // Predicated region
        $region25: #{vision_encoder_forward.21} parent=23 // pred_check
          %p131 = pneg %p32
        $region26: #{vision_encoder_forward.21} parent=23 // pred_check_branch
          %133 = sbr.rel (%p131) target = $region28
        $region27: #{vision_encoder_forward.21} parent=23 // pred_region
          %s134 = smul.u32 16, %s12
          %p135 = scmp.lt.s32.totalorder %s134, 63
          %s136 = scalar_select %p135, %s134, 63
          %s137 = smul.addr %s136, 8
          %s138 = scalar_lea.vmem %s0, %s137
          %s139 = smul.u32 16, %s12
        $region28: #{vision_encoder_forward.21} parent=23 // pred_fallthru
          _
      $region24: #{vision_encoder_forward.21} parent=5 // pred_fallthru
        _
      %p140 = scmp.le.s32.totalorder 1, %s12
      %p141 = scmp.lt.s32.totalorder %s12, 5
      %p142 = pnand %p140, %p141
      %p143 = pneg %p142
      // Predicated region
      $region29: #{vision_encoder_forward.21} parent=5 // pred_check
        _
      $region30: #{vision_encoder_forward.21} parent=5 // pred_check_branch
        %145 = sbr.rel (%p142) target = $region32
      $region31: #{vision_encoder_forward.21} parent=5 // pred_region
        %s146 = ssub.s32 %s12, 1
        %s147 = smul.u32 16, %s17
        %p148 = scmp.lt.s32.totalorder %s147, 63
        %s149 = scalar_select %p148, %s147, 63
        %s150 = smul.addr %s149, 8
        %s151 = scalar_lea.vmem %s0, %s150
        %p152 = pneg %p38
        %p153 = pneg %p35
        %p154 = pneg %p59
        %p155 = pneg %p56
        %p156 = pneg %p80
        %p157 = pneg %p77
        %p158 = pneg %p106
        %p159 = pneg %p103
        %s160 = sand.u32 %s93, 1
        %s161 = scalar_lea.sflag [#allocation3], %s160
        %s162 = sand.u32 %s93, 1
        %s163 = smul.addr %s162, 128
        %s164 = scalar_lea.vmem [#allocation2], %s163
        %s165 = smul.u32 16, %s17
        %p166 = scmp.lt.s32.totalorder %s165, 63
        %s167 = scalar_select %p166, %s165, 63
        %s168 = smul.addr %s167, 8
        %s169 = scalar_lea.vmem %s0, %s168
        %s170 = smul.u32 16, %s17
        %s171 = smul.u32 16, %s17
        %v172 = vld [vmem:[%s169] sm:$0xff]
        %v173 = vld [vmem:[%s169 + $0x8] sm:$0xff]
        %v174 = vld [vmem:[%s169 + $0x10] sm:$0xff]
        %v175 = vld [vmem:[%s169 + $0x18] sm:$0xff]
        %v176 = vld [vmem:[%s169 + $0x20] sm:$0xff]
        %v177 = vld [vmem:[%s169 + $0x28] sm:$0xff]
        %v178 = vld [vmem:[%s169 + $0x30] sm:$0xff]
        %v179 = vld [vmem:[%s169 + $0x38] sm:$0xff]
        %v180 = vld [vmem:[%s169 + $0x40] sm:$0xff]
        %v181 = vld [vmem:[%s169 + $0x48] sm:$0xff]
        %v182 = vld [vmem:[%s169 + $0x50] sm:$0xff]
        %v183 = vld [vmem:[%s169 + $0x58] sm:$0xff]
        %v184 = vld [vmem:[%s169 + $0x60] sm:$0xff]
        %v185 = vld [vmem:[%s169 + $0x68] sm:$0xff]
        %v186 = vld [vmem:[%s169 + $0x70] sm:$0xff]
        %v187 = vld [vmem:[%s169 + $0x78] sm:$0xff]
        %188 = vadd.xlane.f32.xlu0 %v172
        %v189 = vpop.xlane.xlu0 %188
        %190 = vadd.xlane.f32.xlu0 %v173
        %v191 = vpop.xlane.xlu0 %190
        %192 = vadd.xlane.f32.xlu0 %v174
        %v193 = vpop.xlane.xlu0 %192
        %194 = vadd.xlane.f32.xlu0 %v175
        %v195 = vpop.xlane.xlu0 %194
        %196 = vadd.xlane.f32.xlu0 %v176
        %v197 = vpop.xlane.xlu0 %196
        %198 = vadd.xlane.f32.xlu0 %v177
        %v199 = vpop.xlane.xlu0 %198
        %200 = vadd.xlane.f32.xlu0 %v178
        %v201 = vpop.xlane.xlu0 %200
        %202 = vadd.xlane.f32.xlu0 %v179
        %v203 = vpop.xlane.xlu0 %202
        %204 = vadd.xlane.f32.xlu0 %v180
        %v205 = vpop.xlane.xlu0 %204
        %206 = vadd.xlane.f32.xlu0 %v181
        %v207 = vpop.xlane.xlu0 %206
        %208 = vadd.xlane.f32.xlu0 %v182
        %v209 = vpop.xlane.xlu0 %208
        %210 = vadd.xlane.f32.xlu0 %v183
        %v211 = vpop.xlane.xlu0 %210
        %212 = vadd.xlane.f32.xlu0 %v184
        %v213 = vpop.xlane.xlu0 %212
        %214 = vadd.xlane.f32.xlu0 %v185
        %v215 = vpop.xlane.xlu0 %214
        %216 = vadd.xlane.f32.xlu0 %v186
        %v217 = vpop.xlane.xlu0 %216
        %218 = vadd.xlane.f32.xlu0 %v187
        %v219 = vpop.xlane.xlu0 %218
        %v220 = vrcp.pop 128.0
        %v221 = vmul.f32 %v189, %v220
        %v222 = vmul.f32 %v191, %v220
        %v223 = vmul.f32 %v193, %v220
        %v224 = vmul.f32 %v195, %v220
        %v225 = vmul.f32 %v197, %v220
        %v226 = vmul.f32 %v199, %v220
        %v227 = vmul.f32 %v201, %v220
        %v228 = vmul.f32 %v203, %v220
        %v229 = vmul.f32 %v205, %v220
        %v230 = vmul.f32 %v207, %v220
        %v231 = vmul.f32 %v209, %v220
        %v232 = vmul.f32 %v211, %v220
        %v233 = vmul.f32 %v213, %v220
        %v234 = vmul.f32 %v215, %v220
        %v235 = vmul.f32 %v217, %v220
        %v236 = vmul.f32 %v219, %v220
        %v237 = vsub.f32 %v172, %v221
        %v238 = vsub.f32 %v173, %v222
        %v239 = vsub.f32 %v174, %v223
        %v240 = vsub.f32 %v175, %v224
        %v241 = vsub.f32 %v176, %v225
        %v242 = vsub.f32 %v177, %v226
        %v243 = vsub.f32 %v178, %v227
        %v244 = vsub.f32 %v179, %v228
        %v245 = vsub.f32 %v180, %v229
        %v246 = vsub.f32 %v181, %v230
        %v247 = vsub.f32 %v182, %v231
        %v248 = vsub.f32 %v183, %v232
        %v249 = vsub.f32 %v184, %v233
        %v250 = vsub.f32 %v185, %v234
        %v251 = vsub.f32 %v186, %v235
        %v252 = vsub.f32 %v187, %v236
        %v253 = vmul.f32 %v237, %v237
        %v254 = vmul.f32 %v238, %v238
        %v255 = vmul.f32 %v239, %v239
        %v256 = vmul.f32 %v240, %v240
        %v257 = vmul.f32 %v241, %v241
        %v258 = vmul.f32 %v242, %v242
        %v259 = vmul.f32 %v243, %v243
        %v260 = vmul.f32 %v244, %v244
        %v261 = vmul.f32 %v245, %v245
        %v262 = vmul.f32 %v246, %v246
        %v263 = vmul.f32 %v247, %v247
        %v264 = vmul.f32 %v248, %v248
        %v265 = vmul.f32 %v249, %v249
        %v266 = vmul.f32 %v250, %v250
        %v267 = vmul.f32 %v251, %v251
        %v268 = vmul.f32 %v252, %v252
        %269 = vadd.xlane.f32.xlu0 %v253
        %v270 = vpop.xlane.xlu0 %269
        %271 = vadd.xlane.f32.xlu0 %v254
        %v272 = vpop.xlane.xlu0 %271
        %273 = vadd.xlane.f32.xlu0 %v255
        %v274 = vpop.xlane.xlu0 %273
        %275 = vadd.xlane.f32.xlu0 %v256
        %v276 = vpop.xlane.xlu0 %275
        %277 = vadd.xlane.f32.xlu0 %v257
        %v278 = vpop.xlane.xlu0 %277
        %279 = vadd.xlane.f32.xlu0 %v258
        %v280 = vpop.xlane.xlu0 %279
        %281 = vadd.xlane.f32.xlu0 %v259
        %v282 = vpop.xlane.xlu0 %281
        %283 = vadd.xlane.f32.xlu0 %v260
        %v284 = vpop.xlane.xlu0 %283
        %285 = vadd.xlane.f32.xlu0 %v261
        %v286 = vpop.xlane.xlu0 %285
        %287 = vadd.xlane.f32.xlu0 %v262
        %v288 = vpop.xlane.xlu0 %287
        %289 = vadd.xlane.f32.xlu0 %v263
        %v290 = vpop.xlane.xlu0 %289
        %291 = vadd.xlane.f32.xlu0 %v264
        %v292 = vpop.xlane.xlu0 %291
        %293 = vadd.xlane.f32.xlu0 %v265
        %v294 = vpop.xlane.xlu0 %293
        %295 = vadd.xlane.f32.xlu0 %v266
        %v296 = vpop.xlane.xlu0 %295
        %297 = vadd.xlane.f32.xlu0 %v267
        %v298 = vpop.xlane.xlu0 %297
        %299 = vadd.xlane.f32.xlu0 %v268
        %v300 = vpop.xlane.xlu0 %299
        %v301 = vmul.f32 %v270, %v220
        %v302 = vmul.f32 %v272, %v220
        %v303 = vmul.f32 %v274, %v220
        %v304 = vmul.f32 %v276, %v220
        %v305 = vmul.f32 %v278, %v220
        %v306 = vmul.f32 %v280, %v220
        %v307 = vmul.f32 %v282, %v220
        %v308 = vmul.f32 %v284, %v220
        %v309 = vmul.f32 %v286, %v220
        %v310 = vmul.f32 %v288, %v220
        %v311 = vmul.f32 %v290, %v220
        %v312 = vmul.f32 %v292, %v220
        %v313 = vmul.f32 %v294, %v220
        %v314 = vmul.f32 %v296, %v220
        %v315 = vmul.f32 %v298, %v220
        %v316 = vmul.f32 %v300, %v220
        %v317 = vadd.f32 %v301, 1e-05
        %v318 = vadd.f32 %v302, 1e-05
        %v319 = vadd.f32 %v303, 1e-05
        %v320 = vadd.f32 %v304, 1e-05
        %v321 = vadd.f32 %v305, 1e-05
        %v322 = vadd.f32 %v306, 1e-05
        %v323 = vadd.f32 %v307, 1e-05
        %v324 = vadd.f32 %v308, 1e-05
        %v325 = vadd.f32 %v309, 1e-05
        %v326 = vadd.f32 %v310, 1e-05
        %v327 = vadd.f32 %v311, 1e-05
        %v328 = vadd.f32 %v312, 1e-05
        %v329 = vadd.f32 %v313, 1e-05
        %v330 = vadd.f32 %v314, 1e-05
        %v331 = vadd.f32 %v315, 1e-05
        %v332 = vadd.f32 %v316, 1e-05
        %v333 = vrsqrt.pop %v317
        %v334 = vrsqrt.pop %v318
        %v335 = vrsqrt.pop %v319
        %v336 = vrsqrt.pop %v320
        %v337 = vrsqrt.pop %v321
        %v338 = vrsqrt.pop %v322
        %v339 = vrsqrt.pop %v323
        %v340 = vrsqrt.pop %v324
        %v341 = vrsqrt.pop %v325
        %v342 = vrsqrt.pop %v326
        %v343 = vrsqrt.pop %v327
        %v344 = vrsqrt.pop %v328
        %v345 = vrsqrt.pop %v329
        %v346 = vrsqrt.pop %v330
        %v347 = vrsqrt.pop %v331
        %v348 = vrsqrt.pop %v332
        %v349 = vmul.f32 %v237, %v333
        %v350 = vmul.f32 %v238, %v334
        %v351 = vmul.f32 %v239, %v335
        %v352 = vmul.f32 %v240, %v336
        %v353 = vmul.f32 %v241, %v337
        %v354 = vmul.f32 %v242, %v338
        %v355 = vmul.f32 %v243, %v339
        %v356 = vmul.f32 %v244, %v340
        %v357 = vmul.f32 %v245, %v341
        %v358 = vmul.f32 %v246, %v342
        %v359 = vmul.f32 %v247, %v343
        %v360 = vmul.f32 %v248, %v344
        %v361 = vmul.f32 %v249, %v345
        %v362 = vmul.f32 %v250, %v346
        %v363 = vmul.f32 %v251, %v347
        %v364 = vmul.f32 %v252, %v348
        %v365 = vld [vmem:[%s1] sm:$0x1]
        %v367 = vlaneseq
        %v368 = vshrl.u32 %v367, 7
        %v369 = vsub.s32 0, %v368
        %v370 = vrot.slane %v365, %v369
        %v372 = vmul.f32 %v349, %v370
        %v373 = vmul.f32 %v350, %v370
        %v374 = vmul.f32 %v351, %v370
        %v375 = vmul.f32 %v352, %v370
        %v376 = vmul.f32 %v353, %v370
        %v377 = vmul.f32 %v354, %v370
        %v378 = vmul.f32 %v355, %v370
        %v379 = vmul.f32 %v356, %v370
        %v380 = vmul.f32 %v357, %v370
        %v381 = vmul.f32 %v358, %v370
        %v382 = vmul.f32 %v359, %v370
        %v383 = vmul.f32 %v360, %v370
        %v384 = vmul.f32 %v361, %v370
        %v385 = vmul.f32 %v362, %v370
        %v386 = vmul.f32 %v363, %v370
        %v387 = vmul.f32 %v364, %v370
        %v388 = vld [vmem:[%s2] sm:$0x1]
        %v390 = vlaneseq
        %v391 = vshrl.u32 %v390, 7
        %v392 = vsub.s32 0, %v391
        %v393 = vrot.slane %v388, %v392
        %v395 = vadd.f32 %v372, %v393
        %v396 = vadd.f32 %v373, %v393
        %v397 = vadd.f32 %v374, %v393
        %v398 = vadd.f32 %v375, %v393
        %v399 = vadd.f32 %v376, %v393
        %v400 = vadd.f32 %v377, %v393
        %v401 = vadd.f32 %v378, %v393
        %v402 = vadd.f32 %v379, %v393
        %v403 = vadd.f32 %v380, %v393
        %v404 = vadd.f32 %v381, %v393
        %v405 = vadd.f32 %v382, %v393
        %v406 = vadd.f32 %v383, %v393
        %v407 = vadd.f32 %v384, %v393
        %v408 = vadd.f32 %v385, %v393
        %v409 = vadd.f32 %v386, %v393
        %v410 = vadd.f32 %v387, %v393
        %411 = vst [vmem:[%s164] sm:$0xff] %v395
        %412 = vst [vmem:[%s164 + $0x8] sm:$0xff] %v396
        %413 = vst [vmem:[%s164 + $0x10] sm:$0xff] %v397
        %414 = vst [vmem:[%s164 + $0x18] sm:$0xff] %v398
        %415 = vst [vmem:[%s164 + $0x20] sm:$0xff] %v399
        %416 = vst [vmem:[%s164 + $0x28] sm:$0xff] %v400
        %417 = vst [vmem:[%s164 + $0x30] sm:$0xff] %v401
        %418 = vst [vmem:[%s164 + $0x38] sm:$0xff] %v402
        %419 = vst [vmem:[%s164 + $0x40] sm:$0xff] %v403
        %420 = vst [vmem:[%s164 + $0x48] sm:$0xff] %v404
        %421 = vst [vmem:[%s164 + $0x50] sm:$0xff] %v405
        %422 = vst [vmem:[%s164 + $0x58] sm:$0xff] %v406
        %423 = vst [vmem:[%s164 + $0x60] sm:$0xff] %v407
        %424 = vst [vmem:[%s164 + $0x68] sm:$0xff] %v408
        %425 = vst [vmem:[%s164 + $0x70] sm:$0xff] %v409
        %426 = vst [vmem:[%s164 + $0x78] sm:$0xff] %v410
        %s427 = sand.u32 %s93, 1
        %s428 = scalar_lea.sflag [#allocation3], %s427
        %s429 = sand.u32 %s93, 1
        %s430 = smul.addr %s429, 128
        %s431 = scalar_lea.vmem [#allocation2], %s430
        // Predicated region
        $region33: #{vision_encoder_forward.21} parent=31 // pred_check
          %p432 = pneg %p103
        $region34: #{vision_encoder_forward.21} parent=31 // pred_check_branch
          %434 = sbr.rel (%p432) target = $region36
        $region35: #{vision_encoder_forward.21} parent=31 // pred_region
          %s435 = smul.u32 16, %s17
          %s437 = ssub.s32 2048, 2048
          %438 = vsyncadd %s428, %s437
          %s439 = smul.addr %s435, 128
          %s440 = scalar_lea.hbm %s3, %s439
          %s441 = sshll.u32 %s431, 4
          %s442 = int_to_ptr.vmem [resolvable:$true] %s441
          %447 = dma.vmem_to_hbm [thread:$0]  %s442, 2048, %s440, %s428, 128, 128, 8
        $region36: #{vision_encoder_forward.21} parent=31 // pred_fallthru
          _
      $region32: #{vision_encoder_forward.21} parent=5 // pred_fallthru
        _
      %p448 = scmp.le.s32.totalorder 2, %s12
      // Predicated region
      $region37: #{vision_encoder_forward.21} parent=5 // pred_check
        %p449 = pneg %p448
      $region38: #{vision_encoder_forward.21} parent=5 // pred_check_branch
        %451 = sbr.rel (%p449) target = $region40
      $region39: #{vision_encoder_forward.21} parent=5 // pred_region
        %s452 = ssub.s32 %s12, 2
        // Predicated region
        $region41: #{vision_encoder_forward.21} parent=39 // pred_check
          %p453 = pneg %p109
        $region42: #{vision_encoder_forward.21} parent=39 // pred_check_branch
          %455 = sbr.rel (%p453) target = $region44
        $region43: #{vision_encoder_forward.21} parent=39 // pred_region
          %s456 = sand.u32 %s94, 1
          %s457 = scalar_lea.sflag [#allocation3], %s456
          %s458 = sand.u32 %s94, 1
          %s459 = smul.addr %s458, 128
          %s460 = scalar_lea.vmem [#allocation2], %s459
          %461 = dma.done %s457, 2048
        $region44: #{vision_encoder_forward.21} parent=39 // pred_fallthru
          _
      $region40: #{vision_encoder_forward.21} parent=5 // pred_fallthru
        _
    $region6: #{vision_encoder_forward.21} parent=1 // loop_footer
      %s16 = sadd.s32 1, %s12
    $region7: #{vision_encoder_forward.21} parent=1 // loop_footer_branch
      %11 = sbr.rel target = $region3
    $region8: #{vision_encoder_forward.21} parent=1 // loop_exit
      _
    %462 = vsyncpa [#allocation3], 1
    %s463 = scalar_lea.sflag [#allocation3], 1
    %464 = vsyncpa %s463, 1

</llo_original>
